<compile_context>
chip_gen: v5e
topology: v5e:2x2
jax: 0.10.0
libtpu: 0.0.40
codegen_flags: <defaults>
</compile_context>

<pallas_src>
import jax
import jax.numpy as jnp
from jax import lax
from jax.experimental import pallas as pl
from jax.experimental.pallas import tpu as pltpu


# ---------------------------------------------------------------------------
# Kernels
# ---------------------------------------------------------------------------

def _sae_fused_kernel(x_ref, we_ref, be_ref, wd_ref, bd_ref, enc_ref, dec_ref):
    """Fast path: 1-D grid over batch tiles; whole weight matrices stay resident
    in VMEM (constant index_map) and are DMA'd from HBM exactly once."""
    enc = lax.dot_general(
        x_ref[...], we_ref[...],
        dimension_numbers=(((1,), (1,)), ((), ())),   # contract on input_dim
        preferred_element_type=jnp.float32)
    enc = jnp.maximum(enc + be_ref[...], 0.0)

    enc_lo = enc.astype(wd_ref.dtype)                  # one cast, reused below
    if enc_ref.dtype == wd_ref.dtype:
        enc_ref[...] = enc_lo
    else:
        enc_ref[...] = enc.astype(enc_ref.dtype)

    dec = lax.dot_general(
        enc_lo, wd_ref[...],
        dimension_numbers=(((1,), (1,)), ((), ())),   # contract on latent_dim
        preferred_element_type=jnp.float32)
    dec_ref[...] = jax.nn.sigmoid(dec + bd_ref[...]).astype(dec_ref.dtype)


def _sae_tiled_kernel(x_ref, we_ref, be_ref, wd_ref, bd_ref, enc_ref, dec_ref,
                      *scratch):
    """Tiled path: grid (batch tiles, latent tiles).  The decoder output is a
    reduction over latent tiles; it accumulates directly into dec_ref when the
    output dtype is f32, otherwise into an f32 VMEM scratch."""
    acc_ref = scratch[0] if scratch else dec_ref
    k = pl.program_id(1)

    @pl.when(k == 0)
    def _():
        acc_ref[...] = jnp.zeros_like(acc_ref)

    enc = lax.dot_general(
        x_ref[...], we_ref[...],
        dimension_numbers=(((1,), (1,)), ((), ())),
        preferred_element_type=jnp.float32)
    enc = jnp.maximum(enc + be_ref[...], 0.0)

    enc_lo = enc.astype(wd_ref.dtype)
    if enc_ref.dtype == wd_ref.dtype:
        enc_ref[...] = enc_lo
    else:
        enc_ref[...] = enc.astype(enc_ref.dtype)

    acc_ref[...] += lax.dot_general(
        enc_lo, wd_ref[...],
        dimension_numbers=(((1,), (1,)), ((), ())),
        preferred_element_type=jnp.float32)

    @pl.when(k == pl.num_programs(1) - 1)
    def _():
        dec_ref[...] = jax.nn.sigmoid(
            acc_ref[...] + bd_ref[...]).astype(dec_ref.dtype)


# ---------------------------------------------------------------------------
# Planning helpers (generation-aware tile sizes & VMEM budget)
# ---------------------------------------------------------------------------

_TB_CANDIDATES = (1024, 512, 256, 128, 64, 32, 16, 8)
_TL_CANDIDATES = (2048, 1024, 512, 256, 128)


def _round_up(v, m):
    return (v + m - 1) // m * m


def _pad_cast(a, shape, dtype):
    """Cast to `dtype` and zero-pad up to `shape` (no-ops where possible)."""
    a = a.astype(dtype)
    if a.shape == tuple(shape):
        return a
    out = jnp.zeros(shape, dtype)
    return out.at[tuple(slice(0, s) for s in a.shape)].set(a)


def _vmem_capacity_bytes():
    try:
        return int(pltpu.get_tpu_info().vmem_capacity_bytes)
    except Exception:
        return 64 * 1024 * 1024   # conservative (v7x per-core VMEM)


def _default_vmem_limit(capacity):
    # Leave headroom for compiler-internal scratch: ~40 MiB on v7x, ~96 MiB on v5e/v6e.
    return max(16 << 20, min(capacity - (24 << 20), int(capacity * 0.75)))


def _default_mxu_dtype(dtype):
    dtype = jnp.dtype(dtype)
    if dtype.itemsize >= 4:
        return jnp.bfloat16   # feed the MXU bf16, accumulate f32
    return dtype


def _plan_tiles(B, D, L, mxu_bytes, out_bytes, vmem_limit, prefer_multi_batch,
                latent_tile=None):
    """Pick (mode, TB, TL, Dp, Lp) so the double-buffered resident set fits VMEM."""
    Dp = _round_up(D, 128)
    Lp128 = _round_up(L, 128)
    budget = int(vmem_limit * 0.85)
    b_cap = _round_up(B, 8)

    def fast_bytes(tb):
        return (2 * tb * Dp * mxu_bytes                 # x tile (double-buffered)
                + 4 * Lp128 * Dp * mxu_bytes            # W_enc + W_dec (whole, x2 bufs)
                + 2 * (Lp128 + Dp) * 4                  # biases (f32)
                + 2 * tb * (Lp128 + Dp) * out_bytes)    # enc + dec outputs

    def tiled_bytes(tb, tl):
        scratch = tb * Dp * 4 if out_bytes != 4 else 0
        return (2 * tb * Dp * mxu_bytes
                + 4 * tl * Dp * mxu_bytes               # W_enc tile + W_dec tile
                + 2 * (tl + Dp) * 4
                + 2 * tb * (tl + Dp) * out_bytes
                + scratch)

    def pick_tb(fits, want_multi):
        cands = [t for t in _TB_CANDIDATES if t <= b_cap] or [8]
        valid = [t for t in cands if fits(t)]
        if not valid:
            return None
        if want_multi and b_cap >= 16:
            multi = [t for t in valid if _round_up(b_cap, t) // t >= 2]
            if multi:
                return multi[0]
        return valid[0]

    if latent_tile is None and fast_bytes(min(128, b_cap)) <= budget:
        # Whole-weight fast path: >=2 batch steps is free here (weights stay resident).
        tb = pick_tb(lambda t: fast_bytes(t) <= budget, want_multi=True)
        return "fast", tb, Lp128, Dp, Lp128

    tl_cands = ((_round_up(latent_tile, 128),) if latent_tile is not None
                else _TL_CANDIDATES)
    for tl in tl_cands:
        if latent_tile is None and tl > Lp128:
            continue
        tb = pick_tb(lambda t, tl=tl: tiled_bytes(t, tl) <= budget,
                     want_multi=prefer_multi_batch)
        if tb is not None:
            return "tiled", tb, tl, Dp, _round_up(L, tl)

    # Extreme shapes: fall back to the smallest tiles and trust the explicit limit.
    # TODO(synk): for very large input_dim, tile D as a third grid axis for the decoder.
    tl = 128 if latent_tile is None else _round_up(latent_tile, 128)
    return "tiled", min(8, b_cap), tl, Dp, _round_up(L, tl)


# ---------------------------------------------------------------------------
# Host-side wrapper
# ---------------------------------------------------------------------------

def prepare_sae_params(w_enc, b_enc, w_dec, b_dec, *, batch_size, x_dtype,
                       mxu_dtype=None, vmem_limit_bytes=None, latent_tile=None):
    """Plan tiles and pad/cast the weights once (cache & reuse across forward calls)."""
    L, D = w_enc.shape
    assert w_dec.shape == (D, L)
    assert b_enc.shape == (L,) and b_dec.shape == (D,)

    if mxu_dtype is None:
        mxu_dtype = _default_mxu_dtype(jnp.result_type(x_dtype, w_enc.dtype))
    capacity = _vmem_capacity_bytes()
    if vmem_limit_bytes is None:
        vmem_limit_bytes = _default_vmem_limit(capacity)
    prefer_multi_batch = capacity <= (80 << 20)   # v7x (64 MiB / TC, 2 TCs) heuristic

    mode, TB, TL, Dp, Lp = _plan_tiles(
        batch_size, D, L,
        mxu_bytes=jnp.dtype(mxu_dtype).itemsize,
        out_bytes=jnp.dtype(x_dtype).itemsize,
        vmem_limit=vmem_limit_bytes,
        prefer_multi_batch=prefer_multi_batch,
        latent_tile=latent_tile)

    # Zero padding keeps padded latents/features inert: padded b_enc/W_dec columns are
    # zero, so padded latents contribute nothing to the decoder; padded rows/cols of
    # the outputs are sliced off before returning.
    wep = _pad_cast(w_enc, (Lp, Dp), mxu_dtype)                    # (L, D), contract D
    bep = _pad_cast(b_enc.reshape(1, L), (1, Lp), jnp.float32)
    wdp = _pad_cast(w_dec, (Dp, Lp), mxu_dtype)                    # (D, L), contract L
    bdp = _pad_cast(b_dec.reshape(1, D), (1, Dp), jnp.float32)

    return {
        "mode": mode, "TB": TB, "TL": TL, "Dp": Dp, "Lp": Lp,
        "mxu_dtype": jnp.dtype(mxu_dtype), "vmem_limit": int(vmem_limit_bytes),
        "dims": (L, D), "weights": (wep, bep, wdp, bdp),
    }


def sparse_autoencoder_forward(x, w_enc=None, b_enc=None, w_dec=None, b_dec=None, *,
                               prepared=None, mxu_dtype=None, vmem_limit_bytes=None,
                               latent_tile=None):
    """x: (B, D); w_enc: (L, D); b_enc: (L,); w_dec: (D, L); b_dec: (D,).
    Returns (encoded (B, L), decoded (B, D)) matching the PyTorch module."""
    B, D = x.shape
    if prepared is None:
        prepared = prepare_sae_params(
            w_enc, b_enc, w_dec, b_dec, batch_size=B, x_dtype=x.dtype,
            mxu_dtype=mxu_dtype, vmem_limit_bytes=vmem_limit_bytes,
            latent_tile=latent_tile)

    L, D_w = prepared["dims"]
    assert D == D_w, "input_dim mismatch with prepared weights"
    mode, TB, TL = prepared["mode"], prepared["TB"], prepared["TL"]
    Dp, Lp = prepared["Dp"], prepared["Lp"]
    wep, bep, wdp, bdp = prepared["weights"]
    out_dtype = x.dtype

    Bp = _round_up(B, TB)
    xp = _pad_cast(x, (Bp, Dp), prepared["mxu_dtype"])

    if mode == "fast":
        grid = (Bp // TB,)
        in_specs = [
            pl.BlockSpec((TB, Dp), lambda i: (i, 0)),   # x tile
            pl.BlockSpec((Lp, Dp), lambda i: (0, 0)),   # whole W_enc (resident)
            pl.BlockSpec((1, Lp), lambda i: (0, 0)),    # b_enc
            pl.BlockSpec((Dp, Lp), lambda i: (0, 0)),   # whole W_dec (resident)
            pl.BlockSpec((1, Dp), lambda i: (0, 0)),    # b_dec
        ]
        out_specs = (
            pl.BlockSpec((TB, Lp), lambda i: (i, 0)),
            pl.BlockSpec((TB, Dp), lambda i: (i, 0)),
        )
        scratch_shapes = []
        kernel = _sae_fused_kernel
        dim_sems = ("parallel",)
    else:
        grid = (Bp // TB, Lp // TL)
        in_specs = [
            pl.BlockSpec((TB, Dp), lambda i, k: (i, 0)),   # x tile
            pl.BlockSpec((TL, Dp), lambda i, k: (k, 0)),   # W_enc rows for latent tile
            pl.BlockSpec((1, TL), lambda i, k: (0, k)),    # b_enc slice
            pl.BlockSpec((Dp, TL), lambda i, k: (0, k)),   # W_dec cols for latent tile
            pl.BlockSpec((1, Dp), lambda i, k: (0, 0)),    # b_dec
        ]
        out_specs = (
            pl.BlockSpec((TB, TL), lambda i, k: (i, k)),   # encoded tile
            pl.BlockSpec((TB, Dp), lambda i, k: (i, 0)),   # decoded tile (resident over k)
        )
        # f32 outputs accumulate in-place into dec_ref; otherwise use an f32 scratch.
        if jnp.dtype(out_dtype) == jnp.dtype(jnp.float32):
            scratch_shapes = []
        else:
            scratch_shapes = [pltpu.VMEM((TB, Dp), jnp.float32)]
        kernel = _sae_tiled_kernel
        dim_sems = ("parallel", "arbitrary")   # keep latent (reduction) axis last

    enc_p, dec_p = pl.pallas_call(
        kernel,
        out_shape=(
            jax.ShapeDtypeStruct((Bp, Lp), out_dtype),
            jax.ShapeDtypeStruct((Bp, Dp), out_dtype),
        ),
        grid=grid,
        in_specs=in_specs,
        out_specs=out_specs,
        scratch_shapes=scratch_shapes,
        compiler_params=pltpu.CompilerParams(
            dimension_semantics=dim_sems,
            vmem_limit_bytes=prepared["vmem_limit"],
        ),
    )(xp, wep, bep, wdp, bdp)

    return enc_p[:B, :L], dec_p[:B, :D]


# ---------------------------------------------------------------------------
# Reference (mirrors the kernel's precision policy: low-precision MXU operands,
# f32 accumulation) and self-test.
# ---------------------------------------------------------------------------

def _reference_forward(x, w_enc, b_enc, w_dec, b_dec, mxu_dtype):
    xm = x.astype(mxu_dtype)
    wem = w_enc.astype(mxu_dtype)
    wdm = w_dec.astype(mxu_dtype)
    enc = jnp.maximum(
        jnp.dot(xm, wem.T, preferred_element_type=jnp.float32)
        + b_enc.astype(jnp.float32), 0.0)
    enc_out = enc.astype(x.dtype)
    dec = jax.nn.sigmoid(
        jnp.dot(enc_out.astype(mxu_dtype), wdm.T, preferred_element_type=jnp.float32)
        + b_dec.astype(jnp.float32))
    return enc_out, dec.astype(x.dtype)


if __name__ == "__main__":
    # Small but lane-aligned shapes: batch=512, input_dim=256, latent_dim=1024.
    B, INPUT_DIM, LATENT_DIM = 512, 256, 1024

    key = jax.random.PRNGKey(0)
    kx, ke_w, ke_b, kd_w, kd_b = jax.random.split(key, 5)

    x = jax.random.normal(kx, (B, INPUT_DIM), dtype=jnp.float32)

    # Deterministic init mimicking nn.Linear (uniform +-1/sqrt(fan_in)).
    bound_e = 1.0 / jnp.sqrt(INPUT_DIM)
    bound_d = 1.0 / jnp.sqrt(LATENT_DIM)
    w_enc = jax.random.uniform(ke_w, (LATENT_DIM, INPUT_DIM),
                               minval=-bound_e, maxval=bound_e, dtype=jnp.float32)
    b_enc = jax.random.uniform(ke_b, (LATENT_DIM,),
                               minval=-bound_e, maxval=bound_e, dtype=jnp.float32)
    w_dec = jax.random.uniform(kd_w, (INPUT_DIM, LATENT_DIM),
                               minval=-bound_d, maxval=bound_d, dtype=jnp.float32)
    b_dec = jax.random.uniform(kd_b, (INPUT_DIM,),
                               minval=-bound_d, maxval=bound_d, dtype=jnp.float32)

    enc_want, dec_want = _reference_forward(x, w_enc, b_enc, w_dec, b_dec, jnp.bfloat16)

    # 1) Default plan: small SAE -> whole-weight fast path, bf16 MXU feed, f32 outputs.
    enc, dec = sparse_autoencoder_forward(x, w_enc, b_enc, w_dec, b_dec)
    jax.block_until_ready((enc, dec))
    assert enc.shape == (B, LATENT_DIM) and dec.shape == (B, INPUT_DIM)
    assert jnp.allclose(enc, enc_want, atol=2e-3, rtol=2e-3), \
        float(jnp.max(jnp.abs(enc - enc_want)))
    assert jnp.allclose(dec, dec_want, atol=2e-3, rtol=2e-3), \
        float(jnp.max(jnp.abs(dec - dec_want)))

    # 2) Force the latent-tiled (reduction) path via prepared params, to exercise the
    #    accumulate-into-dec_ref kernel and the prepare-once weight padding.
    prepared = prepare_sae_params(w_enc, b_enc, w_dec, b_dec,
                                  batch_size=B, x_dtype=x.dtype, latent_tile=256)
    enc2, dec2 = sparse_autoencoder_forward(x, prepared=prepared)
    jax.block_until_ready((enc2, dec2))
    assert jnp.allclose(enc2, enc_want, atol=2e-3, rtol=2e-3)
    assert jnp.allclose(dec2, dec_want, atol=2e-3, rtol=2e-3)

    # 3) bf16 inputs/outputs: exercises the f32 scratch accumulator branch.
    xb = x.astype(jnp.bfloat16)
    web, wdb = w_enc.astype(jnp.bfloat16), w_dec.astype(jnp.bfloat16)
    encb_want, decb_want = _reference_forward(xb, web, b_enc, wdb, b_dec, jnp.bfloat16)
    encb, decb = sparse_autoencoder_forward(xb, web, b_enc, wdb, b_dec, latent_tile=256)
    jax.block_until_ready((encb, decb))
    assert jnp.allclose(encb.astype(jnp.float32), encb_want.astype(jnp.float32),
                        atol=5e-2, rtol=5e-2)
    assert jnp.allclose(decb.astype(jnp.float32), decb_want.astype(jnp.float32),
                        atol=5e-2, rtol=5e-2)

    print("KERNEL_OK")
</pallas_src>

<mosaic_0001>
module attributes {stable_mosaic.version = 11 : i64} {
  func.func @_sae_fused_kernel(%arg0: i32, %arg1: memref<256x256xbf16, #tpu.memory_space<vmem>>, %arg2: memref<1024x256xbf16, #tpu.memory_space<vmem>>, %arg3: memref<1x1024xf32, #tpu.memory_space<vmem>>, %arg4: memref<256x1024xbf16, #tpu.memory_space<vmem>>, %arg5: memref<1x256xf32, #tpu.memory_space<vmem>>, %arg6: memref<256x1024xf32, #tpu.memory_space<vmem>>, %arg7: memref<256x256xf32, #tpu.memory_space<vmem>>) attributes {dimension_semantics = [#tpu.dimension_semantics<parallel>], iteration_bounds = array<i64: 2>, scalar_prefetch = 0 : i64, scratch_operands = 0 : i64, tpu.core_type = #tpu.core_type<tc>, window_params = [{transform_indices = @transform_0, window_bounds = array<i64: 256, 256>}, {pipeline_mode = #tpu.pipeline_mode<synchronous>, transform_indices = @transform_1, window_bounds = array<i64: 1024, 256>}, {pipeline_mode = #tpu.pipeline_mode<synchronous>, transform_indices = @transform_2, window_bounds = array<i64: 1, 1024>}, {pipeline_mode = #tpu.pipeline_mode<synchronous>, transform_indices = @transform_3, window_bounds = array<i64: 256, 1024>}, {pipeline_mode = #tpu.pipeline_mode<synchronous>, transform_indices = @transform_4, window_bounds = array<i64: 1, 256>}, {transform_indices = @transform_5, window_bounds = array<i64: 256, 1024>}, {transform_indices = @transform_6, window_bounds = array<i64: 256, 256>}]} {
    %c0 = arith.constant 0 : index
    %c0_0 = arith.constant 0 : index
    %0 = vector.load %arg1[%c0, %c0_0] : memref<256x256xbf16, #tpu.memory_space<vmem>>, vector<256x256xbf16>
    %c0_1 = arith.constant 0 : index
    %c0_2 = arith.constant 0 : index
    %1 = vector.load %arg2[%c0_1, %c0_2] : memref<1024x256xbf16, #tpu.memory_space<vmem>>, vector<1024x256xbf16>
    %cst = arith.constant dense<0.000000e+00> : vector<256x1024xf32>
    %2 = tpu.matmul %0, %1, %cst {dimension_numbers = #tpu.dot_dimension_numbers<[1], [1], [0], [0], [0, 0, 1, 0], [], []>} : vector<256x256xbf16>, vector<1024x256xbf16>, vector<256x1024xf32> -> vector<256x1024xf32>
    %c0_3 = arith.constant 0 : index
    %c0_4 = arith.constant 0 : index
    %3 = vector.load %arg3[%c0_3, %c0_4] : memref<1x1024xf32, #tpu.memory_space<vmem>>, vector<1x1024xf32>
    %4 = vector.broadcast %3 : vector<1x1024xf32> to vector<256x1024xf32>
    %5 = arith.addf %2, %4 : vector<256x1024xf32>
    %cst_5 = arith.constant 0.000000e+00 : f32
    %6 = vector.broadcast %cst_5 : f32 to vector<256x1024xf32>
    %7 = arith.maximumf %5, %6 : vector<256x1024xf32>
    %8 = arith.truncf %7 : vector<256x1024xf32> to vector<256x1024xbf16>
    %c0_6 = arith.constant 0 : index
    %c0_7 = arith.constant 0 : index
    %9 = vector.load %arg6[%c0_6, %c0_7] : memref<256x1024xf32, #tpu.memory_space<vmem>>, vector<256x1024xf32>
    tpu.vector_store %arg6[%c0_6, %c0_7], %7 {strides = array<i32>} : memref<256x1024xf32, #tpu.memory_space<vmem>>, vector<256x1024xf32>,
    %c0_8 = arith.constant 0 : index
    %c0_9 = arith.constant 0 : index
    %10 = vector.load %arg4[%c0_8, %c0_9] : memref<256x1024xbf16, #tpu.memory_space<vmem>>, vector<256x1024xbf16>
    %cst_10 = arith.constant dense<0.000000e+00> : vector<256x256xf32>
    %11 = tpu.matmul %8, %10, %cst_10 {dimension_numbers = #tpu.dot_dimension_numbers<[1], [1], [0], [0], [0, 0, 1, 0], [], []>} : vector<256x1024xbf16>, vector<256x1024xbf16>, vector<256x256xf32> -> vector<256x256xf32>
    %c0_11 = arith.constant 0 : index
    %c0_12 = arith.constant 0 : index
    %12 = vector.load %arg5[%c0_11, %c0_12] : memref<1x256xf32, #tpu.memory_space<vmem>>, vector<1x256xf32>
    %13 = vector.broadcast %12 : vector<1x256xf32> to vector<256x256xf32>
    %14 = arith.addf %11, %13 : vector<256x256xf32>
    %15 = arith.negf %14 : vector<256x256xf32>
    %16 = math.exp %15 : vector<256x256xf32>
    %cst_13 = arith.constant 1.000000e+00 : f32
    %17 = vector.broadcast %cst_13 : f32 to vector<256x256xf32>
    %18 = arith.addf %17, %16 : vector<256x256xf32>
    %19 = arith.divf %17, %18 : vector<256x256xf32>
    %c0_14 = arith.constant 0 : index
    %c0_15 = arith.constant 0 : index
    %20 = vector.load %arg7[%c0_14, %c0_15] : memref<256x256xf32, #tpu.memory_space<vmem>>, vector<256x256xf32>
    tpu.vector_store %arg7[%c0_14, %c0_15], %19 {strides = array<i32>} : memref<256x256xf32, #tpu.memory_space<vmem>>, vector<256x256xf32>,
    return
  }
  func.func @transform_0(%arg0: i32) -> (i32, i32) {
    %c0_i32 = arith.constant 0 : i32
    %c0_i32_0 = arith.constant 0 : i32
    return %arg0, %c0_i32 : i32, i32
  }
  func.func @transform_1(%arg0: i32) -> (i32, i32) {
    %c0_i32 = arith.constant 0 : i32
    %c0_i32_0 = arith.constant 0 : i32
    %c0_i32_1 = arith.constant 0 : i32
    return %c0_i32, %c0_i32_0 : i32, i32
  }
  func.func @transform_2(%arg0: i32) -> (i32, i32) {
    %c0_i32 = arith.constant 0 : i32
    %c0_i32_0 = arith.constant 0 : i32
    %c0_i32_1 = arith.constant 0 : i32
    return %c0_i32, %c0_i32_0 : i32, i32
  }
  func.func @transform_3(%arg0: i32) -> (i32, i32) {
    %c0_i32 = arith.constant 0 : i32
    %c0_i32_0 = arith.constant 0 : i32
    %c0_i32_1 = arith.constant 0 : i32
    return %c0_i32, %c0_i32_0 : i32, i32
  }
  func.func @transform_4(%arg0: i32) -> (i32, i32) {
    %c0_i32 = arith.constant 0 : i32
    %c0_i32_0 = arith.constant 0 : i32
    %c0_i32_1 = arith.constant 0 : i32
    return %c0_i32, %c0_i32_0 : i32, i32
  }
  func.func @transform_5(%arg0: i32) -> (i32, i32) {
    %c0_i32 = arith.constant 0 : i32
    %c0_i32_0 = arith.constant 0 : i32
    return %arg0, %c0_i32 : i32, i32
  }
  func.func @transform_6(%arg0: i32) -> (i32, i32) {
    %c0_i32 = arith.constant 0 : i32
    %c0_i32_0 = arith.constant 0 : i32
    return %arg0, %c0_i32 : i32, i32
  }
}

</mosaic_0001>

<llo_original>
// kernel: tpu_custom_call.1
$region0: #{tpu_custom_call.1}
  #allocation0 [shape = 'u32[]', space=smem, size = 0x4, offset = 0x4, fixed_abs, tag = 'smem constant byte address 0x4 - core index']
  #allocation1 [shape = 'u32[72,128]{1,0:T(1,128)}', space=vmem, size = 0x9000, scoped, tag = 'internal scratch']
  %s0 = inlined_call_operand.hbm [shape: bf16[512,256], index: 0, kind: input, shape index: {}]
  %s1 = inlined_call_operand.hbm [shape: bf16[1024,256], index: 1, kind: input, shape index: {}]
  %s2 = inlined_call_operand.hbm [shape: f32[1,1024], index: 2, kind: input, shape index: {}]
  %s3 = inlined_call_operand.hbm [shape: bf16[256,1024], index: 3, kind: input, shape index: {}]
  %s4 = inlined_call_operand.hbm [shape: f32[1,256], index: 4, kind: input, shape index: {}]
  %s5 = inlined_call_operand.hbm [shape: f32[512,1024], index: 5, kind: output, shape index: {0}]
  %s6 = inlined_call_operand.hbm [shape: f32[512,256], index: 6, kind: output, shape index: {1}]
  %7 = xla_tuple %s5, %s6
  %s8 = sld [smem:[#allocation0]]
  $region81: #{tpu_custom_call.1} parent=0
    _
  %s10 = ssub.s32 1, %s8
  %s11 = scalar_select 0, %s10, %s8
  $region1: #{tpu_custom_call.1} parent=0
    #allocation2 [shape = 'u8[262144]{0}', space=vmem, size = 0x40000, scoped, tag = 'input window, operand 0']
    #allocation3 [shape = 's32[2]{0}', space=sflag, size = 0x8, scoped, tag = 'scoped memory for tpu_custom_call.1']
    #allocation4 [shape = 's32[2]{0}', space=sflag, size = 0x8, scoped, tag = 'scoped memory for tpu_custom_call.1']
    #allocation5 [shape = 'u8[524288]{0}', space=vmem, size = 0x80000, scoped, tag = 'input window, operand 1, single buffered']
    #allocation6 [shape = 's32[1]{0}', space=sflag, size = 0x4, scoped, tag = 'scoped memory for tpu_custom_call.1']
    #allocation7 [shape = 'u8[4096]{0}', space=vmem, size = 0x1000, scoped, tag = 'input window, operand 2, single buffered']
    #allocation8 [shape = 'u8[524288]{0}', space=vmem, size = 0x80000, scoped, tag = 'input window, operand 3, single buffered']
    #allocation9 [shape = 's32[1]{0}', space=sflag, size = 0x4, scoped, tag = 'scoped memory for tpu_custom_call.1']
    #allocation10 [shape = 'u8[1024]{0}', space=vmem, size = 0x400, scoped, tag = 'input window, operand 4, single buffered']
    #allocation11 [shape = 'u8[2097152]{0}', space=vmem, size = 0x200000, scoped, tag = 'output window, operand 0']
    #allocation12 [shape = 'u8[524288]{0}', space=vmem, size = 0x80000, scoped, tag = 'output window, operand 1']
    #allocation13 [shape = 's32[2]{0}', space=sflag, size = 0x8, scoped, tag = 'scoped memory for tpu_custom_call.1']
    %12 = vsyncpa [#allocation3], 0
    %s13 = scalar_lea.sflag [#allocation3], 1
    %14 = vsyncpa %s13, 0
    %15 = vsyncpa [#allocation6], 0
    %16 = vsyncpa [#allocation9], 0
    %17 = vsyncpa [#allocation4], 0
    %s18 = scalar_lea.sflag [#allocation4], 1
    %19 = vsyncpa %s18, 0
    %20 = vsyncpa [#allocation13], 0
    %s21 = scalar_lea.sflag [#allocation13], 1
    %22 = vsyncpa %s21, 0
    loop: start=0, step=1, limit=4
    $region2: #{tpu_custom_call.1} parent=1 // loop_pre_header
      _
    $region3: #{tpu_custom_call.1} parent=1 // loop_header
      %s24 = sphi 0, %s28
      %p25 = scmp.ge.s32.totalorder %s24, 4
      %s34 = sphi 0, %s36
      %s37 = sphi 0, %s34
      %s38 = sphi 0, %s37
      %s54 = sphi 0, %s38
      %s58 = sphi 0, %s58
      %s60 = sphi 0, %s58
      %s61 = sphi 0, %s60
      %s75 = sphi 0, %s61
      %s79 = sphi 0, %s79
      %s81 = sphi 0, %s79
      %s82 = sphi 0, %s81
      %s96 = sphi 0, %s82
      %s100 = sphi 0, %s100
      %s102 = sphi 0, %s100
      %s103 = sphi 0, %s102
      %s117 = sphi 0, %s103
      %s121 = sphi 0, %s121
      %s123 = sphi 0, %s121
      %s124 = sphi 0, %s123
      %s138 = sphi 0, %s124
      %s144 = sphi 0, %s146
      %s147 = sphi 0, %s144
      %s148 = sphi 0, %s147
      %s164 = sphi 0, %s148
      %s170 = sphi 0, %s172
      %s173 = sphi 0, %s170
      %s174 = sphi 0, %s173
      %s190 = sphi 0, %s174
    $region4: #{tpu_custom_call.1} parent=1 // loop_header_branch
      %27 = sbr.rel (%p25) target = $region8
    $region5: #{tpu_custom_call.1} parent=1 // loop_body
      %s29 = ssub.s32 %s24, 1
      %s30 = ssub.s32 %s24, 2
      %s31 = sadd.s32 %s24, 1
      %s32 = ssub.s32 %s24, %s31
      %p33 = scmp.eq.s32.totalorder %s32, 0
      %s35 = sadd.s32 %s34, 1
      %s36 = scalar_select %p33, %s34, %s35
      %p39 = pneg %p33
      %p40 = scmp.eq.s32.totalorder %s24, 1
      %p41 = por %p39, %p40
      %p42 = scmp.ne.s32.totalorder %s34, %s37
      %p43 = scmp.eq.s32.totalorder %s24, 0
      %p44 = por %p42, %p43
      %p45 = scmp.ne.s32.totalorder %s34, %s37
      %p46 = scmp.eq.s32.totalorder %s29, 1
      %p47 = por %p45, %p46
      %p48 = scmp.ne.s32.totalorder %s37, %s38
      %p49 = scmp.eq.s32.totalorder %s29, 0
      %p50 = por %p48, %p49
      %p51 = scmp.ne.s32.totalorder %s37, %s38
      %p52 = scmp.eq.s32.totalorder %s30, 1
      %p53 = por %p51, %p52
      %p55 = scmp.ne.s32.totalorder %s38, %s54
      %p56 = scmp.eq.s32.totalorder %s30, 0
      %p57 = por %p55, %p56
      %s59 = sadd.s32 %s58, 1
      %p62 = scmp.eq.s32.totalorder %s24, 1
      %p63 = scmp.ne.s32.totalorder %s58, %s60
      %p64 = scmp.eq.s32.totalorder %s24, 0
      %p65 = por %p63, %p64
      %p66 = scmp.ne.s32.totalorder %s58, %s60
      %p67 = scmp.eq.s32.totalorder %s29, 1
      %p68 = por %p66, %p67
      %p69 = scmp.ne.s32.totalorder %s60, %s61
      %p70 = scmp.eq.s32.totalorder %s29, 0
      %p71 = por %p69, %p70
      %p72 = scmp.ne.s32.totalorder %s60, %s61
      %p73 = scmp.eq.s32.totalorder %s30, 1
      %p74 = por %p72, %p73
      %p76 = scmp.ne.s32.totalorder %s61, %s75
      %p77 = scmp.eq.s32.totalorder %s30, 0
      %p78 = por %p76, %p77
      %s80 = sadd.s32 %s79, 1
      %p83 = scmp.eq.s32.totalorder %s24, 1
      %p84 = scmp.ne.s32.totalorder %s79, %s81
      %p85 = scmp.eq.s32.totalorder %s24, 0
      %p86 = por %p84, %p85
      %p87 = scmp.ne.s32.totalorder %s79, %s81
      %p88 = scmp.eq.s32.totalorder %s29, 1
      %p89 = por %p87, %p88
      %p90 = scmp.ne.s32.totalorder %s81, %s82
      %p91 = scmp.eq.s32.totalorder %s29, 0
      %p92 = por %p90, %p91
      %p93 = scmp.ne.s32.totalorder %s81, %s82
      %p94 = scmp.eq.s32.totalorder %s30, 1
      %p95 = por %p93, %p94
      %p97 = scmp.ne.s32.totalorder %s82, %s96
      %p98 = scmp.eq.s32.totalorder %s30, 0
      %p99 = por %p97, %p98
      %s101 = sadd.s32 %s100, 1
      %p104 = scmp.eq.s32.totalorder %s24, 1
      %p105 = scmp.ne.s32.totalorder %s100, %s102
      %p106 = scmp.eq.s32.totalorder %s24, 0
      %p107 = por %p105, %p106
      %p108 = scmp.ne.s32.totalorder %s100, %s102
      %p109 = scmp.eq.s32.totalorder %s29, 1
      %p110 = por %p108, %p109
      %p111 = scmp.ne.s32.totalorder %s102, %s103
      %p112 = scmp.eq.s32.totalorder %s29, 0
      %p113 = por %p111, %p112
      %p114 = scmp.ne.s32.totalorder %s102, %s103
      %p115 = scmp.eq.s32.totalorder %s30, 1
      %p116 = por %p114, %p115
      %p118 = scmp.ne.s32.totalorder %s103, %s117
      %p119 = scmp.eq.s32.totalorder %s30, 0
      %p120 = por %p118, %p119
      %s122 = sadd.s32 %s121, 1
      %p125 = scmp.eq.s32.totalorder %s24, 1
      %p126 = scmp.ne.s32.totalorder %s121, %s123
      %p127 = scmp.eq.s32.totalorder %s24, 0
      %p128 = por %p126, %p127
      %p129 = scmp.ne.s32.totalorder %s121, %s123
      %p130 = scmp.eq.s32.totalorder %s29, 1
      %p131 = por %p129, %p130
      %p132 = scmp.ne.s32.totalorder %s123, %s124
      %p133 = scmp.eq.s32.totalorder %s29, 0
      %p134 = por %p132, %p133
      %p135 = scmp.ne.s32.totalorder %s123, %s124
      %p136 = scmp.eq.s32.totalorder %s30, 1
      %p137 = por %p135, %p136
      %p139 = scmp.ne.s32.totalorder %s124, %s138
      %p140 = scmp.eq.s32.totalorder %s30, 0
      %p141 = por %p139, %p140
      %s142 = ssub.s32 %s24, %s31
      %p143 = scmp.eq.s32.totalorder %s142, 0
      %s145 = sadd.s32 %s144, 1
      %s146 = scalar_select %p143, %s144, %s145
      %p149 = pneg %p143
      %p150 = scmp.eq.s32.totalorder %s24, 1
      %p151 = por %p149, %p150
      %p152 = scmp.ne.s32.totalorder %s144, %s147
      %p153 = scmp.eq.s32.totalorder %s24, 0
      %p154 = por %p152, %p153
      %p155 = scmp.ne.s32.totalorder %s144, %s147
      %p156 = scmp.eq.s32.totalorder %s29, 1
      %p157 = por %p155, %p156
      %p158 = scmp.ne.s32.totalorder %s147, %s148
      %p159 = scmp.eq.s32.totalorder %s29, 0
      %p160 = por %p158, %p159
      %p161 = scmp.ne.s32.totalorder %s147, %s148
      %p162 = scmp.eq.s32.totalorder %s30, 1
      %p163 = por %p161, %p162
      %p165 = scmp.ne.s32.totalorder %s148, %s164
      %p166 = scmp.eq.s32.totalorder %s30, 0
      %p167 = por %p165, %p166
      %s168 = ssub.s32 %s24, %s31
      %p169 = scmp.eq.s32.totalorder %s168, 0
      %s171 = sadd.s32 %s170, 1
      %s172 = scalar_select %p169, %s170, %s171
      %p175 = pneg %p169
      %p176 = scmp.eq.s32.totalorder %s24, 1
      %p177 = por %p175, %p176
      %p178 = scmp.ne.s32.totalorder %s170, %s173
      %p179 = scmp.eq.s32.totalorder %s24, 0
      %p180 = por %p178, %p179
      %p181 = scmp.ne.s32.totalorder %s170, %s173
      %p182 = scmp.eq.s32.totalorder %s29, 1
      %p183 = por %p181, %p182
      %p184 = scmp.ne.s32.totalorder %s173, %s174
      %p185 = scmp.eq.s32.totalorder %s29, 0
      %p186 = por %p184, %p185
      %p187 = scmp.ne.s32.totalorder %s173, %s174
      %p188 = scmp.eq.s32.totalorder %s30, 1
      %p189 = por %p187, %p188
      %p191 = scmp.ne.s32.totalorder %s174, %s190
      %p192 = scmp.eq.s32.totalorder %s30, 0
      %p193 = por %p191, %p192
      %p194 = scmp.le.s32.totalorder 1, %s24
      %p195 = scmp.lt.s32.totalorder %s24, 3
      %p196 = pnand %p194, %p195
      %p197 = pneg %p196
      // Predicated region
      $region9: #{tpu_custom_call.1} parent=5 // pred_check
        _
      $region10: #{tpu_custom_call.1} parent=5 // pred_check_branch
        %199 = sbr.rel (%p196) target = $region12
      $region11: #{tpu_custom_call.1} parent=5 // pred_region
        %s200 = ssub.s32 %s24, 1
        // Predicated region
        $region13: #{tpu_custom_call.1} parent=11 // pred_check
          %p201 = pneg %p71
        $region14: #{tpu_custom_call.1} parent=11 // pred_check_branch
          %203 = sbr.rel (%p201) target = $region16
        $region15: #{tpu_custom_call.1} parent=11 // pred_region
          %205 = vsyncadd [#allocation6], 0
          %s206 = sshll.u32 %s1, 4
          %s207 = int_to_ptr.hbm [resolvable:$true] %s206
          %s208 = sshll.u32 [#allocation5], 4
          %s209 = int_to_ptr.vmem [resolvable:$true] %s208
          %214 = dma.hbm_to_vmem [thread:$0]  %s207, 16384, %s209, [#allocation6], 128, 128, 8
        $region16: #{tpu_custom_call.1} parent=11 // pred_fallthru
          _
        // Predicated region
        $region17: #{tpu_custom_call.1} parent=11 // pred_check
          %p215 = pneg %p92
        $region18: #{tpu_custom_call.1} parent=11 // pred_check_branch
          %217 = sbr.rel (%p215) target = $region20
        $region19: #{tpu_custom_call.1} parent=11 // pred_region
          %219 = vsyncadd [#allocation6], 0
          %s221 = sshll.u32 %s2, 4
          %s222 = int_to_ptr.hbm [resolvable:$true] %s221
          %s223 = sshll.u32 [#allocation7], 4
          %s224 = int_to_ptr.vmem [resolvable:$true] %s223
          %226 = dma.hbm_to_vmem [thread:$0]  %s222, 128, %s224, [#allocation6]
        $region20: #{tpu_custom_call.1} parent=11 // pred_fallthru
          _
        // Predicated region
        $region21: #{tpu_custom_call.1} parent=11 // pred_check
          %p227 = pneg %p113
        $region22: #{tpu_custom_call.1} parent=11 // pred_check_branch
          %229 = sbr.rel (%p227) target = $region24
        $region23: #{tpu_custom_call.1} parent=11 // pred_region
          %231 = vsyncadd [#allocation9], 0
          %s232 = sshll.u32 %s3, 4
          %s233 = int_to_ptr.hbm [resolvable:$true] %s232
          %s234 = sshll.u32 [#allocation8], 4
          %s235 = int_to_ptr.vmem [resolvable:$true] %s234
          %240 = dma.hbm_to_vmem [thread:$0]  %s233, 16384, %s235, [#allocation9], 512, 512, 32
        $region24: #{tpu_custom_call.1} parent=11 // pred_fallthru
          _
        // Predicated region
        $region25: #{tpu_custom_call.1} parent=11 // pred_check
          %p241 = pneg %p134
        $region26: #{tpu_custom_call.1} parent=11 // pred_check_branch
          %243 = sbr.rel (%p241) target = $region28
        $region27: #{tpu_custom_call.1} parent=11 // pred_region
          %245 = vsyncadd [#allocation9], 0
          %s247 = sshll.u32 %s4, 4
          %s248 = int_to_ptr.hbm [resolvable:$true] %s247
          %s249 = sshll.u32 [#allocation10], 4
          %s250 = int_to_ptr.vmem [resolvable:$true] %s249
          %252 = dma.hbm_to_vmem [thread:$0]  %s248, 32, %s250, [#allocation9]
        $region28: #{tpu_custom_call.1} parent=11 // pred_fallthru
          _
      $region12: #{tpu_custom_call.1} parent=5 // pred_fallthru
        _
      %p253 = scmp.lt.s32.totalorder %s24, 2
      // Predicated region
      $region29: #{tpu_custom_call.1} parent=5 // pred_check
        %p254 = pneg %p253
      $region30: #{tpu_custom_call.1} parent=5 // pred_check_branch
        %256 = sbr.rel (%p254) target = $region32
      $region31: #{tpu_custom_call.1} parent=5 // pred_region
        // Predicated region
        $region33: #{tpu_custom_call.1} parent=31 // pred_check
          %p257 = pneg %p44
        $region34: #{tpu_custom_call.1} parent=31 // pred_check_branch
          %259 = sbr.rel (%p257) target = $region36
        $region35: #{tpu_custom_call.1} parent=31 // pred_region
          %s260 = sand.u32 %s34, 1
          %s261 = scalar_lea.sflag [#allocation3], %s260
          %s262 = sand.u32 %s34, 1
          %s263 = smul.addr %s262, 256
          %s264 = scalar_lea.vmem [#allocation2], %s263
          %s265 = smul.u32 32, %s24
          %267 = vsyncadd %s261, 0
          %s268 = smul.addr %s265, 2
          %s269 = smul.addr %s268, 4
          %s270 = scalar_lea.hbm %s0, %s269
          %s271 = sshll.u32 %s270, 4
          %s272 = int_to_ptr.hbm [resolvable:$true] %s271
          %s273 = sshll.u32 %s264, 4
          %s274 = int_to_ptr.vmem [resolvable:$true] %s273
          %279 = dma.hbm_to_vmem [thread:$0]  %s272, 4096, %s274, %s261, 128, 128, 8
        $region36: #{tpu_custom_call.1} parent=31 // pred_fallthru
          _
      $region32: #{tpu_custom_call.1} parent=5 // pred_fallthru
        _
      %p280 = scmp.le.s32.totalorder 1, %s24
      %p281 = scmp.lt.s32.totalorder %s24, 3
      %p282 = pnand %p280, %p281
      %p283 = pneg %p282
      // Predicated region
      $region37: #{tpu_custom_call.1} parent=5 // pred_check
        _
      $region38: #{tpu_custom_call.1} parent=5 // pred_check_branch
        %285 = sbr.rel (%p282) target = $region40
      $region39: #{tpu_custom_call.1} parent=5 // pred_region
        %s286 = ssub.s32 %s24, 1
        %s287 = sand.u32 %s37, 1
        %s288 = scalar_lea.sflag [#allocation3], %s287
        %s289 = sand.u32 %s37, 1
        %s290 = smul.addr %s289, 256
        %s291 = scalar_lea.vmem [#allocation2], %s290
        // Predicated region
        $region41: #{tpu_custom_call.1} parent=39 // pred_check
          %p292 = pneg %p50
        $region42: #{tpu_custom_call.1} parent=39 // pred_check_branch
          %294 = sbr.rel (%p292) target = $region44
        $region43: #{tpu_custom_call.1} parent=39 // pred_region
          %296 = dma.done %s288, 4096
        $region44: #{tpu_custom_call.1} parent=39 // pred_fallthru
          _
        // Predicated region
        $region45: #{tpu_custom_call.1} parent=39 // pred_check
          %p297 = pneg %p71
        $region46: #{tpu_custom_call.1} parent=39 // pred_check_branch
          %299 = sbr.rel (%p297) target = $region48
        $region47: #{tpu_custom_call.1} parent=39 // pred_region
          %301 = dma.done [#allocation6], 16384
        $region48: #{tpu_custom_call.1} parent=39 // pred_fallthru
          _
        // Predicated region
        $region49: #{tpu_custom_call.1} parent=39 // pred_check
          %p302 = pneg %p92
        $region50: #{tpu_custom_call.1} parent=39 // pred_check_branch
          %304 = sbr.rel (%p302) target = $region52
        $region51: #{tpu_custom_call.1} parent=39 // pred_region
          %306 = dma.done [#allocation6], 128
        $region52: #{tpu_custom_call.1} parent=39 // pred_fallthru
          _
        // Predicated region
        $region53: #{tpu_custom_call.1} parent=39 // pred_check
          %p307 = pneg %p113
        $region54: #{tpu_custom_call.1} parent=39 // pred_check_branch
          %309 = sbr.rel (%p307) target = $region56
        $region55: #{tpu_custom_call.1} parent=39 // pred_region
          %311 = dma.done [#allocation9], 16384
        $region56: #{tpu_custom_call.1} parent=39 // pred_fallthru
          _
        // Predicated region
        $region57: #{tpu_custom_call.1} parent=39 // pred_check
          %p312 = pneg %p134
        $region58: #{tpu_custom_call.1} parent=39 // pred_check_branch
          %314 = sbr.rel (%p312) target = $region60
        $region59: #{tpu_custom_call.1} parent=39 // pred_region
          %316 = dma.done [#allocation9], 32
        $region60: #{tpu_custom_call.1} parent=39 // pred_fallthru
          _
        %s317 = sand.u32 %s37, 1
        %s318 = scalar_lea.sflag [#allocation3], %s317
        %s319 = sand.u32 %s37, 1
        %s320 = smul.addr %s319, 256
        %s321 = scalar_lea.vmem [#allocation2], %s320
        %p322 = pneg %p50
        %p323 = pneg %p47
        %p324 = pneg %p71
        %p325 = pneg %p68
        %p326 = pneg %p92
        %p327 = pneg %p89
        %p328 = pneg %p113
        %p329 = pneg %p110
        %p330 = pneg %p134
        %p331 = pneg %p131
        %p332 = pneg %p160
        %p333 = pneg %p157
        %s334 = sand.u32 %s147, 1
        %s335 = scalar_lea.sflag [#allocation4], %s334
        %s336 = sand.u32 %s147, 1
        %s337 = smul.addr %s336, 2048
        %s338 = scalar_lea.vmem [#allocation11], %s337
        %p339 = pneg %p186
        %p340 = pneg %p183
        %s341 = sand.u32 %s173, 1
        %s342 = scalar_lea.sflag [#allocation13], %s341
        %s343 = sand.u32 %s173, 1
        %s344 = smul.addr %s343, 512
        %s345 = scalar_lea.vmem [#allocation12], %s344
        %s346 = smul.u32 32, %s29
        %s347 = smul.u32 32, %s29
        %s348 = smul.u32 32, %s29
        %v349 = vld [vmem:[%s291] sm:$0xff]
        %v350 = vld [vmem:[%s291 + $0x8] sm:$0xff]
        %v351 = vld [vmem:[%s291 + $0x10] sm:$0xff]
        %v352 = vld [vmem:[%s291 + $0x18] sm:$0xff]
        %v353 = vld [vmem:[%s291 + $0x20] sm:$0xff]
        %v354 = vld [vmem:[%s291 + $0x28] sm:$0xff]
        %v355 = vld [vmem:[%s291 + $0x30] sm:$0xff]
        %v356 = vld [vmem:[%s291 + $0x38] sm:$0xff]
        %v357 = vld [vmem:[%s291 + $0x40] sm:$0xff]
        %v358 = vld [vmem:[%s291 + $0x48] sm:$0xff]
        %v359 = vld [vmem:[%s291 + $0x50] sm:$0xff]
        %v360 = vld [vmem:[%s291 + $0x58] sm:$0xff]
        %v361 = vld [vmem:[%s291 + $0x60] sm:$0xff]
        %v362 = vld [vmem:[%s291 + $0x68] sm:$0xff]
        %v363 = vld [vmem:[%s291 + $0x70] sm:$0xff]
        %v364 = vld [vmem:[%s291 + $0x78] sm:$0xff]
        %v365 = vld [vmem:[%s291 + $0x80] sm:$0xff]
        %v366 = vld [vmem:[%s291 + $0x88] sm:$0xff]
        %v367 = vld [vmem:[%s291 + $0x90] sm:$0xff]
        %v368 = vld [vmem:[%s291 + $0x98] sm:$0xff]
        %v369 = vld [vmem:[%s291 + $0xa0] sm:$0xff]
        %v370 = vld [vmem:[%s291 + $0xa8] sm:$0xff]
        %v371 = vld [vmem:[%s291 + $0xb0] sm:$0xff]
        %v372 = vld [vmem:[%s291 + $0xb8] sm:$0xff]
        %v373 = vld [vmem:[%s291 + $0xc0] sm:$0xff]
        %v374 = vld [vmem:[%s291 + $0xc8] sm:$0xff]
        %v375 = vld [vmem:[%s291 + $0xd0] sm:$0xff]
        %v376 = vld [vmem:[%s291 + $0xd8] sm:$0xff]
        %v377 = vld [vmem:[%s291 + $0xe0] sm:$0xff]
        %v378 = vld [vmem:[%s291 + $0xe8] sm:$0xff]
        %v379 = vld [vmem:[%s291 + $0xf0] sm:$0xff]
        %v380 = vld [vmem:[%s291 + $0xf8] sm:$0xff]
        %v381 = vld [vmem:[#allocation5] sm:$0xff]
        %v382 = vld [vmem:[#allocation5 + $0x8] sm:$0xff]
        %v383 = vld [vmem:[#allocation5 + $0x10] sm:$0xff]
        %v384 = vld [vmem:[#allocation5 + $0x18] sm:$0xff]
        %v385 = vld [vmem:[#allocation5 + $0x20] sm:$0xff]
        %v386 = vld [vmem:[#allocation5 + $0x28] sm:$0xff]
        %v387 = vld [vmem:[#allocation5 + $0x30] sm:$0xff]
        %v388 = vld [vmem:[#allocation5 + $0x38] sm:$0xff]
        %v389 = vld [vmem:[#allocation5 + $0x40] sm:$0xff]
        %v390 = vld [vmem:[#allocation5 + $0x48] sm:$0xff]
        %v391 = vld [vmem:[#allocation5 + $0x50] sm:$0xff]
        %v392 = vld [vmem:[#allocation5 + $0x58] sm:$0xff]
        %v393 = vld [vmem:[#allocation5 + $0x60] sm:$0xff]
        %v394 = vld [vmem:[#allocation5 + $0x68] sm:$0xff]
        %v395 = vld [vmem:[#allocation5 + $0x70] sm:$0xff]
        %v396 = vld [vmem:[#allocation5 + $0x78] sm:$0xff]
        %v397 = vld [vmem:[#allocation5 + $0x80] sm:$0xff]
        %v398 = vld [vmem:[#allocation5 + $0x88] sm:$0xff]
        %v399 = vld [vmem:[#allocation5 + $0x90] sm:$0xff]
        %v400 = vld [vmem:[#allocation5 + $0x98] sm:$0xff]
        %v401 = vld [vmem:[#allocation5 + $0xa0] sm:$0xff]
        %v402 = vld [vmem:[#allocation5 + $0xa8] sm:$0xff]
        %v403 = vld [vmem:[#allocation5 + $0xb0] sm:$0xff]
        %v404 = vld [vmem:[#allocation5 + $0xb8] sm:$0xff]
        %v405 = vld [vmem:[#allocation5 + $0xc0] sm:$0xff]
        %v406 = vld [vmem:[#allocation5 + $0xc8] sm:$0xff]
        %v407 = vld [vmem:[#allocation5 + $0xd0] sm:$0xff]
        %v408 = vld [vmem:[#allocation5 + $0xd8] sm:$0xff]
        %v409 = vld [vmem:[#allocation5 + $0xe0] sm:$0xff]
        %v410 = vld [vmem:[#allocation5 + $0xe8] sm:$0xff]
        %v411 = vld [vmem:[#allocation5 + $0xf0] sm:$0xff]
        %v412 = vld [vmem:[#allocation5 + $0xf8] sm:$0xff]
        %v413 = vld [vmem:[#allocation5 + $0x100] sm:$0xff]
        %v414 = vld [vmem:[#allocation5 + $0x108] sm:$0xff]
        %v415 = vld [vmem:[#allocation5 + $0x110] sm:$0xff]
        %v416 = vld [vmem:[#allocation5 + $0x118] sm:$0xff]
        %v417 = vld [vmem:[#allocation5 + $0x120] sm:$0xff]
        %v418 = vld [vmem:[#allocation5 + $0x128] sm:$0xff]
        %v419 = vld [vmem:[#allocation5 + $0x130] sm:$0xff]
        %v420 = vld [vmem:[#allocation5 + $0x138] sm:$0xff]
        %v421 = vld [vmem:[#allocation5 + $0x140] sm:$0xff]
        %v422 = vld [vmem:[#allocation5 + $0x148] sm:$0xff]
        %v423 = vld [vmem:[#allocation5 + $0x150] sm:$0xff]
        %v424 = vld [vmem:[#allocation5 + $0x158] sm:$0xff]
        %v425 = vld [vmem:[#allocation5 + $0x160] sm:$0xff]
        %v426 = vld [vmem:[#allocation5 + $0x168] sm:$0xff]
        %v427 = vld [vmem:[#allocation5 + $0x170] sm:$0xff]
        %v428 = vld [vmem:[#allocation5 + $0x178] sm:$0xff]
        %v429 = vld [vmem:[#allocation5 + $0x180] sm:$0xff]
        %v430 = vld [vmem:[#allocation5 + $0x188] sm:$0xff]
        %v431 = vld [vmem:[#allocation5 + $0x190] sm:$0xff]
        %v432 = vld [vmem:[#allocation5 + $0x198] sm:$0xff]
        %v433 = vld [vmem:[#allocation5 + $0x1a0] sm:$0xff]
        %v434 = vld [vmem:[#allocation5 + $0x1a8] sm:$0xff]
        %v435 = vld [vmem:[#allocation5 + $0x1b0] sm:$0xff]
        %v436 = vld [vmem:[#allocation5 + $0x1b8] sm:$0xff]
        %v437 = vld [vmem:[#allocation5 + $0x1c0] sm:$0xff]
        %v438 = vld [vmem:[#allocation5 + $0x1c8] sm:$0xff]
        %v439 = vld [vmem:[#allocation5 + $0x1d0] sm:$0xff]
        %v440 = vld [vmem:[#allocation5 + $0x1d8] sm:$0xff]
        %v441 = vld [vmem:[#allocation5 + $0x1e0] sm:$0xff]
        %v442 = vld [vmem:[#allocation5 + $0x1e8] sm:$0xff]
        %v443 = vld [vmem:[#allocation5 + $0x1f0] sm:$0xff]
        %v444 = vld [vmem:[#allocation5 + $0x1f8] sm:$0xff]
        %v445 = vld [vmem:[#allocation5 + $0x200] sm:$0xff]
        %v446 = vld [vmem:[#allocation5 + $0x208] sm:$0xff]
        %v447 = vld [vmem:[#allocation5 + $0x210] sm:$0xff]
        %v448 = vld [vmem:[#allocation5 + $0x218] sm:$0xff]
        %v449 = vld [vmem:[#allocation5 + $0x220] sm:$0xff]
        %v450 = vld [vmem:[#allocation5 + $0x228] sm:$0xff]
        %v451 = vld [vmem:[#allocation5 + $0x230] sm:$0xff]
        %v452 = vld [vmem:[#allocation5 + $0x238] sm:$0xff]
        %v453 = vld [vmem:[#allocation5 + $0x240] sm:$0xff]
        %v454 = vld [vmem:[#allocation5 + $0x248] sm:$0xff]
        %v455 = vld [vmem:[#allocation5 + $0x250] sm:$0xff]
        %v456 = vld [vmem:[#allocation5 + $0x258] sm:$0xff]
        %v457 = vld [vmem:[#allocation5 + $0x260] sm:$0xff]
        %v458 = vld [vmem:[#allocation5 + $0x268] sm:$0xff]
        %v459 = vld [vmem:[#allocation5 + $0x270] sm:$0xff]
        %v460 = vld [vmem:[#allocation5 + $0x278] sm:$0xff]
        %v461 = vld [vmem:[#allocation5 + $0x280] sm:$0xff]
        %v462 = vld [vmem:[#allocation5 + $0x288] sm:$0xff]
        %v463 = vld [vmem:[#allocation5 + $0x290] sm:$0xff]
        %v464 = vld [vmem:[#allocation5 + $0x298] sm:$0xff]
        %v465 = vld [vmem:[#allocation5 + $0x2a0] sm:$0xff]
        %v466 = vld [vmem:[#allocation5 + $0x2a8] sm:$0xff]
        %v467 = vld [vmem:[#allocation5 + $0x2b0] sm:$0xff]
        %v468 = vld [vmem:[#allocation5 + $0x2b8] sm:$0xff]
        %v469 = vld [vmem:[#allocation5 + $0x2c0] sm:$0xff]
        %v470 = vld [vmem:[#allocation5 + $0x2c8] sm:$0xff]
        %v471 = vld [vmem:[#allocation5 + $0x2d0] sm:$0xff]
        %v472 = vld [vmem:[#allocation5 + $0x2d8] sm:$0xff]
        %v473 = vld [vmem:[#allocation5 + $0x2e0] sm:$0xff]
        %v474 = vld [vmem:[#allocation5 + $0x2e8] sm:$0xff]
        %v475 = vld [vmem:[#allocation5 + $0x2f0] sm:$0xff]
        %v476 = vld [vmem:[#allocation5 + $0x2f8] sm:$0xff]
        %v477 = vld [vmem:[#allocation5 + $0x300] sm:$0xff]
        %v478 = vld [vmem:[#allocation5 + $0x308] sm:$0xff]
        %v479 = vld [vmem:[#allocation5 + $0x310] sm:$0xff]
        %v480 = vld [vmem:[#allocation5 + $0x318] sm:$0xff]
        %v481 = vld [vmem:[#allocation5 + $0x320] sm:$0xff]
        %v482 = vld [vmem:[#allocation5 + $0x328] sm:$0xff]
        %v483 = vld [vmem:[#allocation5 + $0x330] sm:$0xff]
        %v484 = vld [vmem:[#allocation5 + $0x338] sm:$0xff]
        %v485 = vld [vmem:[#allocation5 + $0x340] sm:$0xff]
        %v486 = vld [vmem:[#allocation5 + $0x348] sm:$0xff]
        %v487 = vld [vmem:[#allocation5 + $0x350] sm:$0xff]
        %v488 = vld [vmem:[#allocation5 + $0x358] sm:$0xff]
        %v489 = vld [vmem:[#allocation5 + $0x360] sm:$0xff]
        %v490 = vld [vmem:[#allocation5 + $0x368] sm:$0xff]
        %v491 = vld [vmem:[#allocation5 + $0x370] sm:$0xff]
        %v492 = vld [vmem:[#allocation5 + $0x378] sm:$0xff]
        %v493 = vld [vmem:[#allocation5 + $0x380] sm:$0xff]
        %v494 = vld [vmem:[#allocation5 + $0x388] sm:$0xff]
        %v495 = vld [vmem:[#allocation5 + $0x390] sm:$0xff]
        %v496 = vld [vmem:[#allocation5 + $0x398] sm:$0xff]
        %v497 = vld [vmem:[#allocation5 + $0x3a0] sm:$0xff]
        %v498 = vld [vmem:[#allocation5 + $0x3a8] sm:$0xff]
        %v499 = vld [vmem:[#allocation5 + $0x3b0] sm:$0xff]
        %v500 = vld [vmem:[#allocation5 + $0x3b8] sm:$0xff]
        %v501 = vld [vmem:[#allocation5 + $0x3c0] sm:$0xff]
        %v502 = vld [vmem:[#allocation5 + $0x3c8] sm:$0xff]
        %v503 = vld [vmem:[#allocation5 + $0x3d0] sm:$0xff]
        %v504 = vld [vmem:[#allocation5 + $0x3d8] sm:$0xff]
        %v505 = vld [vmem:[#allocation5 + $0x3e0] sm:$0xff]
        %v506 = vld [vmem:[#allocation5 + $0x3e8] sm:$0xff]
        %v507 = vld [vmem:[#allocation5 + $0x3f0] sm:$0xff]
        %v508 = vld [vmem:[#allocation5 + $0x3f8] sm:$0xff]
        %v509 = vld [vmem:[#allocation7] sm:$0xff]
        %v511 = vperm.slane %v509, 0
        %v512 = vperm.slane %v509, 1
        %v513 = vperm.slane %v509, 2
        %v514 = vperm.slane %v509, 3
        %v515 = vperm.slane %v509, 4
        %v516 = vperm.slane %v509, 5
        %v517 = vperm.slane %v509, 6
        %v518 = vperm.slane %v509, 7
        %v559 = vunpack.c.l.b16 %v349
        %v560 = vunpack.c.h.b16 %v349
        %v561 = vunpack.c.l.b16 %v350
        %v562 = vunpack.c.h.b16 %v350
        %v563 = vunpack.c.l.b16 %v351
        %v564 = vunpack.c.h.b16 %v351
        %v565 = vunpack.c.l.b16 %v352
        %v566 = vunpack.c.h.b16 %v352
        %v567 = vunpack.c.l.b16 %v353
        %v568 = vunpack.c.h.b16 %v353
        %v569 = vunpack.c.l.b16 %v354
        %v570 = vunpack.c.h.b16 %v354
        %v571 = vunpack.c.l.b16 %v355
        %v572 = vunpack.c.h.b16 %v355
        %v573 = vunpack.c.l.b16 %v356
        %v574 = vunpack.c.h.b16 %v356
        %v575 = vunpack.c.l.b16 %v357
        %v576 = vunpack.c.h.b16 %v357
        %v577 = vunpack.c.l.b16 %v358
        %v578 = vunpack.c.h.b16 %v358
        %v579 = vunpack.c.l.b16 %v359
        %v580 = vunpack.c.h.b16 %v359
        %v581 = vunpack.c.l.b16 %v360
        %v582 = vunpack.c.h.b16 %v360
        %v583 = vunpack.c.l.b16 %v361
        %v584 = vunpack.c.h.b16 %v361
        %v585 = vunpack.c.l.b16 %v362
        %v586 = vunpack.c.h.b16 %v362
        %v587 = vunpack.c.l.b16 %v363
        %v588 = vunpack.c.h.b16 %v363
        %v589 = vunpack.c.l.b16 %v364
        %v590 = vunpack.c.h.b16 %v364
        %v591 = vunpack.c.l.b16 %v365
        %v592 = vunpack.c.h.b16 %v365
        %v593 = vunpack.c.l.b16 %v366
        %v594 = vunpack.c.h.b16 %v366
        %v595 = vunpack.c.l.b16 %v367
        %v596 = vunpack.c.h.b16 %v367
        %v597 = vunpack.c.l.b16 %v368
        %v598 = vunpack.c.h.b16 %v368
        %v599 = vunpack.c.l.b16 %v369
        %v600 = vunpack.c.h.b16 %v369
        %v601 = vunpack.c.l.b16 %v370
        %v602 = vunpack.c.h.b16 %v370
        %v603 = vunpack.c.l.b16 %v371
        %v604 = vunpack.c.h.b16 %v371
        %v605 = vunpack.c.l.b16 %v372
        %v606 = vunpack.c.h.b16 %v372
        %v607 = vunpack.c.l.b16 %v373
        %v608 = vunpack.c.h.b16 %v373
        %v609 = vunpack.c.l.b16 %v374
        %v610 = vunpack.c.h.b16 %v374
        %v611 = vunpack.c.l.b16 %v375
        %v612 = vunpack.c.h.b16 %v375
        %v613 = vunpack.c.l.b16 %v376
        %v614 = vunpack.c.h.b16 %v376
        %v615 = vunpack.c.l.b16 %v377
        %v616 = vunpack.c.h.b16 %v377
        %v617 = vunpack.c.l.b16 %v378
        %v618 = vunpack.c.h.b16 %v378
        %v619 = vunpack.c.l.b16 %v379
        %v620 = vunpack.c.h.b16 %v379
        %v621 = vunpack.c.l.b16 %v380
        %v622 = vunpack.c.h.b16 %v380
        %v623 = vpack.c.b16 %v561, %v559
        %v624 = vpack.c.b16 %v562, %v560
        %v625 = vpack.c.b16 %v565, %v563
        %v626 = vpack.c.b16 %v566, %v564
        %v627 = vpack.c.b16 %v569, %v567
        %v628 = vpack.c.b16 %v570, %v568
        %v629 = vpack.c.b16 %v573, %v571
        %v630 = vpack.c.b16 %v574, %v572
        %v631 = vpack.c.b16 %v577, %v575
        %v632 = vpack.c.b16 %v578, %v576
        %v633 = vpack.c.b16 %v581, %v579
        %v634 = vpack.c.b16 %v582, %v580
        %v635 = vpack.c.b16 %v585, %v583
        %v636 = vpack.c.b16 %v586, %v584
        %v637 = vpack.c.b16 %v589, %v587
        %v638 = vpack.c.b16 %v590, %v588
        %v639 = vpack.c.b16 %v593, %v591
        %v640 = vpack.c.b16 %v594, %v592
        %v641 = vpack.c.b16 %v597, %v595
        %v642 = vpack.c.b16 %v598, %v596
        %v643 = vpack.c.b16 %v601, %v599
        %v644 = vpack.c.b16 %v602, %v600
        %v645 = vpack.c.b16 %v605, %v603
        %v646 = vpack.c.b16 %v606, %v604
        %v647 = vpack.c.b16 %v609, %v607
        %v648 = vpack.c.b16 %v610, %v608
        %v649 = vpack.c.b16 %v613, %v611
        %v650 = vpack.c.b16 %v614, %v612
        %v651 = vpack.c.b16 %v617, %v615
        %v652 = vpack.c.b16 %v618, %v616
        %v653 = vpack.c.b16 %v621, %v619
        %v654 = vpack.c.b16 %v622, %v620
        %v815 = vunpack.c.l.b16 %v381
        %v816 = vunpack.c.h.b16 %v381
        %v817 = vunpack.c.l.b16 %v382
        %v818 = vunpack.c.h.b16 %v382
        %v819 = vunpack.c.l.b16 %v383
        %v820 = vunpack.c.h.b16 %v383
        %v821 = vunpack.c.l.b16 %v384
        %v822 = vunpack.c.h.b16 %v384
        %v823 = vunpack.c.l.b16 %v385
        %v824 = vunpack.c.h.b16 %v385
        %v825 = vunpack.c.l.b16 %v386
        %v826 = vunpack.c.h.b16 %v386
        %v827 = vunpack.c.l.b16 %v387
        %v828 = vunpack.c.h.b16 %v387
        %v829 = vunpack.c.l.b16 %v388
        %v830 = vunpack.c.h.b16 %v388
        %v831 = vunpack.c.l.b16 %v389
        %v832 = vunpack.c.h.b16 %v389
        %v833 = vunpack.c.l.b16 %v390
        %v834 = vunpack.c.h.b16 %v390
        %v835 = vunpack.c.l.b16 %v391
        %v836 = vunpack.c.h.b16 %v391
        %v837 = vunpack.c.l.b16 %v392
        %v838 = vunpack.c.h.b16 %v392
        %v839 = vunpack.c.l.b16 %v393
        %v840 = vunpack.c.h.b16 %v393
        %v841 = vunpack.c.l.b16 %v394
        %v842 = vunpack.c.h.b16 %v394
        %v843 = vunpack.c.l.b16 %v395
        %v844 = vunpack.c.h.b16 %v395
        %v845 = vunpack.c.l.b16 %v396
        %v846 = vunpack.c.h.b16 %v396
        %v847 = vunpack.c.l.b16 %v397
        %v848 = vunpack.c.h.b16 %v397
        %v849 = vunpack.c.l.b16 %v398
        %v850 = vunpack.c.h.b16 %v398
        %v851 = vunpack.c.l.b16 %v399
        %v852 = vunpack.c.h.b16 %v399
        %v853 = vunpack.c.l.b16 %v400
        %v854 = vunpack.c.h.b16 %v400
        %v855 = vunpack.c.l.b16 %v401
        %v856 = vunpack.c.h.b16 %v401
        %v857 = vunpack.c.l.b16 %v402
        %v858 = vunpack.c.h.b16 %v402
        %v859 = vunpack.c.l.b16 %v403
        %v860 = vunpack.c.h.b16 %v403
        %v861 = vunpack.c.l.b16 %v404
        %v862 = vunpack.c.h.b16 %v404
        %v863 = vunpack.c.l.b16 %v405
        %v864 = vunpack.c.h.b16 %v405
        %v865 = vunpack.c.l.b16 %v406
        %v866 = vunpack.c.h.b16 %v406
        %v867 = vunpack.c.l.b16 %v407
        %v868 = vunpack.c.h.b16 %v407
        %v869 = vunpack.c.l.b16 %v408
        %v870 = vunpack.c.h.b16 %v408
        %v871 = vunpack.c.l.b16 %v409
        %v872 = vunpack.c.h.b16 %v409
        %v873 = vunpack.c.l.b16 %v410
        %v874 = vunpack.c.h.b16 %v410
        %v875 = vunpack.c.l.b16 %v411
        %v876 = vunpack.c.h.b16 %v411
        %v877 = vunpack.c.l.b16 %v412
        %v878 = vunpack.c.h.b16 %v412
        %v879 = vunpack.c.l.b16 %v413
        %v880 = vunpack.c.h.b16 %v413
        %v881 = vunpack.c.l.b16 %v414
        %v882 = vunpack.c.h.b16 %v414
        %v883 = vunpack.c.l.b16 %v415
        %v884 = vunpack.c.h.b16 %v415
        %v885 = vunpack.c.l.b16 %v416
        %v886 = vunpack.c.h.b16 %v416
        %v887 = vunpack.c.l.b16 %v417
        %v888 = vunpack.c.h.b16 %v417
        %v889 = vunpack.c.l.b16 %v418
        %v890 = vunpack.c.h.b16 %v418
        %v891 = vunpack.c.l.b16 %v419
        %v892 = vunpack.c.h.b16 %v419
        %v893 = vunpack.c.l.b16 %v420
        %v894 = vunpack.c.h.b16 %v420
        %v895 = vunpack.c.l.b16 %v421
        %v896 = vunpack.c.h.b16 %v421
        %v897 = vunpack.c.l.b16 %v422
        %v898 = vunpack.c.h.b16 %v422
        %v899 = vunpack.c.l.b16 %v423
        %v900 = vunpack.c.h.b16 %v423
        %v901 = vunpack.c.l.b16 %v424
        %v902 = vunpack.c.h.b16 %v424
        %v903 = vunpack.c.l.b16 %v425
        %v904 = vunpack.c.h.b16 %v425
        %v905 = vunpack.c.l.b16 %v426
        %v906 = vunpack.c.h.b16 %v426
        %v907 = vunpack.c.l.b16 %v427
        %v908 = vunpack.c.h.b16 %v427
        %v909 = vunpack.c.l.b16 %v428
        %v910 = vunpack.c.h.b16 %v428
        %v911 = vunpack.c.l.b16 %v429
        %v912 = vunpack.c.h.b16 %v429
        %v913 = vunpack.c.l.b16 %v430
        %v914 = vunpack.c.h.b16 %v430
        %v915 = vunpack.c.l.b16 %v431
        %v916 = vunpack.c.h.b16 %v431
        %v917 = vunpack.c.l.b16 %v432
        %v918 = vunpack.c.h.b16 %v432
        %v919 = vunpack.c.l.b16 %v433
        %v920 = vunpack.c.h.b16 %v433
        %v921 = vunpack.c.l.b16 %v434
        %v922 = vunpack.c.h.b16 %v434
        %v923 = vunpack.c.l.b16 %v435
        %v924 = vunpack.c.h.b16 %v435
        %v925 = vunpack.c.l.b16 %v436
        %v926 = vunpack.c.h.b16 %v436
        %v927 = vunpack.c.l.b16 %v437
        %v928 = vunpack.c.h.b16 %v437
        %v929 = vunpack.c.l.b16 %v438
        %v930 = vunpack.c.h.b16 %v438
        %v931 = vunpack.c.l.b16 %v439
        %v932 = vunpack.c.h.b16 %v439
        %v933 = vunpack.c.l.b16 %v440
        %v934 = vunpack.c.h.b16 %v440
        %v935 = vunpack.c.l.b16 %v441
        %v936 = vunpack.c.h.b16 %v441
        %v937 = vunpack.c.l.b16 %v442
        %v938 = vunpack.c.h.b16 %v442
        %v939 = vunpack.c.l.b16 %v443
        %v940 = vunpack.c.h.b16 %v443
        %v941 = vunpack.c.l.b16 %v444
        %v942 = vunpack.c.h.b16 %v444
        %v943 = vunpack.c.l.b16 %v445
        %v944 = vunpack.c.h.b16 %v445
        %v945 = vunpack.c.l.b16 %v446
        %v946 = vunpack.c.h.b16 %v446
        %v947 = vunpack.c.l.b16 %v447
        %v948 = vunpack.c.h.b16 %v447
        %v949 = vunpack.c.l.b16 %v448
        %v950 = vunpack.c.h.b16 %v448
        %v951 = vunpack.c.l.b16 %v449
        %v952 = vunpack.c.h.b16 %v449
        %v953 = vunpack.c.l.b16 %v450
        %v954 = vunpack.c.h.b16 %v450
        %v955 = vunpack.c.l.b16 %v451
        %v956 = vunpack.c.h.b16 %v451
        %v957 = vunpack.c.l.b16 %v452
        %v958 = vunpack.c.h.b16 %v452
        %v959 = vunpack.c.l.b16 %v453
        %v960 = vunpack.c.h.b16 %v453
        %v961 = vunpack.c.l.b16 %v454
        %v962 = vunpack.c.h.b16 %v454
        %v963 = vunpack.c.l.b16 %v455
        %v964 = vunpack.c.h.b16 %v455
        %v965 = vunpack.c.l.b16 %v456
        %v966 = vunpack.c.h.b16 %v456
        %v967 = vunpack.c.l.b16 %v457
        %v968 = vunpack.c.h.b16 %v457
        %v969 = vunpack.c.l.b16 %v458
        %v970 = vunpack.c.h.b16 %v458
        %v971 = vunpack.c.l.b16 %v459
        %v972 = vunpack.c.h.b16 %v459
        %v973 = vunpack.c.l.b16 %v460
        %v974 = vunpack.c.h.b16 %v460
        %v975 = vunpack.c.l.b16 %v461
        %v976 = vunpack.c.h.b16 %v461
        %v977 = vunpack.c.l.b16 %v462
        %v978 = vunpack.c.h.b16 %v462
        %v979 = vunpack.c.l.b16 %v463
        %v980 = vunpack.c.h.b16 %v463
        %v981 = vunpack.c.l.b16 %v464
        %v982 = vunpack.c.h.b16 %v464
        %v983 = vunpack.c.l.b16 %v465
        %v984 = vunpack.c.h.b16 %v465
        %v985 = vunpack.c.l.b16 %v466
        %v986 = vunpack.c.h.b16 %v466
        %v987 = vunpack.c.l.b16 %v467
        %v988 = vunpack.c.h.b16 %v467
        %v989 = vunpack.c.l.b16 %v468
        %v990 = vunpack.c.h.b16 %v468
        %v991 = vunpack.c.l.b16 %v469
        %v992 = vunpack.c.h.b16 %v469
        %v993 = vunpack.c.l.b16 %v470
        %v994 = vunpack.c.h.b16 %v470
        %v995 = vunpack.c.l.b16 %v471
        %v996 = vunpack.c.h.b16 %v471
        %v997 = vunpack.c.l.b16 %v472
        %v998 = vunpack.c.h.b16 %v472
        %v999 = vunpack.c.l.b16 %v473
        %v1000 = vunpack.c.h.b16 %v473
        %v1001 = vunpack.c.l.b16 %v474
        %v1002 = vunpack.c.h.b16 %v474
        %v1003 = vunpack.c.l.b16 %v475
        %v1004 = vunpack.c.h.b16 %v475
        %v1005 = vunpack.c.l.b16 %v476
        %v1006 = vunpack.c.h.b16 %v476
        %v1007 = vunpack.c.l.b16 %v477
        %v1008 = vunpack.c.h.b16 %v477
        %v1009 = vunpack.c.l.b16 %v478
        %v1010 = vunpack.c.h.b16 %v478
        %v1011 = vunpack.c.l.b16 %v479
        %v1012 = vunpack.c.h.b16 %v479
        %v1013 = vunpack.c.l.b16 %v480
        %v1014 = vunpack.c.h.b16 %v480
        %v1015 = vunpack.c.l.b16 %v481
        %v1016 = vunpack.c.h.b16 %v481
        %v1017 = vunpack.c.l.b16 %v482
        %v1018 = vunpack.c.h.b16 %v482
        %v1019 = vunpack.c.l.b16 %v483
        %v1020 = vunpack.c.h.b16 %v483
        %v1021 = vunpack.c.l.b16 %v484
        %v1022 = vunpack.c.h.b16 %v484
        %v1023 = vunpack.c.l.b16 %v485
        %v1024 = vunpack.c.h.b16 %v485
        %v1025 = vunpack.c.l.b16 %v486
        %v1026 = vunpack.c.h.b16 %v486
        %v1027 = vunpack.c.l.b16 %v487
        %v1028 = vunpack.c.h.b16 %v487
        %v1029 = vunpack.c.l.b16 %v488
        %v1030 = vunpack.c.h.b16 %v488
        %v1031 = vunpack.c.l.b16 %v489
        %v1032 = vunpack.c.h.b16 %v489
        %v1033 = vunpack.c.l.b16 %v490
        %v1034 = vunpack.c.h.b16 %v490
        %v1035 = vunpack.c.l.b16 %v491
        %v1036 = vunpack.c.h.b16 %v491
        %v1037 = vunpack.c.l.b16 %v492
        %v1038 = vunpack.c.h.b16 %v492
        %v1039 = vunpack.c.l.b16 %v493
        %v1040 = vunpack.c.h.b16 %v493
        %v1041 = vunpack.c.l.b16 %v494
        %v1042 = vunpack.c.h.b16 %v494
        %v1043 = vunpack.c.l.b16 %v495
        %v1044 = vunpack.c.h.b16 %v495
        %v1045 = vunpack.c.l.b16 %v496
        %v1046 = vunpack.c.h.b16 %v496
        %v1047 = vunpack.c.l.b16 %v497
        %v1048 = vunpack.c.h.b16 %v497
        %v1049 = vunpack.c.l.b16 %v498
        %v1050 = vunpack.c.h.b16 %v498
        %v1051 = vunpack.c.l.b16 %v499
        %v1052 = vunpack.c.h.b16 %v499
        %v1053 = vunpack.c.l.b16 %v500
        %v1054 = vunpack.c.h.b16 %v500
        %v1055 = vunpack.c.l.b16 %v501
        %v1056 = vunpack.c.h.b16 %v501
        %v1057 = vunpack.c.l.b16 %v502
        %v1058 = vunpack.c.h.b16 %v502
        %v1059 = vunpack.c.l.b16 %v503
        %v1060 = vunpack.c.h.b16 %v503
        %v1061 = vunpack.c.l.b16 %v504
        %v1062 = vunpack.c.h.b16 %v504
        %v1063 = vunpack.c.l.b16 %v505
        %v1064 = vunpack.c.h.b16 %v505
        %v1065 = vunpack.c.l.b16 %v506
        %v1066 = vunpack.c.h.b16 %v506
        %v1067 = vunpack.c.l.b16 %v507
        %v1068 = vunpack.c.h.b16 %v507
        %v1069 = vunpack.c.l.b16 %v508
        %v1070 = vunpack.c.h.b16 %v508
        %v1071 = vpack.c.b16 %v817, %v815
        %v1072 = vpack.c.b16 %v818, %v816
        %v1073 = vpack.c.b16 %v821, %v819
        %v1074 = vpack.c.b16 %v822, %v820
        %v1075 = vpack.c.b16 %v825, %v823
        %v1076 = vpack.c.b16 %v826, %v824
        %v1077 = vpack.c.b16 %v829, %v827
        %v1078 = vpack.c.b16 %v830, %v828
        %v1079 = vpack.c.b16 %v833, %v831
        %v1080 = vpack.c.b16 %v834, %v832
        %v1081 = vpack.c.b16 %v837, %v835
        %v1082 = vpack.c.b16 %v838, %v836
        %v1083 = vpack.c.b16 %v841, %v839
        %v1084 = vpack.c.b16 %v842, %v840
        %v1085 = vpack.c.b16 %v845, %v843
        %v1086 = vpack.c.b16 %v846, %v844
        %v1087 = vpack.c.b16 %v849, %v847
        %v1088 = vpack.c.b16 %v850, %v848
        %v1089 = vpack.c.b16 %v853, %v851
        %v1090 = vpack.c.b16 %v854, %v852
        %v1091 = vpack.c.b16 %v857, %v855
        %v1092 = vpack.c.b16 %v858, %v856
        %v1093 = vpack.c.b16 %v861, %v859
        %v1094 = vpack.c.b16 %v862, %v860
        %v1095 = vpack.c.b16 %v865, %v863
        %v1096 = vpack.c.b16 %v866, %v864
        %v1097 = vpack.c.b16 %v869, %v867
        %v1098 = vpack.c.b16 %v870, %v868
        %v1099 = vpack.c.b16 %v873, %v871
        %v1100 = vpack.c.b16 %v874, %v872
        %v1101 = vpack.c.b16 %v877, %v875
        %v1102 = vpack.c.b16 %v878, %v876
        %v1103 = vpack.c.b16 %v881, %v879
        %v1104 = vpack.c.b16 %v882, %v880
        %v1105 = vpack.c.b16 %v885, %v883
        %v1106 = vpack.c.b16 %v886, %v884
        %v1107 = vpack.c.b16 %v889, %v887
        %v1108 = vpack.c.b16 %v890, %v888
        %v1109 = vpack.c.b16 %v893, %v891
        %v1110 = vpack.c.b16 %v894, %v892
        %v1111 = vpack.c.b16 %v897, %v895
        %v1112 = vpack.c.b16 %v898, %v896
        %v1113 = vpack.c.b16 %v901, %v899
        %v1114 = vpack.c.b16 %v902, %v900
        %v1115 = vpack.c.b16 %v905, %v903
        %v1116 = vpack.c.b16 %v906, %v904
        %v1117 = vpack.c.b16 %v909, %v907
        %v1118 = vpack.c.b16 %v910, %v908
        %v1119 = vpack.c.b16 %v913, %v911
        %v1120 = vpack.c.b16 %v914, %v912
        %v1121 = vpack.c.b16 %v917, %v915
        %v1122 = vpack.c.b16 %v918, %v916
        %v1123 = vpack.c.b16 %v921, %v919
        %v1124 = vpack.c.b16 %v922, %v920
        %v1125 = vpack.c.b16 %v925, %v923
        %v1126 = vpack.c.b16 %v926, %v924
        %v1127 = vpack.c.b16 %v929, %v927
        %v1128 = vpack.c.b16 %v930, %v928
        %v1129 = vpack.c.b16 %v933, %v931
        %v1130 = vpack.c.b16 %v934, %v932
        %v1131 = vpack.c.b16 %v937, %v935
        %v1132 = vpack.c.b16 %v938, %v936
        %v1133 = vpack.c.b16 %v941, %v939
        %v1134 = vpack.c.b16 %v942, %v940
        %v1135 = vpack.c.b16 %v945, %v943
        %v1136 = vpack.c.b16 %v946, %v944
        %v1137 = vpack.c.b16 %v949, %v947
        %v1138 = vpack.c.b16 %v950, %v948
        %v1139 = vpack.c.b16 %v953, %v951
        %v1140 = vpack.c.b16 %v954, %v952
        %v1141 = vpack.c.b16 %v957, %v955
        %v1142 = vpack.c.b16 %v958, %v956
        %v1143 = vpack.c.b16 %v961, %v959
        %v1144 = vpack.c.b16 %v962, %v960
        %v1145 = vpack.c.b16 %v965, %v963
        %v1146 = vpack.c.b16 %v966, %v964
        %v1147 = vpack.c.b16 %v969, %v967
        %v1148 = vpack.c.b16 %v970, %v968
        %v1149 = vpack.c.b16 %v973, %v971
        %v1150 = vpack.c.b16 %v974, %v972
        %v1151 = vpack.c.b16 %v977, %v975
        %v1152 = vpack.c.b16 %v978, %v976
        %v1153 = vpack.c.b16 %v981, %v979
        %v1154 = vpack.c.b16 %v982, %v980
        %v1155 = vpack.c.b16 %v985, %v983
        %v1156 = vpack.c.b16 %v986, %v984
        %v1157 = vpack.c.b16 %v989, %v987
        %v1158 = vpack.c.b16 %v990, %v988
        %v1159 = vpack.c.b16 %v993, %v991
        %v1160 = vpack.c.b16 %v994, %v992
        %v1161 = vpack.c.b16 %v997, %v995
        %v1162 = vpack.c.b16 %v998, %v996
        %v1163 = vpack.c.b16 %v1001, %v999
        %v1164 = vpack.c.b16 %v1002, %v1000
        %v1165 = vpack.c.b16 %v1005, %v1003
        %v1166 = vpack.c.b16 %v1006, %v1004
        %v1167 = vpack.c.b16 %v1009, %v1007
        %v1168 = vpack.c.b16 %v1010, %v1008
        %v1169 = vpack.c.b16 %v1013, %v1011
        %v1170 = vpack.c.b16 %v1014, %v1012
        %v1171 = vpack.c.b16 %v1017, %v1015
        %v1172 = vpack.c.b16 %v1018, %v1016
        %v1173 = vpack.c.b16 %v1021, %v1019
        %v1174 = vpack.c.b16 %v1022, %v1020
        %v1175 = vpack.c.b16 %v1025, %v1023
        %v1176 = vpack.c.b16 %v1026, %v1024
        %v1177 = vpack.c.b16 %v1029, %v1027
        %v1178 = vpack.c.b16 %v1030, %v1028
        %v1179 = vpack.c.b16 %v1033, %v1031
        %v1180 = vpack.c.b16 %v1034, %v1032
        %v1181 = vpack.c.b16 %v1037, %v1035
        %v1182 = vpack.c.b16 %v1038, %v1036
        %v1183 = vpack.c.b16 %v1041, %v1039
        %v1184 = vpack.c.b16 %v1042, %v1040
        %v1185 = vpack.c.b16 %v1045, %v1043
        %v1186 = vpack.c.b16 %v1046, %v1044
        %v1187 = vpack.c.b16 %v1049, %v1047
        %v1188 = vpack.c.b16 %v1050, %v1048
        %v1189 = vpack.c.b16 %v1053, %v1051
        %v1190 = vpack.c.b16 %v1054, %v1052
        %v1191 = vpack.c.b16 %v1057, %v1055
        %v1192 = vpack.c.b16 %v1058, %v1056
        %v1193 = vpack.c.b16 %v1061, %v1059
        %v1194 = vpack.c.b16 %v1062, %v1060
        %v1195 = vpack.c.b16 %v1065, %v1063
        %v1196 = vpack.c.b16 %v1066, %v1064
        %v1197 = vpack.c.b16 %v1069, %v1067
        %v1198 = vpack.c.b16 %v1070, %v1068
        %1327 = vmatpush.bf16.xpose.msra.mxu0 %v1085
        %1328 = vmatpush.bf16.xpose.msra.mxu0 %v1083
        %1329 = vmatpush.bf16.xpose.msra.mxu0 %v1081
        %1330 = vmatpush.bf16.xpose.msra.mxu0 %v1079
        %1331 = vmatpush.bf16.xpose.msra.mxu0 %v1077
        %1332 = vmatpush.bf16.xpose.msra.mxu0 %v1075
        %1333 = vmatpush.bf16.xpose.msra.mxu0 %v1073
        %1334 = vmatpush.bf16.xpose.msra.mxu0 %v1071
        %1335 = vmatmul.bf16.gmra.mxu0 %v623
        %v1336 = vpop.f32.mrf.mxu0
        %v1337 = vadd.f32 %v511, %v1336
        %v1338 = vpop.f32.mrf.mxu0
        %v1339 = vadd.f32 %v511, %v1338
        %1340 = vmatmul.bf16.gmra.mxu0 %v625
        %v1341 = vpop.f32.mrf.mxu0
        %v1342 = vadd.f32 %v511, %v1341
        %v1343 = vpop.f32.mrf.mxu0
        %v1344 = vadd.f32 %v511, %v1343
        %1345 = vmatmul.bf16.gmra.mxu0 %v627
        %v1346 = vpop.f32.mrf.mxu0
        %v1347 = vadd.f32 %v511, %v1346
        %v1348 = vpop.f32.mrf.mxu0
        %v1349 = vadd.f32 %v511, %v1348
        %1350 = vmatmul.bf16.gmra.mxu0 %v629
        %v1351 = vpop.f32.mrf.mxu0
        %v1352 = vadd.f32 %v511, %v1351
        %v1353 = vpop.f32.mrf.mxu0
        %v1354 = vadd.f32 %v511, %v1353
        %1355 = vmatmul.bf16.gmra.mxu0 %v631
        %v1356 = vpop.f32.mrf.mxu0
        %v1357 = vadd.f32 %v511, %v1356
        %v1358 = vpop.f32.mrf.mxu0
        %v1359 = vadd.f32 %v511, %v1358
        %1360 = vmatmul.bf16.gmra.mxu0 %v633
        %v1361 = vpop.f32.mrf.mxu0
        %v1362 = vadd.f32 %v511, %v1361
        %v1363 = vpop.f32.mrf.mxu0
        %v1364 = vadd.f32 %v511, %v1363
        %1365 = vmatmul.bf16.gmra.mxu0 %v635
        %v1366 = vpop.f32.mrf.mxu0
        %v1367 = vadd.f32 %v511, %v1366
        %v1368 = vpop.f32.mrf.mxu0
        %v1369 = vadd.f32 %v511, %v1368
        %1370 = vmatmul.bf16.gmra.mxu0 %v637
        %v1371 = vpop.f32.mrf.mxu0
        %v1372 = vadd.f32 %v511, %v1371
        %v1373 = vpop.f32.mrf.mxu0
        %v1374 = vadd.f32 %v511, %v1373
        %1375 = vmatmul.bf16.gmra.mxu0 %v639
        %v1376 = vpop.f32.mrf.mxu0
        %v1377 = vadd.f32 %v511, %v1376
        %v1378 = vpop.f32.mrf.mxu0
        %v1379 = vadd.f32 %v511, %v1378
        %1380 = vmatmul.bf16.gmra.mxu0 %v641
        %v1381 = vpop.f32.mrf.mxu0
        %v1382 = vadd.f32 %v511, %v1381
        %v1383 = vpop.f32.mrf.mxu0
        %v1384 = vadd.f32 %v511, %v1383
        %1385 = vmatmul.bf16.gmra.mxu0 %v643
        %v1386 = vpop.f32.mrf.mxu0
        %v1387 = vadd.f32 %v511, %v1386
        %v1388 = vpop.f32.mrf.mxu0
        %v1389 = vadd.f32 %v511, %v1388
        %1390 = vmatmul.bf16.gmra.mxu0 %v645
        %v1391 = vpop.f32.mrf.mxu0
        %v1392 = vadd.f32 %v511, %v1391
        %v1393 = vpop.f32.mrf.mxu0
        %v1394 = vadd.f32 %v511, %v1393
        %1395 = vmatmul.bf16.gmra.mxu0 %v647
        %v1396 = vpop.f32.mrf.mxu0
        %v1397 = vadd.f32 %v511, %v1396
        %v1398 = vpop.f32.mrf.mxu0
        %v1399 = vadd.f32 %v511, %v1398
        %1400 = vmatmul.bf16.gmra.mxu0 %v649
        %v1401 = vpop.f32.mrf.mxu0
        %v1402 = vadd.f32 %v511, %v1401
        %v1403 = vpop.f32.mrf.mxu0
        %v1404 = vadd.f32 %v511, %v1403
        %1405 = vmatmul.bf16.gmra.mxu0 %v651
        %v1406 = vpop.f32.mrf.mxu0
        %v1407 = vadd.f32 %v511, %v1406
        %v1408 = vpop.f32.mrf.mxu0
        %v1409 = vadd.f32 %v511, %v1408
        %1410 = vmatmul.bf16.gmra.mxu0 %v653
        %v1411 = vpop.f32.mrf.mxu0
        %v1412 = vadd.f32 %v511, %v1411
        %v1413 = vpop.f32.mrf.mxu0
        %v1414 = vadd.f32 %v511, %v1413
        %1415 = vdwg.mxu0
        %1416 = vmatpush.bf16.xpose.msra.mxu0 %v1086
        %1417 = vmatpush.bf16.xpose.msra.mxu0 %v1084
        %1418 = vmatpush.bf16.xpose.msra.mxu0 %v1082
        %1419 = vmatpush.bf16.xpose.msra.mxu0 %v1080
        %1420 = vmatpush.bf16.xpose.msra.mxu0 %v1078
        %1421 = vmatpush.bf16.xpose.msra.mxu0 %v1076
        %1422 = vmatpush.bf16.xpose.msra.mxu0 %v1074
        %1423 = vmatpush.bf16.xpose.msra.mxu0 %v1072
        %1424 = vmatmul.bf16.gmra.mxu0 %v624
        %v1425 = vpop.f32.mrf.mxu0
        %v1426 = vadd.f32 %v1337, %v1425
        %v1427 = vpop.f32.mrf.mxu0
        %v1428 = vadd.f32 %v1339, %v1427
        %1429 = vmatmul.bf16.gmra.mxu0 %v626
        %v1430 = vpop.f32.mrf.mxu0
        %v1431 = vadd.f32 %v1342, %v1430
        %v1432 = vpop.f32.mrf.mxu0
        %v1433 = vadd.f32 %v1344, %v1432
        %1434 = vmatmul.bf16.gmra.mxu0 %v628
        %v1435 = vpop.f32.mrf.mxu0
        %v1436 = vadd.f32 %v1347, %v1435
        %v1437 = vpop.f32.mrf.mxu0
        %v1438 = vadd.f32 %v1349, %v1437
        %1439 = vmatmul.bf16.gmra.mxu0 %v630
        %v1440 = vpop.f32.mrf.mxu0
        %v1441 = vadd.f32 %v1352, %v1440
        %v1442 = vpop.f32.mrf.mxu0
        %v1443 = vadd.f32 %v1354, %v1442
        %1444 = vmatmul.bf16.gmra.mxu0 %v632
        %v1445 = vpop.f32.mrf.mxu0
        %v1446 = vadd.f32 %v1357, %v1445
        %v1447 = vpop.f32.mrf.mxu0
        %v1448 = vadd.f32 %v1359, %v1447
        %1449 = vmatmul.bf16.gmra.mxu0 %v634
        %v1450 = vpop.f32.mrf.mxu0
        %v1451 = vadd.f32 %v1362, %v1450
        %v1452 = vpop.f32.mrf.mxu0
        %v1453 = vadd.f32 %v1364, %v1452
        %1454 = vmatmul.bf16.gmra.mxu0 %v636
        %v1455 = vpop.f32.mrf.mxu0
        %v1456 = vadd.f32 %v1367, %v1455
        %v1457 = vpop.f32.mrf.mxu0
        %v1458 = vadd.f32 %v1369, %v1457
        %1459 = vmatmul.bf16.gmra.mxu0 %v638
        %v1460 = vpop.f32.mrf.mxu0
        %v1461 = vadd.f32 %v1372, %v1460
        %v1462 = vpop.f32.mrf.mxu0
        %v1463 = vadd.f32 %v1374, %v1462
        %1464 = vmatmul.bf16.gmra.mxu0 %v640
        %v1465 = vpop.f32.mrf.mxu0
        %v1466 = vadd.f32 %v1377, %v1465
        %v1467 = vpop.f32.mrf.mxu0
        %v1468 = vadd.f32 %v1379, %v1467
        %1469 = vmatmul.bf16.gmra.mxu0 %v642
        %v1470 = vpop.f32.mrf.mxu0
        %v1471 = vadd.f32 %v1382, %v1470
        %v1472 = vpop.f32.mrf.mxu0
        %v1473 = vadd.f32 %v1384, %v1472
        %1474 = vmatmul.bf16.gmra.mxu0 %v644
        %v1475 = vpop.f32.mrf.mxu0
        %v1476 = vadd.f32 %v1387, %v1475
        %v1477 = vpop.f32.mrf.mxu0
        %v1478 = vadd.f32 %v1389, %v1477
        %1479 = vmatmul.bf16.gmra.mxu0 %v646
        %v1480 = vpop.f32.mrf.mxu0
        %v1481 = vadd.f32 %v1392, %v1480
        %v1482 = vpop.f32.mrf.mxu0
        %v1483 = vadd.f32 %v1394, %v1482
        %1484 = vmatmul.bf16.gmra.mxu0 %v648
        %v1485 = vpop.f32.mrf.mxu0
        %v1486 = vadd.f32 %v1397, %v1485
        %v1487 = vpop.f32.mrf.mxu0
        %v1488 = vadd.f32 %v1399, %v1487
        %1489 = vmatmul.bf16.gmra.mxu0 %v650
        %v1490 = vpop.f32.mrf.mxu0
        %v1491 = vadd.f32 %v1402, %v1490
        %v1492 = vpop.f32.mrf.mxu0
        %v1493 = vadd.f32 %v1404, %v1492
        %1494 = vmatmul.bf16.gmra.mxu0 %v652
        %v1495 = vpop.f32.mrf.mxu0
        %v1496 = vadd.f32 %v1407, %v1495
        %v1497 = vpop.f32.mrf.mxu0
        %v1498 = vadd.f32 %v1409, %v1497
        %1499 = vmatmul.bf16.gmra.mxu0 %v654
        %v1500 = vpop.f32.mrf.mxu0
        %v1501 = vadd.f32 %v1412, %v1500
        %v1502 = vpop.f32.mrf.mxu0
        %v1503 = vadd.f32 %v1414, %v1502
        %1504 = vdwg.mxu0
        %1505 = vmatpush.bf16.xpose.msra.mxu0 %v1101
        %1506 = vmatpush.bf16.xpose.msra.mxu0 %v1099
        %1507 = vmatpush.bf16.xpose.msra.mxu0 %v1097
        %1508 = vmatpush.bf16.xpose.msra.mxu0 %v1095
        %1509 = vmatpush.bf16.xpose.msra.mxu0 %v1093
        %1510 = vmatpush.bf16.xpose.msra.mxu0 %v1091
        %1511 = vmatpush.bf16.xpose.msra.mxu0 %v1089
        %1512 = vmatpush.bf16.xpose.msra.mxu0 %v1087
        %1513 = vmatmul.bf16.gmra.mxu0 %v623
        %v1514 = vpop.f32.mrf.mxu0
        %v1515 = vadd.f32 %v512, %v1514
        %v1516 = vpop.f32.mrf.mxu0
        %v1517 = vadd.f32 %v512, %v1516
        %1518 = vmatmul.bf16.gmra.mxu0 %v625
        %v1519 = vpop.f32.mrf.mxu0
        %v1520 = vadd.f32 %v512, %v1519
        %v1521 = vpop.f32.mrf.mxu0
        %v1522 = vadd.f32 %v512, %v1521
        %1523 = vmatmul.bf16.gmra.mxu0 %v627
        %v1524 = vpop.f32.mrf.mxu0
        %v1525 = vadd.f32 %v512, %v1524
        %v1526 = vpop.f32.mrf.mxu0
        %v1527 = vadd.f32 %v512, %v1526
        %1528 = vmatmul.bf16.gmra.mxu0 %v629
        %v1529 = vpop.f32.mrf.mxu0
        %v1530 = vadd.f32 %v512, %v1529
        %v1531 = vpop.f32.mrf.mxu0
        %v1532 = vadd.f32 %v512, %v1531
        %1533 = vmatmul.bf16.gmra.mxu0 %v631
        %v1534 = vpop.f32.mrf.mxu0
        %v1535 = vadd.f32 %v512, %v1534
        %v1536 = vpop.f32.mrf.mxu0
        %v1537 = vadd.f32 %v512, %v1536
        %1538 = vmatmul.bf16.gmra.mxu0 %v633
        %v1539 = vpop.f32.mrf.mxu0
        %v1540 = vadd.f32 %v512, %v1539
        %v1541 = vpop.f32.mrf.mxu0
        %v1542 = vadd.f32 %v512, %v1541
        %1543 = vmatmul.bf16.gmra.mxu0 %v635
        %v1544 = vpop.f32.mrf.mxu0
        %v1545 = vadd.f32 %v512, %v1544
        %v1546 = vpop.f32.mrf.mxu0
        %v1547 = vadd.f32 %v512, %v1546
        %1548 = vmatmul.bf16.gmra.mxu0 %v637
        %v1549 = vpop.f32.mrf.mxu0
        %v1550 = vadd.f32 %v512, %v1549
        %v1551 = vpop.f32.mrf.mxu0
        %v1552 = vadd.f32 %v512, %v1551
        %1553 = vmatmul.bf16.gmra.mxu0 %v639
        %v1554 = vpop.f32.mrf.mxu0
        %v1555 = vadd.f32 %v512, %v1554
        %v1556 = vpop.f32.mrf.mxu0
        %v1557 = vadd.f32 %v512, %v1556
        %1558 = vmatmul.bf16.gmra.mxu0 %v641
        %v1559 = vpop.f32.mrf.mxu0
        %v1560 = vadd.f32 %v512, %v1559
        %v1561 = vpop.f32.mrf.mxu0
        %v1562 = vadd.f32 %v512, %v1561
        %1563 = vmatmul.bf16.gmra.mxu0 %v643
        %v1564 = vpop.f32.mrf.mxu0
        %v1565 = vadd.f32 %v512, %v1564
        %v1566 = vpop.f32.mrf.mxu0
        %v1567 = vadd.f32 %v512, %v1566
        %1568 = vmatmul.bf16.gmra.mxu0 %v645
        %v1569 = vpop.f32.mrf.mxu0
        %v1570 = vadd.f32 %v512, %v1569
        %v1571 = vpop.f32.mrf.mxu0
        %v1572 = vadd.f32 %v512, %v1571
        %1573 = vmatmul.bf16.gmra.mxu0 %v647
        %v1574 = vpop.f32.mrf.mxu0
        %v1575 = vadd.f32 %v512, %v1574
        %v1576 = vpop.f32.mrf.mxu0
        %v1577 = vadd.f32 %v512, %v1576
        %1578 = vmatmul.bf16.gmra.mxu0 %v649
        %v1579 = vpop.f32.mrf.mxu0
        %v1580 = vadd.f32 %v512, %v1579
        %v1581 = vpop.f32.mrf.mxu0
        %v1582 = vadd.f32 %v512, %v1581
        %1583 = vmatmul.bf16.gmra.mxu0 %v651
        %v1584 = vpop.f32.mrf.mxu0
        %v1585 = vadd.f32 %v512, %v1584
        %v1586 = vpop.f32.mrf.mxu0
        %v1587 = vadd.f32 %v512, %v1586
        %1588 = vmatmul.bf16.gmra.mxu0 %v653
        %v1589 = vpop.f32.mrf.mxu0
        %v1590 = vadd.f32 %v512, %v1589
        %v1591 = vpop.f32.mrf.mxu0
        %v1592 = vadd.f32 %v512, %v1591
        %1593 = vdwg.mxu0
        %1594 = vmatpush.bf16.xpose.msra.mxu0 %v1102
        %1595 = vmatpush.bf16.xpose.msra.mxu0 %v1100
        %1596 = vmatpush.bf16.xpose.msra.mxu0 %v1098
        %1597 = vmatpush.bf16.xpose.msra.mxu0 %v1096
        %1598 = vmatpush.bf16.xpose.msra.mxu0 %v1094
        %1599 = vmatpush.bf16.xpose.msra.mxu0 %v1092
        %1600 = vmatpush.bf16.xpose.msra.mxu0 %v1090
        %1601 = vmatpush.bf16.xpose.msra.mxu0 %v1088
        %1602 = vmatmul.bf16.gmra.mxu0 %v624
        %v1603 = vpop.f32.mrf.mxu0
        %v1604 = vadd.f32 %v1515, %v1603
        %v1605 = vpop.f32.mrf.mxu0
        %v1606 = vadd.f32 %v1517, %v1605
        %1607 = vmatmul.bf16.gmra.mxu0 %v626
        %v1608 = vpop.f32.mrf.mxu0
        %v1609 = vadd.f32 %v1520, %v1608
        %v1610 = vpop.f32.mrf.mxu0
        %v1611 = vadd.f32 %v1522, %v1610
        %1612 = vmatmul.bf16.gmra.mxu0 %v628
        %v1613 = vpop.f32.mrf.mxu0
        %v1614 = vadd.f32 %v1525, %v1613
        %v1615 = vpop.f32.mrf.mxu0
        %v1616 = vadd.f32 %v1527, %v1615
        %1617 = vmatmul.bf16.gmra.mxu0 %v630
        %v1618 = vpop.f32.mrf.mxu0
        %v1619 = vadd.f32 %v1530, %v1618
        %v1620 = vpop.f32.mrf.mxu0
        %v1621 = vadd.f32 %v1532, %v1620
        %1622 = vmatmul.bf16.gmra.mxu0 %v632
        %v1623 = vpop.f32.mrf.mxu0
        %v1624 = vadd.f32 %v1535, %v1623
        %v1625 = vpop.f32.mrf.mxu0
        %v1626 = vadd.f32 %v1537, %v1625
        %1627 = vmatmul.bf16.gmra.mxu0 %v634
        %v1628 = vpop.f32.mrf.mxu0
        %v1629 = vadd.f32 %v1540, %v1628
        %v1630 = vpop.f32.mrf.mxu0
        %v1631 = vadd.f32 %v1542, %v1630
        %1632 = vmatmul.bf16.gmra.mxu0 %v636
        %v1633 = vpop.f32.mrf.mxu0
        %v1634 = vadd.f32 %v1545, %v1633
        %v1635 = vpop.f32.mrf.mxu0
        %v1636 = vadd.f32 %v1547, %v1635
        %1637 = vmatmul.bf16.gmra.mxu0 %v638
        %v1638 = vpop.f32.mrf.mxu0
        %v1639 = vadd.f32 %v1550, %v1638
        %v1640 = vpop.f32.mrf.mxu0
        %v1641 = vadd.f32 %v1552, %v1640
        %1642 = vmatmul.bf16.gmra.mxu0 %v640
        %v1643 = vpop.f32.mrf.mxu0
        %v1644 = vadd.f32 %v1555, %v1643
        %v1645 = vpop.f32.mrf.mxu0
        %v1646 = vadd.f32 %v1557, %v1645
        %1647 = vmatmul.bf16.gmra.mxu0 %v642
        %v1648 = vpop.f32.mrf.mxu0
        %v1649 = vadd.f32 %v1560, %v1648
        %v1650 = vpop.f32.mrf.mxu0
        %v1651 = vadd.f32 %v1562, %v1650
        %1652 = vmatmul.bf16.gmra.mxu0 %v644
        %v1653 = vpop.f32.mrf.mxu0
        %v1654 = vadd.f32 %v1565, %v1653
        %v1655 = vpop.f32.mrf.mxu0
        %v1656 = vadd.f32 %v1567, %v1655
        %1657 = vmatmul.bf16.gmra.mxu0 %v646
        %v1658 = vpop.f32.mrf.mxu0
        %v1659 = vadd.f32 %v1570, %v1658
        %v1660 = vpop.f32.mrf.mxu0
        %v1661 = vadd.f32 %v1572, %v1660
        %1662 = vmatmul.bf16.gmra.mxu0 %v648
        %v1663 = vpop.f32.mrf.mxu0
        %v1664 = vadd.f32 %v1575, %v1663
        %v1665 = vpop.f32.mrf.mxu0
        %v1666 = vadd.f32 %v1577, %v1665
        %1667 = vmatmul.bf16.gmra.mxu0 %v650
        %v1668 = vpop.f32.mrf.mxu0
        %v1669 = vadd.f32 %v1580, %v1668
        %v1670 = vpop.f32.mrf.mxu0
        %v1671 = vadd.f32 %v1582, %v1670
        %1672 = vmatmul.bf16.gmra.mxu0 %v652
        %v1673 = vpop.f32.mrf.mxu0
        %v1674 = vadd.f32 %v1585, %v1673
        %v1675 = vpop.f32.mrf.mxu0
        %v1676 = vadd.f32 %v1587, %v1675
        %1677 = vmatmul.bf16.gmra.mxu0 %v654
        %v1678 = vpop.f32.mrf.mxu0
        %v1679 = vadd.f32 %v1590, %v1678
        %v1680 = vpop.f32.mrf.mxu0
        %v1681 = vadd.f32 %v1592, %v1680
        %1682 = vdwg.mxu0
        %1683 = vmatpush.bf16.xpose.msra.mxu0 %v1117
        %1684 = vmatpush.bf16.xpose.msra.mxu0 %v1115
        %1685 = vmatpush.bf16.xpose.msra.mxu0 %v1113
        %1686 = vmatpush.bf16.xpose.msra.mxu0 %v1111
        %1687 = vmatpush.bf16.xpose.msra.mxu0 %v1109
        %1688 = vmatpush.bf16.xpose.msra.mxu0 %v1107
        %1689 = vmatpush.bf16.xpose.msra.mxu0 %v1105
        %1690 = vmatpush.bf16.xpose.msra.mxu0 %v1103
        %1691 = vmatmul.bf16.gmra.mxu0 %v623
        %v1692 = vpop.f32.mrf.mxu0
        %v1693 = vadd.f32 %v513, %v1692
        %v1694 = vpop.f32.mrf.mxu0
        %v1695 = vadd.f32 %v513, %v1694
        %1696 = vmatmul.bf16.gmra.mxu0 %v625
        %v1697 = vpop.f32.mrf.mxu0
        %v1698 = vadd.f32 %v513, %v1697
        %v1699 = vpop.f32.mrf.mxu0
        %v1700 = vadd.f32 %v513, %v1699
        %1701 = vmatmul.bf16.gmra.mxu0 %v627
        %v1702 = vpop.f32.mrf.mxu0
        %v1703 = vadd.f32 %v513, %v1702
        %v1704 = vpop.f32.mrf.mxu0
        %v1705 = vadd.f32 %v513, %v1704
        %1706 = vmatmul.bf16.gmra.mxu0 %v629
        %v1707 = vpop.f32.mrf.mxu0
        %v1708 = vadd.f32 %v513, %v1707
        %v1709 = vpop.f32.mrf.mxu0
        %v1710 = vadd.f32 %v513, %v1709
        %1711 = vmatmul.bf16.gmra.mxu0 %v631
        %v1712 = vpop.f32.mrf.mxu0
        %v1713 = vadd.f32 %v513, %v1712
        %v1714 = vpop.f32.mrf.mxu0
        %v1715 = vadd.f32 %v513, %v1714
        %1716 = vmatmul.bf16.gmra.mxu0 %v633
        %v1717 = vpop.f32.mrf.mxu0
        %v1718 = vadd.f32 %v513, %v1717
        %v1719 = vpop.f32.mrf.mxu0
        %v1720 = vadd.f32 %v513, %v1719
        %1721 = vmatmul.bf16.gmra.mxu0 %v635
        %v1722 = vpop.f32.mrf.mxu0
        %v1723 = vadd.f32 %v513, %v1722
        %v1724 = vpop.f32.mrf.mxu0
        %v1725 = vadd.f32 %v513, %v1724
        %1726 = vmatmul.bf16.gmra.mxu0 %v637
        %v1727 = vpop.f32.mrf.mxu0
        %v1728 = vadd.f32 %v513, %v1727
        %v1729 = vpop.f32.mrf.mxu0
        %v1730 = vadd.f32 %v513, %v1729
        %1731 = vmatmul.bf16.gmra.mxu0 %v639
        %v1732 = vpop.f32.mrf.mxu0
        %v1733 = vadd.f32 %v513, %v1732
        %v1734 = vpop.f32.mrf.mxu0
        %v1735 = vadd.f32 %v513, %v1734
        %1736 = vmatmul.bf16.gmra.mxu0 %v641
        %v1737 = vpop.f32.mrf.mxu0
        %v1738 = vadd.f32 %v513, %v1737
        %v1739 = vpop.f32.mrf.mxu0
        %v1740 = vadd.f32 %v513, %v1739
        %1741 = vmatmul.bf16.gmra.mxu0 %v643
        %v1742 = vpop.f32.mrf.mxu0
        %v1743 = vadd.f32 %v513, %v1742
        %v1744 = vpop.f32.mrf.mxu0
        %v1745 = vadd.f32 %v513, %v1744
        %1746 = vmatmul.bf16.gmra.mxu0 %v645
        %v1747 = vpop.f32.mrf.mxu0
        %v1748 = vadd.f32 %v513, %v1747
        %v1749 = vpop.f32.mrf.mxu0
        %v1750 = vadd.f32 %v513, %v1749
        %1751 = vmatmul.bf16.gmra.mxu0 %v647
        %v1752 = vpop.f32.mrf.mxu0
        %v1753 = vadd.f32 %v513, %v1752
        %v1754 = vpop.f32.mrf.mxu0
        %v1755 = vadd.f32 %v513, %v1754
        %1756 = vmatmul.bf16.gmra.mxu0 %v649
        %v1757 = vpop.f32.mrf.mxu0
        %v1758 = vadd.f32 %v513, %v1757
        %v1759 = vpop.f32.mrf.mxu0
        %v1760 = vadd.f32 %v513, %v1759
        %1761 = vmatmul.bf16.gmra.mxu0 %v651
        %v1762 = vpop.f32.mrf.mxu0
        %v1763 = vadd.f32 %v513, %v1762
        %v1764 = vpop.f32.mrf.mxu0
        %v1765 = vadd.f32 %v513, %v1764
        %1766 = vmatmul.bf16.gmra.mxu0 %v653
        %v1767 = vpop.f32.mrf.mxu0
        %v1768 = vadd.f32 %v513, %v1767
        %v1769 = vpop.f32.mrf.mxu0
        %v1770 = vadd.f32 %v513, %v1769
        %1771 = vdwg.mxu0
        %1772 = vmatpush.bf16.xpose.msra.mxu0 %v1118
        %1773 = vmatpush.bf16.xpose.msra.mxu0 %v1116
        %1774 = vmatpush.bf16.xpose.msra.mxu0 %v1114
        %1775 = vmatpush.bf16.xpose.msra.mxu0 %v1112
        %1776 = vmatpush.bf16.xpose.msra.mxu0 %v1110
        %1777 = vmatpush.bf16.xpose.msra.mxu0 %v1108
        %1778 = vmatpush.bf16.xpose.msra.mxu0 %v1106
        %1779 = vmatpush.bf16.xpose.msra.mxu0 %v1104
        %1780 = vmatmul.bf16.gmra.mxu0 %v624
        %v1781 = vpop.f32.mrf.mxu0
        %v1782 = vadd.f32 %v1693, %v1781
        %v1783 = vpop.f32.mrf.mxu0
        %v1784 = vadd.f32 %v1695, %v1783
        %1785 = vmatmul.bf16.gmra.mxu0 %v626
        %v1786 = vpop.f32.mrf.mxu0
        %v1787 = vadd.f32 %v1698, %v1786
        %v1788 = vpop.f32.mrf.mxu0
        %v1789 = vadd.f32 %v1700, %v1788
        %1790 = vmatmul.bf16.gmra.mxu0 %v628
        %v1791 = vpop.f32.mrf.mxu0
        %v1792 = vadd.f32 %v1703, %v1791
        %v1793 = vpop.f32.mrf.mxu0
        %v1794 = vadd.f32 %v1705, %v1793
        %1795 = vmatmul.bf16.gmra.mxu0 %v630
        %v1796 = vpop.f32.mrf.mxu0
        %v1797 = vadd.f32 %v1708, %v1796
        %v1798 = vpop.f32.mrf.mxu0
        %v1799 = vadd.f32 %v1710, %v1798
        %1800 = vmatmul.bf16.gmra.mxu0 %v632
        %v1801 = vpop.f32.mrf.mxu0
        %v1802 = vadd.f32 %v1713, %v1801
        %v1803 = vpop.f32.mrf.mxu0
        %v1804 = vadd.f32 %v1715, %v1803
        %1805 = vmatmul.bf16.gmra.mxu0 %v634
        %v1806 = vpop.f32.mrf.mxu0
        %v1807 = vadd.f32 %v1718, %v1806
        %v1808 = vpop.f32.mrf.mxu0
        %v1809 = vadd.f32 %v1720, %v1808
        %1810 = vmatmul.bf16.gmra.mxu0 %v636
        %v1811 = vpop.f32.mrf.mxu0
        %v1812 = vadd.f32 %v1723, %v1811
        %v1813 = vpop.f32.mrf.mxu0
        %v1814 = vadd.f32 %v1725, %v1813
        %1815 = vmatmul.bf16.gmra.mxu0 %v638
        %v1816 = vpop.f32.mrf.mxu0
        %v1817 = vadd.f32 %v1728, %v1816
        %v1818 = vpop.f32.mrf.mxu0
        %v1819 = vadd.f32 %v1730, %v1818
        %1820 = vmatmul.bf16.gmra.mxu0 %v640
        %v1821 = vpop.f32.mrf.mxu0
        %v1822 = vadd.f32 %v1733, %v1821
        %v1823 = vpop.f32.mrf.mxu0
        %v1824 = vadd.f32 %v1735, %v1823
        %1825 = vmatmul.bf16.gmra.mxu0 %v642
        %v1826 = vpop.f32.mrf.mxu0
        %v1827 = vadd.f32 %v1738, %v1826
        %v1828 = vpop.f32.mrf.mxu0
        %v1829 = vadd.f32 %v1740, %v1828
        %1830 = vmatmul.bf16.gmra.mxu0 %v644
        %v1831 = vpop.f32.mrf.mxu0
        %v1832 = vadd.f32 %v1743, %v1831
        %v1833 = vpop.f32.mrf.mxu0
        %v1834 = vadd.f32 %v1745, %v1833
        %1835 = vmatmul.bf16.gmra.mxu0 %v646
        %v1836 = vpop.f32.mrf.mxu0
        %v1837 = vadd.f32 %v1748, %v1836
        %v1838 = vpop.f32.mrf.mxu0
        %v1839 = vadd.f32 %v1750, %v1838
        %1840 = vmatmul.bf16.gmra.mxu0 %v648
        %v1841 = vpop.f32.mrf.mxu0
        %v1842 = vadd.f32 %v1753, %v1841
        %v1843 = vpop.f32.mrf.mxu0
        %v1844 = vadd.f32 %v1755, %v1843
        %1845 = vmatmul.bf16.gmra.mxu0 %v650
        %v1846 = vpop.f32.mrf.mxu0
        %v1847 = vadd.f32 %v1758, %v1846
        %v1848 = vpop.f32.mrf.mxu0
        %v1849 = vadd.f32 %v1760, %v1848
        %1850 = vmatmul.bf16.gmra.mxu0 %v652
        %v1851 = vpop.f32.mrf.mxu0
        %v1852 = vadd.f32 %v1763, %v1851
        %v1853 = vpop.f32.mrf.mxu0
        %v1854 = vadd.f32 %v1765, %v1853
        %1855 = vmatmul.bf16.gmra.mxu0 %v654
        %v1856 = vpop.f32.mrf.mxu0
        %v1857 = vadd.f32 %v1768, %v1856
        %v1858 = vpop.f32.mrf.mxu0
        %v1859 = vadd.f32 %v1770, %v1858
        %1860 = vdwg.mxu0
        %1861 = vmatpush.bf16.xpose.msra.mxu0 %v1133
        %1862 = vmatpush.bf16.xpose.msra.mxu0 %v1131
        %1863 = vmatpush.bf16.xpose.msra.mxu0 %v1129
        %1864 = vmatpush.bf16.xpose.msra.mxu0 %v1127
        %1865 = vmatpush.bf16.xpose.msra.mxu0 %v1125
        %1866 = vmatpush.bf16.xpose.msra.mxu0 %v1123
        %1867 = vmatpush.bf16.xpose.msra.mxu0 %v1121
        %1868 = vmatpush.bf16.xpose.msra.mxu0 %v1119
        %1869 = vmatmul.bf16.gmra.mxu0 %v623
        %v1870 = vpop.f32.mrf.mxu0
        %v1871 = vadd.f32 %v514, %v1870
        %v1872 = vpop.f32.mrf.mxu0
        %v1873 = vadd.f32 %v514, %v1872
        %1874 = vmatmul.bf16.gmra.mxu0 %v625
        %v1875 = vpop.f32.mrf.mxu0
        %v1876 = vadd.f32 %v514, %v1875
        %v1877 = vpop.f32.mrf.mxu0
        %v1878 = vadd.f32 %v514, %v1877
        %1879 = vmatmul.bf16.gmra.mxu0 %v627
        %v1880 = vpop.f32.mrf.mxu0
        %v1881 = vadd.f32 %v514, %v1880
        %v1882 = vpop.f32.mrf.mxu0
        %v1883 = vadd.f32 %v514, %v1882
        %1884 = vmatmul.bf16.gmra.mxu0 %v629
        %v1885 = vpop.f32.mrf.mxu0
        %v1886 = vadd.f32 %v514, %v1885
        %v1887 = vpop.f32.mrf.mxu0
        %v1888 = vadd.f32 %v514, %v1887
        %1889 = vmatmul.bf16.gmra.mxu0 %v631
        %v1890 = vpop.f32.mrf.mxu0
        %v1891 = vadd.f32 %v514, %v1890
        %v1892 = vpop.f32.mrf.mxu0
        %v1893 = vadd.f32 %v514, %v1892
        %1894 = vmatmul.bf16.gmra.mxu0 %v633
        %v1895 = vpop.f32.mrf.mxu0
        %v1896 = vadd.f32 %v514, %v1895
        %v1897 = vpop.f32.mrf.mxu0
        %v1898 = vadd.f32 %v514, %v1897
        %1899 = vmatmul.bf16.gmra.mxu0 %v635
        %v1900 = vpop.f32.mrf.mxu0
        %v1901 = vadd.f32 %v514, %v1900
        %v1902 = vpop.f32.mrf.mxu0
        %v1903 = vadd.f32 %v514, %v1902
        %1904 = vmatmul.bf16.gmra.mxu0 %v637
        %v1905 = vpop.f32.mrf.mxu0
        %v1906 = vadd.f32 %v514, %v1905
        %v1907 = vpop.f32.mrf.mxu0
        %v1908 = vadd.f32 %v514, %v1907
        %1909 = vmatmul.bf16.gmra.mxu0 %v639
        %v1910 = vpop.f32.mrf.mxu0
        %v1911 = vadd.f32 %v514, %v1910
        %v1912 = vpop.f32.mrf.mxu0
        %v1913 = vadd.f32 %v514, %v1912
        %1914 = vmatmul.bf16.gmra.mxu0 %v641
        %v1915 = vpop.f32.mrf.mxu0
        %v1916 = vadd.f32 %v514, %v1915
        %v1917 = vpop.f32.mrf.mxu0
        %v1918 = vadd.f32 %v514, %v1917
        %1919 = vmatmul.bf16.gmra.mxu0 %v643
        %v1920 = vpop.f32.mrf.mxu0
        %v1921 = vadd.f32 %v514, %v1920
        %v1922 = vpop.f32.mrf.mxu0
        %v1923 = vadd.f32 %v514, %v1922
        %1924 = vmatmul.bf16.gmra.mxu0 %v645
        %v1925 = vpop.f32.mrf.mxu0
        %v1926 = vadd.f32 %v514, %v1925
        %v1927 = vpop.f32.mrf.mxu0
        %v1928 = vadd.f32 %v514, %v1927
        %1929 = vmatmul.bf16.gmra.mxu0 %v647
        %v1930 = vpop.f32.mrf.mxu0
        %v1931 = vadd.f32 %v514, %v1930
        %v1932 = vpop.f32.mrf.mxu0
        %v1933 = vadd.f32 %v514, %v1932
        %1934 = vmatmul.bf16.gmra.mxu0 %v649
        %v1935 = vpop.f32.mrf.mxu0
        %v1936 = vadd.f32 %v514, %v1935
        %v1937 = vpop.f32.mrf.mxu0
        %v1938 = vadd.f32 %v514, %v1937
        %1939 = vmatmul.bf16.gmra.mxu0 %v651
        %v1940 = vpop.f32.mrf.mxu0
        %v1941 = vadd.f32 %v514, %v1940
        %v1942 = vpop.f32.mrf.mxu0
        %v1943 = vadd.f32 %v514, %v1942
        %1944 = vmatmul.bf16.gmra.mxu0 %v653
        %v1945 = vpop.f32.mrf.mxu0
        %v1946 = vadd.f32 %v514, %v1945
        %v1947 = vpop.f32.mrf.mxu0
        %v1948 = vadd.f32 %v514, %v1947
        %1949 = vdwg.mxu0
        %1950 = vmatpush.bf16.xpose.msra.mxu0 %v1134
        %1951 = vmatpush.bf16.xpose.msra.mxu0 %v1132
        %1952 = vmatpush.bf16.xpose.msra.mxu0 %v1130
        %1953 = vmatpush.bf16.xpose.msra.mxu0 %v1128
        %1954 = vmatpush.bf16.xpose.msra.mxu0 %v1126
        %1955 = vmatpush.bf16.xpose.msra.mxu0 %v1124
        %1956 = vmatpush.bf16.xpose.msra.mxu0 %v1122
        %1957 = vmatpush.bf16.xpose.msra.mxu0 %v1120
        %1958 = vmatmul.bf16.gmra.mxu0 %v624
        %v1959 = vpop.f32.mrf.mxu0
        %v1960 = vadd.f32 %v1871, %v1959
        %v1961 = vpop.f32.mrf.mxu0
        %v1962 = vadd.f32 %v1873, %v1961
        %1963 = vmatmul.bf16.gmra.mxu0 %v626
        %v1964 = vpop.f32.mrf.mxu0
        %v1965 = vadd.f32 %v1876, %v1964
        %v1966 = vpop.f32.mrf.mxu0
        %v1967 = vadd.f32 %v1878, %v1966
        %1968 = vmatmul.bf16.gmra.mxu0 %v628
        %v1969 = vpop.f32.mrf.mxu0
        %v1970 = vadd.f32 %v1881, %v1969
        %v1971 = vpop.f32.mrf.mxu0
        %v1972 = vadd.f32 %v1883, %v1971
        %1973 = vmatmul.bf16.gmra.mxu0 %v630
        %v1974 = vpop.f32.mrf.mxu0
        %v1975 = vadd.f32 %v1886, %v1974
        %v1976 = vpop.f32.mrf.mxu0
        %v1977 = vadd.f32 %v1888, %v1976
        %1978 = vmatmul.bf16.gmra.mxu0 %v632
        %v1979 = vpop.f32.mrf.mxu0
        %v1980 = vadd.f32 %v1891, %v1979
        %v1981 = vpop.f32.mrf.mxu0
        %v1982 = vadd.f32 %v1893, %v1981
        %1983 = vmatmul.bf16.gmra.mxu0 %v634
        %v1984 = vpop.f32.mrf.mxu0
        %v1985 = vadd.f32 %v1896, %v1984
        %v1986 = vpop.f32.mrf.mxu0
        %v1987 = vadd.f32 %v1898, %v1986
        %1988 = vmatmul.bf16.gmra.mxu0 %v636
        %v1989 = vpop.f32.mrf.mxu0
        %v1990 = vadd.f32 %v1901, %v1989
        %v1991 = vpop.f32.mrf.mxu0
        %v1992 = vadd.f32 %v1903, %v1991
        %1993 = vmatmul.bf16.gmra.mxu0 %v638
        %v1994 = vpop.f32.mrf.mxu0
        %v1995 = vadd.f32 %v1906, %v1994
        %v1996 = vpop.f32.mrf.mxu0
        %v1997 = vadd.f32 %v1908, %v1996
        %1998 = vmatmul.bf16.gmra.mxu0 %v640
        %v1999 = vpop.f32.mrf.mxu0
        %v2000 = vadd.f32 %v1911, %v1999
        %v2001 = vpop.f32.mrf.mxu0
        %v2002 = vadd.f32 %v1913, %v2001
        %2003 = vmatmul.bf16.gmra.mxu0 %v642
        %v2004 = vpop.f32.mrf.mxu0
        %v2005 = vadd.f32 %v1916, %v2004
        %v2006 = vpop.f32.mrf.mxu0
        %v2007 = vadd.f32 %v1918, %v2006
        %2008 = vmatmul.bf16.gmra.mxu0 %v644
        %v2009 = vpop.f32.mrf.mxu0
        %v2010 = vadd.f32 %v1921, %v2009
        %v2011 = vpop.f32.mrf.mxu0
        %v2012 = vadd.f32 %v1923, %v2011
        %2013 = vmatmul.bf16.gmra.mxu0 %v646
        %v2014 = vpop.f32.mrf.mxu0
        %v2015 = vadd.f32 %v1926, %v2014
        %v2016 = vpop.f32.mrf.mxu0
        %v2017 = vadd.f32 %v1928, %v2016
        %2018 = vmatmul.bf16.gmra.mxu0 %v648
        %v2019 = vpop.f32.mrf.mxu0
        %v2020 = vadd.f32 %v1931, %v2019
        %v2021 = vpop.f32.mrf.mxu0
        %v2022 = vadd.f32 %v1933, %v2021
        %2023 = vmatmul.bf16.gmra.mxu0 %v650
        %v2024 = vpop.f32.mrf.mxu0
        %v2025 = vadd.f32 %v1936, %v2024
        %v2026 = vpop.f32.mrf.mxu0
        %v2027 = vadd.f32 %v1938, %v2026
        %2028 = vmatmul.bf16.gmra.mxu0 %v652
        %v2029 = vpop.f32.mrf.mxu0
        %v2030 = vadd.f32 %v1941, %v2029
        %v2031 = vpop.f32.mrf.mxu0
        %v2032 = vadd.f32 %v1943, %v2031
        %2033 = vmatmul.bf16.gmra.mxu0 %v654
        %v2034 = vpop.f32.mrf.mxu0
        %v2035 = vadd.f32 %v1946, %v2034
        %v2036 = vpop.f32.mrf.mxu0
        %v2037 = vadd.f32 %v1948, %v2036
        %2038 = vdwg.mxu0
        %2039 = vmatpush.bf16.xpose.msra.mxu0 %v1149
        %2040 = vmatpush.bf16.xpose.msra.mxu0 %v1147
        %2041 = vmatpush.bf16.xpose.msra.mxu0 %v1145
        %2042 = vmatpush.bf16.xpose.msra.mxu0 %v1143
        %2043 = vmatpush.bf16.xpose.msra.mxu0 %v1141
        %2044 = vmatpush.bf16.xpose.msra.mxu0 %v1139
        %2045 = vmatpush.bf16.xpose.msra.mxu0 %v1137
        %2046 = vmatpush.bf16.xpose.msra.mxu0 %v1135
        %2047 = vmatmul.bf16.gmra.mxu0 %v623
        %v2048 = vpop.f32.mrf.mxu0
        %v2049 = vadd.f32 %v515, %v2048
        %v2050 = vpop.f32.mrf.mxu0
        %v2051 = vadd.f32 %v515, %v2050
        %2052 = vmatmul.bf16.gmra.mxu0 %v625
        %v2053 = vpop.f32.mrf.mxu0
        %v2054 = vadd.f32 %v515, %v2053
        %v2055 = vpop.f32.mrf.mxu0
        %v2056 = vadd.f32 %v515, %v2055
        %2057 = vmatmul.bf16.gmra.mxu0 %v627
        %v2058 = vpop.f32.mrf.mxu0
        %v2059 = vadd.f32 %v515, %v2058
        %v2060 = vpop.f32.mrf.mxu0
        %v2061 = vadd.f32 %v515, %v2060
        %2062 = vmatmul.bf16.gmra.mxu0 %v629
        %v2063 = vpop.f32.mrf.mxu0
        %v2064 = vadd.f32 %v515, %v2063
        %v2065 = vpop.f32.mrf.mxu0
        %v2066 = vadd.f32 %v515, %v2065
        %2067 = vmatmul.bf16.gmra.mxu0 %v631
        %v2068 = vpop.f32.mrf.mxu0
        %v2069 = vadd.f32 %v515, %v2068
        %v2070 = vpop.f32.mrf.mxu0
        %v2071 = vadd.f32 %v515, %v2070
        %2072 = vmatmul.bf16.gmra.mxu0 %v633
        %v2073 = vpop.f32.mrf.mxu0
        %v2074 = vadd.f32 %v515, %v2073
        %v2075 = vpop.f32.mrf.mxu0
        %v2076 = vadd.f32 %v515, %v2075
        %2077 = vmatmul.bf16.gmra.mxu0 %v635
        %v2078 = vpop.f32.mrf.mxu0
        %v2079 = vadd.f32 %v515, %v2078
        %v2080 = vpop.f32.mrf.mxu0
        %v2081 = vadd.f32 %v515, %v2080
        %2082 = vmatmul.bf16.gmra.mxu0 %v637
        %v2083 = vpop.f32.mrf.mxu0
        %v2084 = vadd.f32 %v515, %v2083
        %v2085 = vpop.f32.mrf.mxu0
        %v2086 = vadd.f32 %v515, %v2085
        %2087 = vmatmul.bf16.gmra.mxu0 %v639
        %v2088 = vpop.f32.mrf.mxu0
        %v2089 = vadd.f32 %v515, %v2088
        %v2090 = vpop.f32.mrf.mxu0
        %v2091 = vadd.f32 %v515, %v2090
        %2092 = vmatmul.bf16.gmra.mxu0 %v641
        %v2093 = vpop.f32.mrf.mxu0
        %v2094 = vadd.f32 %v515, %v2093
        %v2095 = vpop.f32.mrf.mxu0
        %v2096 = vadd.f32 %v515, %v2095
        %2097 = vmatmul.bf16.gmra.mxu0 %v643
        %v2098 = vpop.f32.mrf.mxu0
        %v2099 = vadd.f32 %v515, %v2098
        %v2100 = vpop.f32.mrf.mxu0
        %v2101 = vadd.f32 %v515, %v2100
        %2102 = vmatmul.bf16.gmra.mxu0 %v645
        %v2103 = vpop.f32.mrf.mxu0
        %v2104 = vadd.f32 %v515, %v2103
        %v2105 = vpop.f32.mrf.mxu0
        %v2106 = vadd.f32 %v515, %v2105
        %2107 = vmatmul.bf16.gmra.mxu0 %v647
        %v2108 = vpop.f32.mrf.mxu0
        %v2109 = vadd.f32 %v515, %v2108
        %v2110 = vpop.f32.mrf.mxu0
        %v2111 = vadd.f32 %v515, %v2110
        %2112 = vmatmul.bf16.gmra.mxu0 %v649
        %v2113 = vpop.f32.mrf.mxu0
        %v2114 = vadd.f32 %v515, %v2113
        %v2115 = vpop.f32.mrf.mxu0
        %v2116 = vadd.f32 %v515, %v2115
        %2117 = vmatmul.bf16.gmra.mxu0 %v651
        %v2118 = vpop.f32.mrf.mxu0
        %v2119 = vadd.f32 %v515, %v2118
        %v2120 = vpop.f32.mrf.mxu0
        %v2121 = vadd.f32 %v515, %v2120
        %2122 = vmatmul.bf16.gmra.mxu0 %v653
        %v2123 = vpop.f32.mrf.mxu0
        %v2124 = vadd.f32 %v515, %v2123
        %v2125 = vpop.f32.mrf.mxu0
        %v2126 = vadd.f32 %v515, %v2125
        %2127 = vdwg.mxu0
        %2128 = vmatpush.bf16.xpose.msra.mxu0 %v1150
        %2129 = vmatpush.bf16.xpose.msra.mxu0 %v1148
        %2130 = vmatpush.bf16.xpose.msra.mxu0 %v1146
        %2131 = vmatpush.bf16.xpose.msra.mxu0 %v1144
        %2132 = vmatpush.bf16.xpose.msra.mxu0 %v1142
        %2133 = vmatpush.bf16.xpose.msra.mxu0 %v1140
        %2134 = vmatpush.bf16.xpose.msra.mxu0 %v1138
        %2135 = vmatpush.bf16.xpose.msra.mxu0 %v1136
        %2136 = vmatmul.bf16.gmra.mxu0 %v624
        %v2137 = vpop.f32.mrf.mxu0
        %v2138 = vadd.f32 %v2049, %v2137
        %v2139 = vpop.f32.mrf.mxu0
        %v2140 = vadd.f32 %v2051, %v2139
        %2141 = vmatmul.bf16.gmra.mxu0 %v626
        %v2142 = vpop.f32.mrf.mxu0
        %v2143 = vadd.f32 %v2054, %v2142
        %v2144 = vpop.f32.mrf.mxu0
        %v2145 = vadd.f32 %v2056, %v2144
        %2146 = vmatmul.bf16.gmra.mxu0 %v628
        %v2147 = vpop.f32.mrf.mxu0
        %v2148 = vadd.f32 %v2059, %v2147
        %v2149 = vpop.f32.mrf.mxu0
        %v2150 = vadd.f32 %v2061, %v2149
        %2151 = vmatmul.bf16.gmra.mxu0 %v630
        %v2152 = vpop.f32.mrf.mxu0
        %v2153 = vadd.f32 %v2064, %v2152
        %v2154 = vpop.f32.mrf.mxu0
        %v2155 = vadd.f32 %v2066, %v2154
        %2156 = vmatmul.bf16.gmra.mxu0 %v632
        %v2157 = vpop.f32.mrf.mxu0
        %v2158 = vadd.f32 %v2069, %v2157
        %v2159 = vpop.f32.mrf.mxu0
        %v2160 = vadd.f32 %v2071, %v2159
        %2161 = vmatmul.bf16.gmra.mxu0 %v634
        %v2162 = vpop.f32.mrf.mxu0
        %v2163 = vadd.f32 %v2074, %v2162
        %v2164 = vpop.f32.mrf.mxu0
        %v2165 = vadd.f32 %v2076, %v2164
        %2166 = vmatmul.bf16.gmra.mxu0 %v636
        %v2167 = vpop.f32.mrf.mxu0
        %v2168 = vadd.f32 %v2079, %v2167
        %v2169 = vpop.f32.mrf.mxu0
        %v2170 = vadd.f32 %v2081, %v2169
        %2171 = vmatmul.bf16.gmra.mxu0 %v638
        %v2172 = vpop.f32.mrf.mxu0
        %v2173 = vadd.f32 %v2084, %v2172
        %v2174 = vpop.f32.mrf.mxu0
        %v2175 = vadd.f32 %v2086, %v2174
        %2176 = vmatmul.bf16.gmra.mxu0 %v640
        %v2177 = vpop.f32.mrf.mxu0
        %v2178 = vadd.f32 %v2089, %v2177
        %v2179 = vpop.f32.mrf.mxu0
        %v2180 = vadd.f32 %v2091, %v2179
        %2181 = vmatmul.bf16.gmra.mxu0 %v642
        %v2182 = vpop.f32.mrf.mxu0
        %v2183 = vadd.f32 %v2094, %v2182
        %v2184 = vpop.f32.mrf.mxu0
        %v2185 = vadd.f32 %v2096, %v2184
        %2186 = vmatmul.bf16.gmra.mxu0 %v644
        %v2187 = vpop.f32.mrf.mxu0
        %v2188 = vadd.f32 %v2099, %v2187
        %v2189 = vpop.f32.mrf.mxu0
        %v2190 = vadd.f32 %v2101, %v2189
        %2191 = vmatmul.bf16.gmra.mxu0 %v646
        %v2192 = vpop.f32.mrf.mxu0
        %v2193 = vadd.f32 %v2104, %v2192
        %v2194 = vpop.f32.mrf.mxu0
        %v2195 = vadd.f32 %v2106, %v2194
        %2196 = vmatmul.bf16.gmra.mxu0 %v648
        %v2197 = vpop.f32.mrf.mxu0
        %v2198 = vadd.f32 %v2109, %v2197
        %v2199 = vpop.f32.mrf.mxu0
        %v2200 = vadd.f32 %v2111, %v2199
        %2201 = vmatmul.bf16.gmra.mxu0 %v650
        %v2202 = vpop.f32.mrf.mxu0
        %v2203 = vadd.f32 %v2114, %v2202
        %v2204 = vpop.f32.mrf.mxu0
        %v2205 = vadd.f32 %v2116, %v2204
        %2206 = vmatmul.bf16.gmra.mxu0 %v652
        %v2207 = vpop.f32.mrf.mxu0
        %v2208 = vadd.f32 %v2119, %v2207
        %v2209 = vpop.f32.mrf.mxu0
        %v2210 = vadd.f32 %v2121, %v2209
        %2211 = vmatmul.bf16.gmra.mxu0 %v654
        %v2212 = vpop.f32.mrf.mxu0
        %v2213 = vadd.f32 %v2124, %v2212
        %v2214 = vpop.f32.mrf.mxu0
        %v2215 = vadd.f32 %v2126, %v2214
        %2216 = vdwg.mxu0
        %2217 = vmatpush.bf16.xpose.msra.mxu0 %v1165
        %2218 = vmatpush.bf16.xpose.msra.mxu0 %v1163
        %2219 = vmatpush.bf16.xpose.msra.mxu0 %v1161
        %2220 = vmatpush.bf16.xpose.msra.mxu0 %v1159
        %2221 = vmatpush.bf16.xpose.msra.mxu0 %v1157
        %2222 = vmatpush.bf16.xpose.msra.mxu0 %v1155
        %2223 = vmatpush.bf16.xpose.msra.mxu0 %v1153
        %2224 = vmatpush.bf16.xpose.msra.mxu0 %v1151
        %2225 = vmatmul.bf16.gmra.mxu0 %v623
        %v2226 = vpop.f32.mrf.mxu0
        %v2227 = vadd.f32 %v516, %v2226
        %v2228 = vpop.f32.mrf.mxu0
        %v2229 = vadd.f32 %v516, %v2228
        %2230 = vmatmul.bf16.gmra.mxu0 %v625
        %v2231 = vpop.f32.mrf.mxu0
        %v2232 = vadd.f32 %v516, %v2231
        %v2233 = vpop.f32.mrf.mxu0
        %v2234 = vadd.f32 %v516, %v2233
        %2235 = vmatmul.bf16.gmra.mxu0 %v627
        %v2236 = vpop.f32.mrf.mxu0
        %v2237 = vadd.f32 %v516, %v2236
        %v2238 = vpop.f32.mrf.mxu0
        %v2239 = vadd.f32 %v516, %v2238
        %2240 = vmatmul.bf16.gmra.mxu0 %v629
        %v2241 = vpop.f32.mrf.mxu0
        %v2242 = vadd.f32 %v516, %v2241
        %v2243 = vpop.f32.mrf.mxu0
        %v2244 = vadd.f32 %v516, %v2243
        %2245 = vmatmul.bf16.gmra.mxu0 %v631
        %v2246 = vpop.f32.mrf.mxu0
        %v2247 = vadd.f32 %v516, %v2246
        %v2248 = vpop.f32.mrf.mxu0
        %v2249 = vadd.f32 %v516, %v2248
        %2250 = vmatmul.bf16.gmra.mxu0 %v633
        %v2251 = vpop.f32.mrf.mxu0
        %v2252 = vadd.f32 %v516, %v2251
        %v2253 = vpop.f32.mrf.mxu0
        %v2254 = vadd.f32 %v516, %v2253
        %2255 = vmatmul.bf16.gmra.mxu0 %v635
        %v2256 = vpop.f32.mrf.mxu0
        %v2257 = vadd.f32 %v516, %v2256
        %v2258 = vpop.f32.mrf.mxu0
        %v2259 = vadd.f32 %v516, %v2258
        %2260 = vmatmul.bf16.gmra.mxu0 %v637
        %v2261 = vpop.f32.mrf.mxu0
        %v2262 = vadd.f32 %v516, %v2261
        %v2263 = vpop.f32.mrf.mxu0
        %v2264 = vadd.f32 %v516, %v2263
        %2265 = vmatmul.bf16.gmra.mxu0 %v639
        %v2266 = vpop.f32.mrf.mxu0
        %v2267 = vadd.f32 %v516, %v2266
        %v2268 = vpop.f32.mrf.mxu0
        %v2269 = vadd.f32 %v516, %v2268
        %2270 = vmatmul.bf16.gmra.mxu0 %v641
        %v2271 = vpop.f32.mrf.mxu0
        %v2272 = vadd.f32 %v516, %v2271
        %v2273 = vpop.f32.mrf.mxu0
        %v2274 = vadd.f32 %v516, %v2273
        %2275 = vmatmul.bf16.gmra.mxu0 %v643
        %v2276 = vpop.f32.mrf.mxu0
        %v2277 = vadd.f32 %v516, %v2276
        %v2278 = vpop.f32.mrf.mxu0
        %v2279 = vadd.f32 %v516, %v2278
        %2280 = vmatmul.bf16.gmra.mxu0 %v645
        %v2281 = vpop.f32.mrf.mxu0
        %v2282 = vadd.f32 %v516, %v2281
        %v2283 = vpop.f32.mrf.mxu0
        %v2284 = vadd.f32 %v516, %v2283
        %2285 = vmatmul.bf16.gmra.mxu0 %v647
        %v2286 = vpop.f32.mrf.mxu0
        %v2287 = vadd.f32 %v516, %v2286
        %v2288 = vpop.f32.mrf.mxu0
        %v2289 = vadd.f32 %v516, %v2288
        %2290 = vmatmul.bf16.gmra.mxu0 %v649
        %v2291 = vpop.f32.mrf.mxu0
        %v2292 = vadd.f32 %v516, %v2291
        %v2293 = vpop.f32.mrf.mxu0
        %v2294 = vadd.f32 %v516, %v2293
        %2295 = vmatmul.bf16.gmra.mxu0 %v651
        %v2296 = vpop.f32.mrf.mxu0
        %v2297 = vadd.f32 %v516, %v2296
        %v2298 = vpop.f32.mrf.mxu0
        %v2299 = vadd.f32 %v516, %v2298
        %2300 = vmatmul.bf16.gmra.mxu0 %v653
        %v2301 = vpop.f32.mrf.mxu0
        %v2302 = vadd.f32 %v516, %v2301
        %v2303 = vpop.f32.mrf.mxu0
        %v2304 = vadd.f32 %v516, %v2303
        %2305 = vdwg.mxu0
        %2306 = vmatpush.bf16.xpose.msra.mxu0 %v1166
        %2307 = vmatpush.bf16.xpose.msra.mxu0 %v1164
        %2308 = vmatpush.bf16.xpose.msra.mxu0 %v1162
        %2309 = vmatpush.bf16.xpose.msra.mxu0 %v1160
        %2310 = vmatpush.bf16.xpose.msra.mxu0 %v1158
        %2311 = vmatpush.bf16.xpose.msra.mxu0 %v1156
        %2312 = vmatpush.bf16.xpose.msra.mxu0 %v1154
        %2313 = vmatpush.bf16.xpose.msra.mxu0 %v1152
        %2314 = vmatmul.bf16.gmra.mxu0 %v624
        %v2315 = vpop.f32.mrf.mxu0
        %v2316 = vadd.f32 %v2227, %v2315
        %v2317 = vpop.f32.mrf.mxu0
        %v2318 = vadd.f32 %v2229, %v2317
        %2319 = vmatmul.bf16.gmra.mxu0 %v626
        %v2320 = vpop.f32.mrf.mxu0
        %v2321 = vadd.f32 %v2232, %v2320
        %v2322 = vpop.f32.mrf.mxu0
        %v2323 = vadd.f32 %v2234, %v2322
        %2324 = vmatmul.bf16.gmra.mxu0 %v628
        %v2325 = vpop.f32.mrf.mxu0
        %v2326 = vadd.f32 %v2237, %v2325
        %v2327 = vpop.f32.mrf.mxu0
        %v2328 = vadd.f32 %v2239, %v2327
        %2329 = vmatmul.bf16.gmra.mxu0 %v630
        %v2330 = vpop.f32.mrf.mxu0
        %v2331 = vadd.f32 %v2242, %v2330
        %v2332 = vpop.f32.mrf.mxu0
        %v2333 = vadd.f32 %v2244, %v2332
        %2334 = vmatmul.bf16.gmra.mxu0 %v632
        %v2335 = vpop.f32.mrf.mxu0
        %v2336 = vadd.f32 %v2247, %v2335
        %v2337 = vpop.f32.mrf.mxu0
        %v2338 = vadd.f32 %v2249, %v2337
        %2339 = vmatmul.bf16.gmra.mxu0 %v634
        %v2340 = vpop.f32.mrf.mxu0
        %v2341 = vadd.f32 %v2252, %v2340
        %v2342 = vpop.f32.mrf.mxu0
        %v2343 = vadd.f32 %v2254, %v2342
        %2344 = vmatmul.bf16.gmra.mxu0 %v636
        %v2345 = vpop.f32.mrf.mxu0
        %v2346 = vadd.f32 %v2257, %v2345
        %v2347 = vpop.f32.mrf.mxu0
        %v2348 = vadd.f32 %v2259, %v2347
        %2349 = vmatmul.bf16.gmra.mxu0 %v638
        %v2350 = vpop.f32.mrf.mxu0
        %v2351 = vadd.f32 %v2262, %v2350
        %v2352 = vpop.f32.mrf.mxu0
        %v2353 = vadd.f32 %v2264, %v2352
        %2354 = vmatmul.bf16.gmra.mxu0 %v640
        %v2355 = vpop.f32.mrf.mxu0
        %v2356 = vadd.f32 %v2267, %v2355
        %v2357 = vpop.f32.mrf.mxu0
        %v2358 = vadd.f32 %v2269, %v2357
        %2359 = vmatmul.bf16.gmra.mxu0 %v642
        %v2360 = vpop.f32.mrf.mxu0
        %v2361 = vadd.f32 %v2272, %v2360
        %v2362 = vpop.f32.mrf.mxu0
        %v2363 = vadd.f32 %v2274, %v2362
        %2364 = vmatmul.bf16.gmra.mxu0 %v644
        %v2365 = vpop.f32.mrf.mxu0
        %v2366 = vadd.f32 %v2277, %v2365
        %v2367 = vpop.f32.mrf.mxu0
        %v2368 = vadd.f32 %v2279, %v2367
        %2369 = vmatmul.bf16.gmra.mxu0 %v646
        %v2370 = vpop.f32.mrf.mxu0
        %v2371 = vadd.f32 %v2282, %v2370
        %v2372 = vpop.f32.mrf.mxu0
        %v2373 = vadd.f32 %v2284, %v2372
        %2374 = vmatmul.bf16.gmra.mxu0 %v648
        %v2375 = vpop.f32.mrf.mxu0
        %v2376 = vadd.f32 %v2287, %v2375
        %v2377 = vpop.f32.mrf.mxu0
        %v2378 = vadd.f32 %v2289, %v2377
        %2379 = vmatmul.bf16.gmra.mxu0 %v650
        %v2380 = vpop.f32.mrf.mxu0
        %v2381 = vadd.f32 %v2292, %v2380
        %v2382 = vpop.f32.mrf.mxu0
        %v2383 = vadd.f32 %v2294, %v2382
        %2384 = vmatmul.bf16.gmra.mxu0 %v652
        %v2385 = vpop.f32.mrf.mxu0
        %v2386 = vadd.f32 %v2297, %v2385
        %v2387 = vpop.f32.mrf.mxu0
        %v2388 = vadd.f32 %v2299, %v2387
        %2389 = vmatmul.bf16.gmra.mxu0 %v654
        %v2390 = vpop.f32.mrf.mxu0
        %v2391 = vadd.f32 %v2302, %v2390
        %v2392 = vpop.f32.mrf.mxu0
        %v2393 = vadd.f32 %v2304, %v2392
        %2394 = vdwg.mxu0
        %2395 = vmatpush.bf16.xpose.msra.mxu0 %v1181
        %2396 = vmatpush.bf16.xpose.msra.mxu0 %v1179
        %2397 = vmatpush.bf16.xpose.msra.mxu0 %v1177
        %2398 = vmatpush.bf16.xpose.msra.mxu0 %v1175
        %2399 = vmatpush.bf16.xpose.msra.mxu0 %v1173
        %2400 = vmatpush.bf16.xpose.msra.mxu0 %v1171
        %2401 = vmatpush.bf16.xpose.msra.mxu0 %v1169
        %2402 = vmatpush.bf16.xpose.msra.mxu0 %v1167
        %2403 = vmatmul.bf16.gmra.mxu0 %v623
        %v2404 = vpop.f32.mrf.mxu0
        %v2405 = vadd.f32 %v517, %v2404
        %v2406 = vpop.f32.mrf.mxu0
        %v2407 = vadd.f32 %v517, %v2406
        %2408 = vmatmul.bf16.gmra.mxu0 %v625
        %v2409 = vpop.f32.mrf.mxu0
        %v2410 = vadd.f32 %v517, %v2409
        %v2411 = vpop.f32.mrf.mxu0
        %v2412 = vadd.f32 %v517, %v2411
        %2413 = vmatmul.bf16.gmra.mxu0 %v627
        %v2414 = vpop.f32.mrf.mxu0
        %v2415 = vadd.f32 %v517, %v2414
        %v2416 = vpop.f32.mrf.mxu0
        %v2417 = vadd.f32 %v517, %v2416
        %2418 = vmatmul.bf16.gmra.mxu0 %v629
        %v2419 = vpop.f32.mrf.mxu0
        %v2420 = vadd.f32 %v517, %v2419
        %v2421 = vpop.f32.mrf.mxu0
        %v2422 = vadd.f32 %v517, %v2421
        %2423 = vmatmul.bf16.gmra.mxu0 %v631
        %v2424 = vpop.f32.mrf.mxu0
        %v2425 = vadd.f32 %v517, %v2424
        %v2426 = vpop.f32.mrf.mxu0
        %v2427 = vadd.f32 %v517, %v2426
        %2428 = vmatmul.bf16.gmra.mxu0 %v633
        %v2429 = vpop.f32.mrf.mxu0
        %v2430 = vadd.f32 %v517, %v2429
        %v2431 = vpop.f32.mrf.mxu0
        %v2432 = vadd.f32 %v517, %v2431
        %2433 = vmatmul.bf16.gmra.mxu0 %v635
        %v2434 = vpop.f32.mrf.mxu0
        %v2435 = vadd.f32 %v517, %v2434
        %v2436 = vpop.f32.mrf.mxu0
        %v2437 = vadd.f32 %v517, %v2436
        %2438 = vmatmul.bf16.gmra.mxu0 %v637
        %v2439 = vpop.f32.mrf.mxu0
        %v2440 = vadd.f32 %v517, %v2439
        %v2441 = vpop.f32.mrf.mxu0
        %v2442 = vadd.f32 %v517, %v2441
        %2443 = vmatmul.bf16.gmra.mxu0 %v639
        %v2444 = vpop.f32.mrf.mxu0
        %v2445 = vadd.f32 %v517, %v2444
        %v2446 = vpop.f32.mrf.mxu0
        %v2447 = vadd.f32 %v517, %v2446
        %2448 = vmatmul.bf16.gmra.mxu0 %v641
        %v2449 = vpop.f32.mrf.mxu0
        %v2450 = vadd.f32 %v517, %v2449
        %v2451 = vpop.f32.mrf.mxu0
        %v2452 = vadd.f32 %v517, %v2451
        %2453 = vmatmul.bf16.gmra.mxu0 %v643
        %v2454 = vpop.f32.mrf.mxu0
        %v2455 = vadd.f32 %v517, %v2454
        %v2456 = vpop.f32.mrf.mxu0
        %v2457 = vadd.f32 %v517, %v2456
        %2458 = vmatmul.bf16.gmra.mxu0 %v645
        %v2459 = vpop.f32.mrf.mxu0
        %v2460 = vadd.f32 %v517, %v2459
        %v2461 = vpop.f32.mrf.mxu0
        %v2462 = vadd.f32 %v517, %v2461
        %2463 = vmatmul.bf16.gmra.mxu0 %v647
        %v2464 = vpop.f32.mrf.mxu0
        %v2465 = vadd.f32 %v517, %v2464
        %v2466 = vpop.f32.mrf.mxu0
        %v2467 = vadd.f32 %v517, %v2466
        %2468 = vmatmul.bf16.gmra.mxu0 %v649
        %v2469 = vpop.f32.mrf.mxu0
        %v2470 = vadd.f32 %v517, %v2469
        %v2471 = vpop.f32.mrf.mxu0
        %v2472 = vadd.f32 %v517, %v2471
        %2473 = vmatmul.bf16.gmra.mxu0 %v651
        %v2474 = vpop.f32.mrf.mxu0
        %v2475 = vadd.f32 %v517, %v2474
        %v2476 = vpop.f32.mrf.mxu0
        %v2477 = vadd.f32 %v517, %v2476
        %2478 = vmatmul.bf16.gmra.mxu0 %v653
        %v2479 = vpop.f32.mrf.mxu0
        %v2480 = vadd.f32 %v517, %v2479
        %v2481 = vpop.f32.mrf.mxu0
        %v2482 = vadd.f32 %v517, %v2481
        %2483 = vdwg.mxu0
        %2484 = vmatpush.bf16.xpose.msra.mxu0 %v1182
        %2485 = vmatpush.bf16.xpose.msra.mxu0 %v1180
        %2486 = vmatpush.bf16.xpose.msra.mxu0 %v1178
        %2487 = vmatpush.bf16.xpose.msra.mxu0 %v1176
        %2488 = vmatpush.bf16.xpose.msra.mxu0 %v1174
        %2489 = vmatpush.bf16.xpose.msra.mxu0 %v1172
        %2490 = vmatpush.bf16.xpose.msra.mxu0 %v1170
        %2491 = vmatpush.bf16.xpose.msra.mxu0 %v1168
        %2492 = vmatmul.bf16.gmra.mxu0 %v624
        %v2493 = vpop.f32.mrf.mxu0
        %v2494 = vadd.f32 %v2405, %v2493
        %v2495 = vpop.f32.mrf.mxu0
        %v2496 = vadd.f32 %v2407, %v2495
        %2497 = vmatmul.bf16.gmra.mxu0 %v626
        %v2498 = vpop.f32.mrf.mxu0
        %v2499 = vadd.f32 %v2410, %v2498
        %v2500 = vpop.f32.mrf.mxu0
        %v2501 = vadd.f32 %v2412, %v2500
        %2502 = vmatmul.bf16.gmra.mxu0 %v628
        %v2503 = vpop.f32.mrf.mxu0
        %v2504 = vadd.f32 %v2415, %v2503
        %v2505 = vpop.f32.mrf.mxu0
        %v2506 = vadd.f32 %v2417, %v2505
        %2507 = vmatmul.bf16.gmra.mxu0 %v630
        %v2508 = vpop.f32.mrf.mxu0
        %v2509 = vadd.f32 %v2420, %v2508
        %v2510 = vpop.f32.mrf.mxu0
        %v2511 = vadd.f32 %v2422, %v2510
        %2512 = vmatmul.bf16.gmra.mxu0 %v632
        %v2513 = vpop.f32.mrf.mxu0
        %v2514 = vadd.f32 %v2425, %v2513
        %v2515 = vpop.f32.mrf.mxu0
        %v2516 = vadd.f32 %v2427, %v2515
        %2517 = vmatmul.bf16.gmra.mxu0 %v634
        %v2518 = vpop.f32.mrf.mxu0
        %v2519 = vadd.f32 %v2430, %v2518
        %v2520 = vpop.f32.mrf.mxu0
        %v2521 = vadd.f32 %v2432, %v2520
        %2522 = vmatmul.bf16.gmra.mxu0 %v636
        %v2523 = vpop.f32.mrf.mxu0
        %v2524 = vadd.f32 %v2435, %v2523
        %v2525 = vpop.f32.mrf.mxu0
        %v2526 = vadd.f32 %v2437, %v2525
        %2527 = vmatmul.bf16.gmra.mxu0 %v638
        %v2528 = vpop.f32.mrf.mxu0
        %v2529 = vadd.f32 %v2440, %v2528
        %v2530 = vpop.f32.mrf.mxu0
        %v2531 = vadd.f32 %v2442, %v2530
        %2532 = vmatmul.bf16.gmra.mxu0 %v640
        %v2533 = vpop.f32.mrf.mxu0
        %v2534 = vadd.f32 %v2445, %v2533
        %v2535 = vpop.f32.mrf.mxu0
        %v2536 = vadd.f32 %v2447, %v2535
        %2537 = vmatmul.bf16.gmra.mxu0 %v642
        %v2538 = vpop.f32.mrf.mxu0
        %v2539 = vadd.f32 %v2450, %v2538
        %v2540 = vpop.f32.mrf.mxu0
        %v2541 = vadd.f32 %v2452, %v2540
        %2542 = vmatmul.bf16.gmra.mxu0 %v644
        %v2543 = vpop.f32.mrf.mxu0
        %v2544 = vadd.f32 %v2455, %v2543
        %v2545 = vpop.f32.mrf.mxu0
        %v2546 = vadd.f32 %v2457, %v2545
        %2547 = vmatmul.bf16.gmra.mxu0 %v646
        %v2548 = vpop.f32.mrf.mxu0
        %v2549 = vadd.f32 %v2460, %v2548
        %v2550 = vpop.f32.mrf.mxu0
        %v2551 = vadd.f32 %v2462, %v2550
        %2552 = vmatmul.bf16.gmra.mxu0 %v648
        %v2553 = vpop.f32.mrf.mxu0
        %v2554 = vadd.f32 %v2465, %v2553
        %v2555 = vpop.f32.mrf.mxu0
        %v2556 = vadd.f32 %v2467, %v2555
        %2557 = vmatmul.bf16.gmra.mxu0 %v650
        %v2558 = vpop.f32.mrf.mxu0
        %v2559 = vadd.f32 %v2470, %v2558
        %v2560 = vpop.f32.mrf.mxu0
        %v2561 = vadd.f32 %v2472, %v2560
        %2562 = vmatmul.bf16.gmra.mxu0 %v652
        %v2563 = vpop.f32.mrf.mxu0
        %v2564 = vadd.f32 %v2475, %v2563
        %v2565 = vpop.f32.mrf.mxu0
        %v2566 = vadd.f32 %v2477, %v2565
        %2567 = vmatmul.bf16.gmra.mxu0 %v654
        %v2568 = vpop.f32.mrf.mxu0
        %v2569 = vadd.f32 %v2480, %v2568
        %v2570 = vpop.f32.mrf.mxu0
        %v2571 = vadd.f32 %v2482, %v2570
        %2572 = vdwg.mxu0
        %2573 = vmatpush.bf16.xpose.msra.mxu0 %v1197
        %2574 = vmatpush.bf16.xpose.msra.mxu0 %v1195
        %2575 = vmatpush.bf16.xpose.msra.mxu0 %v1193
        %2576 = vmatpush.bf16.xpose.msra.mxu0 %v1191
        %2577 = vmatpush.bf16.xpose.msra.mxu0 %v1189
        %2578 = vmatpush.bf16.xpose.msra.mxu0 %v1187
        %2579 = vmatpush.bf16.xpose.msra.mxu0 %v1185
        %2580 = vmatpush.bf16.xpose.msra.mxu0 %v1183
        %2581 = vmatmul.bf16.gmra.mxu0 %v623
        %v2582 = vpop.f32.mrf.mxu0
        %v2583 = vadd.f32 %v518, %v2582
        %v2584 = vpop.f32.mrf.mxu0
        %v2585 = vadd.f32 %v518, %v2584
        %2586 = vmatmul.bf16.gmra.mxu0 %v625
        %v2587 = vpop.f32.mrf.mxu0
        %v2588 = vadd.f32 %v518, %v2587
        %v2589 = vpop.f32.mrf.mxu0
        %v2590 = vadd.f32 %v518, %v2589
        %2591 = vmatmul.bf16.gmra.mxu0 %v627
        %v2592 = vpop.f32.mrf.mxu0
        %v2593 = vadd.f32 %v518, %v2592
        %v2594 = vpop.f32.mrf.mxu0
        %v2595 = vadd.f32 %v518, %v2594
        %2596 = vmatmul.bf16.gmra.mxu0 %v629
        %v2597 = vpop.f32.mrf.mxu0
        %v2598 = vadd.f32 %v518, %v2597
        %v2599 = vpop.f32.mrf.mxu0
        %v2600 = vadd.f32 %v518, %v2599
        %2601 = vmatmul.bf16.gmra.mxu0 %v631
        %v2602 = vpop.f32.mrf.mxu0
        %v2603 = vadd.f32 %v518, %v2602
        %v2604 = vpop.f32.mrf.mxu0
        %v2605 = vadd.f32 %v518, %v2604
        %2606 = vmatmul.bf16.gmra.mxu0 %v633
        %v2607 = vpop.f32.mrf.mxu0
        %v2608 = vadd.f32 %v518, %v2607
        %v2609 = vpop.f32.mrf.mxu0
        %v2610 = vadd.f32 %v518, %v2609
        %2611 = vmatmul.bf16.gmra.mxu0 %v635
        %v2612 = vpop.f32.mrf.mxu0
        %v2613 = vadd.f32 %v518, %v2612
        %v2614 = vpop.f32.mrf.mxu0
        %v2615 = vadd.f32 %v518, %v2614
        %2616 = vmatmul.bf16.gmra.mxu0 %v637
        %v2617 = vpop.f32.mrf.mxu0
        %v2618 = vadd.f32 %v518, %v2617
        %v2619 = vpop.f32.mrf.mxu0
        %v2620 = vadd.f32 %v518, %v2619
        %2621 = vmatmul.bf16.gmra.mxu0 %v639
        %v2622 = vpop.f32.mrf.mxu0
        %v2623 = vadd.f32 %v518, %v2622
        %v2624 = vpop.f32.mrf.mxu0
        %v2625 = vadd.f32 %v518, %v2624
        %2626 = vmatmul.bf16.gmra.mxu0 %v641
        %v2627 = vpop.f32.mrf.mxu0
        %v2628 = vadd.f32 %v518, %v2627
        %v2629 = vpop.f32.mrf.mxu0
        %v2630 = vadd.f32 %v518, %v2629
        %2631 = vmatmul.bf16.gmra.mxu0 %v643
        %v2632 = vpop.f32.mrf.mxu0
        %v2633 = vadd.f32 %v518, %v2632
        %v2634 = vpop.f32.mrf.mxu0
        %v2635 = vadd.f32 %v518, %v2634
        %2636 = vmatmul.bf16.gmra.mxu0 %v645
        %v2637 = vpop.f32.mrf.mxu0
        %v2638 = vadd.f32 %v518, %v2637
        %v2639 = vpop.f32.mrf.mxu0
        %v2640 = vadd.f32 %v518, %v2639
        %2641 = vmatmul.bf16.gmra.mxu0 %v647
        %v2642 = vpop.f32.mrf.mxu0
        %v2643 = vadd.f32 %v518, %v2642
        %v2644 = vpop.f32.mrf.mxu0
        %v2645 = vadd.f32 %v518, %v2644
        %2646 = vmatmul.bf16.gmra.mxu0 %v649
        %v2647 = vpop.f32.mrf.mxu0
        %v2648 = vadd.f32 %v518, %v2647
        %v2649 = vpop.f32.mrf.mxu0
        %v2650 = vadd.f32 %v518, %v2649
        %2651 = vmatmul.bf16.gmra.mxu0 %v651
        %v2652 = vpop.f32.mrf.mxu0
        %v2653 = vadd.f32 %v518, %v2652
        %v2654 = vpop.f32.mrf.mxu0
        %v2655 = vadd.f32 %v518, %v2654
        %2656 = vmatmul.bf16.gmra.mxu0 %v653
        %v2657 = vpop.f32.mrf.mxu0
        %v2658 = vadd.f32 %v518, %v2657
        %v2659 = vpop.f32.mrf.mxu0
        %v2660 = vadd.f32 %v518, %v2659
        %2661 = vdwg.mxu0
        %2662 = vmatpush.bf16.xpose.msra.mxu0 %v1198
        %2663 = vmatpush.bf16.xpose.msra.mxu0 %v1196
        %2664 = vmatpush.bf16.xpose.msra.mxu0 %v1194
        %2665 = vmatpush.bf16.xpose.msra.mxu0 %v1192
        %2666 = vmatpush.bf16.xpose.msra.mxu0 %v1190
        %2667 = vmatpush.bf16.xpose.msra.mxu0 %v1188
        %2668 = vmatpush.bf16.xpose.msra.mxu0 %v1186
        %2669 = vmatpush.bf16.xpose.msra.mxu0 %v1184
        %2670 = vmatmul.bf16.gmra.mxu0 %v624
        %v2671 = vpop.f32.mrf.mxu0
        %v2672 = vadd.f32 %v2583, %v2671
        %v2673 = vpop.f32.mrf.mxu0
        %v2674 = vadd.f32 %v2585, %v2673
        %2675 = vmatmul.bf16.gmra.mxu0 %v626
        %v2676 = vpop.f32.mrf.mxu0
        %v2677 = vadd.f32 %v2588, %v2676
        %v2678 = vpop.f32.mrf.mxu0
        %v2679 = vadd.f32 %v2590, %v2678
        %2680 = vmatmul.bf16.gmra.mxu0 %v628
        %v2681 = vpop.f32.mrf.mxu0
        %v2682 = vadd.f32 %v2593, %v2681
        %v2683 = vpop.f32.mrf.mxu0
        %v2684 = vadd.f32 %v2595, %v2683
        %2685 = vmatmul.bf16.gmra.mxu0 %v630
        %v2686 = vpop.f32.mrf.mxu0
        %v2687 = vadd.f32 %v2598, %v2686
        %v2688 = vpop.f32.mrf.mxu0
        %v2689 = vadd.f32 %v2600, %v2688
        %2690 = vmatmul.bf16.gmra.mxu0 %v632
        %v2691 = vpop.f32.mrf.mxu0
        %v2692 = vadd.f32 %v2603, %v2691
        %v2693 = vpop.f32.mrf.mxu0
        %v2694 = vadd.f32 %v2605, %v2693
        %2695 = vmatmul.bf16.gmra.mxu0 %v634
        %v2696 = vpop.f32.mrf.mxu0
        %v2697 = vadd.f32 %v2608, %v2696
        %v2698 = vpop.f32.mrf.mxu0
        %v2699 = vadd.f32 %v2610, %v2698
        %2700 = vmatmul.bf16.gmra.mxu0 %v636
        %v2701 = vpop.f32.mrf.mxu0
        %v2702 = vadd.f32 %v2613, %v2701
        %v2703 = vpop.f32.mrf.mxu0
        %v2704 = vadd.f32 %v2615, %v2703
        %2705 = vmatmul.bf16.gmra.mxu0 %v638
        %v2706 = vpop.f32.mrf.mxu0
        %v2707 = vadd.f32 %v2618, %v2706
        %v2708 = vpop.f32.mrf.mxu0
        %v2709 = vadd.f32 %v2620, %v2708
        %2710 = vmatmul.bf16.gmra.mxu0 %v640
        %v2711 = vpop.f32.mrf.mxu0
        %v2712 = vadd.f32 %v2623, %v2711
        %v2713 = vpop.f32.mrf.mxu0
        %v2714 = vadd.f32 %v2625, %v2713
        %2715 = vmatmul.bf16.gmra.mxu0 %v642
        %v2716 = vpop.f32.mrf.mxu0
        %v2717 = vadd.f32 %v2628, %v2716
        %v2718 = vpop.f32.mrf.mxu0
        %v2719 = vadd.f32 %v2630, %v2718
        %2720 = vmatmul.bf16.gmra.mxu0 %v644
        %v2721 = vpop.f32.mrf.mxu0
        %v2722 = vadd.f32 %v2633, %v2721
        %v2723 = vpop.f32.mrf.mxu0
        %v2724 = vadd.f32 %v2635, %v2723
        %2725 = vmatmul.bf16.gmra.mxu0 %v646
        %v2726 = vpop.f32.mrf.mxu0
        %v2727 = vadd.f32 %v2638, %v2726
        %v2728 = vpop.f32.mrf.mxu0
        %v2729 = vadd.f32 %v2640, %v2728
        %2730 = vmatmul.bf16.gmra.mxu0 %v648
        %v2731 = vpop.f32.mrf.mxu0
        %v2732 = vadd.f32 %v2643, %v2731
        %v2733 = vpop.f32.mrf.mxu0
        %v2734 = vadd.f32 %v2645, %v2733
        %2735 = vmatmul.bf16.gmra.mxu0 %v650
        %v2736 = vpop.f32.mrf.mxu0
        %v2737 = vadd.f32 %v2648, %v2736
        %v2738 = vpop.f32.mrf.mxu0
        %v2739 = vadd.f32 %v2650, %v2738
        %2740 = vmatmul.bf16.gmra.mxu0 %v652
        %v2741 = vpop.f32.mrf.mxu0
        %v2742 = vadd.f32 %v2653, %v2741
        %v2743 = vpop.f32.mrf.mxu0
        %v2744 = vadd.f32 %v2655, %v2743
        %2745 = vmatmul.bf16.gmra.mxu0 %v654
        %v2746 = vpop.f32.mrf.mxu0
        %v2747 = vadd.f32 %v2658, %v2746
        %v2748 = vpop.f32.mrf.mxu0
        %v2749 = vadd.f32 %v2660, %v2748
        %2750 = vdwg.mxu0
        %v2751 = vmax.f32 %v1426, 0.0
        %v2752 = vmax.f32 %v1604, 0.0
        %v2753 = vmax.f32 %v1782, 0.0
        %v2754 = vmax.f32 %v1960, 0.0
        %v2755 = vmax.f32 %v2138, 0.0
        %v2756 = vmax.f32 %v2316, 0.0
        %v2757 = vmax.f32 %v2494, 0.0
        %v2758 = vmax.f32 %v2672, 0.0
        %v2759 = vmax.f32 %v1428, 0.0
        %v2760 = vmax.f32 %v1606, 0.0
        %v2761 = vmax.f32 %v1784, 0.0
        %v2762 = vmax.f32 %v1962, 0.0
        %v2763 = vmax.f32 %v2140, 0.0
        %v2764 = vmax.f32 %v2318, 0.0
        %v2765 = vmax.f32 %v2496, 0.0
        %v2766 = vmax.f32 %v2674, 0.0
        %v2767 = vmax.f32 %v1431, 0.0
        %v2768 = vmax.f32 %v1609, 0.0
        %v2769 = vmax.f32 %v1787, 0.0
        %v2770 = vmax.f32 %v1965, 0.0
        %v2771 = vmax.f32 %v2143, 0.0
        %v2772 = vmax.f32 %v2321, 0.0
        %v2773 = vmax.f32 %v2499, 0.0
        %v2774 = vmax.f32 %v2677, 0.0
        %v2775 = vmax.f32 %v1433, 0.0
        %v2776 = vmax.f32 %v1611, 0.0
        %v2777 = vmax.f32 %v1789, 0.0
        %v2778 = vmax.f32 %v1967, 0.0
        %v2779 = vmax.f32 %v2145, 0.0
        %v2780 = vmax.f32 %v2323, 0.0
        %v2781 = vmax.f32 %v2501, 0.0
        %v2782 = vmax.f32 %v2679, 0.0
        %v2783 = vmax.f32 %v1436, 0.0
        %v2784 = vmax.f32 %v1614, 0.0
        %v2785 = vmax.f32 %v1792, 0.0
        %v2786 = vmax.f32 %v1970, 0.0
        %v2787 = vmax.f32 %v2148, 0.0
        %v2788 = vmax.f32 %v2326, 0.0
        %v2789 = vmax.f32 %v2504, 0.0
        %v2790 = vmax.f32 %v2682, 0.0
        %v2791 = vmax.f32 %v1438, 0.0
        %v2792 = vmax.f32 %v1616, 0.0
        %v2793 = vmax.f32 %v1794, 0.0
        %v2794 = vmax.f32 %v1972, 0.0
        %v2795 = vmax.f32 %v2150, 0.0
        %v2796 = vmax.f32 %v2328, 0.0
        %v2797 = vmax.f32 %v2506, 0.0
        %v2798 = vmax.f32 %v2684, 0.0
        %v2799 = vmax.f32 %v1441, 0.0
        %v2800 = vmax.f32 %v1619, 0.0
        %v2801 = vmax.f32 %v1797, 0.0
        %v2802 = vmax.f32 %v1975, 0.0
        %v2803 = vmax.f32 %v2153, 0.0
        %v2804 = vmax.f32 %v2331, 0.0
        %v2805 = vmax.f32 %v2509, 0.0
        %v2806 = vmax.f32 %v2687, 0.0
        %v2807 = vmax.f32 %v1443, 0.0
        %v2808 = vmax.f32 %v1621, 0.0
        %v2809 = vmax.f32 %v1799, 0.0
        %v2810 = vmax.f32 %v1977, 0.0
        %v2811 = vmax.f32 %v2155, 0.0
        %v2812 = vmax.f32 %v2333, 0.0
        %v2813 = vmax.f32 %v2511, 0.0
        %v2814 = vmax.f32 %v2689, 0.0
        %v2815 = vmax.f32 %v1446, 0.0
        %v2816 = vmax.f32 %v1624, 0.0
        %v2817 = vmax.f32 %v1802, 0.0
        %v2818 = vmax.f32 %v1980, 0.0
        %v2819 = vmax.f32 %v2158, 0.0
        %v2820 = vmax.f32 %v2336, 0.0
        %v2821 = vmax.f32 %v2514, 0.0
        %v2822 = vmax.f32 %v2692, 0.0
        %v2823 = vmax.f32 %v1448, 0.0
        %v2824 = vmax.f32 %v1626, 0.0
        %v2825 = vmax.f32 %v1804, 0.0
        %v2826 = vmax.f32 %v1982, 0.0
        %v2827 = vmax.f32 %v2160, 0.0
        %v2828 = vmax.f32 %v2338, 0.0
        %v2829 = vmax.f32 %v2516, 0.0
        %v2830 = vmax.f32 %v2694, 0.0
        %v2831 = vmax.f32 %v1451, 0.0
        %v2832 = vmax.f32 %v1629, 0.0
        %v2833 = vmax.f32 %v1807, 0.0
        %v2834 = vmax.f32 %v1985, 0.0
        %v2835 = vmax.f32 %v2163, 0.0
        %v2836 = vmax.f32 %v2341, 0.0
        %v2837 = vmax.f32 %v2519, 0.0
        %v2838 = vmax.f32 %v2697, 0.0
        %v2839 = vmax.f32 %v1453, 0.0
        %v2840 = vmax.f32 %v1631, 0.0
        %v2841 = vmax.f32 %v1809, 0.0
        %v2842 = vmax.f32 %v1987, 0.0
        %v2843 = vmax.f32 %v2165, 0.0
        %v2844 = vmax.f32 %v2343, 0.0
        %v2845 = vmax.f32 %v2521, 0.0
        %v2846 = vmax.f32 %v2699, 0.0
        %v2847 = vmax.f32 %v1456, 0.0
        %v2848 = vmax.f32 %v1634, 0.0
        %v2849 = vmax.f32 %v1812, 0.0
        %v2850 = vmax.f32 %v1990, 0.0
        %v2851 = vmax.f32 %v2168, 0.0
        %v2852 = vmax.f32 %v2346, 0.0
        %v2853 = vmax.f32 %v2524, 0.0
        %v2854 = vmax.f32 %v2702, 0.0
        %v2855 = vmax.f32 %v1458, 0.0
        %v2856 = vmax.f32 %v1636, 0.0
        %v2857 = vmax.f32 %v1814, 0.0
        %v2858 = vmax.f32 %v1992, 0.0
        %v2859 = vmax.f32 %v2170, 0.0
        %v2860 = vmax.f32 %v2348, 0.0
        %v2861 = vmax.f32 %v2526, 0.0
        %v2862 = vmax.f32 %v2704, 0.0
        %v2863 = vmax.f32 %v1461, 0.0
        %v2864 = vmax.f32 %v1639, 0.0
        %v2865 = vmax.f32 %v1817, 0.0
        %v2866 = vmax.f32 %v1995, 0.0
        %v2867 = vmax.f32 %v2173, 0.0
        %v2868 = vmax.f32 %v2351, 0.0
        %v2869 = vmax.f32 %v2529, 0.0
        %v2870 = vmax.f32 %v2707, 0.0
        %v2871 = vmax.f32 %v1463, 0.0
        %v2872 = vmax.f32 %v1641, 0.0
        %v2873 = vmax.f32 %v1819, 0.0
        %v2874 = vmax.f32 %v1997, 0.0
        %v2875 = vmax.f32 %v2175, 0.0
        %v2876 = vmax.f32 %v2353, 0.0
        %v2877 = vmax.f32 %v2531, 0.0
        %v2878 = vmax.f32 %v2709, 0.0
        %v2879 = vmax.f32 %v1466, 0.0
        %v2880 = vmax.f32 %v1644, 0.0
        %v2881 = vmax.f32 %v1822, 0.0
        %v2882 = vmax.f32 %v2000, 0.0
        %v2883 = vmax.f32 %v2178, 0.0
        %v2884 = vmax.f32 %v2356, 0.0
        %v2885 = vmax.f32 %v2534, 0.0
        %v2886 = vmax.f32 %v2712, 0.0
        %v2887 = vmax.f32 %v1468, 0.0
        %v2888 = vmax.f32 %v1646, 0.0
        %v2889 = vmax.f32 %v1824, 0.0
        %v2890 = vmax.f32 %v2002, 0.0
        %v2891 = vmax.f32 %v2180, 0.0
        %v2892 = vmax.f32 %v2358, 0.0
        %v2893 = vmax.f32 %v2536, 0.0
        %v2894 = vmax.f32 %v2714, 0.0
        %v2895 = vmax.f32 %v1471, 0.0
        %v2896 = vmax.f32 %v1649, 0.0
        %v2897 = vmax.f32 %v1827, 0.0
        %v2898 = vmax.f32 %v2005, 0.0
        %v2899 = vmax.f32 %v2183, 0.0
        %v2900 = vmax.f32 %v2361, 0.0
        %v2901 = vmax.f32 %v2539, 0.0
        %v2902 = vmax.f32 %v2717, 0.0
        %v2903 = vmax.f32 %v1473, 0.0
        %v2904 = vmax.f32 %v1651, 0.0
        %v2905 = vmax.f32 %v1829, 0.0
        %v2906 = vmax.f32 %v2007, 0.0
        %v2907 = vmax.f32 %v2185, 0.0
        %v2908 = vmax.f32 %v2363, 0.0
        %v2909 = vmax.f32 %v2541, 0.0
        %v2910 = vmax.f32 %v2719, 0.0
        %v2911 = vmax.f32 %v1476, 0.0
        %v2912 = vmax.f32 %v1654, 0.0
        %v2913 = vmax.f32 %v1832, 0.0
        %v2914 = vmax.f32 %v2010, 0.0
        %v2915 = vmax.f32 %v2188, 0.0
        %v2916 = vmax.f32 %v2366, 0.0
        %v2917 = vmax.f32 %v2544, 0.0
        %v2918 = vmax.f32 %v2722, 0.0
        %v2919 = vmax.f32 %v1478, 0.0
        %v2920 = vmax.f32 %v1656, 0.0
        %v2921 = vmax.f32 %v1834, 0.0
        %v2922 = vmax.f32 %v2012, 0.0
        %v2923 = vmax.f32 %v2190, 0.0
        %v2924 = vmax.f32 %v2368, 0.0
        %v2925 = vmax.f32 %v2546, 0.0
        %v2926 = vmax.f32 %v2724, 0.0
        %v2927 = vmax.f32 %v1481, 0.0
        %v2928 = vmax.f32 %v1659, 0.0
        %v2929 = vmax.f32 %v1837, 0.0
        %v2930 = vmax.f32 %v2015, 0.0
        %v2931 = vmax.f32 %v2193, 0.0
        %v2932 = vmax.f32 %v2371, 0.0
        %v2933 = vmax.f32 %v2549, 0.0
        %v2934 = vmax.f32 %v2727, 0.0
        %v2935 = vmax.f32 %v1483, 0.0
        %v2936 = vmax.f32 %v1661, 0.0
        %v2937 = vmax.f32 %v1839, 0.0
        %v2938 = vmax.f32 %v2017, 0.0
        %v2939 = vmax.f32 %v2195, 0.0
        %v2940 = vmax.f32 %v2373, 0.0
        %v2941 = vmax.f32 %v2551, 0.0
        %v2942 = vmax.f32 %v2729, 0.0
        %v2943 = vmax.f32 %v1486, 0.0
        %v2944 = vmax.f32 %v1664, 0.0
        %v2945 = vmax.f32 %v1842, 0.0
        %v2946 = vmax.f32 %v2020, 0.0
        %v2947 = vmax.f32 %v2198, 0.0
        %v2948 = vmax.f32 %v2376, 0.0
        %v2949 = vmax.f32 %v2554, 0.0
        %v2950 = vmax.f32 %v2732, 0.0
        %v2951 = vmax.f32 %v1488, 0.0
        %v2952 = vmax.f32 %v1666, 0.0
        %v2953 = vmax.f32 %v1844, 0.0
        %v2954 = vmax.f32 %v2022, 0.0
        %v2955 = vmax.f32 %v2200, 0.0
        %v2956 = vmax.f32 %v2378, 0.0
        %v2957 = vmax.f32 %v2556, 0.0
        %v2958 = vmax.f32 %v2734, 0.0
        %v2959 = vmax.f32 %v1491, 0.0
        %v2960 = vmax.f32 %v1669, 0.0
        %v2961 = vmax.f32 %v1847, 0.0
        %v2962 = vmax.f32 %v2025, 0.0
        %v2963 = vmax.f32 %v2203, 0.0
        %v2964 = vmax.f32 %v2381, 0.0
        %v2965 = vmax.f32 %v2559, 0.0
        %v2966 = vmax.f32 %v2737, 0.0
        %v2967 = vmax.f32 %v1493, 0.0
        %v2968 = vmax.f32 %v1671, 0.0
        %v2969 = vmax.f32 %v1849, 0.0
        %v2970 = vmax.f32 %v2027, 0.0
        %v2971 = vmax.f32 %v2205, 0.0
        %v2972 = vmax.f32 %v2383, 0.0
        %v2973 = vmax.f32 %v2561, 0.0
        %v2974 = vmax.f32 %v2739, 0.0
        %v2975 = vmax.f32 %v1496, 0.0
        %v2976 = vmax.f32 %v1674, 0.0
        %v2977 = vmax.f32 %v1852, 0.0
        %v2978 = vmax.f32 %v2030, 0.0
        %v2979 = vmax.f32 %v2208, 0.0
        %v2980 = vmax.f32 %v2386, 0.0
        %v2981 = vmax.f32 %v2564, 0.0
        %v2982 = vmax.f32 %v2742, 0.0
        %v2983 = vmax.f32 %v1498, 0.0
        %v2984 = vmax.f32 %v1676, 0.0
        %v2985 = vmax.f32 %v1854, 0.0
        %v2986 = vmax.f32 %v2032, 0.0
        %v2987 = vmax.f32 %v2210, 0.0
        %v2988 = vmax.f32 %v2388, 0.0
        %v2989 = vmax.f32 %v2566, 0.0
        %v2990 = vmax.f32 %v2744, 0.0
        %v2991 = vmax.f32 %v1501, 0.0
        %v2992 = vmax.f32 %v1679, 0.0
        %v2993 = vmax.f32 %v1857, 0.0
        %v2994 = vmax.f32 %v2035, 0.0
        %v2995 = vmax.f32 %v2213, 0.0
        %v2996 = vmax.f32 %v2391, 0.0
        %v2997 = vmax.f32 %v2569, 0.0
        %v2998 = vmax.f32 %v2747, 0.0
        %v2999 = vmax.f32 %v1503, 0.0
        %v3000 = vmax.f32 %v1681, 0.0
        %v3001 = vmax.f32 %v1859, 0.0
        %v3002 = vmax.f32 %v2037, 0.0
        %v3003 = vmax.f32 %v2215, 0.0
        %v3004 = vmax.f32 %v2393, 0.0
        %v3005 = vmax.f32 %v2571, 0.0
        %v3006 = vmax.f32 %v2749, 0.0
        %v3007 = vpack.c.bf16 %v2759, %v2751
        %v3008 = vpack.c.bf16 %v2760, %v2752
        %v3009 = vpack.c.bf16 %v2761, %v2753
        %v3010 = vpack.c.bf16 %v2762, %v2754
        %v3011 = vpack.c.bf16 %v2763, %v2755
        %v3012 = vpack.c.bf16 %v2764, %v2756
        %v3013 = vpack.c.bf16 %v2765, %v2757
        %v3014 = vpack.c.bf16 %v2766, %v2758
        %v3015 = vpack.c.bf16 %v2775, %v2767
        %v3016 = vpack.c.bf16 %v2776, %v2768
        %v3017 = vpack.c.bf16 %v2777, %v2769
        %v3018 = vpack.c.bf16 %v2778, %v2770
        %v3019 = vpack.c.bf16 %v2779, %v2771
        %v3020 = vpack.c.bf16 %v2780, %v2772
        %v3021 = vpack.c.bf16 %v2781, %v2773
        %v3022 = vpack.c.bf16 %v2782, %v2774
        %v3023 = vpack.c.bf16 %v2791, %v2783
        %v3024 = vpack.c.bf16 %v2792, %v2784
        %v3025 = vpack.c.bf16 %v2793, %v2785
        %v3026 = vpack.c.bf16 %v2794, %v2786
        %v3027 = vpack.c.bf16 %v2795, %v2787
        %v3028 = vpack.c.bf16 %v2796, %v2788
        %v3029 = vpack.c.bf16 %v2797, %v2789
        %v3030 = vpack.c.bf16 %v2798, %v2790
        %v3031 = vpack.c.bf16 %v2807, %v2799
        %v3032 = vpack.c.bf16 %v2808, %v2800
        %v3033 = vpack.c.bf16 %v2809, %v2801
        %v3034 = vpack.c.bf16 %v2810, %v2802
        %v3035 = vpack.c.bf16 %v2811, %v2803
        %v3036 = vpack.c.bf16 %v2812, %v2804
        %v3037 = vpack.c.bf16 %v2813, %v2805
        %v3038 = vpack.c.bf16 %v2814, %v2806
        %v3039 = vpack.c.bf16 %v2823, %v2815
        %v3040 = vpack.c.bf16 %v2824, %v2816
        %v3041 = vpack.c.bf16 %v2825, %v2817
        %v3042 = vpack.c.bf16 %v2826, %v2818
        %v3043 = vpack.c.bf16 %v2827, %v2819
        %v3044 = vpack.c.bf16 %v2828, %v2820
        %v3045 = vpack.c.bf16 %v2829, %v2821
        %v3046 = vpack.c.bf16 %v2830, %v2822
        %v3047 = vpack.c.bf16 %v2839, %v2831
        %v3048 = vpack.c.bf16 %v2840, %v2832
        %v3049 = vpack.c.bf16 %v2841, %v2833
        %v3050 = vpack.c.bf16 %v2842, %v2834
        %v3051 = vpack.c.bf16 %v2843, %v2835
        %v3052 = vpack.c.bf16 %v2844, %v2836
        %v3053 = vpack.c.bf16 %v2845, %v2837
        %v3054 = vpack.c.bf16 %v2846, %v2838
        %v3055 = vpack.c.bf16 %v2855, %v2847
        %v3056 = vpack.c.bf16 %v2856, %v2848
        %v3057 = vpack.c.bf16 %v2857, %v2849
        %v3058 = vpack.c.bf16 %v2858, %v2850
        %v3059 = vpack.c.bf16 %v2859, %v2851
        %v3060 = vpack.c.bf16 %v2860, %v2852
        %v3061 = vpack.c.bf16 %v2861, %v2853
        %v3062 = vpack.c.bf16 %v2862, %v2854
        %v3063 = vpack.c.bf16 %v2871, %v2863
        %v3064 = vpack.c.bf16 %v2872, %v2864
        %v3065 = vpack.c.bf16 %v2873, %v2865
        %v3066 = vpack.c.bf16 %v2874, %v2866
        %v3067 = vpack.c.bf16 %v2875, %v2867
        %v3068 = vpack.c.bf16 %v2876, %v2868
        %v3069 = vpack.c.bf16 %v2877, %v2869
        %v3070 = vpack.c.bf16 %v2878, %v2870
        %v3071 = vpack.c.bf16 %v2887, %v2879
        %v3072 = vpack.c.bf16 %v2888, %v2880
        %v3073 = vpack.c.bf16 %v2889, %v2881
        %v3074 = vpack.c.bf16 %v2890, %v2882
        %v3075 = vpack.c.bf16 %v2891, %v2883
        %v3076 = vpack.c.bf16 %v2892, %v2884
        %v3077 = vpack.c.bf16 %v2893, %v2885
        %v3078 = vpack.c.bf16 %v2894, %v2886
        %v3079 = vpack.c.bf16 %v2903, %v2895
        %v3080 = vpack.c.bf16 %v2904, %v2896
        %v3081 = vpack.c.bf16 %v2905, %v2897
        %v3082 = vpack.c.bf16 %v2906, %v2898
        %v3083 = vpack.c.bf16 %v2907, %v2899
        %v3084 = vpack.c.bf16 %v2908, %v2900
        %v3085 = vpack.c.bf16 %v2909, %v2901
        %v3086 = vpack.c.bf16 %v2910, %v2902
        %v3087 = vpack.c.bf16 %v2919, %v2911
        %v3088 = vpack.c.bf16 %v2920, %v2912
        %v3089 = vpack.c.bf16 %v2921, %v2913
        %v3090 = vpack.c.bf16 %v2922, %v2914
        %v3091 = vpack.c.bf16 %v2923, %v2915
        %v3092 = vpack.c.bf16 %v2924, %v2916
        %v3093 = vpack.c.bf16 %v2925, %v2917
        %v3094 = vpack.c.bf16 %v2926, %v2918
        %v3095 = vpack.c.bf16 %v2935, %v2927
        %v3096 = vpack.c.bf16 %v2936, %v2928
        %v3097 = vpack.c.bf16 %v2937, %v2929
        %v3098 = vpack.c.bf16 %v2938, %v2930
        %v3099 = vpack.c.bf16 %v2939, %v2931
        %v3100 = vpack.c.bf16 %v2940, %v2932
        %v3101 = vpack.c.bf16 %v2941, %v2933
        %v3102 = vpack.c.bf16 %v2942, %v2934
        %v3103 = vpack.c.bf16 %v2951, %v2943
        %v3104 = vpack.c.bf16 %v2952, %v2944
        %v3105 = vpack.c.bf16 %v2953, %v2945
        %v3106 = vpack.c.bf16 %v2954, %v2946
        %v3107 = vpack.c.bf16 %v2955, %v2947
        %v3108 = vpack.c.bf16 %v2956, %v2948
        %v3109 = vpack.c.bf16 %v2957, %v2949
        %v3110 = vpack.c.bf16 %v2958, %v2950
        %v3111 = vpack.c.bf16 %v2967, %v2959
        %v3112 = vpack.c.bf16 %v2968, %v2960
        %v3113 = vpack.c.bf16 %v2969, %v2961
        %v3114 = vpack.c.bf16 %v2970, %v2962
        %v3115 = vpack.c.bf16 %v2971, %v2963
        %v3116 = vpack.c.bf16 %v2972, %v2964
        %v3117 = vpack.c.bf16 %v2973, %v2965
        %v3118 = vpack.c.bf16 %v2974, %v2966
        %v3119 = vpack.c.bf16 %v2983, %v2975
        %v3120 = vpack.c.bf16 %v2984, %v2976
        %v3121 = vpack.c.bf16 %v2985, %v2977
        %v3122 = vpack.c.bf16 %v2986, %v2978
        %v3123 = vpack.c.bf16 %v2987, %v2979
        %v3124 = vpack.c.bf16 %v2988, %v2980
        %v3125 = vpack.c.bf16 %v2989, %v2981
        %v3126 = vpack.c.bf16 %v2990, %v2982
        %v3127 = vpack.c.bf16 %v2999, %v2991
        %v3128 = vpack.c.bf16 %v3000, %v2992
        %v3129 = vpack.c.bf16 %v3001, %v2993
        %v3130 = vpack.c.bf16 %v3002, %v2994
        %v3131 = vpack.c.bf16 %v3003, %v2995
        %v3132 = vpack.c.bf16 %v3004, %v2996
        %v3133 = vpack.c.bf16 %v3005, %v2997
        %v3134 = vpack.c.bf16 %v3006, %v2998
        %3135 = vst [vmem:[%s338] sm:$0xff] %v2751
        %3136 = vst [vmem:[%s338 + $0x8] sm:$0xff] %v2752
        %3137 = vst [vmem:[%s338 + $0x10] sm:$0xff] %v2753
        %3138 = vst [vmem:[%s338 + $0x18] sm:$0xff] %v2754
        %3139 = vst [vmem:[%s338 + $0x20] sm:$0xff] %v2755
        %3140 = vst [vmem:[%s338 + $0x28] sm:$0xff] %v2756
        %3141 = vst [vmem:[%s338 + $0x30] sm:$0xff] %v2757
        %3142 = vst [vmem:[%s338 + $0x38] sm:$0xff] %v2758
        %3143 = vst [vmem:[%s338 + $0x40] sm:$0xff] %v2759
        %3144 = vst [vmem:[%s338 + $0x48] sm:$0xff] %v2760
        %3145 = vst [vmem:[%s338 + $0x50] sm:$0xff] %v2761
        %3146 = vst [vmem:[%s338 + $0x58] sm:$0xff] %v2762
        %3147 = vst [vmem:[%s338 + $0x60] sm:$0xff] %v2763
        %3148 = vst [vmem:[%s338 + $0x68] sm:$0xff] %v2764
        %3149 = vst [vmem:[%s338 + $0x70] sm:$0xff] %v2765
        %3150 = vst [vmem:[%s338 + $0x78] sm:$0xff] %v2766
        %3151 = vst [vmem:[%s338 + $0x80] sm:$0xff] %v2767
        %3152 = vst [vmem:[%s338 + $0x88] sm:$0xff] %v2768
        %3153 = vst [vmem:[%s338 + $0x90] sm:$0xff] %v2769
        %3154 = vst [vmem:[%s338 + $0x98] sm:$0xff] %v2770
        %3155 = vst [vmem:[%s338 + $0xa0] sm:$0xff] %v2771
        %3156 = vst [vmem:[%s338 + $0xa8] sm:$0xff] %v2772
        %3157 = vst [vmem:[%s338 + $0xb0] sm:$0xff] %v2773
        %3158 = vst [vmem:[%s338 + $0xb8] sm:$0xff] %v2774
        %3159 = vst [vmem:[%s338 + $0xc0] sm:$0xff] %v2775
        %3160 = vst [vmem:[%s338 + $0xc8] sm:$0xff] %v2776
        %3161 = vst [vmem:[%s338 + $0xd0] sm:$0xff] %v2777
        %3162 = vst [vmem:[%s338 + $0xd8] sm:$0xff] %v2778
        %3163 = vst [vmem:[%s338 + $0xe0] sm:$0xff] %v2779
        %3164 = vst [vmem:[%s338 + $0xe8] sm:$0xff] %v2780
        %3165 = vst [vmem:[%s338 + $0xf0] sm:$0xff] %v2781
        %3166 = vst [vmem:[%s338 + $0xf8] sm:$0xff] %v2782
        %3167 = vst [vmem:[%s338 + $0x100] sm:$0xff] %v2783
        %3168 = vst [vmem:[%s338 + $0x108] sm:$0xff] %v2784
        %3169 = vst [vmem:[%s338 + $0x110] sm:$0xff] %v2785
        %3170 = vst [vmem:[%s338 + $0x118] sm:$0xff] %v2786
        %3171 = vst [vmem:[%s338 + $0x120] sm:$0xff] %v2787
        %3172 = vst [vmem:[%s338 + $0x128] sm:$0xff] %v2788
        %3173 = vst [vmem:[%s338 + $0x130] sm:$0xff] %v2789
        %3174 = vst [vmem:[%s338 + $0x138] sm:$0xff] %v2790
        %3175 = vst [vmem:[%s338 + $0x140] sm:$0xff] %v2791
        %3176 = vst [vmem:[%s338 + $0x148] sm:$0xff] %v2792
        %3177 = vst [vmem:[%s338 + $0x150] sm:$0xff] %v2793
        %3178 = vst [vmem:[%s338 + $0x158] sm:$0xff] %v2794
        %3179 = vst [vmem:[%s338 + $0x160] sm:$0xff] %v2795
        %3180 = vst [vmem:[%s338 + $0x168] sm:$0xff] %v2796
        %3181 = vst [vmem:[%s338 + $0x170] sm:$0xff] %v2797
        %3182 = vst [vmem:[%s338 + $0x178] sm:$0xff] %v2798
        %3183 = vst [vmem:[%s338 + $0x180] sm:$0xff] %v2799
        %3184 = vst [vmem:[%s338 + $0x188] sm:$0xff] %v2800
        %3185 = vst [vmem:[%s338 + $0x190] sm:$0xff] %v2801
        %3186 = vst [vmem:[%s338 + $0x198] sm:$0xff] %v2802
        %3187 = vst [vmem:[%s338 + $0x1a0] sm:$0xff] %v2803
        %3188 = vst [vmem:[%s338 + $0x1a8] sm:$0xff] %v2804
        %3189 = vst [vmem:[%s338 + $0x1b0] sm:$0xff] %v2805
        %3190 = vst [vmem:[%s338 + $0x1b8] sm:$0xff] %v2806
        %3191 = vst [vmem:[%s338 + $0x1c0] sm:$0xff] %v2807
        %3192 = vst [vmem:[%s338 + $0x1c8] sm:$0xff] %v2808
        %3193 = vst [vmem:[%s338 + $0x1d0] sm:$0xff] %v2809
        %3194 = vst [vmem:[%s338 + $0x1d8] sm:$0xff] %v2810
        %3195 = vst [vmem:[%s338 + $0x1e0] sm:$0xff] %v2811
        %3196 = vst [vmem:[%s338 + $0x1e8] sm:$0xff] %v2812
        %3197 = vst [vmem:[%s338 + $0x1f0] sm:$0xff] %v2813
        %3198 = vst [vmem:[%s338 + $0x1f8] sm:$0xff] %v2814
        %3199 = vst [vmem:[%s338 + $0x200] sm:$0xff] %v2815
        %3200 = vst [vmem:[%s338 + $0x208] sm:$0xff] %v2816
        %3201 = vst [vmem:[%s338 + $0x210] sm:$0xff] %v2817
        %3202 = vst [vmem:[%s338 + $0x218] sm:$0xff] %v2818
        %3203 = vst [vmem:[%s338 + $0x220] sm:$0xff] %v2819
        %3204 = vst [vmem:[%s338 + $0x228] sm:$0xff] %v2820
        %3205 = vst [vmem:[%s338 + $0x230] sm:$0xff] %v2821
        %3206 = vst [vmem:[%s338 + $0x238] sm:$0xff] %v2822
        %3207 = vst [vmem:[%s338 + $0x240] sm:$0xff] %v2823
        %3208 = vst [vmem:[%s338 + $0x248] sm:$0xff] %v2824
        %3209 = vst [vmem:[%s338 + $0x250] sm:$0xff] %v2825
        %3210 = vst [vmem:[%s338 + $0x258] sm:$0xff] %v2826
        %3211 = vst [vmem:[%s338 + $0x260] sm:$0xff] %v2827
        %3212 = vst [vmem:[%s338 + $0x268] sm:$0xff] %v2828
        %3213 = vst [vmem:[%s338 + $0x270] sm:$0xff] %v2829
        %3214 = vst [vmem:[%s338 + $0x278] sm:$0xff] %v2830
        %3215 = vst [vmem:[%s338 + $0x280] sm:$0xff] %v2831
        %3216 = vst [vmem:[%s338 + $0x288] sm:$0xff] %v2832
        %3217 = vst [vmem:[%s338 + $0x290] sm:$0xff] %v2833
        %3218 = vst [vmem:[%s338 + $0x298] sm:$0xff] %v2834
        %3219 = vst [vmem:[%s338 + $0x2a0] sm:$0xff] %v2835
        %3220 = vst [vmem:[%s338 + $0x2a8] sm:$0xff] %v2836
        %3221 = vst [vmem:[%s338 + $0x2b0] sm:$0xff] %v2837
        %3222 = vst [vmem:[%s338 + $0x2b8] sm:$0xff] %v2838
        %3223 = vst [vmem:[%s338 + $0x2c0] sm:$0xff] %v2839
        %3224 = vst [vmem:[%s338 + $0x2c8] sm:$0xff] %v2840
        %3225 = vst [vmem:[%s338 + $0x2d0] sm:$0xff] %v2841
        %3226 = vst [vmem:[%s338 + $0x2d8] sm:$0xff] %v2842
        %3227 = vst [vmem:[%s338 + $0x2e0] sm:$0xff] %v2843
        %3228 = vst [vmem:[%s338 + $0x2e8] sm:$0xff] %v2844
        %3229 = vst [vmem:[%s338 + $0x2f0] sm:$0xff] %v2845
        %3230 = vst [vmem:[%s338 + $0x2f8] sm:$0xff] %v2846
        %3231 = vst [vmem:[%s338 + $0x300] sm:$0xff] %v2847
        %3232 = vst [vmem:[%s338 + $0x308] sm:$0xff] %v2848
        %3233 = vst [vmem:[%s338 + $0x310] sm:$0xff] %v2849
        %3234 = vst [vmem:[%s338 + $0x318] sm:$0xff] %v2850
        %3235 = vst [vmem:[%s338 + $0x320] sm:$0xff] %v2851
        %3236 = vst [vmem:[%s338 + $0x328] sm:$0xff] %v2852
        %3237 = vst [vmem:[%s338 + $0x330] sm:$0xff] %v2853
        %3238 = vst [vmem:[%s338 + $0x338] sm:$0xff] %v2854
        %3239 = vst [vmem:[%s338 + $0x340] sm:$0xff] %v2855
        %3240 = vst [vmem:[%s338 + $0x348] sm:$0xff] %v2856
        %3241 = vst [vmem:[%s338 + $0x350] sm:$0xff] %v2857
        %3242 = vst [vmem:[%s338 + $0x358] sm:$0xff] %v2858
        %3243 = vst [vmem:[%s338 + $0x360] sm:$0xff] %v2859
        %3244 = vst [vmem:[%s338 + $0x368] sm:$0xff] %v2860
        %3245 = vst [vmem:[%s338 + $0x370] sm:$0xff] %v2861
        %3246 = vst [vmem:[%s338 + $0x378] sm:$0xff] %v2862
        %3247 = vst [vmem:[%s338 + $0x380] sm:$0xff] %v2863
        %3248 = vst [vmem:[%s338 + $0x388] sm:$0xff] %v2864
        %3249 = vst [vmem:[%s338 + $0x390] sm:$0xff] %v2865
        %3250 = vst [vmem:[%s338 + $0x398] sm:$0xff] %v2866
        %3251 = vst [vmem:[%s338 + $0x3a0] sm:$0xff] %v2867
        %3252 = vst [vmem:[%s338 + $0x3a8] sm:$0xff] %v2868
        %3253 = vst [vmem:[%s338 + $0x3b0] sm:$0xff] %v2869
        %3254 = vst [vmem:[%s338 + $0x3b8] sm:$0xff] %v2870
        %3255 = vst [vmem:[%s338 + $0x3c0] sm:$0xff] %v2871
        %3256 = vst [vmem:[%s338 + $0x3c8] sm:$0xff] %v2872
        %3257 = vst [vmem:[%s338 + $0x3d0] sm:$0xff] %v2873
        %3258 = vst [vmem:[%s338 + $0x3d8] sm:$0xff] %v2874
        %3259 = vst [vmem:[%s338 + $0x3e0] sm:$0xff] %v2875
        %3260 = vst [vmem:[%s338 + $0x3e8] sm:$0xff] %v2876
        %3261 = vst [vmem:[%s338 + $0x3f0] sm:$0xff] %v2877
        %3262 = vst [vmem:[%s338 + $0x3f8] sm:$0xff] %v2878
        %3263 = vst [vmem:[%s338 + $0x400] sm:$0xff] %v2879
        %3264 = vst [vmem:[%s338 + $0x408] sm:$0xff] %v2880
        %3265 = vst [vmem:[%s338 + $0x410] sm:$0xff] %v2881
        %3266 = vst [vmem:[%s338 + $0x418] sm:$0xff] %v2882
        %3267 = vst [vmem:[%s338 + $0x420] sm:$0xff] %v2883
        %3268 = vst [vmem:[%s338 + $0x428] sm:$0xff] %v2884
        %3269 = vst [vmem:[%s338 + $0x430] sm:$0xff] %v2885
        %3270 = vst [vmem:[%s338 + $0x438] sm:$0xff] %v2886
        %3271 = vst [vmem:[%s338 + $0x440] sm:$0xff] %v2887
        %3272 = vst [vmem:[%s338 + $0x448] sm:$0xff] %v2888
        %3273 = vst [vmem:[%s338 + $0x450] sm:$0xff] %v2889
        %3274 = vst [vmem:[%s338 + $0x458] sm:$0xff] %v2890
        %3275 = vst [vmem:[%s338 + $0x460] sm:$0xff] %v2891
        %3276 = vst [vmem:[%s338 + $0x468] sm:$0xff] %v2892
        %3277 = vst [vmem:[%s338 + $0x470] sm:$0xff] %v2893
        %3278 = vst [vmem:[%s338 + $0x478] sm:$0xff] %v2894
        %3279 = vst [vmem:[%s338 + $0x480] sm:$0xff] %v2895
        %3280 = vst [vmem:[%s338 + $0x488] sm:$0xff] %v2896
        %3281 = vst [vmem:[%s338 + $0x490] sm:$0xff] %v2897
        %3282 = vst [vmem:[%s338 + $0x498] sm:$0xff] %v2898
        %3283 = vst [vmem:[%s338 + $0x4a0] sm:$0xff] %v2899
        %3284 = vst [vmem:[%s338 + $0x4a8] sm:$0xff] %v2900
        %3285 = vst [vmem:[%s338 + $0x4b0] sm:$0xff] %v2901
        %3286 = vst [vmem:[%s338 + $0x4b8] sm:$0xff] %v2902
        %3287 = vst [vmem:[%s338 + $0x4c0] sm:$0xff] %v2903
        %3288 = vst [vmem:[%s338 + $0x4c8] sm:$0xff] %v2904
        %3289 = vst [vmem:[%s338 + $0x4d0] sm:$0xff] %v2905
        %3290 = vst [vmem:[%s338 + $0x4d8] sm:$0xff] %v2906
        %3291 = vst [vmem:[%s338 + $0x4e0] sm:$0xff] %v2907
        %3292 = vst [vmem:[%s338 + $0x4e8] sm:$0xff] %v2908
        %3293 = vst [vmem:[%s338 + $0x4f0] sm:$0xff] %v2909
        %3294 = vst [vmem:[%s338 + $0x4f8] sm:$0xff] %v2910
        %3295 = vst [vmem:[%s338 + $0x500] sm:$0xff] %v2911
        %3296 = vst [vmem:[%s338 + $0x508] sm:$0xff] %v2912
        %3297 = vst [vmem:[%s338 + $0x510] sm:$0xff] %v2913
        %3298 = vst [vmem:[%s338 + $0x518] sm:$0xff] %v2914
        %3299 = vst [vmem:[%s338 + $0x520] sm:$0xff] %v2915
        %3300 = vst [vmem:[%s338 + $0x528] sm:$0xff] %v2916
        %3301 = vst [vmem:[%s338 + $0x530] sm:$0xff] %v2917
        %3302 = vst [vmem:[%s338 + $0x538] sm:$0xff] %v2918
        %3303 = vst [vmem:[%s338 + $0x540] sm:$0xff] %v2919
        %3304 = vst [vmem:[%s338 + $0x548] sm:$0xff] %v2920
        %3305 = vst [vmem:[%s338 + $0x550] sm:$0xff] %v2921
        %3306 = vst [vmem:[%s338 + $0x558] sm:$0xff] %v2922
        %3307 = vst [vmem:[%s338 + $0x560] sm:$0xff] %v2923
        %3308 = vst [vmem:[%s338 + $0x568] sm:$0xff] %v2924
        %3309 = vst [vmem:[%s338 + $0x570] sm:$0xff] %v2925
        %3310 = vst [vmem:[%s338 + $0x578] sm:$0xff] %v2926
        %3311 = vst [vmem:[%s338 + $0x580] sm:$0xff] %v2927
        %3312 = vst [vmem:[%s338 + $0x588] sm:$0xff] %v2928
        %3313 = vst [vmem:[%s338 + $0x590] sm:$0xff] %v2929
        %3314 = vst [vmem:[%s338 + $0x598] sm:$0xff] %v2930
        %3315 = vst [vmem:[%s338 + $0x5a0] sm:$0xff] %v2931
        %3316 = vst [vmem:[%s338 + $0x5a8] sm:$0xff] %v2932
        %3317 = vst [vmem:[%s338 + $0x5b0] sm:$0xff] %v2933
        %3318 = vst [vmem:[%s338 + $0x5b8] sm:$0xff] %v2934
        %3319 = vst [vmem:[%s338 + $0x5c0] sm:$0xff] %v2935
        %3320 = vst [vmem:[%s338 + $0x5c8] sm:$0xff] %v2936
        %3321 = vst [vmem:[%s338 + $0x5d0] sm:$0xff] %v2937
        %3322 = vst [vmem:[%s338 + $0x5d8] sm:$0xff] %v2938
        %3323 = vst [vmem:[%s338 + $0x5e0] sm:$0xff] %v2939
        %3324 = vst [vmem:[%s338 + $0x5e8] sm:$0xff] %v2940
        %3325 = vst [vmem:[%s338 + $0x5f0] sm:$0xff] %v2941
        %3326 = vst [vmem:[%s338 + $0x5f8] sm:$0xff] %v2942
        %3327 = vst [vmem:[%s338 + $0x600] sm:$0xff] %v2943
        %3328 = vst [vmem:[%s338 + $0x608] sm:$0xff] %v2944
        %3329 = vst [vmem:[%s338 + $0x610] sm:$0xff] %v2945
        %3330 = vst [vmem:[%s338 + $0x618] sm:$0xff] %v2946
        %3331 = vst [vmem:[%s338 + $0x620] sm:$0xff] %v2947
        %3332 = vst [vmem:[%s338 + $0x628] sm:$0xff] %v2948
        %3333 = vst [vmem:[%s338 + $0x630] sm:$0xff] %v2949
        %3334 = vst [vmem:[%s338 + $0x638] sm:$0xff] %v2950
        %3335 = vst [vmem:[%s338 + $0x640] sm:$0xff] %v2951
        %3336 = vst [vmem:[%s338 + $0x648] sm:$0xff] %v2952
        %3337 = vst [vmem:[%s338 + $0x650] sm:$0xff] %v2953
        %3338 = vst [vmem:[%s338 + $0x658] sm:$0xff] %v2954
        %3339 = vst [vmem:[%s338 + $0x660] sm:$0xff] %v2955
        %3340 = vst [vmem:[%s338 + $0x668] sm:$0xff] %v2956
        %3341 = vst [vmem:[%s338 + $0x670] sm:$0xff] %v2957
        %3342 = vst [vmem:[%s338 + $0x678] sm:$0xff] %v2958
        %3343 = vst [vmem:[%s338 + $0x680] sm:$0xff] %v2959
        %3344 = vst [vmem:[%s338 + $0x688] sm:$0xff] %v2960
        %3345 = vst [vmem:[%s338 + $0x690] sm:$0xff] %v2961
        %3346 = vst [vmem:[%s338 + $0x698] sm:$0xff] %v2962
        %3347 = vst [vmem:[%s338 + $0x6a0] sm:$0xff] %v2963
        %3348 = vst [vmem:[%s338 + $0x6a8] sm:$0xff] %v2964
        %3349 = vst [vmem:[%s338 + $0x6b0] sm:$0xff] %v2965
        %3350 = vst [vmem:[%s338 + $0x6b8] sm:$0xff] %v2966
        %3351 = vst [vmem:[%s338 + $0x6c0] sm:$0xff] %v2967
        %3352 = vst [vmem:[%s338 + $0x6c8] sm:$0xff] %v2968
        %3353 = vst [vmem:[%s338 + $0x6d0] sm:$0xff] %v2969
        %3354 = vst [vmem:[%s338 + $0x6d8] sm:$0xff] %v2970
        %3355 = vst [vmem:[%s338 + $0x6e0] sm:$0xff] %v2971
        %3356 = vst [vmem:[%s338 + $0x6e8] sm:$0xff] %v2972
        %3357 = vst [vmem:[%s338 + $0x6f0] sm:$0xff] %v2973
        %3358 = vst [vmem:[%s338 + $0x6f8] sm:$0xff] %v2974
        %3359 = vst [vmem:[%s338 + $0x700] sm:$0xff] %v2975
        %3360 = vst [vmem:[%s338 + $0x708] sm:$0xff] %v2976
        %3361 = vst [vmem:[%s338 + $0x710] sm:$0xff] %v2977
        %3362 = vst [vmem:[%s338 + $0x718] sm:$0xff] %v2978
        %3363 = vst [vmem:[%s338 + $0x720] sm:$0xff] %v2979
        %3364 = vst [vmem:[%s338 + $0x728] sm:$0xff] %v2980
        %3365 = vst [vmem:[%s338 + $0x730] sm:$0xff] %v2981
        %3366 = vst [vmem:[%s338 + $0x738] sm:$0xff] %v2982
        %3367 = vst [vmem:[%s338 + $0x740] sm:$0xff] %v2983
        %3368 = vst [vmem:[%s338 + $0x748] sm:$0xff] %v2984
        %3369 = vst [vmem:[%s338 + $0x750] sm:$0xff] %v2985
        %3370 = vst [vmem:[%s338 + $0x758] sm:$0xff] %v2986
        %3371 = vst [vmem:[%s338 + $0x760] sm:$0xff] %v2987
        %3372 = vst [vmem:[%s338 + $0x768] sm:$0xff] %v2988
        %3373 = vst [vmem:[%s338 + $0x770] sm:$0xff] %v2989
        %3374 = vst [vmem:[%s338 + $0x778] sm:$0xff] %v2990
        %3375 = vst [vmem:[%s338 + $0x780] sm:$0xff] %v2991
        %3376 = vst [vmem:[%s338 + $0x788] sm:$0xff] %v2992
        %3377 = vst [vmem:[%s338 + $0x790] sm:$0xff] %v2993
        %3378 = vst [vmem:[%s338 + $0x798] sm:$0xff] %v2994
        %3379 = vst [vmem:[%s338 + $0x7a0] sm:$0xff] %v2995
        %3380 = vst [vmem:[%s338 + $0x7a8] sm:$0xff] %v2996
        %3381 = vst [vmem:[%s338 + $0x7b0] sm:$0xff] %v2997
        %3382 = vst [vmem:[%s338 + $0x7b8] sm:$0xff] %v2998
        %3383 = vst [vmem:[%s338 + $0x7c0] sm:$0xff] %v2999
        %3384 = vst [vmem:[%s338 + $0x7c8] sm:$0xff] %v3000
        %3385 = vst [vmem:[%s338 + $0x7d0] sm:$0xff] %v3001
        %3386 = vst [vmem:[%s338 + $0x7d8] sm:$0xff] %v3002
        %3387 = vst [vmem:[%s338 + $0x7e0] sm:$0xff] %v3003
        %3388 = vst [vmem:[%s338 + $0x7e8] sm:$0xff] %v3004
        %3389 = vst [vmem:[%s338 + $0x7f0] sm:$0xff] %v3005
        %3390 = vst [vmem:[%s338 + $0x7f8] sm:$0xff] %v3006
        %v3391 = vld [vmem:[#allocation8] sm:$0xff]
        %v3392 = vld [vmem:[#allocation8 + $0x8] sm:$0xff]
        %v3393 = vld [vmem:[#allocation8 + $0x10] sm:$0xff]
        %v3394 = vld [vmem:[#allocation8 + $0x18] sm:$0xff]
        %v3395 = vld [vmem:[#allocation8 + $0x20] sm:$0xff]
        %v3396 = vld [vmem:[#allocation8 + $0x28] sm:$0xff]
        %v3397 = vld [vmem:[#allocation8 + $0x30] sm:$0xff]
        %v3398 = vld [vmem:[#allocation8 + $0x38] sm:$0xff]
        %v3399 = vld [vmem:[#allocation8 + $0x40] sm:$0xff]
        %v3400 = vld [vmem:[#allocation8 + $0x48] sm:$0xff]
        %v3401 = vld [vmem:[#allocation8 + $0x50] sm:$0xff]
        %v3402 = vld [vmem:[#allocation8 + $0x58] sm:$0xff]
        %v3403 = vld [vmem:[#allocation8 + $0x60] sm:$0xff]
        %v3404 = vld [vmem:[#allocation8 + $0x68] sm:$0xff]
        %v3405 = vld [vmem:[#allocation8 + $0x70] sm:$0xff]
        %v3406 = vld [vmem:[#allocation8 + $0x78] sm:$0xff]
        %v3407 = vld [vmem:[#allocation8 + $0x80] sm:$0xff]
        %v3408 = vld [vmem:[#allocation8 + $0x88] sm:$0xff]
        %v3409 = vld [vmem:[#allocation8 + $0x90] sm:$0xff]
        %v3410 = vld [vmem:[#allocation8 + $0x98] sm:$0xff]
        %v3411 = vld [vmem:[#allocation8 + $0xa0] sm:$0xff]
        %v3412 = vld [vmem:[#allocation8 + $0xa8] sm:$0xff]
        %v3413 = vld [vmem:[#allocation8 + $0xb0] sm:$0xff]
        %v3414 = vld [vmem:[#allocation8 + $0xb8] sm:$0xff]
        %v3415 = vld [vmem:[#allocation8 + $0xc0] sm:$0xff]
        %v3416 = vld [vmem:[#allocation8 + $0xc8] sm:$0xff]
        %v3417 = vld [vmem:[#allocation8 + $0xd0] sm:$0xff]
        %v3418 = vld [vmem:[#allocation8 + $0xd8] sm:$0xff]
        %v3419 = vld [vmem:[#allocation8 + $0xe0] sm:$0xff]
        %v3420 = vld [vmem:[#allocation8 + $0xe8] sm:$0xff]
        %v3421 = vld [vmem:[#allocation8 + $0xf0] sm:$0xff]
        %v3422 = vld [vmem:[#allocation8 + $0xf8] sm:$0xff]
        %v3423 = vld [vmem:[#allocation8 + $0x100] sm:$0xff]
        %v3424 = vld [vmem:[#allocation8 + $0x108] sm:$0xff]
        %v3425 = vld [vmem:[#allocation8 + $0x110] sm:$0xff]
        %v3426 = vld [vmem:[#allocation8 + $0x118] sm:$0xff]
        %v3427 = vld [vmem:[#allocation8 + $0x120] sm:$0xff]
        %v3428 = vld [vmem:[#allocation8 + $0x128] sm:$0xff]
        %v3429 = vld [vmem:[#allocation8 + $0x130] sm:$0xff]
        %v3430 = vld [vmem:[#allocation8 + $0x138] sm:$0xff]
        %v3431 = vld [vmem:[#allocation8 + $0x140] sm:$0xff]
        %v3432 = vld [vmem:[#allocation8 + $0x148] sm:$0xff]
        %v3433 = vld [vmem:[#allocation8 + $0x150] sm:$0xff]
        %v3434 = vld [vmem:[#allocation8 + $0x158] sm:$0xff]
        %v3435 = vld [vmem:[#allocation8 + $0x160] sm:$0xff]
        %v3436 = vld [vmem:[#allocation8 + $0x168] sm:$0xff]
        %v3437 = vld [vmem:[#allocation8 + $0x170] sm:$0xff]
        %v3438 = vld [vmem:[#allocation8 + $0x178] sm:$0xff]
        %v3439 = vld [vmem:[#allocation8 + $0x180] sm:$0xff]
        %v3440 = vld [vmem:[#allocation8 + $0x188] sm:$0xff]
        %v3441 = vld [vmem:[#allocation8 + $0x190] sm:$0xff]
        %v3442 = vld [vmem:[#allocation8 + $0x198] sm:$0xff]
        %v3443 = vld [vmem:[#allocation8 + $0x1a0] sm:$0xff]
        %v3444 = vld [vmem:[#allocation8 + $0x1a8] sm:$0xff]
        %v3445 = vld [vmem:[#allocation8 + $0x1b0] sm:$0xff]
        %v3446 = vld [vmem:[#allocation8 + $0x1b8] sm:$0xff]
        %v3447 = vld [vmem:[#allocation8 + $0x1c0] sm:$0xff]
        %v3448 = vld [vmem:[#allocation8 + $0x1c8] sm:$0xff]
        %v3449 = vld [vmem:[#allocation8 + $0x1d0] sm:$0xff]
        %v3450 = vld [vmem:[#allocation8 + $0x1d8] sm:$0xff]
        %v3451 = vld [vmem:[#allocation8 + $0x1e0] sm:$0xff]
        %v3452 = vld [vmem:[#allocation8 + $0x1e8] sm:$0xff]
        %v3453 = vld [vmem:[#allocation8 + $0x1f0] sm:$0xff]
        %v3454 = vld [vmem:[#allocation8 + $0x1f8] sm:$0xff]
        %v3455 = vld [vmem:[#allocation8 + $0x200] sm:$0xff]
        %v3456 = vld [vmem:[#allocation8 + $0x208] sm:$0xff]
        %v3457 = vld [vmem:[#allocation8 + $0x210] sm:$0xff]
        %v3458 = vld [vmem:[#allocation8 + $0x218] sm:$0xff]
        %v3459 = vld [vmem:[#allocation8 + $0x220] sm:$0xff]
        %v3460 = vld [vmem:[#allocation8 + $0x228] sm:$0xff]
        %v3461 = vld [vmem:[#allocation8 + $0x230] sm:$0xff]
        %v3462 = vld [vmem:[#allocation8 + $0x238] sm:$0xff]
        %v3463 = vld [vmem:[#allocation8 + $0x240] sm:$0xff]
        %v3464 = vld [vmem:[#allocation8 + $0x248] sm:$0xff]
        %v3465 = vld [vmem:[#allocation8 + $0x250] sm:$0xff]
        %v3466 = vld [vmem:[#allocation8 + $0x258] sm:$0xff]
        %v3467 = vld [vmem:[#allocation8 + $0x260] sm:$0xff]
        %v3468 = vld [vmem:[#allocation8 + $0x268] sm:$0xff]
        %v3469 = vld [vmem:[#allocation8 + $0x270] sm:$0xff]
        %v3470 = vld [vmem:[#allocation8 + $0x278] sm:$0xff]
        %v3471 = vld [vmem:[#allocation8 + $0x280] sm:$0xff]
        %v3472 = vld [vmem:[#allocation8 + $0x288] sm:$0xff]
        %v3473 = vld [vmem:[#allocation8 + $0x290] sm:$0xff]
        %v3474 = vld [vmem:[#allocation8 + $0x298] sm:$0xff]
        %v3475 = vld [vmem:[#allocation8 + $0x2a0] sm:$0xff]
        %v3476 = vld [vmem:[#allocation8 + $0x2a8] sm:$0xff]
        %v3477 = vld [vmem:[#allocation8 + $0x2b0] sm:$0xff]
        %v3478 = vld [vmem:[#allocation8 + $0x2b8] sm:$0xff]
        %v3479 = vld [vmem:[#allocation8 + $0x2c0] sm:$0xff]
        %v3480 = vld [vmem:[#allocation8 + $0x2c8] sm:$0xff]
        %v3481 = vld [vmem:[#allocation8 + $0x2d0] sm:$0xff]
        %v3482 = vld [vmem:[#allocation8 + $0x2d8] sm:$0xff]
        %v3483 = vld [vmem:[#allocation8 + $0x2e0] sm:$0xff]
        %v3484 = vld [vmem:[#allocation8 + $0x2e8] sm:$0xff]
        %v3485 = vld [vmem:[#allocation8 + $0x2f0] sm:$0xff]
        %v3486 = vld [vmem:[#allocation8 + $0x2f8] sm:$0xff]
        %v3487 = vld [vmem:[#allocation8 + $0x300] sm:$0xff]
        %v3488 = vld [vmem:[#allocation8 + $0x308] sm:$0xff]
        %v3489 = vld [vmem:[#allocation8 + $0x310] sm:$0xff]
        %v3490 = vld [vmem:[#allocation8 + $0x318] sm:$0xff]
        %v3491 = vld [vmem:[#allocation8 + $0x320] sm:$0xff]
        %v3492 = vld [vmem:[#allocation8 + $0x328] sm:$0xff]
        %v3493 = vld [vmem:[#allocation8 + $0x330] sm:$0xff]
        %v3494 = vld [vmem:[#allocation8 + $0x338] sm:$0xff]
        %v3495 = vld [vmem:[#allocation8 + $0x340] sm:$0xff]
        %v3496 = vld [vmem:[#allocation8 + $0x348] sm:$0xff]
        %v3497 = vld [vmem:[#allocation8 + $0x350] sm:$0xff]
        %v3498 = vld [vmem:[#allocation8 + $0x358] sm:$0xff]
        %v3499 = vld [vmem:[#allocation8 + $0x360] sm:$0xff]
        %v3500 = vld [vmem:[#allocation8 + $0x368] sm:$0xff]
        %v3501 = vld [vmem:[#allocation8 + $0x370] sm:$0xff]
        %v3502 = vld [vmem:[#allocation8 + $0x378] sm:$0xff]
        %v3503 = vld [vmem:[#allocation8 + $0x380] sm:$0xff]
        %v3504 = vld [vmem:[#allocation8 + $0x388] sm:$0xff]
        %v3505 = vld [vmem:[#allocation8 + $0x390] sm:$0xff]
        %v3506 = vld [vmem:[#allocation8 + $0x398] sm:$0xff]
        %v3507 = vld [vmem:[#allocation8 + $0x3a0] sm:$0xff]
        %v3508 = vld [vmem:[#allocation8 + $0x3a8] sm:$0xff]
        %v3509 = vld [vmem:[#allocation8 + $0x3b0] sm:$0xff]
        %v3510 = vld [vmem:[#allocation8 + $0x3b8] sm:$0xff]
        %v3511 = vld [vmem:[#allocation8 + $0x3c0] sm:$0xff]
        %v3512 = vld [vmem:[#allocation8 + $0x3c8] sm:$0xff]
        %v3513 = vld [vmem:[#allocation8 + $0x3d0] sm:$0xff]
        %v3514 = vld [vmem:[#allocation8 + $0x3d8] sm:$0xff]
        %v3515 = vld [vmem:[#allocation8 + $0x3e0] sm:$0xff]
        %v3516 = vld [vmem:[#allocation8 + $0x3e8] sm:$0xff]
        %v3517 = vld [vmem:[#allocation8 + $0x3f0] sm:$0xff]
        %v3518 = vld [vmem:[#allocation8 + $0x3f8] sm:$0xff]
        %v3519 = vld [vmem:[#allocation10] sm:$0x3]
        %v3521 = vperm.slane %v3519, 0
        %v3522 = vperm.slane %v3519, 1
        %v3653 = vunpack.c.l.b16 %v3391
        %v3654 = vunpack.c.h.b16 %v3391
        %v3655 = vunpack.c.l.b16 %v3392
        %v3656 = vunpack.c.h.b16 %v3392
        %v3657 = vunpack.c.l.b16 %v3393
        %v3658 = vunpack.c.h.b16 %v3393
        %v3659 = vunpack.c.l.b16 %v3394
        %v3660 = vunpack.c.h.b16 %v3394
        %v3661 = vunpack.c.l.b16 %v3395
        %v3662 = vunpack.c.h.b16 %v3395
        %v3663 = vunpack.c.l.b16 %v3396
        %v3664 = vunpack.c.h.b16 %v3396
        %v3665 = vunpack.c.l.b16 %v3397
        %v3666 = vunpack.c.h.b16 %v3397
        %v3667 = vunpack.c.l.b16 %v3398
        %v3668 = vunpack.c.h.b16 %v3398
        %v3669 = vunpack.c.l.b16 %v3399
        %v3670 = vunpack.c.h.b16 %v3399
        %v3671 = vunpack.c.l.b16 %v3400
        %v3672 = vunpack.c.h.b16 %v3400
        %v3673 = vunpack.c.l.b16 %v3401
        %v3674 = vunpack.c.h.b16 %v3401
        %v3675 = vunpack.c.l.b16 %v3402
        %v3676 = vunpack.c.h.b16 %v3402
        %v3677 = vunpack.c.l.b16 %v3403
        %v3678 = vunpack.c.h.b16 %v3403
        %v3679 = vunpack.c.l.b16 %v3404
        %v3680 = vunpack.c.h.b16 %v3404
        %v3681 = vunpack.c.l.b16 %v3405
        %v3682 = vunpack.c.h.b16 %v3405
        %v3683 = vunpack.c.l.b16 %v3406
        %v3684 = vunpack.c.h.b16 %v3406
        %v3685 = vunpack.c.l.b16 %v3407
        %v3686 = vunpack.c.h.b16 %v3407
        %v3687 = vunpack.c.l.b16 %v3408
        %v3688 = vunpack.c.h.b16 %v3408
        %v3689 = vunpack.c.l.b16 %v3409
        %v3690 = vunpack.c.h.b16 %v3409
        %v3691 = vunpack.c.l.b16 %v3410
        %v3692 = vunpack.c.h.b16 %v3410
        %v3693 = vunpack.c.l.b16 %v3411
        %v3694 = vunpack.c.h.b16 %v3411
        %v3695 = vunpack.c.l.b16 %v3412
        %v3696 = vunpack.c.h.b16 %v3412
        %v3697 = vunpack.c.l.b16 %v3413
        %v3698 = vunpack.c.h.b16 %v3413
        %v3699 = vunpack.c.l.b16 %v3414
        %v3700 = vunpack.c.h.b16 %v3414
        %v3701 = vunpack.c.l.b16 %v3415
        %v3702 = vunpack.c.h.b16 %v3415
        %v3703 = vunpack.c.l.b16 %v3416
        %v3704 = vunpack.c.h.b16 %v3416
        %v3705 = vunpack.c.l.b16 %v3417
        %v3706 = vunpack.c.h.b16 %v3417
        %v3707 = vunpack.c.l.b16 %v3418
        %v3708 = vunpack.c.h.b16 %v3418
        %v3709 = vunpack.c.l.b16 %v3419
        %v3710 = vunpack.c.h.b16 %v3419
        %v3711 = vunpack.c.l.b16 %v3420
        %v3712 = vunpack.c.h.b16 %v3420
        %v3713 = vunpack.c.l.b16 %v3421
        %v3714 = vunpack.c.h.b16 %v3421
        %v3715 = vunpack.c.l.b16 %v3422
        %v3716 = vunpack.c.h.b16 %v3422
        %v3717 = vunpack.c.l.b16 %v3423
        %v3718 = vunpack.c.h.b16 %v3423
        %v3719 = vunpack.c.l.b16 %v3424
        %v3720 = vunpack.c.h.b16 %v3424
        %v3721 = vunpack.c.l.b16 %v3425
        %v3722 = vunpack.c.h.b16 %v3425
        %v3723 = vunpack.c.l.b16 %v3426
        %v3724 = vunpack.c.h.b16 %v3426
        %v3725 = vunpack.c.l.b16 %v3427
        %v3726 = vunpack.c.h.b16 %v3427
        %v3727 = vunpack.c.l.b16 %v3428
        %v3728 = vunpack.c.h.b16 %v3428
        %v3729 = vunpack.c.l.b16 %v3429
        %v3730 = vunpack.c.h.b16 %v3429
        %v3731 = vunpack.c.l.b16 %v3430
        %v3732 = vunpack.c.h.b16 %v3430
        %v3733 = vunpack.c.l.b16 %v3431
        %v3734 = vunpack.c.h.b16 %v3431
        %v3735 = vunpack.c.l.b16 %v3432
        %v3736 = vunpack.c.h.b16 %v3432
        %v3737 = vunpack.c.l.b16 %v3433
        %v3738 = vunpack.c.h.b16 %v3433
        %v3739 = vunpack.c.l.b16 %v3434
        %v3740 = vunpack.c.h.b16 %v3434
        %v3741 = vunpack.c.l.b16 %v3435
        %v3742 = vunpack.c.h.b16 %v3435
        %v3743 = vunpack.c.l.b16 %v3436
        %v3744 = vunpack.c.h.b16 %v3436
        %v3745 = vunpack.c.l.b16 %v3437
        %v3746 = vunpack.c.h.b16 %v3437
        %v3747 = vunpack.c.l.b16 %v3438
        %v3748 = vunpack.c.h.b16 %v3438
        %v3749 = vunpack.c.l.b16 %v3439
        %v3750 = vunpack.c.h.b16 %v3439
        %v3751 = vunpack.c.l.b16 %v3440
        %v3752 = vunpack.c.h.b16 %v3440
        %v3753 = vunpack.c.l.b16 %v3441
        %v3754 = vunpack.c.h.b16 %v3441
        %v3755 = vunpack.c.l.b16 %v3442
        %v3756 = vunpack.c.h.b16 %v3442
        %v3757 = vunpack.c.l.b16 %v3443
        %v3758 = vunpack.c.h.b16 %v3443
        %v3759 = vunpack.c.l.b16 %v3444
        %v3760 = vunpack.c.h.b16 %v3444
        %v3761 = vunpack.c.l.b16 %v3445
        %v3762 = vunpack.c.h.b16 %v3445
        %v3763 = vunpack.c.l.b16 %v3446
        %v3764 = vunpack.c.h.b16 %v3446
        %v3765 = vunpack.c.l.b16 %v3447
        %v3766 = vunpack.c.h.b16 %v3447
        %v3767 = vunpack.c.l.b16 %v3448
        %v3768 = vunpack.c.h.b16 %v3448
        %v3769 = vunpack.c.l.b16 %v3449
        %v3770 = vunpack.c.h.b16 %v3449
        %v3771 = vunpack.c.l.b16 %v3450
        %v3772 = vunpack.c.h.b16 %v3450
        %v3773 = vunpack.c.l.b16 %v3451
        %v3774 = vunpack.c.h.b16 %v3451
        %v3775 = vunpack.c.l.b16 %v3452
        %v3776 = vunpack.c.h.b16 %v3452
        %v3777 = vunpack.c.l.b16 %v3453
        %v3778 = vunpack.c.h.b16 %v3453
        %v3779 = vunpack.c.l.b16 %v3454
        %v3780 = vunpack.c.h.b16 %v3454
        %v3781 = vunpack.c.l.b16 %v3455
        %v3782 = vunpack.c.h.b16 %v3455
        %v3783 = vunpack.c.l.b16 %v3456
        %v3784 = vunpack.c.h.b16 %v3456
        %v3785 = vunpack.c.l.b16 %v3457
        %v3786 = vunpack.c.h.b16 %v3457
        %v3787 = vunpack.c.l.b16 %v3458
        %v3788 = vunpack.c.h.b16 %v3458
        %v3789 = vunpack.c.l.b16 %v3459
        %v3790 = vunpack.c.h.b16 %v3459
        %v3791 = vunpack.c.l.b16 %v3460
        %v3792 = vunpack.c.h.b16 %v3460
        %v3793 = vunpack.c.l.b16 %v3461
        %v3794 = vunpack.c.h.b16 %v3461
        %v3795 = vunpack.c.l.b16 %v3462
        %v3796 = vunpack.c.h.b16 %v3462
        %v3797 = vunpack.c.l.b16 %v3463
        %v3798 = vunpack.c.h.b16 %v3463
        %v3799 = vunpack.c.l.b16 %v3464
        %v3800 = vunpack.c.h.b16 %v3464
        %v3801 = vunpack.c.l.b16 %v3465
        %v3802 = vunpack.c.h.b16 %v3465
        %v3803 = vunpack.c.l.b16 %v3466
        %v3804 = vunpack.c.h.b16 %v3466
        %v3805 = vunpack.c.l.b16 %v3467
        %v3806 = vunpack.c.h.b16 %v3467
        %v3807 = vunpack.c.l.b16 %v3468
        %v3808 = vunpack.c.h.b16 %v3468
        %v3809 = vunpack.c.l.b16 %v3469
        %v3810 = vunpack.c.h.b16 %v3469
        %v3811 = vunpack.c.l.b16 %v3470
        %v3812 = vunpack.c.h.b16 %v3470
        %v3813 = vunpack.c.l.b16 %v3471
        %v3814 = vunpack.c.h.b16 %v3471
        %v3815 = vunpack.c.l.b16 %v3472
        %v3816 = vunpack.c.h.b16 %v3472
        %v3817 = vunpack.c.l.b16 %v3473
        %v3818 = vunpack.c.h.b16 %v3473
        %v3819 = vunpack.c.l.b16 %v3474
        %v3820 = vunpack.c.h.b16 %v3474
        %v3821 = vunpack.c.l.b16 %v3475
        %v3822 = vunpack.c.h.b16 %v3475
        %v3823 = vunpack.c.l.b16 %v3476
        %v3824 = vunpack.c.h.b16 %v3476
        %v3825 = vunpack.c.l.b16 %v3477
        %v3826 = vunpack.c.h.b16 %v3477
        %v3827 = vunpack.c.l.b16 %v3478
        %v3828 = vunpack.c.h.b16 %v3478
        %v3829 = vunpack.c.l.b16 %v3479
        %v3830 = vunpack.c.h.b16 %v3479
        %v3831 = vunpack.c.l.b16 %v3480
        %v3832 = vunpack.c.h.b16 %v3480
        %v3833 = vunpack.c.l.b16 %v3481
        %v3834 = vunpack.c.h.b16 %v3481
        %v3835 = vunpack.c.l.b16 %v3482
        %v3836 = vunpack.c.h.b16 %v3482
        %v3837 = vunpack.c.l.b16 %v3483
        %v3838 = vunpack.c.h.b16 %v3483
        %v3839 = vunpack.c.l.b16 %v3484
        %v3840 = vunpack.c.h.b16 %v3484
        %v3841 = vunpack.c.l.b16 %v3485
        %v3842 = vunpack.c.h.b16 %v3485
        %v3843 = vunpack.c.l.b16 %v3486
        %v3844 = vunpack.c.h.b16 %v3486
        %v3845 = vunpack.c.l.b16 %v3487
        %v3846 = vunpack.c.h.b16 %v3487
        %v3847 = vunpack.c.l.b16 %v3488
        %v3848 = vunpack.c.h.b16 %v3488
        %v3849 = vunpack.c.l.b16 %v3489
        %v3850 = vunpack.c.h.b16 %v3489
        %v3851 = vunpack.c.l.b16 %v3490
        %v3852 = vunpack.c.h.b16 %v3490
        %v3853 = vunpack.c.l.b16 %v3491
        %v3854 = vunpack.c.h.b16 %v3491
        %v3855 = vunpack.c.l.b16 %v3492
        %v3856 = vunpack.c.h.b16 %v3492
        %v3857 = vunpack.c.l.b16 %v3493
        %v3858 = vunpack.c.h.b16 %v3493
        %v3859 = vunpack.c.l.b16 %v3494
        %v3860 = vunpack.c.h.b16 %v3494
        %v3861 = vunpack.c.l.b16 %v3495
        %v3862 = vunpack.c.h.b16 %v3495
        %v3863 = vunpack.c.l.b16 %v3496
        %v3864 = vunpack.c.h.b16 %v3496
        %v3865 = vunpack.c.l.b16 %v3497
        %v3866 = vunpack.c.h.b16 %v3497
        %v3867 = vunpack.c.l.b16 %v3498
        %v3868 = vunpack.c.h.b16 %v3498
        %v3869 = vunpack.c.l.b16 %v3499
        %v3870 = vunpack.c.h.b16 %v3499
        %v3871 = vunpack.c.l.b16 %v3500
        %v3872 = vunpack.c.h.b16 %v3500
        %v3873 = vunpack.c.l.b16 %v3501
        %v3874 = vunpack.c.h.b16 %v3501
        %v3875 = vunpack.c.l.b16 %v3502
        %v3876 = vunpack.c.h.b16 %v3502
        %v3877 = vunpack.c.l.b16 %v3503
        %v3878 = vunpack.c.h.b16 %v3503
        %v3879 = vunpack.c.l.b16 %v3504
        %v3880 = vunpack.c.h.b16 %v3504
        %v3881 = vunpack.c.l.b16 %v3505
        %v3882 = vunpack.c.h.b16 %v3505
        %v3883 = vunpack.c.l.b16 %v3506
        %v3884 = vunpack.c.h.b16 %v3506
        %v3885 = vunpack.c.l.b16 %v3507
        %v3886 = vunpack.c.h.b16 %v3507
        %v3887 = vunpack.c.l.b16 %v3508
        %v3888 = vunpack.c.h.b16 %v3508
        %v3889 = vunpack.c.l.b16 %v3509
        %v3890 = vunpack.c.h.b16 %v3509
        %v3891 = vunpack.c.l.b16 %v3510
        %v3892 = vunpack.c.h.b16 %v3510
        %v3893 = vunpack.c.l.b16 %v3511
        %v3894 = vunpack.c.h.b16 %v3511
        %v3895 = vunpack.c.l.b16 %v3512
        %v3896 = vunpack.c.h.b16 %v3512
        %v3897 = vunpack.c.l.b16 %v3513
        %v3898 = vunpack.c.h.b16 %v3513
        %v3899 = vunpack.c.l.b16 %v3514
        %v3900 = vunpack.c.h.b16 %v3514
        %v3901 = vunpack.c.l.b16 %v3515
        %v3902 = vunpack.c.h.b16 %v3515
        %v3903 = vunpack.c.l.b16 %v3516
        %v3904 = vunpack.c.h.b16 %v3516
        %v3905 = vunpack.c.l.b16 %v3517
        %v3906 = vunpack.c.h.b16 %v3517
        %v3907 = vunpack.c.l.b16 %v3518
        %v3908 = vunpack.c.h.b16 %v3518
        %v3909 = vpack.c.b16 %v3661, %v3653
        %v3910 = vpack.c.b16 %v3662, %v3654
        %v3911 = vpack.c.b16 %v3663, %v3655
        %v3912 = vpack.c.b16 %v3664, %v3656
        %v3913 = vpack.c.b16 %v3665, %v3657
        %v3914 = vpack.c.b16 %v3666, %v3658
        %v3915 = vpack.c.b16 %v3667, %v3659
        %v3916 = vpack.c.b16 %v3668, %v3660
        %v3917 = vpack.c.b16 %v3677, %v3669
        %v3918 = vpack.c.b16 %v3678, %v3670
        %v3919 = vpack.c.b16 %v3679, %v3671
        %v3920 = vpack.c.b16 %v3680, %v3672
        %v3921 = vpack.c.b16 %v3681, %v3673
        %v3922 = vpack.c.b16 %v3682, %v3674
        %v3923 = vpack.c.b16 %v3683, %v3675
        %v3924 = vpack.c.b16 %v3684, %v3676
        %v3925 = vpack.c.b16 %v3693, %v3685
        %v3926 = vpack.c.b16 %v3694, %v3686
        %v3927 = vpack.c.b16 %v3695, %v3687
        %v3928 = vpack.c.b16 %v3696, %v3688
        %v3929 = vpack.c.b16 %v3697, %v3689
        %v3930 = vpack.c.b16 %v3698, %v3690
        %v3931 = vpack.c.b16 %v3699, %v3691
        %v3932 = vpack.c.b16 %v3700, %v3692
        %v3933 = vpack.c.b16 %v3709, %v3701
        %v3934 = vpack.c.b16 %v3710, %v3702
        %v3935 = vpack.c.b16 %v3711, %v3703
        %v3936 = vpack.c.b16 %v3712, %v3704
        %v3937 = vpack.c.b16 %v3713, %v3705
        %v3938 = vpack.c.b16 %v3714, %v3706
        %v3939 = vpack.c.b16 %v3715, %v3707
        %v3940 = vpack.c.b16 %v3716, %v3708
        %v3941 = vpack.c.b16 %v3725, %v3717
        %v3942 = vpack.c.b16 %v3726, %v3718
        %v3943 = vpack.c.b16 %v3727, %v3719
        %v3944 = vpack.c.b16 %v3728, %v3720
        %v3945 = vpack.c.b16 %v3729, %v3721
        %v3946 = vpack.c.b16 %v3730, %v3722
        %v3947 = vpack.c.b16 %v3731, %v3723
        %v3948 = vpack.c.b16 %v3732, %v3724
        %v3949 = vpack.c.b16 %v3741, %v3733
        %v3950 = vpack.c.b16 %v3742, %v3734
        %v3951 = vpack.c.b16 %v3743, %v3735
        %v3952 = vpack.c.b16 %v3744, %v3736
        %v3953 = vpack.c.b16 %v3745, %v3737
        %v3954 = vpack.c.b16 %v3746, %v3738
        %v3955 = vpack.c.b16 %v3747, %v3739
        %v3956 = vpack.c.b16 %v3748, %v3740
        %v3957 = vpack.c.b16 %v3757, %v3749
        %v3958 = vpack.c.b16 %v3758, %v3750
        %v3959 = vpack.c.b16 %v3759, %v3751
        %v3960 = vpack.c.b16 %v3760, %v3752
        %v3961 = vpack.c.b16 %v3761, %v3753
        %v3962 = vpack.c.b16 %v3762, %v3754
        %v3963 = vpack.c.b16 %v3763, %v3755
        %v3964 = vpack.c.b16 %v3764, %v3756
        %v3965 = vpack.c.b16 %v3773, %v3765
        %v3966 = vpack.c.b16 %v3774, %v3766
        %v3967 = vpack.c.b16 %v3775, %v3767
        %v3968 = vpack.c.b16 %v3776, %v3768
        %v3969 = vpack.c.b16 %v3777, %v3769
        %v3970 = vpack.c.b16 %v3778, %v3770
        %v3971 = vpack.c.b16 %v3779, %v3771
        %v3972 = vpack.c.b16 %v3780, %v3772
        %v3973 = vpack.c.b16 %v3789, %v3781
        %v3974 = vpack.c.b16 %v3790, %v3782
        %v3975 = vpack.c.b16 %v3791, %v3783
        %v3976 = vpack.c.b16 %v3792, %v3784
        %v3977 = vpack.c.b16 %v3793, %v3785
        %v3978 = vpack.c.b16 %v3794, %v3786
        %v3979 = vpack.c.b16 %v3795, %v3787
        %v3980 = vpack.c.b16 %v3796, %v3788
        %v3981 = vpack.c.b16 %v3805, %v3797
        %v3982 = vpack.c.b16 %v3806, %v3798
        %v3983 = vpack.c.b16 %v3807, %v3799
        %v3984 = vpack.c.b16 %v3808, %v3800
        %v3985 = vpack.c.b16 %v3809, %v3801
        %v3986 = vpack.c.b16 %v3810, %v3802
        %v3987 = vpack.c.b16 %v3811, %v3803
        %v3988 = vpack.c.b16 %v3812, %v3804
        %v3989 = vpack.c.b16 %v3821, %v3813
        %v3990 = vpack.c.b16 %v3822, %v3814
        %v3991 = vpack.c.b16 %v3823, %v3815
        %v3992 = vpack.c.b16 %v3824, %v3816
        %v3993 = vpack.c.b16 %v3825, %v3817
        %v3994 = vpack.c.b16 %v3826, %v3818
        %v3995 = vpack.c.b16 %v3827, %v3819
        %v3996 = vpack.c.b16 %v3828, %v3820
        %v3997 = vpack.c.b16 %v3837, %v3829
        %v3998 = vpack.c.b16 %v3838, %v3830
        %v3999 = vpack.c.b16 %v3839, %v3831
        %v4000 = vpack.c.b16 %v3840, %v3832
        %v4001 = vpack.c.b16 %v3841, %v3833
        %v4002 = vpack.c.b16 %v3842, %v3834
        %v4003 = vpack.c.b16 %v3843, %v3835
        %v4004 = vpack.c.b16 %v3844, %v3836
        %v4005 = vpack.c.b16 %v3853, %v3845
        %v4006 = vpack.c.b16 %v3854, %v3846
        %v4007 = vpack.c.b16 %v3855, %v3847
        %v4008 = vpack.c.b16 %v3856, %v3848
        %v4009 = vpack.c.b16 %v3857, %v3849
        %v4010 = vpack.c.b16 %v3858, %v3850
        %v4011 = vpack.c.b16 %v3859, %v3851
        %v4012 = vpack.c.b16 %v3860, %v3852
        %v4013 = vpack.c.b16 %v3869, %v3861
        %v4014 = vpack.c.b16 %v3870, %v3862
        %v4015 = vpack.c.b16 %v3871, %v3863
        %v4016 = vpack.c.b16 %v3872, %v3864
        %v4017 = vpack.c.b16 %v3873, %v3865
        %v4018 = vpack.c.b16 %v3874, %v3866
        %v4019 = vpack.c.b16 %v3875, %v3867
        %v4020 = vpack.c.b16 %v3876, %v3868
        %v4021 = vpack.c.b16 %v3885, %v3877
        %v4022 = vpack.c.b16 %v3886, %v3878
        %v4023 = vpack.c.b16 %v3887, %v3879
        %v4024 = vpack.c.b16 %v3888, %v3880
        %v4025 = vpack.c.b16 %v3889, %v3881
        %v4026 = vpack.c.b16 %v3890, %v3882
        %v4027 = vpack.c.b16 %v3891, %v3883
        %v4028 = vpack.c.b16 %v3892, %v3884
        %v4029 = vpack.c.b16 %v3901, %v3893
        %v4030 = vpack.c.b16 %v3902, %v3894
        %v4031 = vpack.c.b16 %v3903, %v3895
        %v4032 = vpack.c.b16 %v3904, %v3896
        %v4033 = vpack.c.b16 %v3905, %v3897
        %v4034 = vpack.c.b16 %v3906, %v3898
        %v4035 = vpack.c.b16 %v3907, %v3899
        %v4036 = vpack.c.b16 %v3908, %v3900
        %4165 = vmatpush.bf16.xpose.msra.mxu0 %v3965
        %4166 = vmatpush.bf16.xpose.msra.mxu0 %v3957
        %4167 = vmatpush.bf16.xpose.msra.mxu0 %v3949
        %4168 = vmatpush.bf16.xpose.msra.mxu0 %v3941
        %4169 = vmatpush.bf16.xpose.msra.mxu0 %v3933
        %4170 = vmatpush.bf16.xpose.msra.mxu0 %v3925
        %4171 = vmatpush.bf16.xpose.msra.mxu0 %v3917
        %4172 = vmatpush.bf16.xpose.msra.mxu0 %v3909
        %4173 = vmatmul.bf16.gmra.mxu0 %v3007
        %v4174 = vpop.f32.mrf.mxu0
        %v4175 = vadd.f32 %v3521, %v4174
        %v4176 = vpop.f32.mrf.mxu0
        %v4177 = vadd.f32 %v3521, %v4176
        %4178 = vmatmul.bf16.gmra.mxu0 %v3015
        %v4179 = vpop.f32.mrf.mxu0
        %v4180 = vadd.f32 %v3521, %v4179
        %v4181 = vpop.f32.mrf.mxu0
        %v4182 = vadd.f32 %v3521, %v4181
        %4183 = vmatmul.bf16.gmra.mxu0 %v3023
        %v4184 = vpop.f32.mrf.mxu0
        %v4185 = vadd.f32 %v3521, %v4184
        %v4186 = vpop.f32.mrf.mxu0
        %v4187 = vadd.f32 %v3521, %v4186
        %4188 = vmatmul.bf16.gmra.mxu0 %v3031
        %v4189 = vpop.f32.mrf.mxu0
        %v4190 = vadd.f32 %v3521, %v4189
        %v4191 = vpop.f32.mrf.mxu0
        %v4192 = vadd.f32 %v3521, %v4191
        %4193 = vmatmul.bf16.gmra.mxu0 %v3039
        %v4194 = vpop.f32.mrf.mxu0
        %v4195 = vadd.f32 %v3521, %v4194
        %v4196 = vpop.f32.mrf.mxu0
        %v4197 = vadd.f32 %v3521, %v4196
        %4198 = vmatmul.bf16.gmra.mxu0 %v3047
        %v4199 = vpop.f32.mrf.mxu0
        %v4200 = vadd.f32 %v3521, %v4199
        %v4201 = vpop.f32.mrf.mxu0
        %v4202 = vadd.f32 %v3521, %v4201
        %4203 = vmatmul.bf16.gmra.mxu0 %v3055
        %v4204 = vpop.f32.mrf.mxu0
        %v4205 = vadd.f32 %v3521, %v4204
        %v4206 = vpop.f32.mrf.mxu0
        %v4207 = vadd.f32 %v3521, %v4206
        %4208 = vmatmul.bf16.gmra.mxu0 %v3063
        %v4209 = vpop.f32.mrf.mxu0
        %v4210 = vadd.f32 %v3521, %v4209
        %v4211 = vpop.f32.mrf.mxu0
        %v4212 = vadd.f32 %v3521, %v4211
        %4213 = vmatmul.bf16.gmra.mxu0 %v3071
        %v4214 = vpop.f32.mrf.mxu0
        %v4215 = vadd.f32 %v3521, %v4214
        %v4216 = vpop.f32.mrf.mxu0
        %v4217 = vadd.f32 %v3521, %v4216
        %4218 = vmatmul.bf16.gmra.mxu0 %v3079
        %v4219 = vpop.f32.mrf.mxu0
        %v4220 = vadd.f32 %v3521, %v4219
        %v4221 = vpop.f32.mrf.mxu0
        %v4222 = vadd.f32 %v3521, %v4221
        %4223 = vmatmul.bf16.gmra.mxu0 %v3087
        %v4224 = vpop.f32.mrf.mxu0
        %v4225 = vadd.f32 %v3521, %v4224
        %v4226 = vpop.f32.mrf.mxu0
        %v4227 = vadd.f32 %v3521, %v4226
        %4228 = vmatmul.bf16.gmra.mxu0 %v3095
        %v4229 = vpop.f32.mrf.mxu0
        %v4230 = vadd.f32 %v3521, %v4229
        %v4231 = vpop.f32.mrf.mxu0
        %v4232 = vadd.f32 %v3521, %v4231
        %4233 = vmatmul.bf16.gmra.mxu0 %v3103
        %v4234 = vpop.f32.mrf.mxu0
        %v4235 = vadd.f32 %v3521, %v4234
        %v4236 = vpop.f32.mrf.mxu0
        %v4237 = vadd.f32 %v3521, %v4236
        %4238 = vmatmul.bf16.gmra.mxu0 %v3111
        %v4239 = vpop.f32.mrf.mxu0
        %v4240 = vadd.f32 %v3521, %v4239
        %v4241 = vpop.f32.mrf.mxu0
        %v4242 = vadd.f32 %v3521, %v4241
        %4243 = vmatmul.bf16.gmra.mxu0 %v3119
        %v4244 = vpop.f32.mrf.mxu0
        %v4245 = vadd.f32 %v3521, %v4244
        %v4246 = vpop.f32.mrf.mxu0
        %v4247 = vadd.f32 %v3521, %v4246
        %4248 = vmatmul.bf16.gmra.mxu0 %v3127
        %v4249 = vpop.f32.mrf.mxu0
        %v4250 = vadd.f32 %v3521, %v4249
        %v4251 = vpop.f32.mrf.mxu0
        %v4252 = vadd.f32 %v3521, %v4251
        %4253 = vdwg.mxu0
        %4254 = vmatpush.bf16.xpose.msra.mxu0 %v3966
        %4255 = vmatpush.bf16.xpose.msra.mxu0 %v3958
        %4256 = vmatpush.bf16.xpose.msra.mxu0 %v3950
        %4257 = vmatpush.bf16.xpose.msra.mxu0 %v3942
        %4258 = vmatpush.bf16.xpose.msra.mxu0 %v3934
        %4259 = vmatpush.bf16.xpose.msra.mxu0 %v3926
        %4260 = vmatpush.bf16.xpose.msra.mxu0 %v3918
        %4261 = vmatpush.bf16.xpose.msra.mxu0 %v3910
        %4262 = vmatmul.bf16.gmra.mxu0 %v3008
        %v4263 = vpop.f32.mrf.mxu0
        %v4264 = vadd.f32 %v4175, %v4263
        %v4265 = vpop.f32.mrf.mxu0
        %v4266 = vadd.f32 %v4177, %v4265
        %4267 = vmatmul.bf16.gmra.mxu0 %v3016
        %v4268 = vpop.f32.mrf.mxu0
        %v4269 = vadd.f32 %v4180, %v4268
        %v4270 = vpop.f32.mrf.mxu0
        %v4271 = vadd.f32 %v4182, %v4270
        %4272 = vmatmul.bf16.gmra.mxu0 %v3024
        %v4273 = vpop.f32.mrf.mxu0
        %v4274 = vadd.f32 %v4185, %v4273
        %v4275 = vpop.f32.mrf.mxu0
        %v4276 = vadd.f32 %v4187, %v4275
        %4277 = vmatmul.bf16.gmra.mxu0 %v3032
        %v4278 = vpop.f32.mrf.mxu0
        %v4279 = vadd.f32 %v4190, %v4278
        %v4280 = vpop.f32.mrf.mxu0
        %v4281 = vadd.f32 %v4192, %v4280
        %4282 = vmatmul.bf16.gmra.mxu0 %v3040
        %v4283 = vpop.f32.mrf.mxu0
        %v4284 = vadd.f32 %v4195, %v4283
        %v4285 = vpop.f32.mrf.mxu0
        %v4286 = vadd.f32 %v4197, %v4285
        %4287 = vmatmul.bf16.gmra.mxu0 %v3048
        %v4288 = vpop.f32.mrf.mxu0
        %v4289 = vadd.f32 %v4200, %v4288
        %v4290 = vpop.f32.mrf.mxu0
        %v4291 = vadd.f32 %v4202, %v4290
        %4292 = vmatmul.bf16.gmra.mxu0 %v3056
        %v4293 = vpop.f32.mrf.mxu0
        %v4294 = vadd.f32 %v4205, %v4293
        %v4295 = vpop.f32.mrf.mxu0
        %v4296 = vadd.f32 %v4207, %v4295
        %4297 = vmatmul.bf16.gmra.mxu0 %v3064
        %v4298 = vpop.f32.mrf.mxu0
        %v4299 = vadd.f32 %v4210, %v4298
        %v4300 = vpop.f32.mrf.mxu0
        %v4301 = vadd.f32 %v4212, %v4300
        %4302 = vmatmul.bf16.gmra.mxu0 %v3072
        %v4303 = vpop.f32.mrf.mxu0
        %v4304 = vadd.f32 %v4215, %v4303
        %v4305 = vpop.f32.mrf.mxu0
        %v4306 = vadd.f32 %v4217, %v4305
        %4307 = vmatmul.bf16.gmra.mxu0 %v3080
        %v4308 = vpop.f32.mrf.mxu0
        %v4309 = vadd.f32 %v4220, %v4308
        %v4310 = vpop.f32.mrf.mxu0
        %v4311 = vadd.f32 %v4222, %v4310
        %4312 = vmatmul.bf16.gmra.mxu0 %v3088
        %v4313 = vpop.f32.mrf.mxu0
        %v4314 = vadd.f32 %v4225, %v4313
        %v4315 = vpop.f32.mrf.mxu0
        %v4316 = vadd.f32 %v4227, %v4315
        %4317 = vmatmul.bf16.gmra.mxu0 %v3096
        %v4318 = vpop.f32.mrf.mxu0
        %v4319 = vadd.f32 %v4230, %v4318
        %v4320 = vpop.f32.mrf.mxu0
        %v4321 = vadd.f32 %v4232, %v4320
        %4322 = vmatmul.bf16.gmra.mxu0 %v3104
        %v4323 = vpop.f32.mrf.mxu0
        %v4324 = vadd.f32 %v4235, %v4323
        %v4325 = vpop.f32.mrf.mxu0
        %v4326 = vadd.f32 %v4237, %v4325
        %4327 = vmatmul.bf16.gmra.mxu0 %v3112
        %v4328 = vpop.f32.mrf.mxu0
        %v4329 = vadd.f32 %v4240, %v4328
        %v4330 = vpop.f32.mrf.mxu0
        %v4331 = vadd.f32 %v4242, %v4330
        %4332 = vmatmul.bf16.gmra.mxu0 %v3120
        %v4333 = vpop.f32.mrf.mxu0
        %v4334 = vadd.f32 %v4245, %v4333
        %v4335 = vpop.f32.mrf.mxu0
        %v4336 = vadd.f32 %v4247, %v4335
        %4337 = vmatmul.bf16.gmra.mxu0 %v3128
        %v4338 = vpop.f32.mrf.mxu0
        %v4339 = vadd.f32 %v4250, %v4338
        %v4340 = vpop.f32.mrf.mxu0
        %v4341 = vadd.f32 %v4252, %v4340
        %4342 = vdwg.mxu0
        %4343 = vmatpush.bf16.xpose.msra.mxu0 %v3967
        %4344 = vmatpush.bf16.xpose.msra.mxu0 %v3959
        %4345 = vmatpush.bf16.xpose.msra.mxu0 %v3951
        %4346 = vmatpush.bf16.xpose.msra.mxu0 %v3943
        %4347 = vmatpush.bf16.xpose.msra.mxu0 %v3935
        %4348 = vmatpush.bf16.xpose.msra.mxu0 %v3927
        %4349 = vmatpush.bf16.xpose.msra.mxu0 %v3919
        %4350 = vmatpush.bf16.xpose.msra.mxu0 %v3911
        %4351 = vmatmul.bf16.gmra.mxu0 %v3009
        %v4352 = vpop.f32.mrf.mxu0
        %v4353 = vadd.f32 %v4264, %v4352
        %v4354 = vpop.f32.mrf.mxu0
        %v4355 = vadd.f32 %v4266, %v4354
        %4356 = vmatmul.bf16.gmra.mxu0 %v3017
        %v4357 = vpop.f32.mrf.mxu0
        %v4358 = vadd.f32 %v4269, %v4357
        %v4359 = vpop.f32.mrf.mxu0
        %v4360 = vadd.f32 %v4271, %v4359
        %4361 = vmatmul.bf16.gmra.mxu0 %v3025
        %v4362 = vpop.f32.mrf.mxu0
        %v4363 = vadd.f32 %v4274, %v4362
        %v4364 = vpop.f32.mrf.mxu0
        %v4365 = vadd.f32 %v4276, %v4364
        %4366 = vmatmul.bf16.gmra.mxu0 %v3033
        %v4367 = vpop.f32.mrf.mxu0
        %v4368 = vadd.f32 %v4279, %v4367
        %v4369 = vpop.f32.mrf.mxu0
        %v4370 = vadd.f32 %v4281, %v4369
        %4371 = vmatmul.bf16.gmra.mxu0 %v3041
        %v4372 = vpop.f32.mrf.mxu0
        %v4373 = vadd.f32 %v4284, %v4372
        %v4374 = vpop.f32.mrf.mxu0
        %v4375 = vadd.f32 %v4286, %v4374
        %4376 = vmatmul.bf16.gmra.mxu0 %v3049
        %v4377 = vpop.f32.mrf.mxu0
        %v4378 = vadd.f32 %v4289, %v4377
        %v4379 = vpop.f32.mrf.mxu0
        %v4380 = vadd.f32 %v4291, %v4379
        %4381 = vmatmul.bf16.gmra.mxu0 %v3057
        %v4382 = vpop.f32.mrf.mxu0
        %v4383 = vadd.f32 %v4294, %v4382
        %v4384 = vpop.f32.mrf.mxu0
        %v4385 = vadd.f32 %v4296, %v4384
        %4386 = vmatmul.bf16.gmra.mxu0 %v3065
        %v4387 = vpop.f32.mrf.mxu0
        %v4388 = vadd.f32 %v4299, %v4387
        %v4389 = vpop.f32.mrf.mxu0
        %v4390 = vadd.f32 %v4301, %v4389
        %4391 = vmatmul.bf16.gmra.mxu0 %v3073
        %v4392 = vpop.f32.mrf.mxu0
        %v4393 = vadd.f32 %v4304, %v4392
        %v4394 = vpop.f32.mrf.mxu0
        %v4395 = vadd.f32 %v4306, %v4394
        %4396 = vmatmul.bf16.gmra.mxu0 %v3081
        %v4397 = vpop.f32.mrf.mxu0
        %v4398 = vadd.f32 %v4309, %v4397
        %v4399 = vpop.f32.mrf.mxu0
        %v4400 = vadd.f32 %v4311, %v4399
        %4401 = vmatmul.bf16.gmra.mxu0 %v3089
        %v4402 = vpop.f32.mrf.mxu0
        %v4403 = vadd.f32 %v4314, %v4402
        %v4404 = vpop.f32.mrf.mxu0
        %v4405 = vadd.f32 %v4316, %v4404
        %4406 = vmatmul.bf16.gmra.mxu0 %v3097
        %v4407 = vpop.f32.mrf.mxu0
        %v4408 = vadd.f32 %v4319, %v4407
        %v4409 = vpop.f32.mrf.mxu0
        %v4410 = vadd.f32 %v4321, %v4409
        %4411 = vmatmul.bf16.gmra.mxu0 %v3105
        %v4412 = vpop.f32.mrf.mxu0
        %v4413 = vadd.f32 %v4324, %v4412
        %v4414 = vpop.f32.mrf.mxu0
        %v4415 = vadd.f32 %v4326, %v4414
        %4416 = vmatmul.bf16.gmra.mxu0 %v3113
        %v4417 = vpop.f32.mrf.mxu0
        %v4418 = vadd.f32 %v4329, %v4417
        %v4419 = vpop.f32.mrf.mxu0
        %v4420 = vadd.f32 %v4331, %v4419
        %4421 = vmatmul.bf16.gmra.mxu0 %v3121
        %v4422 = vpop.f32.mrf.mxu0
        %v4423 = vadd.f32 %v4334, %v4422
        %v4424 = vpop.f32.mrf.mxu0
        %v4425 = vadd.f32 %v4336, %v4424
        %4426 = vmatmul.bf16.gmra.mxu0 %v3129
        %v4427 = vpop.f32.mrf.mxu0
        %v4428 = vadd.f32 %v4339, %v4427
        %v4429 = vpop.f32.mrf.mxu0
        %v4430 = vadd.f32 %v4341, %v4429
        %4431 = vdwg.mxu0
        %4432 = vmatpush.bf16.xpose.msra.mxu0 %v3968
        %4433 = vmatpush.bf16.xpose.msra.mxu0 %v3960
        %4434 = vmatpush.bf16.xpose.msra.mxu0 %v3952
        %4435 = vmatpush.bf16.xpose.msra.mxu0 %v3944
        %4436 = vmatpush.bf16.xpose.msra.mxu0 %v3936
        %4437 = vmatpush.bf16.xpose.msra.mxu0 %v3928
        %4438 = vmatpush.bf16.xpose.msra.mxu0 %v3920
        %4439 = vmatpush.bf16.xpose.msra.mxu0 %v3912
        %4440 = vmatmul.bf16.gmra.mxu0 %v3010
        %v4441 = vpop.f32.mrf.mxu0
        %v4442 = vadd.f32 %v4353, %v4441
        %v4443 = vpop.f32.mrf.mxu0
        %v4444 = vadd.f32 %v4355, %v4443
        %4445 = vmatmul.bf16.gmra.mxu0 %v3018
        %v4446 = vpop.f32.mrf.mxu0
        %v4447 = vadd.f32 %v4358, %v4446
        %v4448 = vpop.f32.mrf.mxu0
        %v4449 = vadd.f32 %v4360, %v4448
        %4450 = vmatmul.bf16.gmra.mxu0 %v3026
        %v4451 = vpop.f32.mrf.mxu0
        %v4452 = vadd.f32 %v4363, %v4451
        %v4453 = vpop.f32.mrf.mxu0
        %v4454 = vadd.f32 %v4365, %v4453
        %4455 = vmatmul.bf16.gmra.mxu0 %v3034
        %v4456 = vpop.f32.mrf.mxu0
        %v4457 = vadd.f32 %v4368, %v4456
        %v4458 = vpop.f32.mrf.mxu0
        %v4459 = vadd.f32 %v4370, %v4458
        %4460 = vmatmul.bf16.gmra.mxu0 %v3042
        %v4461 = vpop.f32.mrf.mxu0
        %v4462 = vadd.f32 %v4373, %v4461
        %v4463 = vpop.f32.mrf.mxu0
        %v4464 = vadd.f32 %v4375, %v4463
        %4465 = vmatmul.bf16.gmra.mxu0 %v3050
        %v4466 = vpop.f32.mrf.mxu0
        %v4467 = vadd.f32 %v4378, %v4466
        %v4468 = vpop.f32.mrf.mxu0
        %v4469 = vadd.f32 %v4380, %v4468
        %4470 = vmatmul.bf16.gmra.mxu0 %v3058
        %v4471 = vpop.f32.mrf.mxu0
        %v4472 = vadd.f32 %v4383, %v4471
        %v4473 = vpop.f32.mrf.mxu0
        %v4474 = vadd.f32 %v4385, %v4473
        %4475 = vmatmul.bf16.gmra.mxu0 %v3066
        %v4476 = vpop.f32.mrf.mxu0
        %v4477 = vadd.f32 %v4388, %v4476
        %v4478 = vpop.f32.mrf.mxu0
        %v4479 = vadd.f32 %v4390, %v4478
        %4480 = vmatmul.bf16.gmra.mxu0 %v3074
        %v4481 = vpop.f32.mrf.mxu0
        %v4482 = vadd.f32 %v4393, %v4481
        %v4483 = vpop.f32.mrf.mxu0
        %v4484 = vadd.f32 %v4395, %v4483
        %4485 = vmatmul.bf16.gmra.mxu0 %v3082
        %v4486 = vpop.f32.mrf.mxu0
        %v4487 = vadd.f32 %v4398, %v4486
        %v4488 = vpop.f32.mrf.mxu0
        %v4489 = vadd.f32 %v4400, %v4488
        %4490 = vmatmul.bf16.gmra.mxu0 %v3090
        %v4491 = vpop.f32.mrf.mxu0
        %v4492 = vadd.f32 %v4403, %v4491
        %v4493 = vpop.f32.mrf.mxu0
        %v4494 = vadd.f32 %v4405, %v4493
        %4495 = vmatmul.bf16.gmra.mxu0 %v3098
        %v4496 = vpop.f32.mrf.mxu0
        %v4497 = vadd.f32 %v4408, %v4496
        %v4498 = vpop.f32.mrf.mxu0
        %v4499 = vadd.f32 %v4410, %v4498
        %4500 = vmatmul.bf16.gmra.mxu0 %v3106
        %v4501 = vpop.f32.mrf.mxu0
        %v4502 = vadd.f32 %v4413, %v4501
        %v4503 = vpop.f32.mrf.mxu0
        %v4504 = vadd.f32 %v4415, %v4503
        %4505 = vmatmul.bf16.gmra.mxu0 %v3114
        %v4506 = vpop.f32.mrf.mxu0
        %v4507 = vadd.f32 %v4418, %v4506
        %v4508 = vpop.f32.mrf.mxu0
        %v4509 = vadd.f32 %v4420, %v4508
        %4510 = vmatmul.bf16.gmra.mxu0 %v3122
        %v4511 = vpop.f32.mrf.mxu0
        %v4512 = vadd.f32 %v4423, %v4511
        %v4513 = vpop.f32.mrf.mxu0
        %v4514 = vadd.f32 %v4425, %v4513
        %4515 = vmatmul.bf16.gmra.mxu0 %v3130
        %v4516 = vpop.f32.mrf.mxu0
        %v4517 = vadd.f32 %v4428, %v4516
        %v4518 = vpop.f32.mrf.mxu0
        %v4519 = vadd.f32 %v4430, %v4518
        %4520 = vdwg.mxu0
        %4521 = vmatpush.bf16.xpose.msra.mxu0 %v3969
        %4522 = vmatpush.bf16.xpose.msra.mxu0 %v3961
        %4523 = vmatpush.bf16.xpose.msra.mxu0 %v3953
        %4524 = vmatpush.bf16.xpose.msra.mxu0 %v3945
        %4525 = vmatpush.bf16.xpose.msra.mxu0 %v3937
        %4526 = vmatpush.bf16.xpose.msra.mxu0 %v3929
        %4527 = vmatpush.bf16.xpose.msra.mxu0 %v3921
        %4528 = vmatpush.bf16.xpose.msra.mxu0 %v3913
        %4529 = vmatmul.bf16.gmra.mxu0 %v3011
        %v4530 = vpop.f32.mrf.mxu0
        %v4531 = vadd.f32 %v4442, %v4530
        %v4532 = vpop.f32.mrf.mxu0
        %v4533 = vadd.f32 %v4444, %v4532
        %4534 = vmatmul.bf16.gmra.mxu0 %v3019
        %v4535 = vpop.f32.mrf.mxu0
        %v4536 = vadd.f32 %v4447, %v4535
        %v4537 = vpop.f32.mrf.mxu0
        %v4538 = vadd.f32 %v4449, %v4537
        %4539 = vmatmul.bf16.gmra.mxu0 %v3027
        %v4540 = vpop.f32.mrf.mxu0
        %v4541 = vadd.f32 %v4452, %v4540
        %v4542 = vpop.f32.mrf.mxu0
        %v4543 = vadd.f32 %v4454, %v4542
        %4544 = vmatmul.bf16.gmra.mxu0 %v3035
        %v4545 = vpop.f32.mrf.mxu0
        %v4546 = vadd.f32 %v4457, %v4545
        %v4547 = vpop.f32.mrf.mxu0
        %v4548 = vadd.f32 %v4459, %v4547
        %4549 = vmatmul.bf16.gmra.mxu0 %v3043
        %v4550 = vpop.f32.mrf.mxu0
        %v4551 = vadd.f32 %v4462, %v4550
        %v4552 = vpop.f32.mrf.mxu0
        %v4553 = vadd.f32 %v4464, %v4552
        %4554 = vmatmul.bf16.gmra.mxu0 %v3051
        %v4555 = vpop.f32.mrf.mxu0
        %v4556 = vadd.f32 %v4467, %v4555
        %v4557 = vpop.f32.mrf.mxu0
        %v4558 = vadd.f32 %v4469, %v4557
        %4559 = vmatmul.bf16.gmra.mxu0 %v3059
        %v4560 = vpop.f32.mrf.mxu0
        %v4561 = vadd.f32 %v4472, %v4560
        %v4562 = vpop.f32.mrf.mxu0
        %v4563 = vadd.f32 %v4474, %v4562
        %4564 = vmatmul.bf16.gmra.mxu0 %v3067
        %v4565 = vpop.f32.mrf.mxu0
        %v4566 = vadd.f32 %v4477, %v4565
        %v4567 = vpop.f32.mrf.mxu0
        %v4568 = vadd.f32 %v4479, %v4567
        %4569 = vmatmul.bf16.gmra.mxu0 %v3075
        %v4570 = vpop.f32.mrf.mxu0
        %v4571 = vadd.f32 %v4482, %v4570
        %v4572 = vpop.f32.mrf.mxu0
        %v4573 = vadd.f32 %v4484, %v4572
        %4574 = vmatmul.bf16.gmra.mxu0 %v3083
        %v4575 = vpop.f32.mrf.mxu0
        %v4576 = vadd.f32 %v4487, %v4575
        %v4577 = vpop.f32.mrf.mxu0
        %v4578 = vadd.f32 %v4489, %v4577
        %4579 = vmatmul.bf16.gmra.mxu0 %v3091
        %v4580 = vpop.f32.mrf.mxu0
        %v4581 = vadd.f32 %v4492, %v4580
        %v4582 = vpop.f32.mrf.mxu0
        %v4583 = vadd.f32 %v4494, %v4582
        %4584 = vmatmul.bf16.gmra.mxu0 %v3099
        %v4585 = vpop.f32.mrf.mxu0
        %v4586 = vadd.f32 %v4497, %v4585
        %v4587 = vpop.f32.mrf.mxu0
        %v4588 = vadd.f32 %v4499, %v4587
        %4589 = vmatmul.bf16.gmra.mxu0 %v3107
        %v4590 = vpop.f32.mrf.mxu0
        %v4591 = vadd.f32 %v4502, %v4590
        %v4592 = vpop.f32.mrf.mxu0
        %v4593 = vadd.f32 %v4504, %v4592
        %4594 = vmatmul.bf16.gmra.mxu0 %v3115
        %v4595 = vpop.f32.mrf.mxu0
        %v4596 = vadd.f32 %v4507, %v4595
        %v4597 = vpop.f32.mrf.mxu0
        %v4598 = vadd.f32 %v4509, %v4597
        %4599 = vmatmul.bf16.gmra.mxu0 %v3123
        %v4600 = vpop.f32.mrf.mxu0
        %v4601 = vadd.f32 %v4512, %v4600
        %v4602 = vpop.f32.mrf.mxu0
        %v4603 = vadd.f32 %v4514, %v4602
        %4604 = vmatmul.bf16.gmra.mxu0 %v3131
        %v4605 = vpop.f32.mrf.mxu0
        %v4606 = vadd.f32 %v4517, %v4605
        %v4607 = vpop.f32.mrf.mxu0
        %v4608 = vadd.f32 %v4519, %v4607
        %4609 = vdwg.mxu0
        %4610 = vmatpush.bf16.xpose.msra.mxu0 %v3970
        %4611 = vmatpush.bf16.xpose.msra.mxu0 %v3962
        %4612 = vmatpush.bf16.xpose.msra.mxu0 %v3954
        %4613 = vmatpush.bf16.xpose.msra.mxu0 %v3946
        %4614 = vmatpush.bf16.xpose.msra.mxu0 %v3938
        %4615 = vmatpush.bf16.xpose.msra.mxu0 %v3930
        %4616 = vmatpush.bf16.xpose.msra.mxu0 %v3922
        %4617 = vmatpush.bf16.xpose.msra.mxu0 %v3914
        %4618 = vmatmul.bf16.gmra.mxu0 %v3012
        %v4619 = vpop.f32.mrf.mxu0
        %v4620 = vadd.f32 %v4531, %v4619
        %v4621 = vpop.f32.mrf.mxu0
        %v4622 = vadd.f32 %v4533, %v4621
        %4623 = vmatmul.bf16.gmra.mxu0 %v3020
        %v4624 = vpop.f32.mrf.mxu0
        %v4625 = vadd.f32 %v4536, %v4624
        %v4626 = vpop.f32.mrf.mxu0
        %v4627 = vadd.f32 %v4538, %v4626
        %4628 = vmatmul.bf16.gmra.mxu0 %v3028
        %v4629 = vpop.f32.mrf.mxu0
        %v4630 = vadd.f32 %v4541, %v4629
        %v4631 = vpop.f32.mrf.mxu0
        %v4632 = vadd.f32 %v4543, %v4631
        %4633 = vmatmul.bf16.gmra.mxu0 %v3036
        %v4634 = vpop.f32.mrf.mxu0
        %v4635 = vadd.f32 %v4546, %v4634
        %v4636 = vpop.f32.mrf.mxu0
        %v4637 = vadd.f32 %v4548, %v4636
        %4638 = vmatmul.bf16.gmra.mxu0 %v3044
        %v4639 = vpop.f32.mrf.mxu0
        %v4640 = vadd.f32 %v4551, %v4639
        %v4641 = vpop.f32.mrf.mxu0
        %v4642 = vadd.f32 %v4553, %v4641
        %4643 = vmatmul.bf16.gmra.mxu0 %v3052
        %v4644 = vpop.f32.mrf.mxu0
        %v4645 = vadd.f32 %v4556, %v4644
        %v4646 = vpop.f32.mrf.mxu0
        %v4647 = vadd.f32 %v4558, %v4646
        %4648 = vmatmul.bf16.gmra.mxu0 %v3060
        %v4649 = vpop.f32.mrf.mxu0
        %v4650 = vadd.f32 %v4561, %v4649
        %v4651 = vpop.f32.mrf.mxu0
        %v4652 = vadd.f32 %v4563, %v4651
        %4653 = vmatmul.bf16.gmra.mxu0 %v3068
        %v4654 = vpop.f32.mrf.mxu0
        %v4655 = vadd.f32 %v4566, %v4654
        %v4656 = vpop.f32.mrf.mxu0
        %v4657 = vadd.f32 %v4568, %v4656
        %4658 = vmatmul.bf16.gmra.mxu0 %v3076
        %v4659 = vpop.f32.mrf.mxu0
        %v4660 = vadd.f32 %v4571, %v4659
        %v4661 = vpop.f32.mrf.mxu0
        %v4662 = vadd.f32 %v4573, %v4661
        %4663 = vmatmul.bf16.gmra.mxu0 %v3084
        %v4664 = vpop.f32.mrf.mxu0
        %v4665 = vadd.f32 %v4576, %v4664
        %v4666 = vpop.f32.mrf.mxu0
        %v4667 = vadd.f32 %v4578, %v4666
        %4668 = vmatmul.bf16.gmra.mxu0 %v3092
        %v4669 = vpop.f32.mrf.mxu0
        %v4670 = vadd.f32 %v4581, %v4669
        %v4671 = vpop.f32.mrf.mxu0
        %v4672 = vadd.f32 %v4583, %v4671
        %4673 = vmatmul.bf16.gmra.mxu0 %v3100
        %v4674 = vpop.f32.mrf.mxu0
        %v4675 = vadd.f32 %v4586, %v4674
        %v4676 = vpop.f32.mrf.mxu0
        %v4677 = vadd.f32 %v4588, %v4676
        %4678 = vmatmul.bf16.gmra.mxu0 %v3108
        %v4679 = vpop.f32.mrf.mxu0
        %v4680 = vadd.f32 %v4591, %v4679
        %v4681 = vpop.f32.mrf.mxu0
        %v4682 = vadd.f32 %v4593, %v4681
        %4683 = vmatmul.bf16.gmra.mxu0 %v3116
        %v4684 = vpop.f32.mrf.mxu0
        %v4685 = vadd.f32 %v4596, %v4684
        %v4686 = vpop.f32.mrf.mxu0
        %v4687 = vadd.f32 %v4598, %v4686
        %4688 = vmatmul.bf16.gmra.mxu0 %v3124
        %v4689 = vpop.f32.mrf.mxu0
        %v4690 = vadd.f32 %v4601, %v4689
        %v4691 = vpop.f32.mrf.mxu0
        %v4692 = vadd.f32 %v4603, %v4691
        %4693 = vmatmul.bf16.gmra.mxu0 %v3132
        %v4694 = vpop.f32.mrf.mxu0
        %v4695 = vadd.f32 %v4606, %v4694
        %v4696 = vpop.f32.mrf.mxu0
        %v4697 = vadd.f32 %v4608, %v4696
        %4698 = vdwg.mxu0
        %4699 = vmatpush.bf16.xpose.msra.mxu0 %v3971
        %4700 = vmatpush.bf16.xpose.msra.mxu0 %v3963
        %4701 = vmatpush.bf16.xpose.msra.mxu0 %v3955
        %4702 = vmatpush.bf16.xpose.msra.mxu0 %v3947
        %4703 = vmatpush.bf16.xpose.msra.mxu0 %v3939
        %4704 = vmatpush.bf16.xpose.msra.mxu0 %v3931
        %4705 = vmatpush.bf16.xpose.msra.mxu0 %v3923
        %4706 = vmatpush.bf16.xpose.msra.mxu0 %v3915
        %4707 = vmatmul.bf16.gmra.mxu0 %v3013
        %v4708 = vpop.f32.mrf.mxu0
        %v4709 = vadd.f32 %v4620, %v4708
        %v4710 = vpop.f32.mrf.mxu0
        %v4711 = vadd.f32 %v4622, %v4710
        %4712 = vmatmul.bf16.gmra.mxu0 %v3021
        %v4713 = vpop.f32.mrf.mxu0
        %v4714 = vadd.f32 %v4625, %v4713
        %v4715 = vpop.f32.mrf.mxu0
        %v4716 = vadd.f32 %v4627, %v4715
        %4717 = vmatmul.bf16.gmra.mxu0 %v3029
        %v4718 = vpop.f32.mrf.mxu0
        %v4719 = vadd.f32 %v4630, %v4718
        %v4720 = vpop.f32.mrf.mxu0
        %v4721 = vadd.f32 %v4632, %v4720
        %4722 = vmatmul.bf16.gmra.mxu0 %v3037
        %v4723 = vpop.f32.mrf.mxu0
        %v4724 = vadd.f32 %v4635, %v4723
        %v4725 = vpop.f32.mrf.mxu0
        %v4726 = vadd.f32 %v4637, %v4725
        %4727 = vmatmul.bf16.gmra.mxu0 %v3045
        %v4728 = vpop.f32.mrf.mxu0
        %v4729 = vadd.f32 %v4640, %v4728
        %v4730 = vpop.f32.mrf.mxu0
        %v4731 = vadd.f32 %v4642, %v4730
        %4732 = vmatmul.bf16.gmra.mxu0 %v3053
        %v4733 = vpop.f32.mrf.mxu0
        %v4734 = vadd.f32 %v4645, %v4733
        %v4735 = vpop.f32.mrf.mxu0
        %v4736 = vadd.f32 %v4647, %v4735
        %4737 = vmatmul.bf16.gmra.mxu0 %v3061
        %v4738 = vpop.f32.mrf.mxu0
        %v4739 = vadd.f32 %v4650, %v4738
        %v4740 = vpop.f32.mrf.mxu0
        %v4741 = vadd.f32 %v4652, %v4740
        %4742 = vmatmul.bf16.gmra.mxu0 %v3069
        %v4743 = vpop.f32.mrf.mxu0
        %v4744 = vadd.f32 %v4655, %v4743
        %v4745 = vpop.f32.mrf.mxu0
        %v4746 = vadd.f32 %v4657, %v4745
        %4747 = vmatmul.bf16.gmra.mxu0 %v3077
        %v4748 = vpop.f32.mrf.mxu0
        %v4749 = vadd.f32 %v4660, %v4748
        %v4750 = vpop.f32.mrf.mxu0
        %v4751 = vadd.f32 %v4662, %v4750
        %4752 = vmatmul.bf16.gmra.mxu0 %v3085
        %v4753 = vpop.f32.mrf.mxu0
        %v4754 = vadd.f32 %v4665, %v4753
        %v4755 = vpop.f32.mrf.mxu0
        %v4756 = vadd.f32 %v4667, %v4755
        %4757 = vmatmul.bf16.gmra.mxu0 %v3093
        %v4758 = vpop.f32.mrf.mxu0
        %v4759 = vadd.f32 %v4670, %v4758
        %v4760 = vpop.f32.mrf.mxu0
        %v4761 = vadd.f32 %v4672, %v4760
        %4762 = vmatmul.bf16.gmra.mxu0 %v3101
        %v4763 = vpop.f32.mrf.mxu0
        %v4764 = vadd.f32 %v4675, %v4763
        %v4765 = vpop.f32.mrf.mxu0
        %v4766 = vadd.f32 %v4677, %v4765
        %4767 = vmatmul.bf16.gmra.mxu0 %v3109
        %v4768 = vpop.f32.mrf.mxu0
        %v4769 = vadd.f32 %v4680, %v4768
        %v4770 = vpop.f32.mrf.mxu0
        %v4771 = vadd.f32 %v4682, %v4770
        %4772 = vmatmul.bf16.gmra.mxu0 %v3117
        %v4773 = vpop.f32.mrf.mxu0
        %v4774 = vadd.f32 %v4685, %v4773
        %v4775 = vpop.f32.mrf.mxu0
        %v4776 = vadd.f32 %v4687, %v4775
        %4777 = vmatmul.bf16.gmra.mxu0 %v3125
        %v4778 = vpop.f32.mrf.mxu0
        %v4779 = vadd.f32 %v4690, %v4778
        %v4780 = vpop.f32.mrf.mxu0
        %v4781 = vadd.f32 %v4692, %v4780
        %4782 = vmatmul.bf16.gmra.mxu0 %v3133
        %v4783 = vpop.f32.mrf.mxu0
        %v4784 = vadd.f32 %v4695, %v4783
        %v4785 = vpop.f32.mrf.mxu0
        %v4786 = vadd.f32 %v4697, %v4785
        %4787 = vdwg.mxu0
        %4788 = vmatpush.bf16.xpose.msra.mxu0 %v3972
        %4789 = vmatpush.bf16.xpose.msra.mxu0 %v3964
        %4790 = vmatpush.bf16.xpose.msra.mxu0 %v3956
        %4791 = vmatpush.bf16.xpose.msra.mxu0 %v3948
        %4792 = vmatpush.bf16.xpose.msra.mxu0 %v3940
        %4793 = vmatpush.bf16.xpose.msra.mxu0 %v3932
        %4794 = vmatpush.bf16.xpose.msra.mxu0 %v3924
        %4795 = vmatpush.bf16.xpose.msra.mxu0 %v3916
        %4796 = vmatmul.bf16.gmra.mxu0 %v3014
        %v4797 = vpop.f32.mrf.mxu0
        %v4798 = vadd.f32 %v4709, %v4797
        %v4799 = vpop.f32.mrf.mxu0
        %v4800 = vadd.f32 %v4711, %v4799
        %4801 = vmatmul.bf16.gmra.mxu0 %v3022
        %v4802 = vpop.f32.mrf.mxu0
        %v4803 = vadd.f32 %v4714, %v4802
        %v4804 = vpop.f32.mrf.mxu0
        %v4805 = vadd.f32 %v4716, %v4804
        %4806 = vmatmul.bf16.gmra.mxu0 %v3030
        %v4807 = vpop.f32.mrf.mxu0
        %v4808 = vadd.f32 %v4719, %v4807
        %v4809 = vpop.f32.mrf.mxu0
        %v4810 = vadd.f32 %v4721, %v4809
        %4811 = vmatmul.bf16.gmra.mxu0 %v3038
        %v4812 = vpop.f32.mrf.mxu0
        %v4813 = vadd.f32 %v4724, %v4812
        %v4814 = vpop.f32.mrf.mxu0
        %v4815 = vadd.f32 %v4726, %v4814
        %4816 = vmatmul.bf16.gmra.mxu0 %v3046
        %v4817 = vpop.f32.mrf.mxu0
        %v4818 = vadd.f32 %v4729, %v4817
        %v4819 = vpop.f32.mrf.mxu0
        %v4820 = vadd.f32 %v4731, %v4819
        %4821 = vmatmul.bf16.gmra.mxu0 %v3054
        %v4822 = vpop.f32.mrf.mxu0
        %v4823 = vadd.f32 %v4734, %v4822
        %v4824 = vpop.f32.mrf.mxu0
        %v4825 = vadd.f32 %v4736, %v4824
        %4826 = vmatmul.bf16.gmra.mxu0 %v3062
        %v4827 = vpop.f32.mrf.mxu0
        %v4828 = vadd.f32 %v4739, %v4827
        %v4829 = vpop.f32.mrf.mxu0
        %v4830 = vadd.f32 %v4741, %v4829
        %4831 = vmatmul.bf16.gmra.mxu0 %v3070
        %v4832 = vpop.f32.mrf.mxu0
        %v4833 = vadd.f32 %v4744, %v4832
        %v4834 = vpop.f32.mrf.mxu0
        %v4835 = vadd.f32 %v4746, %v4834
        %4836 = vmatmul.bf16.gmra.mxu0 %v3078
        %v4837 = vpop.f32.mrf.mxu0
        %v4838 = vadd.f32 %v4749, %v4837
        %v4839 = vpop.f32.mrf.mxu0
        %v4840 = vadd.f32 %v4751, %v4839
        %4841 = vmatmul.bf16.gmra.mxu0 %v3086
        %v4842 = vpop.f32.mrf.mxu0
        %v4843 = vadd.f32 %v4754, %v4842
        %v4844 = vpop.f32.mrf.mxu0
        %v4845 = vadd.f32 %v4756, %v4844
        %4846 = vmatmul.bf16.gmra.mxu0 %v3094
        %v4847 = vpop.f32.mrf.mxu0
        %v4848 = vadd.f32 %v4759, %v4847
        %v4849 = vpop.f32.mrf.mxu0
        %v4850 = vadd.f32 %v4761, %v4849
        %4851 = vmatmul.bf16.gmra.mxu0 %v3102
        %v4852 = vpop.f32.mrf.mxu0
        %v4853 = vadd.f32 %v4764, %v4852
        %v4854 = vpop.f32.mrf.mxu0
        %v4855 = vadd.f32 %v4766, %v4854
        %4856 = vmatmul.bf16.gmra.mxu0 %v3110
        %v4857 = vpop.f32.mrf.mxu0
        %v4858 = vadd.f32 %v4769, %v4857
        %v4859 = vpop.f32.mrf.mxu0
        %v4860 = vadd.f32 %v4771, %v4859
        %4861 = vmatmul.bf16.gmra.mxu0 %v3118
        %v4862 = vpop.f32.mrf.mxu0
        %v4863 = vadd.f32 %v4774, %v4862
        %v4864 = vpop.f32.mrf.mxu0
        %v4865 = vadd.f32 %v4776, %v4864
        %4866 = vmatmul.bf16.gmra.mxu0 %v3126
        %v4867 = vpop.f32.mrf.mxu0
        %v4868 = vadd.f32 %v4779, %v4867
        %v4869 = vpop.f32.mrf.mxu0
        %v4870 = vadd.f32 %v4781, %v4869
        %4871 = vmatmul.bf16.gmra.mxu0 %v3134
        %v4872 = vpop.f32.mrf.mxu0
        %v4873 = vadd.f32 %v4784, %v4872
        %v4874 = vpop.f32.mrf.mxu0
        %v4875 = vadd.f32 %v4786, %v4874
        %4876 = vdwg.mxu0
        %4877 = vmatpush.bf16.xpose.msra.mxu0 %v4029
        %4878 = vmatpush.bf16.xpose.msra.mxu0 %v4021
        %4879 = vmatpush.bf16.xpose.msra.mxu0 %v4013
        %4880 = vmatpush.bf16.xpose.msra.mxu0 %v4005
        %4881 = vmatpush.bf16.xpose.msra.mxu0 %v3997
        %4882 = vmatpush.bf16.xpose.msra.mxu0 %v3989
        %4883 = vmatpush.bf16.xpose.msra.mxu0 %v3981
        %4884 = vmatpush.bf16.xpose.msra.mxu0 %v3973
        %4885 = vmatmul.bf16.gmra.mxu0 %v3007
        %v4886 = vpop.f32.mrf.mxu0
        %v4887 = vadd.f32 %v3522, %v4886
        %v4888 = vpop.f32.mrf.mxu0
        %v4889 = vadd.f32 %v3522, %v4888
        %4890 = vmatmul.bf16.gmra.mxu0 %v3015
        %v4891 = vpop.f32.mrf.mxu0
        %v4892 = vadd.f32 %v3522, %v4891
        %v4893 = vpop.f32.mrf.mxu0
        %v4894 = vadd.f32 %v3522, %v4893
        %4895 = vmatmul.bf16.gmra.mxu0 %v3023
        %v4896 = vpop.f32.mrf.mxu0
        %v4897 = vadd.f32 %v3522, %v4896
        %v4898 = vpop.f32.mrf.mxu0
        %v4899 = vadd.f32 %v3522, %v4898
        %4900 = vmatmul.bf16.gmra.mxu0 %v3031
        %v4901 = vpop.f32.mrf.mxu0
        %v4902 = vadd.f32 %v3522, %v4901
        %v4903 = vpop.f32.mrf.mxu0
        %v4904 = vadd.f32 %v3522, %v4903
        %4905 = vmatmul.bf16.gmra.mxu0 %v3039
        %v4906 = vpop.f32.mrf.mxu0
        %v4907 = vadd.f32 %v3522, %v4906
        %v4908 = vpop.f32.mrf.mxu0
        %v4909 = vadd.f32 %v3522, %v4908
        %4910 = vmatmul.bf16.gmra.mxu0 %v3047
        %v4911 = vpop.f32.mrf.mxu0
        %v4912 = vadd.f32 %v3522, %v4911
        %v4913 = vpop.f32.mrf.mxu0
        %v4914 = vadd.f32 %v3522, %v4913
        %4915 = vmatmul.bf16.gmra.mxu0 %v3055
        %v4916 = vpop.f32.mrf.mxu0
        %v4917 = vadd.f32 %v3522, %v4916
        %v4918 = vpop.f32.mrf.mxu0
        %v4919 = vadd.f32 %v3522, %v4918
        %4920 = vmatmul.bf16.gmra.mxu0 %v3063
        %v4921 = vpop.f32.mrf.mxu0
        %v4922 = vadd.f32 %v3522, %v4921
        %v4923 = vpop.f32.mrf.mxu0
        %v4924 = vadd.f32 %v3522, %v4923
        %4925 = vmatmul.bf16.gmra.mxu0 %v3071
        %v4926 = vpop.f32.mrf.mxu0
        %v4927 = vadd.f32 %v3522, %v4926
        %v4928 = vpop.f32.mrf.mxu0
        %v4929 = vadd.f32 %v3522, %v4928
        %4930 = vmatmul.bf16.gmra.mxu0 %v3079
        %v4931 = vpop.f32.mrf.mxu0
        %v4932 = vadd.f32 %v3522, %v4931
        %v4933 = vpop.f32.mrf.mxu0
        %v4934 = vadd.f32 %v3522, %v4933
        %4935 = vmatmul.bf16.gmra.mxu0 %v3087
        %v4936 = vpop.f32.mrf.mxu0
        %v4937 = vadd.f32 %v3522, %v4936
        %v4938 = vpop.f32.mrf.mxu0
        %v4939 = vadd.f32 %v3522, %v4938
        %4940 = vmatmul.bf16.gmra.mxu0 %v3095
        %v4941 = vpop.f32.mrf.mxu0
        %v4942 = vadd.f32 %v3522, %v4941
        %v4943 = vpop.f32.mrf.mxu0
        %v4944 = vadd.f32 %v3522, %v4943
        %4945 = vmatmul.bf16.gmra.mxu0 %v3103
        %v4946 = vpop.f32.mrf.mxu0
        %v4947 = vadd.f32 %v3522, %v4946
        %v4948 = vpop.f32.mrf.mxu0
        %v4949 = vadd.f32 %v3522, %v4948
        %4950 = vmatmul.bf16.gmra.mxu0 %v3111
        %v4951 = vpop.f32.mrf.mxu0
        %v4952 = vadd.f32 %v3522, %v4951
        %v4953 = vpop.f32.mrf.mxu0
        %v4954 = vadd.f32 %v3522, %v4953
        %4955 = vmatmul.bf16.gmra.mxu0 %v3119
        %v4956 = vpop.f32.mrf.mxu0
        %v4957 = vadd.f32 %v3522, %v4956
        %v4958 = vpop.f32.mrf.mxu0
        %v4959 = vadd.f32 %v3522, %v4958
        %4960 = vmatmul.bf16.gmra.mxu0 %v3127
        %v4961 = vpop.f32.mrf.mxu0
        %v4962 = vadd.f32 %v3522, %v4961
        %v4963 = vpop.f32.mrf.mxu0
        %v4964 = vadd.f32 %v3522, %v4963
        %4965 = vdwg.mxu0
        %4966 = vmatpush.bf16.xpose.msra.mxu0 %v4030
        %4967 = vmatpush.bf16.xpose.msra.mxu0 %v4022
        %4968 = vmatpush.bf16.xpose.msra.mxu0 %v4014
        %4969 = vmatpush.bf16.xpose.msra.mxu0 %v4006
        %4970 = vmatpush.bf16.xpose.msra.mxu0 %v3998
        %4971 = vmatpush.bf16.xpose.msra.mxu0 %v3990
        %4972 = vmatpush.bf16.xpose.msra.mxu0 %v3982
        %4973 = vmatpush.bf16.xpose.msra.mxu0 %v3974
        %4974 = vmatmul.bf16.gmra.mxu0 %v3008
        %v4975 = vpop.f32.mrf.mxu0
        %v4976 = vadd.f32 %v4887, %v4975
        %v4977 = vpop.f32.mrf.mxu0
        %v4978 = vadd.f32 %v4889, %v4977
        %4979 = vmatmul.bf16.gmra.mxu0 %v3016
        %v4980 = vpop.f32.mrf.mxu0
        %v4981 = vadd.f32 %v4892, %v4980
        %v4982 = vpop.f32.mrf.mxu0
        %v4983 = vadd.f32 %v4894, %v4982
        %4984 = vmatmul.bf16.gmra.mxu0 %v3024
        %v4985 = vpop.f32.mrf.mxu0
        %v4986 = vadd.f32 %v4897, %v4985
        %v4987 = vpop.f32.mrf.mxu0
        %v4988 = vadd.f32 %v4899, %v4987
        %4989 = vmatmul.bf16.gmra.mxu0 %v3032
        %v4990 = vpop.f32.mrf.mxu0
        %v4991 = vadd.f32 %v4902, %v4990
        %v4992 = vpop.f32.mrf.mxu0
        %v4993 = vadd.f32 %v4904, %v4992
        %4994 = vmatmul.bf16.gmra.mxu0 %v3040
        %v4995 = vpop.f32.mrf.mxu0
        %v4996 = vadd.f32 %v4907, %v4995
        %v4997 = vpop.f32.mrf.mxu0
        %v4998 = vadd.f32 %v4909, %v4997
        %4999 = vmatmul.bf16.gmra.mxu0 %v3048
        %v5000 = vpop.f32.mrf.mxu0
        %v5001 = vadd.f32 %v4912, %v5000
        %v5002 = vpop.f32.mrf.mxu0
        %v5003 = vadd.f32 %v4914, %v5002
        %5004 = vmatmul.bf16.gmra.mxu0 %v3056
        %v5005 = vpop.f32.mrf.mxu0
        %v5006 = vadd.f32 %v4917, %v5005
        %v5007 = vpop.f32.mrf.mxu0
        %v5008 = vadd.f32 %v4919, %v5007
        %5009 = vmatmul.bf16.gmra.mxu0 %v3064
        %v5010 = vpop.f32.mrf.mxu0
        %v5011 = vadd.f32 %v4922, %v5010
        %v5012 = vpop.f32.mrf.mxu0
        %v5013 = vadd.f32 %v4924, %v5012
        %5014 = vmatmul.bf16.gmra.mxu0 %v3072
        %v5015 = vpop.f32.mrf.mxu0
        %v5016 = vadd.f32 %v4927, %v5015
        %v5017 = vpop.f32.mrf.mxu0
        %v5018 = vadd.f32 %v4929, %v5017
        %5019 = vmatmul.bf16.gmra.mxu0 %v3080
        %v5020 = vpop.f32.mrf.mxu0
        %v5021 = vadd.f32 %v4932, %v5020
        %v5022 = vpop.f32.mrf.mxu0
        %v5023 = vadd.f32 %v4934, %v5022
        %5024 = vmatmul.bf16.gmra.mxu0 %v3088
        %v5025 = vpop.f32.mrf.mxu0
        %v5026 = vadd.f32 %v4937, %v5025
        %v5027 = vpop.f32.mrf.mxu0
        %v5028 = vadd.f32 %v4939, %v5027
        %5029 = vmatmul.bf16.gmra.mxu0 %v3096
        %v5030 = vpop.f32.mrf.mxu0
        %v5031 = vadd.f32 %v4942, %v5030
        %v5032 = vpop.f32.mrf.mxu0
        %v5033 = vadd.f32 %v4944, %v5032
        %5034 = vmatmul.bf16.gmra.mxu0 %v3104
        %v5035 = vpop.f32.mrf.mxu0
        %v5036 = vadd.f32 %v4947, %v5035
        %v5037 = vpop.f32.mrf.mxu0
        %v5038 = vadd.f32 %v4949, %v5037
        %5039 = vmatmul.bf16.gmra.mxu0 %v3112
        %v5040 = vpop.f32.mrf.mxu0
        %v5041 = vadd.f32 %v4952, %v5040
        %v5042 = vpop.f32.mrf.mxu0
        %v5043 = vadd.f32 %v4954, %v5042
        %5044 = vmatmul.bf16.gmra.mxu0 %v3120
        %v5045 = vpop.f32.mrf.mxu0
        %v5046 = vadd.f32 %v4957, %v5045
        %v5047 = vpop.f32.mrf.mxu0
        %v5048 = vadd.f32 %v4959, %v5047
        %5049 = vmatmul.bf16.gmra.mxu0 %v3128
        %v5050 = vpop.f32.mrf.mxu0
        %v5051 = vadd.f32 %v4962, %v5050
        %v5052 = vpop.f32.mrf.mxu0
        %v5053 = vadd.f32 %v4964, %v5052
        %5054 = vdwg.mxu0
        %5055 = vmatpush.bf16.xpose.msra.mxu0 %v4031
        %5056 = vmatpush.bf16.xpose.msra.mxu0 %v4023
        %5057 = vmatpush.bf16.xpose.msra.mxu0 %v4015
        %5058 = vmatpush.bf16.xpose.msra.mxu0 %v4007
        %5059 = vmatpush.bf16.xpose.msra.mxu0 %v3999
        %5060 = vmatpush.bf16.xpose.msra.mxu0 %v3991
        %5061 = vmatpush.bf16.xpose.msra.mxu0 %v3983
        %5062 = vmatpush.bf16.xpose.msra.mxu0 %v3975
        %5063 = vmatmul.bf16.gmra.mxu0 %v3009
        %v5064 = vpop.f32.mrf.mxu0
        %v5065 = vadd.f32 %v4976, %v5064
        %v5066 = vpop.f32.mrf.mxu0
        %v5067 = vadd.f32 %v4978, %v5066
        %5068 = vmatmul.bf16.gmra.mxu0 %v3017
        %v5069 = vpop.f32.mrf.mxu0
        %v5070 = vadd.f32 %v4981, %v5069
        %v5071 = vpop.f32.mrf.mxu0
        %v5072 = vadd.f32 %v4983, %v5071
        %5073 = vmatmul.bf16.gmra.mxu0 %v3025
        %v5074 = vpop.f32.mrf.mxu0
        %v5075 = vadd.f32 %v4986, %v5074
        %v5076 = vpop.f32.mrf.mxu0
        %v5077 = vadd.f32 %v4988, %v5076
        %5078 = vmatmul.bf16.gmra.mxu0 %v3033
        %v5079 = vpop.f32.mrf.mxu0
        %v5080 = vadd.f32 %v4991, %v5079
        %v5081 = vpop.f32.mrf.mxu0
        %v5082 = vadd.f32 %v4993, %v5081
        %5083 = vmatmul.bf16.gmra.mxu0 %v3041
        %v5084 = vpop.f32.mrf.mxu0
        %v5085 = vadd.f32 %v4996, %v5084
        %v5086 = vpop.f32.mrf.mxu0
        %v5087 = vadd.f32 %v4998, %v5086
        %5088 = vmatmul.bf16.gmra.mxu0 %v3049
        %v5089 = vpop.f32.mrf.mxu0
        %v5090 = vadd.f32 %v5001, %v5089
        %v5091 = vpop.f32.mrf.mxu0
        %v5092 = vadd.f32 %v5003, %v5091
        %5093 = vmatmul.bf16.gmra.mxu0 %v3057
        %v5094 = vpop.f32.mrf.mxu0
        %v5095 = vadd.f32 %v5006, %v5094
        %v5096 = vpop.f32.mrf.mxu0
        %v5097 = vadd.f32 %v5008, %v5096
        %5098 = vmatmul.bf16.gmra.mxu0 %v3065
        %v5099 = vpop.f32.mrf.mxu0
        %v5100 = vadd.f32 %v5011, %v5099
        %v5101 = vpop.f32.mrf.mxu0
        %v5102 = vadd.f32 %v5013, %v5101
        %5103 = vmatmul.bf16.gmra.mxu0 %v3073
        %v5104 = vpop.f32.mrf.mxu0
        %v5105 = vadd.f32 %v5016, %v5104
        %v5106 = vpop.f32.mrf.mxu0
        %v5107 = vadd.f32 %v5018, %v5106
        %5108 = vmatmul.bf16.gmra.mxu0 %v3081
        %v5109 = vpop.f32.mrf.mxu0
        %v5110 = vadd.f32 %v5021, %v5109
        %v5111 = vpop.f32.mrf.mxu0
        %v5112 = vadd.f32 %v5023, %v5111
        %5113 = vmatmul.bf16.gmra.mxu0 %v3089
        %v5114 = vpop.f32.mrf.mxu0
        %v5115 = vadd.f32 %v5026, %v5114
        %v5116 = vpop.f32.mrf.mxu0
        %v5117 = vadd.f32 %v5028, %v5116
        %5118 = vmatmul.bf16.gmra.mxu0 %v3097
        %v5119 = vpop.f32.mrf.mxu0
        %v5120 = vadd.f32 %v5031, %v5119
        %v5121 = vpop.f32.mrf.mxu0
        %v5122 = vadd.f32 %v5033, %v5121
        %5123 = vmatmul.bf16.gmra.mxu0 %v3105
        %v5124 = vpop.f32.mrf.mxu0
        %v5125 = vadd.f32 %v5036, %v5124
        %v5126 = vpop.f32.mrf.mxu0
        %v5127 = vadd.f32 %v5038, %v5126
        %5128 = vmatmul.bf16.gmra.mxu0 %v3113
        %v5129 = vpop.f32.mrf.mxu0
        %v5130 = vadd.f32 %v5041, %v5129
        %v5131 = vpop.f32.mrf.mxu0
        %v5132 = vadd.f32 %v5043, %v5131
        %5133 = vmatmul.bf16.gmra.mxu0 %v3121
        %v5134 = vpop.f32.mrf.mxu0
        %v5135 = vadd.f32 %v5046, %v5134
        %v5136 = vpop.f32.mrf.mxu0
        %v5137 = vadd.f32 %v5048, %v5136
        %5138 = vmatmul.bf16.gmra.mxu0 %v3129
        %v5139 = vpop.f32.mrf.mxu0
        %v5140 = vadd.f32 %v5051, %v5139
        %v5141 = vpop.f32.mrf.mxu0
        %v5142 = vadd.f32 %v5053, %v5141
        %5143 = vdwg.mxu0
        %5144 = vmatpush.bf16.xpose.msra.mxu0 %v4032
        %5145 = vmatpush.bf16.xpose.msra.mxu0 %v4024
        %5146 = vmatpush.bf16.xpose.msra.mxu0 %v4016
        %5147 = vmatpush.bf16.xpose.msra.mxu0 %v4008
        %5148 = vmatpush.bf16.xpose.msra.mxu0 %v4000
        %5149 = vmatpush.bf16.xpose.msra.mxu0 %v3992
        %5150 = vmatpush.bf16.xpose.msra.mxu0 %v3984
        %5151 = vmatpush.bf16.xpose.msra.mxu0 %v3976
        %5152 = vmatmul.bf16.gmra.mxu0 %v3010
        %v5153 = vpop.f32.mrf.mxu0
        %v5154 = vadd.f32 %v5065, %v5153
        %v5155 = vpop.f32.mrf.mxu0
        %v5156 = vadd.f32 %v5067, %v5155
        %5157 = vmatmul.bf16.gmra.mxu0 %v3018
        %v5158 = vpop.f32.mrf.mxu0
        %v5159 = vadd.f32 %v5070, %v5158
        %v5160 = vpop.f32.mrf.mxu0
        %v5161 = vadd.f32 %v5072, %v5160
        %5162 = vmatmul.bf16.gmra.mxu0 %v3026
        %v5163 = vpop.f32.mrf.mxu0
        %v5164 = vadd.f32 %v5075, %v5163
        %v5165 = vpop.f32.mrf.mxu0
        %v5166 = vadd.f32 %v5077, %v5165
        %5167 = vmatmul.bf16.gmra.mxu0 %v3034
        %v5168 = vpop.f32.mrf.mxu0
        %v5169 = vadd.f32 %v5080, %v5168
        %v5170 = vpop.f32.mrf.mxu0
        %v5171 = vadd.f32 %v5082, %v5170
        %5172 = vmatmul.bf16.gmra.mxu0 %v3042
        %v5173 = vpop.f32.mrf.mxu0
        %v5174 = vadd.f32 %v5085, %v5173
        %v5175 = vpop.f32.mrf.mxu0
        %v5176 = vadd.f32 %v5087, %v5175
        %5177 = vmatmul.bf16.gmra.mxu0 %v3050
        %v5178 = vpop.f32.mrf.mxu0
        %v5179 = vadd.f32 %v5090, %v5178
        %v5180 = vpop.f32.mrf.mxu0
        %v5181 = vadd.f32 %v5092, %v5180
        %5182 = vmatmul.bf16.gmra.mxu0 %v3058
        %v5183 = vpop.f32.mrf.mxu0
        %v5184 = vadd.f32 %v5095, %v5183
        %v5185 = vpop.f32.mrf.mxu0
        %v5186 = vadd.f32 %v5097, %v5185
        %5187 = vmatmul.bf16.gmra.mxu0 %v3066
        %v5188 = vpop.f32.mrf.mxu0
        %v5189 = vadd.f32 %v5100, %v5188
        %v5190 = vpop.f32.mrf.mxu0
        %v5191 = vadd.f32 %v5102, %v5190
        %5192 = vmatmul.bf16.gmra.mxu0 %v3074
        %v5193 = vpop.f32.mrf.mxu0
        %v5194 = vadd.f32 %v5105, %v5193
        %v5195 = vpop.f32.mrf.mxu0
        %v5196 = vadd.f32 %v5107, %v5195
        %5197 = vmatmul.bf16.gmra.mxu0 %v3082
        %v5198 = vpop.f32.mrf.mxu0
        %v5199 = vadd.f32 %v5110, %v5198
        %v5200 = vpop.f32.mrf.mxu0
        %v5201 = vadd.f32 %v5112, %v5200
        %5202 = vmatmul.bf16.gmra.mxu0 %v3090
        %v5203 = vpop.f32.mrf.mxu0
        %v5204 = vadd.f32 %v5115, %v5203
        %v5205 = vpop.f32.mrf.mxu0
        %v5206 = vadd.f32 %v5117, %v5205
        %5207 = vmatmul.bf16.gmra.mxu0 %v3098
        %v5208 = vpop.f32.mrf.mxu0
        %v5209 = vadd.f32 %v5120, %v5208
        %v5210 = vpop.f32.mrf.mxu0
        %v5211 = vadd.f32 %v5122, %v5210
        %5212 = vmatmul.bf16.gmra.mxu0 %v3106
        %v5213 = vpop.f32.mrf.mxu0
        %v5214 = vadd.f32 %v5125, %v5213
        %v5215 = vpop.f32.mrf.mxu0
        %v5216 = vadd.f32 %v5127, %v5215
        %5217 = vmatmul.bf16.gmra.mxu0 %v3114
        %v5218 = vpop.f32.mrf.mxu0
        %v5219 = vadd.f32 %v5130, %v5218
        %v5220 = vpop.f32.mrf.mxu0
        %v5221 = vadd.f32 %v5132, %v5220
        %5222 = vmatmul.bf16.gmra.mxu0 %v3122
        %v5223 = vpop.f32.mrf.mxu0
        %v5224 = vadd.f32 %v5135, %v5223
        %v5225 = vpop.f32.mrf.mxu0
        %v5226 = vadd.f32 %v5137, %v5225
        %5227 = vmatmul.bf16.gmra.mxu0 %v3130
        %v5228 = vpop.f32.mrf.mxu0
        %v5229 = vadd.f32 %v5140, %v5228
        %v5230 = vpop.f32.mrf.mxu0
        %v5231 = vadd.f32 %v5142, %v5230
        %5232 = vdwg.mxu0
        %5233 = vmatpush.bf16.xpose.msra.mxu0 %v4033
        %5234 = vmatpush.bf16.xpose.msra.mxu0 %v4025
        %5235 = vmatpush.bf16.xpose.msra.mxu0 %v4017
        %5236 = vmatpush.bf16.xpose.msra.mxu0 %v4009
        %5237 = vmatpush.bf16.xpose.msra.mxu0 %v4001
        %5238 = vmatpush.bf16.xpose.msra.mxu0 %v3993
        %5239 = vmatpush.bf16.xpose.msra.mxu0 %v3985
        %5240 = vmatpush.bf16.xpose.msra.mxu0 %v3977
        %5241 = vmatmul.bf16.gmra.mxu0 %v3011
        %v5242 = vpop.f32.mrf.mxu0
        %v5243 = vadd.f32 %v5154, %v5242
        %v5244 = vpop.f32.mrf.mxu0
        %v5245 = vadd.f32 %v5156, %v5244
        %5246 = vmatmul.bf16.gmra.mxu0 %v3019
        %v5247 = vpop.f32.mrf.mxu0
        %v5248 = vadd.f32 %v5159, %v5247
        %v5249 = vpop.f32.mrf.mxu0
        %v5250 = vadd.f32 %v5161, %v5249
        %5251 = vmatmul.bf16.gmra.mxu0 %v3027
        %v5252 = vpop.f32.mrf.mxu0
        %v5253 = vadd.f32 %v5164, %v5252
        %v5254 = vpop.f32.mrf.mxu0
        %v5255 = vadd.f32 %v5166, %v5254
        %5256 = vmatmul.bf16.gmra.mxu0 %v3035
        %v5257 = vpop.f32.mrf.mxu0
        %v5258 = vadd.f32 %v5169, %v5257
        %v5259 = vpop.f32.mrf.mxu0
        %v5260 = vadd.f32 %v5171, %v5259
        %5261 = vmatmul.bf16.gmra.mxu0 %v3043
        %v5262 = vpop.f32.mrf.mxu0
        %v5263 = vadd.f32 %v5174, %v5262
        %v5264 = vpop.f32.mrf.mxu0
        %v5265 = vadd.f32 %v5176, %v5264
        %5266 = vmatmul.bf16.gmra.mxu0 %v3051
        %v5267 = vpop.f32.mrf.mxu0
        %v5268 = vadd.f32 %v5179, %v5267
        %v5269 = vpop.f32.mrf.mxu0
        %v5270 = vadd.f32 %v5181, %v5269
        %5271 = vmatmul.bf16.gmra.mxu0 %v3059
        %v5272 = vpop.f32.mrf.mxu0
        %v5273 = vadd.f32 %v5184, %v5272
        %v5274 = vpop.f32.mrf.mxu0
        %v5275 = vadd.f32 %v5186, %v5274
        %5276 = vmatmul.bf16.gmra.mxu0 %v3067
        %v5277 = vpop.f32.mrf.mxu0
        %v5278 = vadd.f32 %v5189, %v5277
        %v5279 = vpop.f32.mrf.mxu0
        %v5280 = vadd.f32 %v5191, %v5279
        %5281 = vmatmul.bf16.gmra.mxu0 %v3075
        %v5282 = vpop.f32.mrf.mxu0
        %v5283 = vadd.f32 %v5194, %v5282
        %v5284 = vpop.f32.mrf.mxu0
        %v5285 = vadd.f32 %v5196, %v5284
        %5286 = vmatmul.bf16.gmra.mxu0 %v3083
        %v5287 = vpop.f32.mrf.mxu0
        %v5288 = vadd.f32 %v5199, %v5287
        %v5289 = vpop.f32.mrf.mxu0
        %v5290 = vadd.f32 %v5201, %v5289
        %5291 = vmatmul.bf16.gmra.mxu0 %v3091
        %v5292 = vpop.f32.mrf.mxu0
        %v5293 = vadd.f32 %v5204, %v5292
        %v5294 = vpop.f32.mrf.mxu0
        %v5295 = vadd.f32 %v5206, %v5294
        %5296 = vmatmul.bf16.gmra.mxu0 %v3099
        %v5297 = vpop.f32.mrf.mxu0
        %v5298 = vadd.f32 %v5209, %v5297
        %v5299 = vpop.f32.mrf.mxu0
        %v5300 = vadd.f32 %v5211, %v5299
        %5301 = vmatmul.bf16.gmra.mxu0 %v3107
        %v5302 = vpop.f32.mrf.mxu0
        %v5303 = vadd.f32 %v5214, %v5302
        %v5304 = vpop.f32.mrf.mxu0
        %v5305 = vadd.f32 %v5216, %v5304
        %5306 = vmatmul.bf16.gmra.mxu0 %v3115
        %v5307 = vpop.f32.mrf.mxu0
        %v5308 = vadd.f32 %v5219, %v5307
        %v5309 = vpop.f32.mrf.mxu0
        %v5310 = vadd.f32 %v5221, %v5309
        %5311 = vmatmul.bf16.gmra.mxu0 %v3123
        %v5312 = vpop.f32.mrf.mxu0
        %v5313 = vadd.f32 %v5224, %v5312
        %v5314 = vpop.f32.mrf.mxu0
        %v5315 = vadd.f32 %v5226, %v5314
        %5316 = vmatmul.bf16.gmra.mxu0 %v3131
        %v5317 = vpop.f32.mrf.mxu0
        %v5318 = vadd.f32 %v5229, %v5317
        %v5319 = vpop.f32.mrf.mxu0
        %v5320 = vadd.f32 %v5231, %v5319
        %5321 = vdwg.mxu0
        %5322 = vmatpush.bf16.xpose.msra.mxu0 %v4034
        %5323 = vmatpush.bf16.xpose.msra.mxu0 %v4026
        %5324 = vmatpush.bf16.xpose.msra.mxu0 %v4018
        %5325 = vmatpush.bf16.xpose.msra.mxu0 %v4010
        %5326 = vmatpush.bf16.xpose.msra.mxu0 %v4002
        %5327 = vmatpush.bf16.xpose.msra.mxu0 %v3994
        %5328 = vmatpush.bf16.xpose.msra.mxu0 %v3986
        %5329 = vmatpush.bf16.xpose.msra.mxu0 %v3978
        %5330 = vmatmul.bf16.gmra.mxu0 %v3012
        %v5331 = vpop.f32.mrf.mxu0
        %v5332 = vadd.f32 %v5243, %v5331
        %v5333 = vpop.f32.mrf.mxu0
        %v5334 = vadd.f32 %v5245, %v5333
        %5335 = vmatmul.bf16.gmra.mxu0 %v3020
        %v5336 = vpop.f32.mrf.mxu0
        %v5337 = vadd.f32 %v5248, %v5336
        %v5338 = vpop.f32.mrf.mxu0
        %v5339 = vadd.f32 %v5250, %v5338
        %5340 = vmatmul.bf16.gmra.mxu0 %v3028
        %v5341 = vpop.f32.mrf.mxu0
        %v5342 = vadd.f32 %v5253, %v5341
        %v5343 = vpop.f32.mrf.mxu0
        %v5344 = vadd.f32 %v5255, %v5343
        %5345 = vmatmul.bf16.gmra.mxu0 %v3036
        %v5346 = vpop.f32.mrf.mxu0
        %v5347 = vadd.f32 %v5258, %v5346
        %v5348 = vpop.f32.mrf.mxu0
        %v5349 = vadd.f32 %v5260, %v5348
        %5350 = vmatmul.bf16.gmra.mxu0 %v3044
        %v5351 = vpop.f32.mrf.mxu0
        %v5352 = vadd.f32 %v5263, %v5351
        %v5353 = vpop.f32.mrf.mxu0
        %v5354 = vadd.f32 %v5265, %v5353
        %5355 = vmatmul.bf16.gmra.mxu0 %v3052
        %v5356 = vpop.f32.mrf.mxu0
        %v5357 = vadd.f32 %v5268, %v5356
        %v5358 = vpop.f32.mrf.mxu0
        %v5359 = vadd.f32 %v5270, %v5358
        %5360 = vmatmul.bf16.gmra.mxu0 %v3060
        %v5361 = vpop.f32.mrf.mxu0
        %v5362 = vadd.f32 %v5273, %v5361
        %v5363 = vpop.f32.mrf.mxu0
        %v5364 = vadd.f32 %v5275, %v5363
        %5365 = vmatmul.bf16.gmra.mxu0 %v3068
        %v5366 = vpop.f32.mrf.mxu0
        %v5367 = vadd.f32 %v5278, %v5366
        %v5368 = vpop.f32.mrf.mxu0
        %v5369 = vadd.f32 %v5280, %v5368
        %5370 = vmatmul.bf16.gmra.mxu0 %v3076
        %v5371 = vpop.f32.mrf.mxu0
        %v5372 = vadd.f32 %v5283, %v5371
        %v5373 = vpop.f32.mrf.mxu0
        %v5374 = vadd.f32 %v5285, %v5373
        %5375 = vmatmul.bf16.gmra.mxu0 %v3084
        %v5376 = vpop.f32.mrf.mxu0
        %v5377 = vadd.f32 %v5288, %v5376
        %v5378 = vpop.f32.mrf.mxu0
        %v5379 = vadd.f32 %v5290, %v5378
        %5380 = vmatmul.bf16.gmra.mxu0 %v3092
        %v5381 = vpop.f32.mrf.mxu0
        %v5382 = vadd.f32 %v5293, %v5381
        %v5383 = vpop.f32.mrf.mxu0
        %v5384 = vadd.f32 %v5295, %v5383
        %5385 = vmatmul.bf16.gmra.mxu0 %v3100
        %v5386 = vpop.f32.mrf.mxu0
        %v5387 = vadd.f32 %v5298, %v5386
        %v5388 = vpop.f32.mrf.mxu0
        %v5389 = vadd.f32 %v5300, %v5388
        %5390 = vmatmul.bf16.gmra.mxu0 %v3108
        %v5391 = vpop.f32.mrf.mxu0
        %v5392 = vadd.f32 %v5303, %v5391
        %v5393 = vpop.f32.mrf.mxu0
        %v5394 = vadd.f32 %v5305, %v5393
        %5395 = vmatmul.bf16.gmra.mxu0 %v3116
        %v5396 = vpop.f32.mrf.mxu0
        %v5397 = vadd.f32 %v5308, %v5396
        %v5398 = vpop.f32.mrf.mxu0
        %v5399 = vadd.f32 %v5310, %v5398
        %5400 = vmatmul.bf16.gmra.mxu0 %v3124
        %v5401 = vpop.f32.mrf.mxu0
        %v5402 = vadd.f32 %v5313, %v5401
        %v5403 = vpop.f32.mrf.mxu0
        %v5404 = vadd.f32 %v5315, %v5403
        %5405 = vmatmul.bf16.gmra.mxu0 %v3132
        %v5406 = vpop.f32.mrf.mxu0
        %v5407 = vadd.f32 %v5318, %v5406
        %v5408 = vpop.f32.mrf.mxu0
        %v5409 = vadd.f32 %v5320, %v5408
        %5410 = vdwg.mxu0
        %5411 = vmatpush.bf16.xpose.msra.mxu0 %v4035
        %5412 = vmatpush.bf16.xpose.msra.mxu0 %v4027
        %5413 = vmatpush.bf16.xpose.msra.mxu0 %v4019
        %5414 = vmatpush.bf16.xpose.msra.mxu0 %v4011
        %5415 = vmatpush.bf16.xpose.msra.mxu0 %v4003
        %5416 = vmatpush.bf16.xpose.msra.mxu0 %v3995
        %5417 = vmatpush.bf16.xpose.msra.mxu0 %v3987
        %5418 = vmatpush.bf16.xpose.msra.mxu0 %v3979
        %5419 = vmatmul.bf16.gmra.mxu0 %v3013
        %v5420 = vpop.f32.mrf.mxu0
        %v5421 = vadd.f32 %v5332, %v5420
        %v5422 = vpop.f32.mrf.mxu0
        %v5423 = vadd.f32 %v5334, %v5422
        %5424 = vmatmul.bf16.gmra.mxu0 %v3021
        %v5425 = vpop.f32.mrf.mxu0
        %v5426 = vadd.f32 %v5337, %v5425
        %v5427 = vpop.f32.mrf.mxu0
        %v5428 = vadd.f32 %v5339, %v5427
        %5429 = vmatmul.bf16.gmra.mxu0 %v3029
        %v5430 = vpop.f32.mrf.mxu0
        %v5431 = vadd.f32 %v5342, %v5430
        %v5432 = vpop.f32.mrf.mxu0
        %v5433 = vadd.f32 %v5344, %v5432
        %5434 = vmatmul.bf16.gmra.mxu0 %v3037
        %v5435 = vpop.f32.mrf.mxu0
        %v5436 = vadd.f32 %v5347, %v5435
        %v5437 = vpop.f32.mrf.mxu0
        %v5438 = vadd.f32 %v5349, %v5437
        %5439 = vmatmul.bf16.gmra.mxu0 %v3045
        %v5440 = vpop.f32.mrf.mxu0
        %v5441 = vadd.f32 %v5352, %v5440
        %v5442 = vpop.f32.mrf.mxu0
        %v5443 = vadd.f32 %v5354, %v5442
        %5444 = vmatmul.bf16.gmra.mxu0 %v3053
        %v5445 = vpop.f32.mrf.mxu0
        %v5446 = vadd.f32 %v5357, %v5445
        %v5447 = vpop.f32.mrf.mxu0
        %v5448 = vadd.f32 %v5359, %v5447
        %5449 = vmatmul.bf16.gmra.mxu0 %v3061
        %v5450 = vpop.f32.mrf.mxu0
        %v5451 = vadd.f32 %v5362, %v5450
        %v5452 = vpop.f32.mrf.mxu0
        %v5453 = vadd.f32 %v5364, %v5452
        %5454 = vmatmul.bf16.gmra.mxu0 %v3069
        %v5455 = vpop.f32.mrf.mxu0
        %v5456 = vadd.f32 %v5367, %v5455
        %v5457 = vpop.f32.mrf.mxu0
        %v5458 = vadd.f32 %v5369, %v5457
        %5459 = vmatmul.bf16.gmra.mxu0 %v3077
        %v5460 = vpop.f32.mrf.mxu0
        %v5461 = vadd.f32 %v5372, %v5460
        %v5462 = vpop.f32.mrf.mxu0
        %v5463 = vadd.f32 %v5374, %v5462
        %5464 = vmatmul.bf16.gmra.mxu0 %v3085
        %v5465 = vpop.f32.mrf.mxu0
        %v5466 = vadd.f32 %v5377, %v5465
        %v5467 = vpop.f32.mrf.mxu0
        %v5468 = vadd.f32 %v5379, %v5467
        %5469 = vmatmul.bf16.gmra.mxu0 %v3093
        %v5470 = vpop.f32.mrf.mxu0
        %v5471 = vadd.f32 %v5382, %v5470
        %v5472 = vpop.f32.mrf.mxu0
        %v5473 = vadd.f32 %v5384, %v5472
        %5474 = vmatmul.bf16.gmra.mxu0 %v3101
        %v5475 = vpop.f32.mrf.mxu0
        %v5476 = vadd.f32 %v5387, %v5475
        %v5477 = vpop.f32.mrf.mxu0
        %v5478 = vadd.f32 %v5389, %v5477
        %5479 = vmatmul.bf16.gmra.mxu0 %v3109
        %v5480 = vpop.f32.mrf.mxu0
        %v5481 = vadd.f32 %v5392, %v5480
        %v5482 = vpop.f32.mrf.mxu0
        %v5483 = vadd.f32 %v5394, %v5482
        %5484 = vmatmul.bf16.gmra.mxu0 %v3117
        %v5485 = vpop.f32.mrf.mxu0
        %v5486 = vadd.f32 %v5397, %v5485
        %v5487 = vpop.f32.mrf.mxu0
        %v5488 = vadd.f32 %v5399, %v5487
        %5489 = vmatmul.bf16.gmra.mxu0 %v3125
        %v5490 = vpop.f32.mrf.mxu0
        %v5491 = vadd.f32 %v5402, %v5490
        %v5492 = vpop.f32.mrf.mxu0
        %v5493 = vadd.f32 %v5404, %v5492
        %5494 = vmatmul.bf16.gmra.mxu0 %v3133
        %v5495 = vpop.f32.mrf.mxu0
        %v5496 = vadd.f32 %v5407, %v5495
        %v5497 = vpop.f32.mrf.mxu0
        %v5498 = vadd.f32 %v5409, %v5497
        %5499 = vdwg.mxu0
        %5500 = vmatpush.bf16.xpose.msra.mxu0 %v4036
        %5501 = vmatpush.bf16.xpose.msra.mxu0 %v4028
        %5502 = vmatpush.bf16.xpose.msra.mxu0 %v4020
        %5503 = vmatpush.bf16.xpose.msra.mxu0 %v4012
        %5504 = vmatpush.bf16.xpose.msra.mxu0 %v4004
        %5505 = vmatpush.bf16.xpose.msra.mxu0 %v3996
        %5506 = vmatpush.bf16.xpose.msra.mxu0 %v3988
        %5507 = vmatpush.bf16.xpose.msra.mxu0 %v3980
        %5508 = vmatmul.bf16.gmra.mxu0 %v3014
        %v5509 = vpop.f32.mrf.mxu0
        %v5510 = vadd.f32 %v5421, %v5509
        %v5511 = vpop.f32.mrf.mxu0
        %v5512 = vadd.f32 %v5423, %v5511
        %5513 = vmatmul.bf16.gmra.mxu0 %v3022
        %v5514 = vpop.f32.mrf.mxu0
        %v5515 = vadd.f32 %v5426, %v5514
        %v5516 = vpop.f32.mrf.mxu0
        %v5517 = vadd.f32 %v5428, %v5516
        %5518 = vmatmul.bf16.gmra.mxu0 %v3030
        %v5519 = vpop.f32.mrf.mxu0
        %v5520 = vadd.f32 %v5431, %v5519
        %v5521 = vpop.f32.mrf.mxu0
        %v5522 = vadd.f32 %v5433, %v5521
        %5523 = vmatmul.bf16.gmra.mxu0 %v3038
        %v5524 = vpop.f32.mrf.mxu0
        %v5525 = vadd.f32 %v5436, %v5524
        %v5526 = vpop.f32.mrf.mxu0
        %v5527 = vadd.f32 %v5438, %v5526
        %5528 = vmatmul.bf16.gmra.mxu0 %v3046
        %v5529 = vpop.f32.mrf.mxu0
        %v5530 = vadd.f32 %v5441, %v5529
        %v5531 = vpop.f32.mrf.mxu0
        %v5532 = vadd.f32 %v5443, %v5531
        %5533 = vmatmul.bf16.gmra.mxu0 %v3054
        %v5534 = vpop.f32.mrf.mxu0
        %v5535 = vadd.f32 %v5446, %v5534
        %v5536 = vpop.f32.mrf.mxu0
        %v5537 = vadd.f32 %v5448, %v5536
        %5538 = vmatmul.bf16.gmra.mxu0 %v3062
        %v5539 = vpop.f32.mrf.mxu0
        %v5540 = vadd.f32 %v5451, %v5539
        %v5541 = vpop.f32.mrf.mxu0
        %v5542 = vadd.f32 %v5453, %v5541
        %5543 = vmatmul.bf16.gmra.mxu0 %v3070
        %v5544 = vpop.f32.mrf.mxu0
        %v5545 = vadd.f32 %v5456, %v5544
        %v5546 = vpop.f32.mrf.mxu0
        %v5547 = vadd.f32 %v5458, %v5546
        %5548 = vmatmul.bf16.gmra.mxu0 %v3078
        %v5549 = vpop.f32.mrf.mxu0
        %v5550 = vadd.f32 %v5461, %v5549
        %v5551 = vpop.f32.mrf.mxu0
        %v5552 = vadd.f32 %v5463, %v5551
        %5553 = vmatmul.bf16.gmra.mxu0 %v3086
        %v5554 = vpop.f32.mrf.mxu0
        %v5555 = vadd.f32 %v5466, %v5554
        %v5556 = vpop.f32.mrf.mxu0
        %v5557 = vadd.f32 %v5468, %v5556
        %5558 = vmatmul.bf16.gmra.mxu0 %v3094
        %v5559 = vpop.f32.mrf.mxu0
        %v5560 = vadd.f32 %v5471, %v5559
        %v5561 = vpop.f32.mrf.mxu0
        %v5562 = vadd.f32 %v5473, %v5561
        %5563 = vmatmul.bf16.gmra.mxu0 %v3102
        %v5564 = vpop.f32.mrf.mxu0
        %v5565 = vadd.f32 %v5476, %v5564
        %v5566 = vpop.f32.mrf.mxu0
        %v5567 = vadd.f32 %v5478, %v5566
        %5568 = vmatmul.bf16.gmra.mxu0 %v3110
        %v5569 = vpop.f32.mrf.mxu0
        %v5570 = vadd.f32 %v5481, %v5569
        %v5571 = vpop.f32.mrf.mxu0
        %v5572 = vadd.f32 %v5483, %v5571
        %5573 = vmatmul.bf16.gmra.mxu0 %v3118
        %v5574 = vpop.f32.mrf.mxu0
        %v5575 = vadd.f32 %v5486, %v5574
        %v5576 = vpop.f32.mrf.mxu0
        %v5577 = vadd.f32 %v5488, %v5576
        %5578 = vmatmul.bf16.gmra.mxu0 %v3126
        %v5579 = vpop.f32.mrf.mxu0
        %v5580 = vadd.f32 %v5491, %v5579
        %v5581 = vpop.f32.mrf.mxu0
        %v5582 = vadd.f32 %v5493, %v5581
        %5583 = vmatmul.bf16.gmra.mxu0 %v3134
        %v5584 = vpop.f32.mrf.mxu0
        %v5585 = vadd.f32 %v5496, %v5584
        %v5586 = vpop.f32.mrf.mxu0
        %v5587 = vadd.f32 %v5498, %v5586
        %5588 = vdwg.mxu0
        %v5589 = vxor.u32 %v4798, 2147483648
        %v5590 = vxor.u32 %v5510, 2147483648
        %v5591 = vxor.u32 %v4800, 2147483648
        %v5592 = vxor.u32 %v5512, 2147483648
        %v5593 = vxor.u32 %v4803, 2147483648
        %v5594 = vxor.u32 %v5515, 2147483648
        %v5595 = vxor.u32 %v4805, 2147483648
        %v5596 = vxor.u32 %v5517, 2147483648
        %v5597 = vxor.u32 %v4808, 2147483648
        %v5598 = vxor.u32 %v5520, 2147483648
        %v5599 = vxor.u32 %v4810, 2147483648
        %v5600 = vxor.u32 %v5522, 2147483648
        %v5601 = vxor.u32 %v4813, 2147483648
        %v5602 = vxor.u32 %v5525, 2147483648
        %v5603 = vxor.u32 %v4815, 2147483648
        %v5604 = vxor.u32 %v5527, 2147483648
        %v5605 = vxor.u32 %v4818, 2147483648
        %v5606 = vxor.u32 %v5530, 2147483648
        %v5607 = vxor.u32 %v4820, 2147483648
        %v5608 = vxor.u32 %v5532, 2147483648
        %v5609 = vxor.u32 %v4823, 2147483648
        %v5610 = vxor.u32 %v5535, 2147483648
        %v5611 = vxor.u32 %v4825, 2147483648
        %v5612 = vxor.u32 %v5537, 2147483648
        %v5613 = vxor.u32 %v4828, 2147483648
        %v5614 = vxor.u32 %v5540, 2147483648
        %v5615 = vxor.u32 %v4830, 2147483648
        %v5616 = vxor.u32 %v5542, 2147483648
        %v5617 = vxor.u32 %v4833, 2147483648
        %v5618 = vxor.u32 %v5545, 2147483648
        %v5619 = vxor.u32 %v4835, 2147483648
        %v5620 = vxor.u32 %v5547, 2147483648
        %v5621 = vxor.u32 %v4838, 2147483648
        %v5622 = vxor.u32 %v5550, 2147483648
        %v5623 = vxor.u32 %v4840, 2147483648
        %v5624 = vxor.u32 %v5552, 2147483648
        %v5625 = vxor.u32 %v4843, 2147483648
        %v5626 = vxor.u32 %v5555, 2147483648
        %v5627 = vxor.u32 %v4845, 2147483648
        %v5628 = vxor.u32 %v5557, 2147483648
        %v5629 = vxor.u32 %v4848, 2147483648
        %v5630 = vxor.u32 %v5560, 2147483648
        %v5631 = vxor.u32 %v4850, 2147483648
        %v5632 = vxor.u32 %v5562, 2147483648
        %v5633 = vxor.u32 %v4853, 2147483648
        %v5634 = vxor.u32 %v5565, 2147483648
        %v5635 = vxor.u32 %v4855, 2147483648
        %v5636 = vxor.u32 %v5567, 2147483648
        %v5637 = vxor.u32 %v4858, 2147483648
        %v5638 = vxor.u32 %v5570, 2147483648
        %v5639 = vxor.u32 %v4860, 2147483648
        %v5640 = vxor.u32 %v5572, 2147483648
        %v5641 = vxor.u32 %v4863, 2147483648
        %v5642 = vxor.u32 %v5575, 2147483648
        %v5643 = vxor.u32 %v4865, 2147483648
        %v5644 = vxor.u32 %v5577, 2147483648
        %v5645 = vxor.u32 %v4868, 2147483648
        %v5646 = vxor.u32 %v5580, 2147483648
        %v5647 = vxor.u32 %v4870, 2147483648
        %v5648 = vxor.u32 %v5582, 2147483648
        %v5649 = vxor.u32 %v4873, 2147483648
        %v5650 = vxor.u32 %v5585, 2147483648
        %v5651 = vxor.u32 %v4875, 2147483648
        %v5652 = vxor.u32 %v5587, 2147483648
        %v5653 = vmul.f32 %v5589, 1.442695
        %v5654 = vpow.pop %v5653
        %v5655 = vmul.f32 %v5590, 1.442695
        %v5656 = vpow.pop %v5655
        %v5657 = vmul.f32 %v5591, 1.442695
        %v5658 = vpow.pop %v5657
        %v5659 = vmul.f32 %v5592, 1.442695
        %v5660 = vpow.pop %v5659
        %v5661 = vmul.f32 %v5593, 1.442695
        %v5662 = vpow.pop %v5661
        %v5663 = vmul.f32 %v5594, 1.442695
        %v5664 = vpow.pop %v5663
        %v5665 = vmul.f32 %v5595, 1.442695
        %v5666 = vpow.pop %v5665
        %v5667 = vmul.f32 %v5596, 1.442695
        %v5668 = vpow.pop %v5667
        %v5669 = vmul.f32 %v5597, 1.442695
        %v5670 = vpow.pop %v5669
        %v5671 = vmul.f32 %v5598, 1.442695
        %v5672 = vpow.pop %v5671
        %v5673 = vmul.f32 %v5599, 1.442695
        %v5674 = vpow.pop %v5673
        %v5675 = vmul.f32 %v5600, 1.442695
        %v5676 = vpow.pop %v5675
        %v5677 = vmul.f32 %v5601, 1.442695
        %v5678 = vpow.pop %v5677
        %v5679 = vmul.f32 %v5602, 1.442695
        %v5680 = vpow.pop %v5679
        %v5681 = vmul.f32 %v5603, 1.442695
        %v5682 = vpow.pop %v5681
        %v5683 = vmul.f32 %v5604, 1.442695
        %v5684 = vpow.pop %v5683
        %v5685 = vmul.f32 %v5605, 1.442695
        %v5686 = vpow.pop %v5685
        %v5687 = vmul.f32 %v5606, 1.442695
        %v5688 = vpow.pop %v5687
        %v5689 = vmul.f32 %v5607, 1.442695
        %v5690 = vpow.pop %v5689
        %v5691 = vmul.f32 %v5608, 1.442695
        %v5692 = vpow.pop %v5691
        %v5693 = vmul.f32 %v5609, 1.442695
        %v5694 = vpow.pop %v5693
        %v5695 = vmul.f32 %v5610, 1.442695
        %v5696 = vpow.pop %v5695
        %v5697 = vmul.f32 %v5611, 1.442695
        %v5698 = vpow.pop %v5697
        %v5699 = vmul.f32 %v5612, 1.442695
        %v5700 = vpow.pop %v5699
        %v5701 = vmul.f32 %v5613, 1.442695
        %v5702 = vpow.pop %v5701
        %v5703 = vmul.f32 %v5614, 1.442695
        %v5704 = vpow.pop %v5703
        %v5705 = vmul.f32 %v5615, 1.442695
        %v5706 = vpow.pop %v5705
        %v5707 = vmul.f32 %v5616, 1.442695
        %v5708 = vpow.pop %v5707
        %v5709 = vmul.f32 %v5617, 1.442695
        %v5710 = vpow.pop %v5709
        %v5711 = vmul.f32 %v5618, 1.442695
        %v5712 = vpow.pop %v5711
        %v5713 = vmul.f32 %v5619, 1.442695
        %v5714 = vpow.pop %v5713
        %v5715 = vmul.f32 %v5620, 1.442695
        %v5716 = vpow.pop %v5715
        %v5717 = vmul.f32 %v5621, 1.442695
        %v5718 = vpow.pop %v5717
        %v5719 = vmul.f32 %v5622, 1.442695
        %v5720 = vpow.pop %v5719
        %v5721 = vmul.f32 %v5623, 1.442695
        %v5722 = vpow.pop %v5721
        %v5723 = vmul.f32 %v5624, 1.442695
        %v5724 = vpow.pop %v5723
        %v5725 = vmul.f32 %v5625, 1.442695
        %v5726 = vpow.pop %v5725
        %v5727 = vmul.f32 %v5626, 1.442695
        %v5728 = vpow.pop %v5727
        %v5729 = vmul.f32 %v5627, 1.442695
        %v5730 = vpow.pop %v5729
        %v5731 = vmul.f32 %v5628, 1.442695
        %v5732 = vpow.pop %v5731
        %v5733 = vmul.f32 %v5629, 1.442695
        %v5734 = vpow.pop %v5733
        %v5735 = vmul.f32 %v5630, 1.442695
        %v5736 = vpow.pop %v5735
        %v5737 = vmul.f32 %v5631, 1.442695
        %v5738 = vpow.pop %v5737
        %v5739 = vmul.f32 %v5632, 1.442695
        %v5740 = vpow.pop %v5739
        %v5741 = vmul.f32 %v5633, 1.442695
        %v5742 = vpow.pop %v5741
        %v5743 = vmul.f32 %v5634, 1.442695
        %v5744 = vpow.pop %v5743
        %v5745 = vmul.f32 %v5635, 1.442695
        %v5746 = vpow.pop %v5745
        %v5747 = vmul.f32 %v5636, 1.442695
        %v5748 = vpow.pop %v5747
        %v5749 = vmul.f32 %v5637, 1.442695
        %v5750 = vpow.pop %v5749
        %v5751 = vmul.f32 %v5638, 1.442695
        %v5752 = vpow.pop %v5751
        %v5753 = vmul.f32 %v5639, 1.442695
        %v5754 = vpow.pop %v5753
        %v5755 = vmul.f32 %v5640, 1.442695
        %v5756 = vpow.pop %v5755
        %v5757 = vmul.f32 %v5641, 1.442695
        %v5758 = vpow.pop %v5757
        %v5759 = vmul.f32 %v5642, 1.442695
        %v5760 = vpow.pop %v5759
        %v5761 = vmul.f32 %v5643, 1.442695
        %v5762 = vpow.pop %v5761
        %v5763 = vmul.f32 %v5644, 1.442695
        %v5764 = vpow.pop %v5763
        %v5765 = vmul.f32 %v5645, 1.442695
        %v5766 = vpow.pop %v5765
        %v5767 = vmul.f32 %v5646, 1.442695
        %v5768 = vpow.pop %v5767
        %v5769 = vmul.f32 %v5647, 1.442695
        %v5770 = vpow.pop %v5769
        %v5771 = vmul.f32 %v5648, 1.442695
        %v5772 = vpow.pop %v5771
        %v5773 = vmul.f32 %v5649, 1.442695
        %v5774 = vpow.pop %v5773
        %v5775 = vmul.f32 %v5650, 1.442695
        %v5776 = vpow.pop %v5775
        %v5777 = vmul.f32 %v5651, 1.442695
        %v5778 = vpow.pop %v5777
        %v5779 = vmul.f32 %v5652, 1.442695
        %v5780 = vpow.pop %v5779
        %v5781 = vadd.f32 %v5654, 1.0
        %v5782 = vadd.f32 %v5656, 1.0
        %v5783 = vadd.f32 %v5658, 1.0
        %v5784 = vadd.f32 %v5660, 1.0
        %v5785 = vadd.f32 %v5662, 1.0
        %v5786 = vadd.f32 %v5664, 1.0
        %v5787 = vadd.f32 %v5666, 1.0
        %v5788 = vadd.f32 %v5668, 1.0
        %v5789 = vadd.f32 %v5670, 1.0
        %v5790 = vadd.f32 %v5672, 1.0
        %v5791 = vadd.f32 %v5674, 1.0
        %v5792 = vadd.f32 %v5676, 1.0
        %v5793 = vadd.f32 %v5678, 1.0
        %v5794 = vadd.f32 %v5680, 1.0
        %v5795 = vadd.f32 %v5682, 1.0
        %v5796 = vadd.f32 %v5684, 1.0
        %v5797 = vadd.f32 %v5686, 1.0
        %v5798 = vadd.f32 %v5688, 1.0
        %v5799 = vadd.f32 %v5690, 1.0
        %v5800 = vadd.f32 %v5692, 1.0
        %v5801 = vadd.f32 %v5694, 1.0
        %v5802 = vadd.f32 %v5696, 1.0
        %v5803 = vadd.f32 %v5698, 1.0
        %v5804 = vadd.f32 %v5700, 1.0
        %v5805 = vadd.f32 %v5702, 1.0
        %v5806 = vadd.f32 %v5704, 1.0
        %v5807 = vadd.f32 %v5706, 1.0
        %v5808 = vadd.f32 %v5708, 1.0
        %v5809 = vadd.f32 %v5710, 1.0
        %v5810 = vadd.f32 %v5712, 1.0
        %v5811 = vadd.f32 %v5714, 1.0
        %v5812 = vadd.f32 %v5716, 1.0
        %v5813 = vadd.f32 %v5718, 1.0
        %v5814 = vadd.f32 %v5720, 1.0
        %v5815 = vadd.f32 %v5722, 1.0
        %v5816 = vadd.f32 %v5724, 1.0
        %v5817 = vadd.f32 %v5726, 1.0
        %v5818 = vadd.f32 %v5728, 1.0
        %v5819 = vadd.f32 %v5730, 1.0
        %v5820 = vadd.f32 %v5732, 1.0
        %v5821 = vadd.f32 %v5734, 1.0
        %v5822 = vadd.f32 %v5736, 1.0
        %v5823 = vadd.f32 %v5738, 1.0
        %v5824 = vadd.f32 %v5740, 1.0
        %v5825 = vadd.f32 %v5742, 1.0
        %v5826 = vadd.f32 %v5744, 1.0
        %v5827 = vadd.f32 %v5746, 1.0
        %v5828 = vadd.f32 %v5748, 1.0
        %v5829 = vadd.f32 %v5750, 1.0
        %v5830 = vadd.f32 %v5752, 1.0
        %v5831 = vadd.f32 %v5754, 1.0
        %v5832 = vadd.f32 %v5756, 1.0
        %v5833 = vadd.f32 %v5758, 1.0
        %v5834 = vadd.f32 %v5760, 1.0
        %v5835 = vadd.f32 %v5762, 1.0
        %v5836 = vadd.f32 %v5764, 1.0
        %v5837 = vadd.f32 %v5766, 1.0
        %v5838 = vadd.f32 %v5768, 1.0
        %v5839 = vadd.f32 %v5770, 1.0
        %v5840 = vadd.f32 %v5772, 1.0
        %v5841 = vadd.f32 %v5774, 1.0
        %v5842 = vadd.f32 %v5776, 1.0
        %v5843 = vadd.f32 %v5778, 1.0
        %v5844 = vadd.f32 %v5780, 1.0
        %v5845 = vrcp.pop %v5781
        %v5846 = vmul.f32 %v5781, %v5845
        %v5847 = vsub.f32 1.0, %v5846
        %v5848 = vmul.f32 %v5845, %v5847
        %v5849 = vadd.f32 %v5845, %v5848
        %vm5850 = vweird.f32 %v5781
        %vm5851 = vweird.f32 %v5845
        %vm5852 = vmor %vm5850, %vm5851
        %v5853 = vsel %vm5852, %v5845, %v5849
        %v5854 = vand.u32 2147483647, %v5781
        %vm5855 = vcmp.eq.f32.partialorder %v5854, 8.507059e+37
        %v5856 = vand.u32 %v5781, 2147483648
        %v5857 = vor.u32 1.1754944e-38, %v5856
        %v5858 = vsel %vm5855, %v5857, %v5853
        %v5859 = vmul.f32 1.0, %v5858
        %v5860 = vrcp.pop %v5782
        %v5861 = vmul.f32 %v5782, %v5860
        %v5862 = vsub.f32 1.0, %v5861
        %v5863 = vmul.f32 %v5860, %v5862
        %v5864 = vadd.f32 %v5860, %v5863
        %vm5865 = vweird.f32 %v5782
        %vm5866 = vweird.f32 %v5860
        %vm5867 = vmor %vm5865, %vm5866
        %v5868 = vsel %vm5867, %v5860, %v5864
        %v5869 = vand.u32 2147483647, %v5782
        %vm5870 = vcmp.eq.f32.partialorder %v5869, 8.507059e+37
        %v5871 = vand.u32 %v5782, 2147483648
        %v5872 = vor.u32 1.1754944e-38, %v5871
        %v5873 = vsel %vm5870, %v5872, %v5868
        %v5874 = vmul.f32 1.0, %v5873
        %v5875 = vrcp.pop %v5783
        %v5876 = vmul.f32 %v5783, %v5875
        %v5877 = vsub.f32 1.0, %v5876
        %v5878 = vmul.f32 %v5875, %v5877
        %v5879 = vadd.f32 %v5875, %v5878
        %vm5880 = vweird.f32 %v5783
        %vm5881 = vweird.f32 %v5875
        %vm5882 = vmor %vm5880, %vm5881
        %v5883 = vsel %vm5882, %v5875, %v5879
        %v5884 = vand.u32 2147483647, %v5783
        %vm5885 = vcmp.eq.f32.partialorder %v5884, 8.507059e+37
        %v5886 = vand.u32 %v5783, 2147483648
        %v5887 = vor.u32 1.1754944e-38, %v5886
        %v5888 = vsel %vm5885, %v5887, %v5883
        %v5889 = vmul.f32 1.0, %v5888
        %v5890 = vrcp.pop %v5784
        %v5891 = vmul.f32 %v5784, %v5890
        %v5892 = vsub.f32 1.0, %v5891
        %v5893 = vmul.f32 %v5890, %v5892
        %v5894 = vadd.f32 %v5890, %v5893
        %vm5895 = vweird.f32 %v5784
        %vm5896 = vweird.f32 %v5890
        %vm5897 = vmor %vm5895, %vm5896
        %v5898 = vsel %vm5897, %v5890, %v5894
        %v5899 = vand.u32 2147483647, %v5784
        %vm5900 = vcmp.eq.f32.partialorder %v5899, 8.507059e+37
        %v5901 = vand.u32 %v5784, 2147483648
        %v5902 = vor.u32 1.1754944e-38, %v5901
        %v5903 = vsel %vm5900, %v5902, %v5898
        %v5904 = vmul.f32 1.0, %v5903
        %v5905 = vrcp.pop %v5785
        %v5906 = vmul.f32 %v5785, %v5905
        %v5907 = vsub.f32 1.0, %v5906
        %v5908 = vmul.f32 %v5905, %v5907
        %v5909 = vadd.f32 %v5905, %v5908
        %vm5910 = vweird.f32 %v5785
        %vm5911 = vweird.f32 %v5905
        %vm5912 = vmor %vm5910, %vm5911
        %v5913 = vsel %vm5912, %v5905, %v5909
        %v5914 = vand.u32 2147483647, %v5785
        %vm5915 = vcmp.eq.f32.partialorder %v5914, 8.507059e+37
        %v5916 = vand.u32 %v5785, 2147483648
        %v5917 = vor.u32 1.1754944e-38, %v5916
        %v5918 = vsel %vm5915, %v5917, %v5913
        %v5919 = vmul.f32 1.0, %v5918
        %v5920 = vrcp.pop %v5786
        %v5921 = vmul.f32 %v5786, %v5920
        %v5922 = vsub.f32 1.0, %v5921
        %v5923 = vmul.f32 %v5920, %v5922
        %v5924 = vadd.f32 %v5920, %v5923
        %vm5925 = vweird.f32 %v5786
        %vm5926 = vweird.f32 %v5920
        %vm5927 = vmor %vm5925, %vm5926
        %v5928 = vsel %vm5927, %v5920, %v5924
        %v5929 = vand.u32 2147483647, %v5786
        %vm5930 = vcmp.eq.f32.partialorder %v5929, 8.507059e+37
        %v5931 = vand.u32 %v5786, 2147483648
        %v5932 = vor.u32 1.1754944e-38, %v5931
        %v5933 = vsel %vm5930, %v5932, %v5928
        %v5934 = vmul.f32 1.0, %v5933
        %v5935 = vrcp.pop %v5787
        %v5936 = vmul.f32 %v5787, %v5935
        %v5937 = vsub.f32 1.0, %v5936
        %v5938 = vmul.f32 %v5935, %v5937
        %v5939 = vadd.f32 %v5935, %v5938
        %vm5940 = vweird.f32 %v5787
        %vm5941 = vweird.f32 %v5935
        %vm5942 = vmor %vm5940, %vm5941
        %v5943 = vsel %vm5942, %v5935, %v5939
        %v5944 = vand.u32 2147483647, %v5787
        %vm5945 = vcmp.eq.f32.partialorder %v5944, 8.507059e+37
        %v5946 = vand.u32 %v5787, 2147483648
        %v5947 = vor.u32 1.1754944e-38, %v5946
        %v5948 = vsel %vm5945, %v5947, %v5943
        %v5949 = vmul.f32 1.0, %v5948
        %v5950 = vrcp.pop %v5788
        %v5951 = vmul.f32 %v5788, %v5950
        %v5952 = vsub.f32 1.0, %v5951
        %v5953 = vmul.f32 %v5950, %v5952
        %v5954 = vadd.f32 %v5950, %v5953
        %vm5955 = vweird.f32 %v5788
        %vm5956 = vweird.f32 %v5950
        %vm5957 = vmor %vm5955, %vm5956
        %v5958 = vsel %vm5957, %v5950, %v5954
        %v5959 = vand.u32 2147483647, %v5788
        %vm5960 = vcmp.eq.f32.partialorder %v5959, 8.507059e+37
        %v5961 = vand.u32 %v5788, 2147483648
        %v5962 = vor.u32 1.1754944e-38, %v5961
        %v5963 = vsel %vm5960, %v5962, %v5958
        %v5964 = vmul.f32 1.0, %v5963
        %v5965 = vrcp.pop %v5789
        %v5966 = vmul.f32 %v5789, %v5965
        %v5967 = vsub.f32 1.0, %v5966
        %v5968 = vmul.f32 %v5965, %v5967
        %v5969 = vadd.f32 %v5965, %v5968
        %vm5970 = vweird.f32 %v5789
        %vm5971 = vweird.f32 %v5965
        %vm5972 = vmor %vm5970, %vm5971
        %v5973 = vsel %vm5972, %v5965, %v5969
        %v5974 = vand.u32 2147483647, %v5789
        %vm5975 = vcmp.eq.f32.partialorder %v5974, 8.507059e+37
        %v5976 = vand.u32 %v5789, 2147483648
        %v5977 = vor.u32 1.1754944e-38, %v5976
        %v5978 = vsel %vm5975, %v5977, %v5973
        %v5979 = vmul.f32 1.0, %v5978
        %v5980 = vrcp.pop %v5790
        %v5981 = vmul.f32 %v5790, %v5980
        %v5982 = vsub.f32 1.0, %v5981
        %v5983 = vmul.f32 %v5980, %v5982
        %v5984 = vadd.f32 %v5980, %v5983
        %vm5985 = vweird.f32 %v5790
        %vm5986 = vweird.f32 %v5980
        %vm5987 = vmor %vm5985, %vm5986
        %v5988 = vsel %vm5987, %v5980, %v5984
        %v5989 = vand.u32 2147483647, %v5790
        %vm5990 = vcmp.eq.f32.partialorder %v5989, 8.507059e+37
        %v5991 = vand.u32 %v5790, 2147483648
        %v5992 = vor.u32 1.1754944e-38, %v5991
        %v5993 = vsel %vm5990, %v5992, %v5988
        %v5994 = vmul.f32 1.0, %v5993
        %v5995 = vrcp.pop %v5791
        %v5996 = vmul.f32 %v5791, %v5995
        %v5997 = vsub.f32 1.0, %v5996
        %v5998 = vmul.f32 %v5995, %v5997
        %v5999 = vadd.f32 %v5995, %v5998
        %vm6000 = vweird.f32 %v5791
        %vm6001 = vweird.f32 %v5995
        %vm6002 = vmor %vm6000, %vm6001
        %v6003 = vsel %vm6002, %v5995, %v5999
        %v6004 = vand.u32 2147483647, %v5791
        %vm6005 = vcmp.eq.f32.partialorder %v6004, 8.507059e+37
        %v6006 = vand.u32 %v5791, 2147483648
        %v6007 = vor.u32 1.1754944e-38, %v6006
        %v6008 = vsel %vm6005, %v6007, %v6003
        %v6009 = vmul.f32 1.0, %v6008
        %v6010 = vrcp.pop %v5792
        %v6011 = vmul.f32 %v5792, %v6010
        %v6012 = vsub.f32 1.0, %v6011
        %v6013 = vmul.f32 %v6010, %v6012
        %v6014 = vadd.f32 %v6010, %v6013
        %vm6015 = vweird.f32 %v5792
        %vm6016 = vweird.f32 %v6010
        %vm6017 = vmor %vm6015, %vm6016
        %v6018 = vsel %vm6017, %v6010, %v6014
        %v6019 = vand.u32 2147483647, %v5792
        %vm6020 = vcmp.eq.f32.partialorder %v6019, 8.507059e+37
        %v6021 = vand.u32 %v5792, 2147483648
        %v6022 = vor.u32 1.1754944e-38, %v6021
        %v6023 = vsel %vm6020, %v6022, %v6018
        %v6024 = vmul.f32 1.0, %v6023
        %v6025 = vrcp.pop %v5793
        %v6026 = vmul.f32 %v5793, %v6025
        %v6027 = vsub.f32 1.0, %v6026
        %v6028 = vmul.f32 %v6025, %v6027
        %v6029 = vadd.f32 %v6025, %v6028
        %vm6030 = vweird.f32 %v5793
        %vm6031 = vweird.f32 %v6025
        %vm6032 = vmor %vm6030, %vm6031
        %v6033 = vsel %vm6032, %v6025, %v6029
        %v6034 = vand.u32 2147483647, %v5793
        %vm6035 = vcmp.eq.f32.partialorder %v6034, 8.507059e+37
        %v6036 = vand.u32 %v5793, 2147483648
        %v6037 = vor.u32 1.1754944e-38, %v6036
        %v6038 = vsel %vm6035, %v6037, %v6033
        %v6039 = vmul.f32 1.0, %v6038
        %v6040 = vrcp.pop %v5794
        %v6041 = vmul.f32 %v5794, %v6040
        %v6042 = vsub.f32 1.0, %v6041
        %v6043 = vmul.f32 %v6040, %v6042
        %v6044 = vadd.f32 %v6040, %v6043
        %vm6045 = vweird.f32 %v5794
        %vm6046 = vweird.f32 %v6040
        %vm6047 = vmor %vm6045, %vm6046
        %v6048 = vsel %vm6047, %v6040, %v6044
        %v6049 = vand.u32 2147483647, %v5794
        %vm6050 = vcmp.eq.f32.partialorder %v6049, 8.507059e+37
        %v6051 = vand.u32 %v5794, 2147483648
        %v6052 = vor.u32 1.1754944e-38, %v6051
        %v6053 = vsel %vm6050, %v6052, %v6048
        %v6054 = vmul.f32 1.0, %v6053
        %v6055 = vrcp.pop %v5795
        %v6056 = vmul.f32 %v5795, %v6055
        %v6057 = vsub.f32 1.0, %v6056
        %v6058 = vmul.f32 %v6055, %v6057
        %v6059 = vadd.f32 %v6055, %v6058
        %vm6060 = vweird.f32 %v5795
        %vm6061 = vweird.f32 %v6055
        %vm6062 = vmor %vm6060, %vm6061
        %v6063 = vsel %vm6062, %v6055, %v6059
        %v6064 = vand.u32 2147483647, %v5795
        %vm6065 = vcmp.eq.f32.partialorder %v6064, 8.507059e+37
        %v6066 = vand.u32 %v5795, 2147483648
        %v6067 = vor.u32 1.1754944e-38, %v6066
        %v6068 = vsel %vm6065, %v6067, %v6063
        %v6069 = vmul.f32 1.0, %v6068
        %v6070 = vrcp.pop %v5796
        %v6071 = vmul.f32 %v5796, %v6070
        %v6072 = vsub.f32 1.0, %v6071
        %v6073 = vmul.f32 %v6070, %v6072
        %v6074 = vadd.f32 %v6070, %v6073
        %vm6075 = vweird.f32 %v5796
        %vm6076 = vweird.f32 %v6070
        %vm6077 = vmor %vm6075, %vm6076
        %v6078 = vsel %vm6077, %v6070, %v6074
        %v6079 = vand.u32 2147483647, %v5796
        %vm6080 = vcmp.eq.f32.partialorder %v6079, 8.507059e+37
        %v6081 = vand.u32 %v5796, 2147483648
        %v6082 = vor.u32 1.1754944e-38, %v6081
        %v6083 = vsel %vm6080, %v6082, %v6078
        %v6084 = vmul.f32 1.0, %v6083
        %v6085 = vrcp.pop %v5797
        %v6086 = vmul.f32 %v5797, %v6085
        %v6087 = vsub.f32 1.0, %v6086
        %v6088 = vmul.f32 %v6085, %v6087
        %v6089 = vadd.f32 %v6085, %v6088
        %vm6090 = vweird.f32 %v5797
        %vm6091 = vweird.f32 %v6085
        %vm6092 = vmor %vm6090, %vm6091
        %v6093 = vsel %vm6092, %v6085, %v6089
        %v6094 = vand.u32 2147483647, %v5797
        %vm6095 = vcmp.eq.f32.partialorder %v6094, 8.507059e+37
        %v6096 = vand.u32 %v5797, 2147483648
        %v6097 = vor.u32 1.1754944e-38, %v6096
        %v6098 = vsel %vm6095, %v6097, %v6093
        %v6099 = vmul.f32 1.0, %v6098
        %v6100 = vrcp.pop %v5798
        %v6101 = vmul.f32 %v5798, %v6100
        %v6102 = vsub.f32 1.0, %v6101
        %v6103 = vmul.f32 %v6100, %v6102
        %v6104 = vadd.f32 %v6100, %v6103
        %vm6105 = vweird.f32 %v5798
        %vm6106 = vweird.f32 %v6100
        %vm6107 = vmor %vm6105, %vm6106
        %v6108 = vsel %vm6107, %v6100, %v6104
        %v6109 = vand.u32 2147483647, %v5798
        %vm6110 = vcmp.eq.f32.partialorder %v6109, 8.507059e+37
        %v6111 = vand.u32 %v5798, 2147483648
        %v6112 = vor.u32 1.1754944e-38, %v6111
        %v6113 = vsel %vm6110, %v6112, %v6108
        %v6114 = vmul.f32 1.0, %v6113
        %v6115 = vrcp.pop %v5799
        %v6116 = vmul.f32 %v5799, %v6115
        %v6117 = vsub.f32 1.0, %v6116
        %v6118 = vmul.f32 %v6115, %v6117
        %v6119 = vadd.f32 %v6115, %v6118
        %vm6120 = vweird.f32 %v5799
        %vm6121 = vweird.f32 %v6115
        %vm6122 = vmor %vm6120, %vm6121
        %v6123 = vsel %vm6122, %v6115, %v6119
        %v6124 = vand.u32 2147483647, %v5799
        %vm6125 = vcmp.eq.f32.partialorder %v6124, 8.507059e+37
        %v6126 = vand.u32 %v5799, 2147483648
        %v6127 = vor.u32 1.1754944e-38, %v6126
        %v6128 = vsel %vm6125, %v6127, %v6123
        %v6129 = vmul.f32 1.0, %v6128
        %v6130 = vrcp.pop %v5800
        %v6131 = vmul.f32 %v5800, %v6130
        %v6132 = vsub.f32 1.0, %v6131
        %v6133 = vmul.f32 %v6130, %v6132
        %v6134 = vadd.f32 %v6130, %v6133
        %vm6135 = vweird.f32 %v5800
        %vm6136 = vweird.f32 %v6130
        %vm6137 = vmor %vm6135, %vm6136
        %v6138 = vsel %vm6137, %v6130, %v6134
        %v6139 = vand.u32 2147483647, %v5800
        %vm6140 = vcmp.eq.f32.partialorder %v6139, 8.507059e+37
        %v6141 = vand.u32 %v5800, 2147483648
        %v6142 = vor.u32 1.1754944e-38, %v6141
        %v6143 = vsel %vm6140, %v6142, %v6138
        %v6144 = vmul.f32 1.0, %v6143
        %v6145 = vrcp.pop %v5801
        %v6146 = vmul.f32 %v5801, %v6145
        %v6147 = vsub.f32 1.0, %v6146
        %v6148 = vmul.f32 %v6145, %v6147
        %v6149 = vadd.f32 %v6145, %v6148
        %vm6150 = vweird.f32 %v5801
        %vm6151 = vweird.f32 %v6145
        %vm6152 = vmor %vm6150, %vm6151
        %v6153 = vsel %vm6152, %v6145, %v6149
        %v6154 = vand.u32 2147483647, %v5801
        %vm6155 = vcmp.eq.f32.partialorder %v6154, 8.507059e+37
        %v6156 = vand.u32 %v5801, 2147483648
        %v6157 = vor.u32 1.1754944e-38, %v6156
        %v6158 = vsel %vm6155, %v6157, %v6153
        %v6159 = vmul.f32 1.0, %v6158
        %v6160 = vrcp.pop %v5802
        %v6161 = vmul.f32 %v5802, %v6160
        %v6162 = vsub.f32 1.0, %v6161
        %v6163 = vmul.f32 %v6160, %v6162
        %v6164 = vadd.f32 %v6160, %v6163
        %vm6165 = vweird.f32 %v5802
        %vm6166 = vweird.f32 %v6160
        %vm6167 = vmor %vm6165, %vm6166
        %v6168 = vsel %vm6167, %v6160, %v6164
        %v6169 = vand.u32 2147483647, %v5802
        %vm6170 = vcmp.eq.f32.partialorder %v6169, 8.507059e+37
        %v6171 = vand.u32 %v5802, 2147483648
        %v6172 = vor.u32 1.1754944e-38, %v6171
        %v6173 = vsel %vm6170, %v6172, %v6168
        %v6174 = vmul.f32 1.0, %v6173
        %v6175 = vrcp.pop %v5803
        %v6176 = vmul.f32 %v5803, %v6175
        %v6177 = vsub.f32 1.0, %v6176
        %v6178 = vmul.f32 %v6175, %v6177
        %v6179 = vadd.f32 %v6175, %v6178
        %vm6180 = vweird.f32 %v5803
        %vm6181 = vweird.f32 %v6175
        %vm6182 = vmor %vm6180, %vm6181
        %v6183 = vsel %vm6182, %v6175, %v6179
        %v6184 = vand.u32 2147483647, %v5803
        %vm6185 = vcmp.eq.f32.partialorder %v6184, 8.507059e+37
        %v6186 = vand.u32 %v5803, 2147483648
        %v6187 = vor.u32 1.1754944e-38, %v6186
        %v6188 = vsel %vm6185, %v6187, %v6183
        %v6189 = vmul.f32 1.0, %v6188
        %v6190 = vrcp.pop %v5804
        %v6191 = vmul.f32 %v5804, %v6190
        %v6192 = vsub.f32 1.0, %v6191
        %v6193 = vmul.f32 %v6190, %v6192
        %v6194 = vadd.f32 %v6190, %v6193
        %vm6195 = vweird.f32 %v5804
        %vm6196 = vweird.f32 %v6190
        %vm6197 = vmor %vm6195, %vm6196
        %v6198 = vsel %vm6197, %v6190, %v6194
        %v6199 = vand.u32 2147483647, %v5804
        %vm6200 = vcmp.eq.f32.partialorder %v6199, 8.507059e+37
        %v6201 = vand.u32 %v5804, 2147483648
        %v6202 = vor.u32 1.1754944e-38, %v6201
        %v6203 = vsel %vm6200, %v6202, %v6198
        %v6204 = vmul.f32 1.0, %v6203
        %v6205 = vrcp.pop %v5805
        %v6206 = vmul.f32 %v5805, %v6205
        %v6207 = vsub.f32 1.0, %v6206
        %v6208 = vmul.f32 %v6205, %v6207
        %v6209 = vadd.f32 %v6205, %v6208
        %vm6210 = vweird.f32 %v5805
        %vm6211 = vweird.f32 %v6205
        %vm6212 = vmor %vm6210, %vm6211
        %v6213 = vsel %vm6212, %v6205, %v6209
        %v6214 = vand.u32 2147483647, %v5805
        %vm6215 = vcmp.eq.f32.partialorder %v6214, 8.507059e+37
        %v6216 = vand.u32 %v5805, 2147483648
        %v6217 = vor.u32 1.1754944e-38, %v6216
        %v6218 = vsel %vm6215, %v6217, %v6213
        %v6219 = vmul.f32 1.0, %v6218
        %v6220 = vrcp.pop %v5806
        %v6221 = vmul.f32 %v5806, %v6220
        %v6222 = vsub.f32 1.0, %v6221
        %v6223 = vmul.f32 %v6220, %v6222
        %v6224 = vadd.f32 %v6220, %v6223
        %vm6225 = vweird.f32 %v5806
        %vm6226 = vweird.f32 %v6220
        %vm6227 = vmor %vm6225, %vm6226
        %v6228 = vsel %vm6227, %v6220, %v6224
        %v6229 = vand.u32 2147483647, %v5806
        %vm6230 = vcmp.eq.f32.partialorder %v6229, 8.507059e+37
        %v6231 = vand.u32 %v5806, 2147483648
        %v6232 = vor.u32 1.1754944e-38, %v6231
        %v6233 = vsel %vm6230, %v6232, %v6228
        %v6234 = vmul.f32 1.0, %v6233
        %v6235 = vrcp.pop %v5807
        %v6236 = vmul.f32 %v5807, %v6235
        %v6237 = vsub.f32 1.0, %v6236
        %v6238 = vmul.f32 %v6235, %v6237
        %v6239 = vadd.f32 %v6235, %v6238
        %vm6240 = vweird.f32 %v5807
        %vm6241 = vweird.f32 %v6235
        %vm6242 = vmor %vm6240, %vm6241
        %v6243 = vsel %vm6242, %v6235, %v6239
        %v6244 = vand.u32 2147483647, %v5807
        %vm6245 = vcmp.eq.f32.partialorder %v6244, 8.507059e+37
        %v6246 = vand.u32 %v5807, 2147483648
        %v6247 = vor.u32 1.1754944e-38, %v6246
        %v6248 = vsel %vm6245, %v6247, %v6243
        %v6249 = vmul.f32 1.0, %v6248
        %v6250 = vrcp.pop %v5808
        %v6251 = vmul.f32 %v5808, %v6250
        %v6252 = vsub.f32 1.0, %v6251
        %v6253 = vmul.f32 %v6250, %v6252
        %v6254 = vadd.f32 %v6250, %v6253
        %vm6255 = vweird.f32 %v5808
        %vm6256 = vweird.f32 %v6250
        %vm6257 = vmor %vm6255, %vm6256
        %v6258 = vsel %vm6257, %v6250, %v6254
        %v6259 = vand.u32 2147483647, %v5808
        %vm6260 = vcmp.eq.f32.partialorder %v6259, 8.507059e+37
        %v6261 = vand.u32 %v5808, 2147483648
        %v6262 = vor.u32 1.1754944e-38, %v6261
        %v6263 = vsel %vm6260, %v6262, %v6258
        %v6264 = vmul.f32 1.0, %v6263
        %v6265 = vrcp.pop %v5809
        %v6266 = vmul.f32 %v5809, %v6265
        %v6267 = vsub.f32 1.0, %v6266
        %v6268 = vmul.f32 %v6265, %v6267
        %v6269 = vadd.f32 %v6265, %v6268
        %vm6270 = vweird.f32 %v5809
        %vm6271 = vweird.f32 %v6265
        %vm6272 = vmor %vm6270, %vm6271
        %v6273 = vsel %vm6272, %v6265, %v6269
        %v6274 = vand.u32 2147483647, %v5809
        %vm6275 = vcmp.eq.f32.partialorder %v6274, 8.507059e+37
        %v6276 = vand.u32 %v5809, 2147483648
        %v6277 = vor.u32 1.1754944e-38, %v6276
        %v6278 = vsel %vm6275, %v6277, %v6273
        %v6279 = vmul.f32 1.0, %v6278
        %v6280 = vrcp.pop %v5810
        %v6281 = vmul.f32 %v5810, %v6280
        %v6282 = vsub.f32 1.0, %v6281
        %v6283 = vmul.f32 %v6280, %v6282
        %v6284 = vadd.f32 %v6280, %v6283
        %vm6285 = vweird.f32 %v5810
        %vm6286 = vweird.f32 %v6280
        %vm6287 = vmor %vm6285, %vm6286
        %v6288 = vsel %vm6287, %v6280, %v6284
        %v6289 = vand.u32 2147483647, %v5810
        %vm6290 = vcmp.eq.f32.partialorder %v6289, 8.507059e+37
        %v6291 = vand.u32 %v5810, 2147483648
        %v6292 = vor.u32 1.1754944e-38, %v6291
        %v6293 = vsel %vm6290, %v6292, %v6288
        %v6294 = vmul.f32 1.0, %v6293
        %v6295 = vrcp.pop %v5811
        %v6296 = vmul.f32 %v5811, %v6295
        %v6297 = vsub.f32 1.0, %v6296
        %v6298 = vmul.f32 %v6295, %v6297
        %v6299 = vadd.f32 %v6295, %v6298
        %vm6300 = vweird.f32 %v5811
        %vm6301 = vweird.f32 %v6295
        %vm6302 = vmor %vm6300, %vm6301
        %v6303 = vsel %vm6302, %v6295, %v6299
        %v6304 = vand.u32 2147483647, %v5811
        %vm6305 = vcmp.eq.f32.partialorder %v6304, 8.507059e+37
        %v6306 = vand.u32 %v5811, 2147483648
        %v6307 = vor.u32 1.1754944e-38, %v6306
        %v6308 = vsel %vm6305, %v6307, %v6303
        %v6309 = vmul.f32 1.0, %v6308
        %v6310 = vrcp.pop %v5812
        %v6311 = vmul.f32 %v5812, %v6310
        %v6312 = vsub.f32 1.0, %v6311
        %v6313 = vmul.f32 %v6310, %v6312
        %v6314 = vadd.f32 %v6310, %v6313
        %vm6315 = vweird.f32 %v5812
        %vm6316 = vweird.f32 %v6310
        %vm6317 = vmor %vm6315, %vm6316
        %v6318 = vsel %vm6317, %v6310, %v6314
        %v6319 = vand.u32 2147483647, %v5812
        %vm6320 = vcmp.eq.f32.partialorder %v6319, 8.507059e+37
        %v6321 = vand.u32 %v5812, 2147483648
        %v6322 = vor.u32 1.1754944e-38, %v6321
        %v6323 = vsel %vm6320, %v6322, %v6318
        %v6324 = vmul.f32 1.0, %v6323
        %v6325 = vrcp.pop %v5813
        %v6326 = vmul.f32 %v5813, %v6325
        %v6327 = vsub.f32 1.0, %v6326
        %v6328 = vmul.f32 %v6325, %v6327
        %v6329 = vadd.f32 %v6325, %v6328
        %vm6330 = vweird.f32 %v5813
        %vm6331 = vweird.f32 %v6325
        %vm6332 = vmor %vm6330, %vm6331
        %v6333 = vsel %vm6332, %v6325, %v6329
        %v6334 = vand.u32 2147483647, %v5813
        %vm6335 = vcmp.eq.f32.partialorder %v6334, 8.507059e+37
        %v6336 = vand.u32 %v5813, 2147483648
        %v6337 = vor.u32 1.1754944e-38, %v6336
        %v6338 = vsel %vm6335, %v6337, %v6333
        %v6339 = vmul.f32 1.0, %v6338
        %v6340 = vrcp.pop %v5814
        %v6341 = vmul.f32 %v5814, %v6340
        %v6342 = vsub.f32 1.0, %v6341
        %v6343 = vmul.f32 %v6340, %v6342
        %v6344 = vadd.f32 %v6340, %v6343
        %vm6345 = vweird.f32 %v5814
        %vm6346 = vweird.f32 %v6340
        %vm6347 = vmor %vm6345, %vm6346
        %v6348 = vsel %vm6347, %v6340, %v6344
        %v6349 = vand.u32 2147483647, %v5814
        %vm6350 = vcmp.eq.f32.partialorder %v6349, 8.507059e+37
        %v6351 = vand.u32 %v5814, 2147483648
        %v6352 = vor.u32 1.1754944e-38, %v6351
        %v6353 = vsel %vm6350, %v6352, %v6348
        %v6354 = vmul.f32 1.0, %v6353
        %v6355 = vrcp.pop %v5815
        %v6356 = vmul.f32 %v5815, %v6355
        %v6357 = vsub.f32 1.0, %v6356
        %v6358 = vmul.f32 %v6355, %v6357
        %v6359 = vadd.f32 %v6355, %v6358
        %vm6360 = vweird.f32 %v5815
        %vm6361 = vweird.f32 %v6355
        %vm6362 = vmor %vm6360, %vm6361
        %v6363 = vsel %vm6362, %v6355, %v6359
        %v6364 = vand.u32 2147483647, %v5815
        %vm6365 = vcmp.eq.f32.partialorder %v6364, 8.507059e+37
        %v6366 = vand.u32 %v5815, 2147483648
        %v6367 = vor.u32 1.1754944e-38, %v6366
        %v6368 = vsel %vm6365, %v6367, %v6363
        %v6369 = vmul.f32 1.0, %v6368
        %v6370 = vrcp.pop %v5816
        %v6371 = vmul.f32 %v5816, %v6370
        %v6372 = vsub.f32 1.0, %v6371
        %v6373 = vmul.f32 %v6370, %v6372
        %v6374 = vadd.f32 %v6370, %v6373
        %vm6375 = vweird.f32 %v5816
        %vm6376 = vweird.f32 %v6370
        %vm6377 = vmor %vm6375, %vm6376
        %v6378 = vsel %vm6377, %v6370, %v6374
        %v6379 = vand.u32 2147483647, %v5816
        %vm6380 = vcmp.eq.f32.partialorder %v6379, 8.507059e+37
        %v6381 = vand.u32 %v5816, 2147483648
        %v6382 = vor.u32 1.1754944e-38, %v6381
        %v6383 = vsel %vm6380, %v6382, %v6378
        %v6384 = vmul.f32 1.0, %v6383
        %v6385 = vrcp.pop %v5817
        %v6386 = vmul.f32 %v5817, %v6385
        %v6387 = vsub.f32 1.0, %v6386
        %v6388 = vmul.f32 %v6385, %v6387
        %v6389 = vadd.f32 %v6385, %v6388
        %vm6390 = vweird.f32 %v5817
        %vm6391 = vweird.f32 %v6385
        %vm6392 = vmor %vm6390, %vm6391
        %v6393 = vsel %vm6392, %v6385, %v6389
        %v6394 = vand.u32 2147483647, %v5817
        %vm6395 = vcmp.eq.f32.partialorder %v6394, 8.507059e+37
        %v6396 = vand.u32 %v5817, 2147483648
        %v6397 = vor.u32 1.1754944e-38, %v6396
        %v6398 = vsel %vm6395, %v6397, %v6393
        %v6399 = vmul.f32 1.0, %v6398
        %v6400 = vrcp.pop %v5818
        %v6401 = vmul.f32 %v5818, %v6400
        %v6402 = vsub.f32 1.0, %v6401
        %v6403 = vmul.f32 %v6400, %v6402
        %v6404 = vadd.f32 %v6400, %v6403
        %vm6405 = vweird.f32 %v5818
        %vm6406 = vweird.f32 %v6400
        %vm6407 = vmor %vm6405, %vm6406
        %v6408 = vsel %vm6407, %v6400, %v6404
        %v6409 = vand.u32 2147483647, %v5818
        %vm6410 = vcmp.eq.f32.partialorder %v6409, 8.507059e+37
        %v6411 = vand.u32 %v5818, 2147483648
        %v6412 = vor.u32 1.1754944e-38, %v6411
        %v6413 = vsel %vm6410, %v6412, %v6408
        %v6414 = vmul.f32 1.0, %v6413
        %v6415 = vrcp.pop %v5819
        %v6416 = vmul.f32 %v5819, %v6415
        %v6417 = vsub.f32 1.0, %v6416
        %v6418 = vmul.f32 %v6415, %v6417
        %v6419 = vadd.f32 %v6415, %v6418
        %vm6420 = vweird.f32 %v5819
        %vm6421 = vweird.f32 %v6415
        %vm6422 = vmor %vm6420, %vm6421
        %v6423 = vsel %vm6422, %v6415, %v6419
        %v6424 = vand.u32 2147483647, %v5819
        %vm6425 = vcmp.eq.f32.partialorder %v6424, 8.507059e+37
        %v6426 = vand.u32 %v5819, 2147483648
        %v6427 = vor.u32 1.1754944e-38, %v6426
        %v6428 = vsel %vm6425, %v6427, %v6423
        %v6429 = vmul.f32 1.0, %v6428
        %v6430 = vrcp.pop %v5820
        %v6431 = vmul.f32 %v5820, %v6430
        %v6432 = vsub.f32 1.0, %v6431
        %v6433 = vmul.f32 %v6430, %v6432
        %v6434 = vadd.f32 %v6430, %v6433
        %vm6435 = vweird.f32 %v5820
        %vm6436 = vweird.f32 %v6430
        %vm6437 = vmor %vm6435, %vm6436
        %v6438 = vsel %vm6437, %v6430, %v6434
        %v6439 = vand.u32 2147483647, %v5820
        %vm6440 = vcmp.eq.f32.partialorder %v6439, 8.507059e+37
        %v6441 = vand.u32 %v5820, 2147483648
        %v6442 = vor.u32 1.1754944e-38, %v6441
        %v6443 = vsel %vm6440, %v6442, %v6438
        %v6444 = vmul.f32 1.0, %v6443
        %v6445 = vrcp.pop %v5821
        %v6446 = vmul.f32 %v5821, %v6445
        %v6447 = vsub.f32 1.0, %v6446
        %v6448 = vmul.f32 %v6445, %v6447
        %v6449 = vadd.f32 %v6445, %v6448
        %vm6450 = vweird.f32 %v5821
        %vm6451 = vweird.f32 %v6445
        %vm6452 = vmor %vm6450, %vm6451
        %v6453 = vsel %vm6452, %v6445, %v6449
        %v6454 = vand.u32 2147483647, %v5821
        %vm6455 = vcmp.eq.f32.partialorder %v6454, 8.507059e+37
        %v6456 = vand.u32 %v5821, 2147483648
        %v6457 = vor.u32 1.1754944e-38, %v6456
        %v6458 = vsel %vm6455, %v6457, %v6453
        %v6459 = vmul.f32 1.0, %v6458
        %v6460 = vrcp.pop %v5822
        %v6461 = vmul.f32 %v5822, %v6460
        %v6462 = vsub.f32 1.0, %v6461
        %v6463 = vmul.f32 %v6460, %v6462
        %v6464 = vadd.f32 %v6460, %v6463
        %vm6465 = vweird.f32 %v5822
        %vm6466 = vweird.f32 %v6460
        %vm6467 = vmor %vm6465, %vm6466
        %v6468 = vsel %vm6467, %v6460, %v6464
        %v6469 = vand.u32 2147483647, %v5822
        %vm6470 = vcmp.eq.f32.partialorder %v6469, 8.507059e+37
        %v6471 = vand.u32 %v5822, 2147483648
        %v6472 = vor.u32 1.1754944e-38, %v6471
        %v6473 = vsel %vm6470, %v6472, %v6468
        %v6474 = vmul.f32 1.0, %v6473
        %v6475 = vrcp.pop %v5823
        %v6476 = vmul.f32 %v5823, %v6475
        %v6477 = vsub.f32 1.0, %v6476
        %v6478 = vmul.f32 %v6475, %v6477
        %v6479 = vadd.f32 %v6475, %v6478
        %vm6480 = vweird.f32 %v5823
        %vm6481 = vweird.f32 %v6475
        %vm6482 = vmor %vm6480, %vm6481
        %v6483 = vsel %vm6482, %v6475, %v6479
        %v6484 = vand.u32 2147483647, %v5823
        %vm6485 = vcmp.eq.f32.partialorder %v6484, 8.507059e+37
        %v6486 = vand.u32 %v5823, 2147483648
        %v6487 = vor.u32 1.1754944e-38, %v6486
        %v6488 = vsel %vm6485, %v6487, %v6483
        %v6489 = vmul.f32 1.0, %v6488
        %v6490 = vrcp.pop %v5824
        %v6491 = vmul.f32 %v5824, %v6490
        %v6492 = vsub.f32 1.0, %v6491
        %v6493 = vmul.f32 %v6490, %v6492
        %v6494 = vadd.f32 %v6490, %v6493
        %vm6495 = vweird.f32 %v5824
        %vm6496 = vweird.f32 %v6490
        %vm6497 = vmor %vm6495, %vm6496
        %v6498 = vsel %vm6497, %v6490, %v6494
        %v6499 = vand.u32 2147483647, %v5824
        %vm6500 = vcmp.eq.f32.partialorder %v6499, 8.507059e+37
        %v6501 = vand.u32 %v5824, 2147483648
        %v6502 = vor.u32 1.1754944e-38, %v6501
        %v6503 = vsel %vm6500, %v6502, %v6498
        %v6504 = vmul.f32 1.0, %v6503
        %v6505 = vrcp.pop %v5825
        %v6506 = vmul.f32 %v5825, %v6505
        %v6507 = vsub.f32 1.0, %v6506
        %v6508 = vmul.f32 %v6505, %v6507
        %v6509 = vadd.f32 %v6505, %v6508
        %vm6510 = vweird.f32 %v5825
        %vm6511 = vweird.f32 %v6505
        %vm6512 = vmor %vm6510, %vm6511
        %v6513 = vsel %vm6512, %v6505, %v6509
        %v6514 = vand.u32 2147483647, %v5825
        %vm6515 = vcmp.eq.f32.partialorder %v6514, 8.507059e+37
        %v6516 = vand.u32 %v5825, 2147483648
        %v6517 = vor.u32 1.1754944e-38, %v6516
        %v6518 = vsel %vm6515, %v6517, %v6513
        %v6519 = vmul.f32 1.0, %v6518
        %v6520 = vrcp.pop %v5826
        %v6521 = vmul.f32 %v5826, %v6520
        %v6522 = vsub.f32 1.0, %v6521
        %v6523 = vmul.f32 %v6520, %v6522
        %v6524 = vadd.f32 %v6520, %v6523
        %vm6525 = vweird.f32 %v5826
        %vm6526 = vweird.f32 %v6520
        %vm6527 = vmor %vm6525, %vm6526
        %v6528 = vsel %vm6527, %v6520, %v6524
        %v6529 = vand.u32 2147483647, %v5826
        %vm6530 = vcmp.eq.f32.partialorder %v6529, 8.507059e+37
        %v6531 = vand.u32 %v5826, 2147483648
        %v6532 = vor.u32 1.1754944e-38, %v6531
        %v6533 = vsel %vm6530, %v6532, %v6528
        %v6534 = vmul.f32 1.0, %v6533
        %v6535 = vrcp.pop %v5827
        %v6536 = vmul.f32 %v5827, %v6535
        %v6537 = vsub.f32 1.0, %v6536
        %v6538 = vmul.f32 %v6535, %v6537
        %v6539 = vadd.f32 %v6535, %v6538
        %vm6540 = vweird.f32 %v5827
        %vm6541 = vweird.f32 %v6535
        %vm6542 = vmor %vm6540, %vm6541
        %v6543 = vsel %vm6542, %v6535, %v6539
        %v6544 = vand.u32 2147483647, %v5827
        %vm6545 = vcmp.eq.f32.partialorder %v6544, 8.507059e+37
        %v6546 = vand.u32 %v5827, 2147483648
        %v6547 = vor.u32 1.1754944e-38, %v6546
        %v6548 = vsel %vm6545, %v6547, %v6543
        %v6549 = vmul.f32 1.0, %v6548
        %v6550 = vrcp.pop %v5828
        %v6551 = vmul.f32 %v5828, %v6550
        %v6552 = vsub.f32 1.0, %v6551
        %v6553 = vmul.f32 %v6550, %v6552
        %v6554 = vadd.f32 %v6550, %v6553
        %vm6555 = vweird.f32 %v5828
        %vm6556 = vweird.f32 %v6550
        %vm6557 = vmor %vm6555, %vm6556
        %v6558 = vsel %vm6557, %v6550, %v6554
        %v6559 = vand.u32 2147483647, %v5828
        %vm6560 = vcmp.eq.f32.partialorder %v6559, 8.507059e+37
        %v6561 = vand.u32 %v5828, 2147483648
        %v6562 = vor.u32 1.1754944e-38, %v6561
        %v6563 = vsel %vm6560, %v6562, %v6558
        %v6564 = vmul.f32 1.0, %v6563
        %v6565 = vrcp.pop %v5829
        %v6566 = vmul.f32 %v5829, %v6565
        %v6567 = vsub.f32 1.0, %v6566
        %v6568 = vmul.f32 %v6565, %v6567
        %v6569 = vadd.f32 %v6565, %v6568
        %vm6570 = vweird.f32 %v5829
        %vm6571 = vweird.f32 %v6565
        %vm6572 = vmor %vm6570, %vm6571
        %v6573 = vsel %vm6572, %v6565, %v6569
        %v6574 = vand.u32 2147483647, %v5829
        %vm6575 = vcmp.eq.f32.partialorder %v6574, 8.507059e+37
        %v6576 = vand.u32 %v5829, 2147483648
        %v6577 = vor.u32 1.1754944e-38, %v6576
        %v6578 = vsel %vm6575, %v6577, %v6573
        %v6579 = vmul.f32 1.0, %v6578
        %v6580 = vrcp.pop %v5830
        %v6581 = vmul.f32 %v5830, %v6580
        %v6582 = vsub.f32 1.0, %v6581
        %v6583 = vmul.f32 %v6580, %v6582
        %v6584 = vadd.f32 %v6580, %v6583
        %vm6585 = vweird.f32 %v5830
        %vm6586 = vweird.f32 %v6580
        %vm6587 = vmor %vm6585, %vm6586
        %v6588 = vsel %vm6587, %v6580, %v6584
        %v6589 = vand.u32 2147483647, %v5830
        %vm6590 = vcmp.eq.f32.partialorder %v6589, 8.507059e+37
        %v6591 = vand.u32 %v5830, 2147483648
        %v6592 = vor.u32 1.1754944e-38, %v6591
        %v6593 = vsel %vm6590, %v6592, %v6588
        %v6594 = vmul.f32 1.0, %v6593
        %v6595 = vrcp.pop %v5831
        %v6596 = vmul.f32 %v5831, %v6595
        %v6597 = vsub.f32 1.0, %v6596
        %v6598 = vmul.f32 %v6595, %v6597
        %v6599 = vadd.f32 %v6595, %v6598
        %vm6600 = vweird.f32 %v5831
        %vm6601 = vweird.f32 %v6595
        %vm6602 = vmor %vm6600, %vm6601
        %v6603 = vsel %vm6602, %v6595, %v6599
        %v6604 = vand.u32 2147483647, %v5831
        %vm6605 = vcmp.eq.f32.partialorder %v6604, 8.507059e+37
        %v6606 = vand.u32 %v5831, 2147483648
        %v6607 = vor.u32 1.1754944e-38, %v6606
        %v6608 = vsel %vm6605, %v6607, %v6603
        %v6609 = vmul.f32 1.0, %v6608
        %v6610 = vrcp.pop %v5832
        %v6611 = vmul.f32 %v5832, %v6610
        %v6612 = vsub.f32 1.0, %v6611
        %v6613 = vmul.f32 %v6610, %v6612
        %v6614 = vadd.f32 %v6610, %v6613
        %vm6615 = vweird.f32 %v5832
        %vm6616 = vweird.f32 %v6610
        %vm6617 = vmor %vm6615, %vm6616
        %v6618 = vsel %vm6617, %v6610, %v6614
        %v6619 = vand.u32 2147483647, %v5832
        %vm6620 = vcmp.eq.f32.partialorder %v6619, 8.507059e+37
        %v6621 = vand.u32 %v5832, 2147483648
        %v6622 = vor.u32 1.1754944e-38, %v6621
        %v6623 = vsel %vm6620, %v6622, %v6618
        %v6624 = vmul.f32 1.0, %v6623
        %v6625 = vrcp.pop %v5833
        %v6626 = vmul.f32 %v5833, %v6625
        %v6627 = vsub.f32 1.0, %v6626
        %v6628 = vmul.f32 %v6625, %v6627
        %v6629 = vadd.f32 %v6625, %v6628
        %vm6630 = vweird.f32 %v5833
        %vm6631 = vweird.f32 %v6625
        %vm6632 = vmor %vm6630, %vm6631
        %v6633 = vsel %vm6632, %v6625, %v6629
        %v6634 = vand.u32 2147483647, %v5833
        %vm6635 = vcmp.eq.f32.partialorder %v6634, 8.507059e+37
        %v6636 = vand.u32 %v5833, 2147483648
        %v6637 = vor.u32 1.1754944e-38, %v6636
        %v6638 = vsel %vm6635, %v6637, %v6633
        %v6639 = vmul.f32 1.0, %v6638
        %v6640 = vrcp.pop %v5834
        %v6641 = vmul.f32 %v5834, %v6640
        %v6642 = vsub.f32 1.0, %v6641
        %v6643 = vmul.f32 %v6640, %v6642
        %v6644 = vadd.f32 %v6640, %v6643
        %vm6645 = vweird.f32 %v5834
        %vm6646 = vweird.f32 %v6640
        %vm6647 = vmor %vm6645, %vm6646
        %v6648 = vsel %vm6647, %v6640, %v6644
        %v6649 = vand.u32 2147483647, %v5834
        %vm6650 = vcmp.eq.f32.partialorder %v6649, 8.507059e+37
        %v6651 = vand.u32 %v5834, 2147483648
        %v6652 = vor.u32 1.1754944e-38, %v6651
        %v6653 = vsel %vm6650, %v6652, %v6648
        %v6654 = vmul.f32 1.0, %v6653
        %v6655 = vrcp.pop %v5835
        %v6656 = vmul.f32 %v5835, %v6655
        %v6657 = vsub.f32 1.0, %v6656
        %v6658 = vmul.f32 %v6655, %v6657
        %v6659 = vadd.f32 %v6655, %v6658
        %vm6660 = vweird.f32 %v5835
        %vm6661 = vweird.f32 %v6655
        %vm6662 = vmor %vm6660, %vm6661
        %v6663 = vsel %vm6662, %v6655, %v6659
        %v6664 = vand.u32 2147483647, %v5835
        %vm6665 = vcmp.eq.f32.partialorder %v6664, 8.507059e+37
        %v6666 = vand.u32 %v5835, 2147483648
        %v6667 = vor.u32 1.1754944e-38, %v6666
        %v6668 = vsel %vm6665, %v6667, %v6663
        %v6669 = vmul.f32 1.0, %v6668
        %v6670 = vrcp.pop %v5836
        %v6671 = vmul.f32 %v5836, %v6670
        %v6672 = vsub.f32 1.0, %v6671
        %v6673 = vmul.f32 %v6670, %v6672
        %v6674 = vadd.f32 %v6670, %v6673
        %vm6675 = vweird.f32 %v5836
        %vm6676 = vweird.f32 %v6670
        %vm6677 = vmor %vm6675, %vm6676
        %v6678 = vsel %vm6677, %v6670, %v6674
        %v6679 = vand.u32 2147483647, %v5836
        %vm6680 = vcmp.eq.f32.partialorder %v6679, 8.507059e+37
        %v6681 = vand.u32 %v5836, 2147483648
        %v6682 = vor.u32 1.1754944e-38, %v6681
        %v6683 = vsel %vm6680, %v6682, %v6678
        %v6684 = vmul.f32 1.0, %v6683
        %v6685 = vrcp.pop %v5837
        %v6686 = vmul.f32 %v5837, %v6685
        %v6687 = vsub.f32 1.0, %v6686
        %v6688 = vmul.f32 %v6685, %v6687
        %v6689 = vadd.f32 %v6685, %v6688
        %vm6690 = vweird.f32 %v5837
        %vm6691 = vweird.f32 %v6685
        %vm6692 = vmor %vm6690, %vm6691
        %v6693 = vsel %vm6692, %v6685, %v6689
        %v6694 = vand.u32 2147483647, %v5837
        %vm6695 = vcmp.eq.f32.partialorder %v6694, 8.507059e+37
        %v6696 = vand.u32 %v5837, 2147483648
        %v6697 = vor.u32 1.1754944e-38, %v6696
        %v6698 = vsel %vm6695, %v6697, %v6693
        %v6699 = vmul.f32 1.0, %v6698
        %v6700 = vrcp.pop %v5838
        %v6701 = vmul.f32 %v5838, %v6700
        %v6702 = vsub.f32 1.0, %v6701
        %v6703 = vmul.f32 %v6700, %v6702
        %v6704 = vadd.f32 %v6700, %v6703
        %vm6705 = vweird.f32 %v5838
        %vm6706 = vweird.f32 %v6700
        %vm6707 = vmor %vm6705, %vm6706
        %v6708 = vsel %vm6707, %v6700, %v6704
        %v6709 = vand.u32 2147483647, %v5838
        %vm6710 = vcmp.eq.f32.partialorder %v6709, 8.507059e+37
        %v6711 = vand.u32 %v5838, 2147483648
        %v6712 = vor.u32 1.1754944e-38, %v6711
        %v6713 = vsel %vm6710, %v6712, %v6708
        %v6714 = vmul.f32 1.0, %v6713
        %v6715 = vrcp.pop %v5839
        %v6716 = vmul.f32 %v5839, %v6715
        %v6717 = vsub.f32 1.0, %v6716
        %v6718 = vmul.f32 %v6715, %v6717
        %v6719 = vadd.f32 %v6715, %v6718
        %vm6720 = vweird.f32 %v5839
        %vm6721 = vweird.f32 %v6715
        %vm6722 = vmor %vm6720, %vm6721
        %v6723 = vsel %vm6722, %v6715, %v6719
        %v6724 = vand.u32 2147483647, %v5839
        %vm6725 = vcmp.eq.f32.partialorder %v6724, 8.507059e+37
        %v6726 = vand.u32 %v5839, 2147483648
        %v6727 = vor.u32 1.1754944e-38, %v6726
        %v6728 = vsel %vm6725, %v6727, %v6723
        %v6729 = vmul.f32 1.0, %v6728
        %v6730 = vrcp.pop %v5840
        %v6731 = vmul.f32 %v5840, %v6730
        %v6732 = vsub.f32 1.0, %v6731
        %v6733 = vmul.f32 %v6730, %v6732
        %v6734 = vadd.f32 %v6730, %v6733
        %vm6735 = vweird.f32 %v5840
        %vm6736 = vweird.f32 %v6730
        %vm6737 = vmor %vm6735, %vm6736
        %v6738 = vsel %vm6737, %v6730, %v6734
        %v6739 = vand.u32 2147483647, %v5840
        %vm6740 = vcmp.eq.f32.partialorder %v6739, 8.507059e+37
        %v6741 = vand.u32 %v5840, 2147483648
        %v6742 = vor.u32 1.1754944e-38, %v6741
        %v6743 = vsel %vm6740, %v6742, %v6738
        %v6744 = vmul.f32 1.0, %v6743
        %v6745 = vrcp.pop %v5841
        %v6746 = vmul.f32 %v5841, %v6745
        %v6747 = vsub.f32 1.0, %v6746
        %v6748 = vmul.f32 %v6745, %v6747
        %v6749 = vadd.f32 %v6745, %v6748
        %vm6750 = vweird.f32 %v5841
        %vm6751 = vweird.f32 %v6745
        %vm6752 = vmor %vm6750, %vm6751
        %v6753 = vsel %vm6752, %v6745, %v6749
        %v6754 = vand.u32 2147483647, %v5841
        %vm6755 = vcmp.eq.f32.partialorder %v6754, 8.507059e+37
        %v6756 = vand.u32 %v5841, 2147483648
        %v6757 = vor.u32 1.1754944e-38, %v6756
        %v6758 = vsel %vm6755, %v6757, %v6753
        %v6759 = vmul.f32 1.0, %v6758
        %v6760 = vrcp.pop %v5842
        %v6761 = vmul.f32 %v5842, %v6760
        %v6762 = vsub.f32 1.0, %v6761
        %v6763 = vmul.f32 %v6760, %v6762
        %v6764 = vadd.f32 %v6760, %v6763
        %vm6765 = vweird.f32 %v5842
        %vm6766 = vweird.f32 %v6760
        %vm6767 = vmor %vm6765, %vm6766
        %v6768 = vsel %vm6767, %v6760, %v6764
        %v6769 = vand.u32 2147483647, %v5842
        %vm6770 = vcmp.eq.f32.partialorder %v6769, 8.507059e+37
        %v6771 = vand.u32 %v5842, 2147483648
        %v6772 = vor.u32 1.1754944e-38, %v6771
        %v6773 = vsel %vm6770, %v6772, %v6768
        %v6774 = vmul.f32 1.0, %v6773
        %v6775 = vrcp.pop %v5843
        %v6776 = vmul.f32 %v5843, %v6775
        %v6777 = vsub.f32 1.0, %v6776
        %v6778 = vmul.f32 %v6775, %v6777
        %v6779 = vadd.f32 %v6775, %v6778
        %vm6780 = vweird.f32 %v5843
        %vm6781 = vweird.f32 %v6775
        %vm6782 = vmor %vm6780, %vm6781
        %v6783 = vsel %vm6782, %v6775, %v6779
        %v6784 = vand.u32 2147483647, %v5843
        %vm6785 = vcmp.eq.f32.partialorder %v6784, 8.507059e+37
        %v6786 = vand.u32 %v5843, 2147483648
        %v6787 = vor.u32 1.1754944e-38, %v6786
        %v6788 = vsel %vm6785, %v6787, %v6783
        %v6789 = vmul.f32 1.0, %v6788
        %v6790 = vrcp.pop %v5844
        %v6791 = vmul.f32 %v5844, %v6790
        %v6792 = vsub.f32 1.0, %v6791
        %v6793 = vmul.f32 %v6790, %v6792
        %v6794 = vadd.f32 %v6790, %v6793
        %vm6795 = vweird.f32 %v5844
        %vm6796 = vweird.f32 %v6790
        %vm6797 = vmor %vm6795, %vm6796
        %v6798 = vsel %vm6797, %v6790, %v6794
        %v6799 = vand.u32 2147483647, %v5844
        %vm6800 = vcmp.eq.f32.partialorder %v6799, 8.507059e+37
        %v6801 = vand.u32 %v5844, 2147483648
        %v6802 = vor.u32 1.1754944e-38, %v6801
        %v6803 = vsel %vm6800, %v6802, %v6798
        %v6804 = vmul.f32 1.0, %v6803
        %6805 = vst [vmem:[%s345] sm:$0xff] %v5859
        %6806 = vst [vmem:[%s345 + $0x8] sm:$0xff] %v5874
        %6807 = vst [vmem:[%s345 + $0x10] sm:$0xff] %v5889
        %6808 = vst [vmem:[%s345 + $0x18] sm:$0xff] %v5904
        %6809 = vst [vmem:[%s345 + $0x20] sm:$0xff] %v5919
        %6810 = vst [vmem:[%s345 + $0x28] sm:$0xff] %v5934
        %6811 = vst [vmem:[%s345 + $0x30] sm:$0xff] %v5949
        %6812 = vst [vmem:[%s345 + $0x38] sm:$0xff] %v5964
        %6813 = vst [vmem:[%s345 + $0x40] sm:$0xff] %v5979
        %6814 = vst [vmem:[%s345 + $0x48] sm:$0xff] %v5994
        %6815 = vst [vmem:[%s345 + $0x50] sm:$0xff] %v6009
        %6816 = vst [vmem:[%s345 + $0x58] sm:$0xff] %v6024
        %6817 = vst [vmem:[%s345 + $0x60] sm:$0xff] %v6039
        %6818 = vst [vmem:[%s345 + $0x68] sm:$0xff] %v6054
        %6819 = vst [vmem:[%s345 + $0x70] sm:$0xff] %v6069
        %6820 = vst [vmem:[%s345 + $0x78] sm:$0xff] %v6084
        %6821 = vst [vmem:[%s345 + $0x80] sm:$0xff] %v6099
        %6822 = vst [vmem:[%s345 + $0x88] sm:$0xff] %v6114
        %6823 = vst [vmem:[%s345 + $0x90] sm:$0xff] %v6129
        %6824 = vst [vmem:[%s345 + $0x98] sm:$0xff] %v6144
        %6825 = vst [vmem:[%s345 + $0xa0] sm:$0xff] %v6159
        %6826 = vst [vmem:[%s345 + $0xa8] sm:$0xff] %v6174
        %6827 = vst [vmem:[%s345 + $0xb0] sm:$0xff] %v6189
        %6828 = vst [vmem:[%s345 + $0xb8] sm:$0xff] %v6204
        %6829 = vst [vmem:[%s345 + $0xc0] sm:$0xff] %v6219
        %6830 = vst [vmem:[%s345 + $0xc8] sm:$0xff] %v6234
        %6831 = vst [vmem:[%s345 + $0xd0] sm:$0xff] %v6249
        %6832 = vst [vmem:[%s345 + $0xd8] sm:$0xff] %v6264
        %6833 = vst [vmem:[%s345 + $0xe0] sm:$0xff] %v6279
        %6834 = vst [vmem:[%s345 + $0xe8] sm:$0xff] %v6294
        %6835 = vst [vmem:[%s345 + $0xf0] sm:$0xff] %v6309
        %6836 = vst [vmem:[%s345 + $0xf8] sm:$0xff] %v6324
        %6837 = vst [vmem:[%s345 + $0x100] sm:$0xff] %v6339
        %6838 = vst [vmem:[%s345 + $0x108] sm:$0xff] %v6354
        %6839 = vst [vmem:[%s345 + $0x110] sm:$0xff] %v6369
        %6840 = vst [vmem:[%s345 + $0x118] sm:$0xff] %v6384
        %6841 = vst [vmem:[%s345 + $0x120] sm:$0xff] %v6399
        %6842 = vst [vmem:[%s345 + $0x128] sm:$0xff] %v6414
        %6843 = vst [vmem:[%s345 + $0x130] sm:$0xff] %v6429
        %6844 = vst [vmem:[%s345 + $0x138] sm:$0xff] %v6444
        %6845 = vst [vmem:[%s345 + $0x140] sm:$0xff] %v6459
        %6846 = vst [vmem:[%s345 + $0x148] sm:$0xff] %v6474
        %6847 = vst [vmem:[%s345 + $0x150] sm:$0xff] %v6489
        %6848 = vst [vmem:[%s345 + $0x158] sm:$0xff] %v6504
        %6849 = vst [vmem:[%s345 + $0x160] sm:$0xff] %v6519
        %6850 = vst [vmem:[%s345 + $0x168] sm:$0xff] %v6534
        %6851 = vst [vmem:[%s345 + $0x170] sm:$0xff] %v6549
        %6852 = vst [vmem:[%s345 + $0x178] sm:$0xff] %v6564
        %6853 = vst [vmem:[%s345 + $0x180] sm:$0xff] %v6579
        %6854 = vst [vmem:[%s345 + $0x188] sm:$0xff] %v6594
        %6855 = vst [vmem:[%s345 + $0x190] sm:$0xff] %v6609
        %6856 = vst [vmem:[%s345 + $0x198] sm:$0xff] %v6624
        %6857 = vst [vmem:[%s345 + $0x1a0] sm:$0xff] %v6639
        %6858 = vst [vmem:[%s345 + $0x1a8] sm:$0xff] %v6654
        %6859 = vst [vmem:[%s345 + $0x1b0] sm:$0xff] %v6669
        %6860 = vst [vmem:[%s345 + $0x1b8] sm:$0xff] %v6684
        %6861 = vst [vmem:[%s345 + $0x1c0] sm:$0xff] %v6699
        %6862 = vst [vmem:[%s345 + $0x1c8] sm:$0xff] %v6714
        %6863 = vst [vmem:[%s345 + $0x1d0] sm:$0xff] %v6729
        %6864 = vst [vmem:[%s345 + $0x1d8] sm:$0xff] %v6744
        %6865 = vst [vmem:[%s345 + $0x1e0] sm:$0xff] %v6759
        %6866 = vst [vmem:[%s345 + $0x1e8] sm:$0xff] %v6774
        %6867 = vst [vmem:[%s345 + $0x1f0] sm:$0xff] %v6789
        %6868 = vst [vmem:[%s345 + $0x1f8] sm:$0xff] %v6804
        %s6869 = sand.u32 %s147, 1
        %s6870 = scalar_lea.sflag [#allocation4], %s6869
        %s6871 = sand.u32 %s147, 1
        %s6872 = smul.addr %s6871, 2048
        %s6873 = scalar_lea.vmem [#allocation11], %s6872
        %s6874 = sand.u32 %s173, 1
        %s6875 = scalar_lea.sflag [#allocation13], %s6874
        %s6876 = sand.u32 %s173, 1
        %s6877 = smul.addr %s6876, 512
        %s6878 = scalar_lea.vmem [#allocation12], %s6877
        // Predicated region
        $region61: #{tpu_custom_call.1} parent=39 // pred_check
          %p6879 = pneg %p157
        $region62: #{tpu_custom_call.1} parent=39 // pred_check_branch
          %6881 = sbr.rel (%p6879) target = $region64
        $region63: #{tpu_custom_call.1} parent=39 // pred_region
          %s6882 = smul.u32 32, %s29
          %6884 = vsyncadd %s6870, 0
          %s6885 = smul.addr %s6882, 8
          %s6886 = smul.addr %s6885, 8
          %s6887 = scalar_lea.hbm %s5, %s6886
          %s6888 = sshll.u32 %s6873, 4
          %s6889 = int_to_ptr.vmem [resolvable:$true] %s6888
          %s6890 = sshll.u32 %s6887, 4
          %s6891 = int_to_ptr.hbm [resolvable:$true] %s6890
          %6896 = dma.vmem_to_hbm [thread:$0]  %s6889, 32768, %s6891, %s6870, 1024, 1024, 64
        $region64: #{tpu_custom_call.1} parent=39 // pred_fallthru
          _
        // Predicated region
        $region65: #{tpu_custom_call.1} parent=39 // pred_check
          %p6897 = pneg %p183
        $region66: #{tpu_custom_call.1} parent=39 // pred_check_branch
          %6899 = sbr.rel (%p6897) target = $region68
        $region67: #{tpu_custom_call.1} parent=39 // pred_region
          %s6900 = smul.u32 32, %s29
          %6902 = vsyncadd %s6875, 0
          %s6903 = smul.addr %s6900, 2
          %s6904 = smul.addr %s6903, 8
          %s6905 = scalar_lea.hbm %s6, %s6904
          %s6906 = sshll.u32 %s6878, 4
          %s6907 = int_to_ptr.vmem [resolvable:$true] %s6906
          %s6908 = sshll.u32 %s6905, 4
          %s6909 = int_to_ptr.hbm [resolvable:$true] %s6908
          %6914 = dma.vmem_to_hbm [thread:$0]  %s6907, 8192, %s6909, %s6875, 256, 256, 16
        $region68: #{tpu_custom_call.1} parent=39 // pred_fallthru
          _
      $region40: #{tpu_custom_call.1} parent=5 // pred_fallthru
        _
      %p6915 = scmp.le.s32.totalorder 2, %s24
      // Predicated region
      $region69: #{tpu_custom_call.1} parent=5 // pred_check
        %p6916 = pneg %p6915
      $region70: #{tpu_custom_call.1} parent=5 // pred_check_branch
        %6918 = sbr.rel (%p6916) target = $region72
      $region71: #{tpu_custom_call.1} parent=5 // pred_region
        %s6919 = ssub.s32 %s24, 2
        // Predicated region
        $region73: #{tpu_custom_call.1} parent=71 // pred_check
          %p6920 = pneg %p163
        $region74: #{tpu_custom_call.1} parent=71 // pred_check_branch
          %6922 = sbr.rel (%p6920) target = $region76
        $region75: #{tpu_custom_call.1} parent=71 // pred_region
          %s6923 = sand.u32 %s148, 1
          %s6924 = scalar_lea.sflag [#allocation4], %s6923
          %s6925 = sand.u32 %s148, 1
          %s6926 = smul.addr %s6925, 2048
          %s6927 = scalar_lea.vmem [#allocation11], %s6926
          %6929 = dma.done %s6924, 32768
        $region76: #{tpu_custom_call.1} parent=71 // pred_fallthru
          _
        // Predicated region
        $region77: #{tpu_custom_call.1} parent=71 // pred_check
          %p6930 = pneg %p189
        $region78: #{tpu_custom_call.1} parent=71 // pred_check_branch
          %6932 = sbr.rel (%p6930) target = $region80
        $region79: #{tpu_custom_call.1} parent=71 // pred_region
          %s6933 = sand.u32 %s174, 1
          %s6934 = scalar_lea.sflag [#allocation13], %s6933
          %s6935 = sand.u32 %s174, 1
          %s6936 = smul.addr %s6935, 512
          %s6937 = scalar_lea.vmem [#allocation12], %s6936
          %6939 = dma.done %s6934, 8192
        $region80: #{tpu_custom_call.1} parent=71 // pred_fallthru
          _
      $region72: #{tpu_custom_call.1} parent=5 // pred_fallthru
        _
    $region6: #{tpu_custom_call.1} parent=1 // loop_footer
      %s28 = sadd.s32 1, %s24
    $region7: #{tpu_custom_call.1} parent=1 // loop_footer_branch
      %23 = sbr.rel target = $region3
    $region8: #{tpu_custom_call.1} parent=1 // loop_exit
      _
    %6940 = vsyncpa [#allocation3], 1
    %s6941 = scalar_lea.sflag [#allocation3], 1
    %6942 = vsyncpa %s6941, 1
    %6943 = vsyncpa [#allocation6], 1
    %6944 = vsyncpa [#allocation9], 1
    %6945 = vsyncpa [#allocation4], 1
    %s6946 = scalar_lea.sflag [#allocation4], 1
    %6947 = vsyncpa %s6946, 1
    %6948 = vsyncpa [#allocation13], 1
    %s6949 = scalar_lea.sflag [#allocation13], 1
    %6950 = vsyncpa %s6949, 1

</llo_original>
